<compile_context>
chip_gen: v7x
topology: tpu7x:2x2x1
jax: 0.10.0
libtpu: 0.0.40
codegen_flags: <defaults>
</compile_context>

<pallas_src>
from math import ceil

import jax
import jax.numpy as jnp
from jax.experimental import pallas as pl
from jax.experimental.pallas import tpu as pltpu

_BN_EPS = 1e-5
_DP_EPS = 1e-15
_MXU_DTYPE = jnp.bfloat16          # MXU input dtype; accumulation is always f32


def _vmem_spec():
    return pl.BlockSpec(memory_space=pltpu.MemorySpace.VMEM)


def _sum_all(x):
    """Full 2D reduction -> (1, 1) (lane reduce then sublane reduce)."""
    return jnp.sum(jnp.sum(x, axis=-1, keepdims=True), axis=0, keepdims=True)


# ----------------------------------------------------------------------------
# Single fused kernel for the whole forward pass
# ----------------------------------------------------------------------------

def _net_kernel(x_ref, adj_ref, *refs):
    logp_ref, link_ref, ent_ref = refs[-3:]
    prm = refs[:-3]
    nb = x_ref.shape[0]                       # batch size (Python int)

    cursor = [0]

    def take(n):
        i = cursor[0]
        cursor[0] = i + n
        return prm[i:i + n]

    def norm_adj(adjs):
        # Row-normalized adjacency (mean aggregation): computed once per level in
        # f32, cast to bf16 once, reused by all SAGE layers of both branches.
        out = []
        for a in adjs:
            deg = jnp.maximum(jnp.sum(a, axis=-1, keepdims=True), 1.0)
            out.append((a / deg).astype(_MXU_DTYPE))
        return out

    def sage_relu_bn(hs, adj_bf, w_ref, b_ref, g_ref, be_ref):
        # hs: list of per-graph (rows, Cin) f32 activations.
        cin = hs[0].shape[-1]
        rows = hs[0].shape[0]
        wrel = w_ref[0:cin, :]                # (Cin, Cout) bf16 (static ref slice)
        wroot = w_ref[cin:2 * cin, :]         # (Cin, Cout) bf16
        b = b_ref[...]
        # Mean aggregation with the pre-normalized bf16 adjacency.
        aggs = [jnp.dot(adj_bf[i], hs[i].astype(_MXU_DTYPE),
                        preferred_element_type=jnp.float32) for i in range(nb)]
        inv_rows = 1.0 / float(nb * rows)
        if rows % 8 == 0:
            # Batch the shared-weight matmuls: one MXU push per weight over the
            # whole (nb*rows, Cin) slab; BN stats are one reduction over it.
            agg_slab = jnp.concatenate(aggs, axis=0).astype(_MXU_DTYPE)
            h_slab = jnp.concatenate(hs, axis=0).astype(_MXU_DTYPE)
            y = jnp.maximum(
                jnp.dot(agg_slab, wrel, preferred_element_type=jnp.float32)
                + jnp.dot(h_slab, wroot, preferred_element_type=jnp.float32)
                + b, 0.0)
            mean = jnp.sum(y, axis=0, keepdims=True) * inv_rows
            var = jnp.sum(jnp.square(y - mean), axis=0, keepdims=True) * inv_rows
            scale = jax.lax.rsqrt(var + _BN_EPS) * g_ref[...]
            shift = be_ref[...] - mean * scale
            y = y * scale + shift
            return [y[i * rows:(i + 1) * rows] for i in range(nb)]
        # Tiny non-8-aligned graphs (level 3, rows = 2): per-element matmuls.
        ys = [jnp.maximum(
            jnp.dot(aggs[i].astype(_MXU_DTYPE), wrel,
                    preferred_element_type=jnp.float32)
            + jnp.dot(hs[i].astype(_MXU_DTYPE), wroot,
                      preferred_element_type=jnp.float32)
            + b, 0.0) for i in range(nb)]
        mean = sum(jnp.sum(v, axis=0, keepdims=True) for v in ys) * inv_rows
        var = sum(jnp.sum(jnp.square(v - mean), axis=0, keepdims=True)
                  for v in ys) * inv_rows
        scale = jax.lax.rsqrt(var + _BN_EPS) * g_ref[...]
        shift = be_ref[...] - mean * scale
        return [v * scale + shift for v in ys]

    def linear_relu(hs, w_ref, b_ref):
        w = w_ref[...]
        b = b_ref[...]
        rows = hs[0].shape[0]
        if rows % 8 == 0:
            slab = jnp.concatenate(hs, axis=0).astype(_MXU_DTYPE)
            y = jnp.maximum(
                jnp.dot(slab, w, preferred_element_type=jnp.float32) + b, 0.0)
            return [y[i * rows:(i + 1) * rows] for i in range(nb)]
        return [jnp.maximum(
            jnp.dot(h.astype(_MXU_DTYPE), w, preferred_element_type=jnp.float32)
            + b, 0.0) for h in hs]

    def gnn_block(hs, adj_bf, with_lin):
        x1 = sage_relu_bn(hs, adj_bf, *take(4))
        x2 = sage_relu_bn(x1, adj_bf, *take(4))
        x3 = sage_relu_bn(x2, adj_bf, *take(4))
        cats = [jnp.concatenate(t, axis=-1) for t in zip(x1, x2, x3)]
        if with_lin:
            cats = linear_relu(cats, *take(2))
        return cats

    def diff_pool(xs, adjs, ss):
        rows = xs[0].shape[0]
        link = jnp.zeros((1, 1), jnp.float32)
        ent = jnp.zeros((1, 1), jnp.float32)
        outs, oadjs = [], []
        for i in range(nb):
            lg = ss[i]                                        # (rows, K) logits
            m = jnp.max(lg, axis=-1, keepdims=True)
            e = jnp.exp(lg - m)
            s = e / jnp.sum(e, axis=-1, keepdims=True)        # softmax, exact f32
            st = s.T                                          # (K, rows) f32
            s_bf = s.astype(_MXU_DTYPE)                       # bf16 casts hoisted
            st_bf = st.astype(_MXU_DTYPE)
            adj = adjs[i]
            outs.append(jnp.dot(st_bf, xs[i].astype(_MXU_DTYPE),
                                preferred_element_type=jnp.float32))     # s^T x
            sta = jnp.dot(st_bf, adj.astype(_MXU_DTYPE),
                          preferred_element_type=jnp.float32)            # s^T adj
            oadjs.append(jnp.dot(sta.astype(_MXU_DTYPE), s_bf,
                                 preferred_element_type=jnp.float32))    # s^T adj s
            sst = jnp.dot(s_bf, st_bf, preferred_element_type=jnp.float32)
            diff = adj - sst                                  # adj - s s^T (VMEM only)
            link = link + _sum_all(diff * diff)
            ent = ent + _sum_all(-s * jnp.log(s + _DP_EPS))
        link_loss = jnp.sqrt(link) * (1.0 / float(nb * rows * rows))
        ent_loss = ent * (1.0 / float(nb * rows))
        return outs, oadjs, link_loss, ent_loss

    # ------------------------------ forward ---------------------------------
    xs0 = [x_ref[i] for i in range(nb)]
    adjs0 = [adj_ref[i] for i in range(nb)]
    adj0_bf = norm_adj(adjs0)

    s1 = gnn_block(xs0, adj0_bf, with_lin=True)        # gnn1_pool
    xe1 = gnn_block(xs0, adj0_bf, with_lin=False)      # gnn1_embed
    x1, adj1, l1, e1 = diff_pool(xe1, adjs0, s1)

    adj1_bf = norm_adj(adj1)
    s2 = gnn_block(x1, adj1_bf, with_lin=True)         # gnn2_pool
    xe2 = gnn_block(x1, adj1_bf, with_lin=False)       # gnn2_embed
    x2, adj2, l2, e2 = diff_pool(xe2, adj1, s2)

    adj2_bf = norm_adj(adj2)
    xe3 = gnn_block(x2, adj2_bf, with_lin=False)       # gnn3_embed

    # Head: mean over nodes -> lin1 + ReLU -> lin2 -> log_softmax (all in-kernel).
    wl1_ref, bl1_ref, wl2_ref, bl2_ref = take(4)
    wl1 = wl1_ref[...]
    bl1 = bl1_ref[...]
    wl2 = wl2_ref[...]
    bl2 = bl2_ref[...]
    for i in range(nb):
        pooled = jnp.mean(xe3[i], axis=0, keepdims=True)                  # (1, 3H)
        h = jnp.maximum(
            jnp.dot(pooled.astype(_MXU_DTYPE), wl1,
                    preferred_element_type=jnp.float32) + bl1, 0.0)
        logits = jnp.dot(h.astype(_MXU_DTYPE), wl2,
                         preferred_element_type=jnp.float32) + bl2        # (1, classes)
        z = logits - jnp.max(logits, axis=-1, keepdims=True)
        logp_ref[i] = z - jnp.log(jnp.sum(jnp.exp(z), axis=-1, keepdims=True))

    link_ref[...] = l1 + l2
    ent_ref[...] = e1 + e2


# ----------------------------------------------------------------------------
# Wrapper: one pallas_call for the whole network
# ----------------------------------------------------------------------------

def _flatten_gnn(p, with_lin):
    flat = []
    for i in (1, 2, 3):
        w, b = p[f"conv{i}"]
        g, be = p[f"bn{i}"]
        flat += [w, b, g, be]
    if with_lin:
        flat += list(p["lin"])
    return flat


def net_forward(params, x, adj):
    B = x.shape[0]
    classes = params["lin2"][0].shape[1]
    flat = (_flatten_gnn(params["gnn1_pool"], True)
            + _flatten_gnn(params["gnn1_embed"], False)
            + _flatten_gnn(params["gnn2_pool"], True)
            + _flatten_gnn(params["gnn2_embed"], False)
            + _flatten_gnn(params["gnn3_embed"], False)
            + list(params["lin1"]) + list(params["lin2"]))

    logp3, link, ent = pl.pallas_call(
        _net_kernel,
        out_shape=(jax.ShapeDtypeStruct((B, 1, classes), jnp.float32),
                   jax.ShapeDtypeStruct((1, 1), jnp.float32),
                   jax.ShapeDtypeStruct((1, 1), jnp.float32)),
        in_specs=[_vmem_spec()] * (2 + len(flat)),
        out_specs=(_vmem_spec(), _vmem_spec(), _vmem_spec()),
    )(x, adj, *flat)
    return logp3[:, 0, :], link[0, 0], ent[0, 0]


# ----------------------------------------------------------------------------
# Deterministic parameter init (synthetic; mirrors module __init__ shapes)
# ----------------------------------------------------------------------------

def _uniform(key, shape, bound):
    return jax.random.uniform(key, shape, minval=-bound, maxval=bound,
                              dtype=jnp.float32)


def init_linear(key, cin, cout):
    k1, k2 = jax.random.split(key)
    bound = 1.0 / (cin ** 0.5)
    return (_uniform(k1, (cin, cout), bound).astype(jnp.bfloat16),   # MXU weight
            _uniform(k2, (1, cout), bound))                          # f32 bias


def init_sage(key, cin, cout):
    # lin_rel (no bias) stacked on top of lin_root (bias) -> (2*cin, cout) bf16.
    k1, k2 = jax.random.split(key)
    bound = 1.0 / (cin ** 0.5)
    w = _uniform(k1, (2 * cin, cout), bound).astype(jnp.bfloat16)
    b = _uniform(k2, (1, cout), bound)
    return w, b


def init_bn(c):
    return jnp.ones((1, c), jnp.float32), jnp.zeros((1, c), jnp.float32)


def init_gnn(key, cin, chid, cout, lin=True):
    ks = jax.random.split(key, 4)
    p = {
        "conv1": init_sage(ks[0], cin, chid), "bn1": init_bn(chid),
        "conv2": init_sage(ks[1], chid, chid), "bn2": init_bn(chid),
        "conv3": init_sage(ks[2], chid, cout), "bn3": init_bn(cout),
    }
    if lin:
        p["lin"] = init_linear(ks[3], 2 * chid + cout, cout)
    return p


def init_net(key, max_nodes, features, classes):
    ks = jax.random.split(key, 7)
    n1 = ceil(0.25 * max_nodes)
    n2 = ceil(0.25 * n1)
    return {
        "gnn1_pool": init_gnn(ks[0], features, 64, n1, lin=True),
        "gnn1_embed": init_gnn(ks[1], features, 64, 64, lin=False),
        "gnn2_pool": init_gnn(ks[2], 3 * 64, 64, n2, lin=True),
        "gnn2_embed": init_gnn(ks[3], 3 * 64, 64, 64, lin=False),
        "gnn3_embed": init_gnn(ks[4], 3 * 64, 64, 64, lin=False),
        "lin1": init_linear(ks[5], 3 * 64, 64),
        "lin2": init_linear(ks[6], 64, classes),
    }


# ----------------------------------------------------------------------------
# Main
# ----------------------------------------------------------------------------

if __name__ == "__main__":
    B, MAX_NODES, FEATURES, CLASSES = 2, 32, 16, 4

    key = jax.random.PRNGKey(0)
    k_param, k_x, k_adj = jax.random.split(key, 3)

    params = init_net(k_param, MAX_NODES, FEATURES, CLASSES)

    x = jax.random.normal(k_x, (B, MAX_NODES, FEATURES), dtype=jnp.float32)
    adj_rand = jax.random.uniform(k_adj, (B, MAX_NODES, MAX_NODES))
    adj = (adj_rand > 0.5).astype(jnp.float32)
    adj = jnp.maximum(adj, jnp.swapaxes(adj, 1, 2))          # symmetrize
    eye = jnp.eye(MAX_NODES, dtype=jnp.float32)[None]
    adj = jnp.maximum(adj, eye)                              # self-loops

    fwd = jax.jit(net_forward)
    log_probs, link_loss, ent_loss = fwd(params, x, adj)
    jax.block_until_ready((log_probs, link_loss, ent_loss))

    assert log_probs.shape == (B, CLASSES)
    assert bool(jnp.all(jnp.isfinite(log_probs)))
    assert bool(jnp.isfinite(link_loss)) and bool(jnp.isfinite(ent_loss))
    print("KERNEL_OK")
</pallas_src>

<mosaic_0001>
module attributes {stable_mosaic.version = 11 : i64} {
  func.func @_net_kernel(%arg0: memref<2x32x16xf32, #tpu.memory_space<vmem>>, %arg1: memref<2x32x32xf32, #tpu.memory_space<vmem>>, %arg2: memref<32x64xbf16, #tpu.memory_space<vmem>>, %arg3: memref<1x64xf32, #tpu.memory_space<vmem>>, %arg4: memref<1x64xf32, #tpu.memory_space<vmem>>, %arg5: memref<1x64xf32, #tpu.memory_space<vmem>>, %arg6: memref<128x64xbf16, #tpu.memory_space<vmem>>, %arg7: memref<1x64xf32, #tpu.memory_space<vmem>>, %arg8: memref<1x64xf32, #tpu.memory_space<vmem>>, %arg9: memref<1x64xf32, #tpu.memory_space<vmem>>, %arg10: memref<128x8xbf16, #tpu.memory_space<vmem>>, %arg11: memref<1x8xf32, #tpu.memory_space<vmem>>, %arg12: memref<1x8xf32, #tpu.memory_space<vmem>>, %arg13: memref<1x8xf32, #tpu.memory_space<vmem>>, %arg14: memref<136x8xbf16, #tpu.memory_space<vmem>>, %arg15: memref<1x8xf32, #tpu.memory_space<vmem>>, %arg16: memref<32x64xbf16, #tpu.memory_space<vmem>>, %arg17: memref<1x64xf32, #tpu.memory_space<vmem>>, %arg18: memref<1x64xf32, #tpu.memory_space<vmem>>, %arg19: memref<1x64xf32, #tpu.memory_space<vmem>>, %arg20: memref<128x64xbf16, #tpu.memory_space<vmem>>, %arg21: memref<1x64xf32, #tpu.memory_space<vmem>>, %arg22: memref<1x64xf32, #tpu.memory_space<vmem>>, %arg23: memref<1x64xf32, #tpu.memory_space<vmem>>, %arg24: memref<128x64xbf16, #tpu.memory_space<vmem>>, %arg25: memref<1x64xf32, #tpu.memory_space<vmem>>, %arg26: memref<1x64xf32, #tpu.memory_space<vmem>>, %arg27: memref<1x64xf32, #tpu.memory_space<vmem>>, %arg28: memref<384x64xbf16, #tpu.memory_space<vmem>>, %arg29: memref<1x64xf32, #tpu.memory_space<vmem>>, %arg30: memref<1x64xf32, #tpu.memory_space<vmem>>, %arg31: memref<1x64xf32, #tpu.memory_space<vmem>>, %arg32: memref<128x64xbf16, #tpu.memory_space<vmem>>, %arg33: memref<1x64xf32, #tpu.memory_space<vmem>>, %arg34: memref<1x64xf32, #tpu.memory_space<vmem>>, %arg35: memref<1x64xf32, #tpu.memory_space<vmem>>, %arg36: memref<128x2xbf16, #tpu.memory_space<vmem>>, %arg37: memref<1x2xf32, #tpu.memory_space<vmem>>, %arg38: memref<1x2xf32, #tpu.memory_space<vmem>>, %arg39: memref<1x2xf32, #tpu.memory_space<vmem>>, %arg40: memref<130x2xbf16, #tpu.memory_space<vmem>>, %arg41: memref<1x2xf32, #tpu.memory_space<vmem>>, %arg42: memref<384x64xbf16, #tpu.memory_space<vmem>>, %arg43: memref<1x64xf32, #tpu.memory_space<vmem>>, %arg44: memref<1x64xf32, #tpu.memory_space<vmem>>, %arg45: memref<1x64xf32, #tpu.memory_space<vmem>>, %arg46: memref<128x64xbf16, #tpu.memory_space<vmem>>, %arg47: memref<1x64xf32, #tpu.memory_space<vmem>>, %arg48: memref<1x64xf32, #tpu.memory_space<vmem>>, %arg49: memref<1x64xf32, #tpu.memory_space<vmem>>, %arg50: memref<128x64xbf16, #tpu.memory_space<vmem>>, %arg51: memref<1x64xf32, #tpu.memory_space<vmem>>, %arg52: memref<1x64xf32, #tpu.memory_space<vmem>>, %arg53: memref<1x64xf32, #tpu.memory_space<vmem>>, %arg54: memref<384x64xbf16, #tpu.memory_space<vmem>>, %arg55: memref<1x64xf32, #tpu.memory_space<vmem>>, %arg56: memref<1x64xf32, #tpu.memory_space<vmem>>, %arg57: memref<1x64xf32, #tpu.memory_space<vmem>>, %arg58: memref<128x64xbf16, #tpu.memory_space<vmem>>, %arg59: memref<1x64xf32, #tpu.memory_space<vmem>>, %arg60: memref<1x64xf32, #tpu.memory_space<vmem>>, %arg61: memref<1x64xf32, #tpu.memory_space<vmem>>, %arg62: memref<128x64xbf16, #tpu.memory_space<vmem>>, %arg63: memref<1x64xf32, #tpu.memory_space<vmem>>, %arg64: memref<1x64xf32, #tpu.memory_space<vmem>>, %arg65: memref<1x64xf32, #tpu.memory_space<vmem>>, %arg66: memref<192x64xbf16, #tpu.memory_space<vmem>>, %arg67: memref<1x64xf32, #tpu.memory_space<vmem>>, %arg68: memref<64x4xbf16, #tpu.memory_space<vmem>>, %arg69: memref<1x4xf32, #tpu.memory_space<vmem>>, %arg70: memref<2x1x4xf32, #tpu.memory_space<vmem>>, %arg71: memref<1x1xf32, #tpu.memory_space<vmem>>, %arg72: memref<1x1xf32, #tpu.memory_space<vmem>>) attributes {dimension_semantics = [], scalar_prefetch = 0 : i64, scratch_operands = 0 : i64, tpu.core_type = #tpu.core_type<tc>} {
    %c0 = arith.constant 0 : index
    %c0_0 = arith.constant 0 : index
    %c0_1 = arith.constant 0 : index
    %0 = vector.load %arg0[%c0, %c0_0, %c0_1] : memref<2x32x16xf32, #tpu.memory_space<vmem>>, vector<1x32x16xf32>
    %1 = vector.shape_cast %0 : vector<1x32x16xf32> to vector<32x16xf32>
    %c1 = arith.constant 1 : index
    %c0_2 = arith.constant 0 : index
    %c0_3 = arith.constant 0 : index
    %2 = vector.load %arg0[%c1, %c0_2, %c0_3] : memref<2x32x16xf32, #tpu.memory_space<vmem>>, vector<1x32x16xf32>
    %3 = vector.shape_cast %2 : vector<1x32x16xf32> to vector<32x16xf32>
    %c0_4 = arith.constant 0 : index
    %c0_5 = arith.constant 0 : index
    %c0_6 = arith.constant 0 : index
    %4 = vector.load %arg1[%c0_4, %c0_5, %c0_6] : memref<2x32x32xf32, #tpu.memory_space<vmem>>, vector<1x32x32xf32>
    %5 = vector.shape_cast %4 : vector<1x32x32xf32> to vector<32x32xf32>
    %c1_7 = arith.constant 1 : index
    %c0_8 = arith.constant 0 : index
    %c0_9 = arith.constant 0 : index
    %6 = vector.load %arg1[%c1_7, %c0_8, %c0_9] : memref<2x32x32xf32, #tpu.memory_space<vmem>>, vector<1x32x32xf32>
    %7 = vector.shape_cast %6 : vector<1x32x32xf32> to vector<32x32xf32>
    %cst = arith.constant dense<0.000000e+00> : vector<32xf32>
    %8 = vector.multi_reduction <add>, %5, %cst [1] : vector<32x32xf32> to vector<32xf32>
    %9 = vector.shape_cast %8 : vector<32xf32> to vector<32x1xf32>
    %cst_10 = arith.constant 1.000000e+00 : f32
    %10 = vector.broadcast %cst_10 : f32 to vector<32x1xf32>
    %11 = arith.maximumf %9, %10 : vector<32x1xf32>
    %12 = vector.broadcast %11 : vector<32x1xf32> to vector<32x32xf32>
    %13 = arith.divf %5, %12 : vector<32x32xf32>
    %14 = arith.truncf %13 : vector<32x32xf32> to vector<32x32xbf16>
    %cst_11 = arith.constant dense<0.000000e+00> : vector<32xf32>
    %15 = vector.multi_reduction <add>, %7, %cst_11 [1] : vector<32x32xf32> to vector<32xf32>
    %16 = vector.shape_cast %15 : vector<32xf32> to vector<32x1xf32>
    %cst_12 = arith.constant 1.000000e+00 : f32
    %17 = vector.broadcast %cst_12 : f32 to vector<32x1xf32>
    %18 = arith.maximumf %16, %17 : vector<32x1xf32>
    %19 = vector.broadcast %18 : vector<32x1xf32> to vector<32x32xf32>
    %20 = arith.divf %7, %19 : vector<32x32xf32>
    %21 = arith.truncf %20 : vector<32x32xf32> to vector<32x32xbf16>
    %c0_13 = arith.constant 0 : index
    %c0_14 = arith.constant 0 : index
    %22 = vector.load %arg2[%c0_13, %c0_14] : memref<32x64xbf16, #tpu.memory_space<vmem>>, vector<16x64xbf16>
    %c16 = arith.constant 16 : index
    %c0_15 = arith.constant 0 : index
    %23 = vector.load %arg2[%c16, %c0_15] : memref<32x64xbf16, #tpu.memory_space<vmem>>, vector<16x64xbf16>
    %c0_16 = arith.constant 0 : index
    %c0_17 = arith.constant 0 : index
    %24 = vector.load %arg3[%c0_16, %c0_17] : memref<1x64xf32, #tpu.memory_space<vmem>>, vector<1x64xf32>
    %25 = arith.truncf %1 : vector<32x16xf32> to vector<32x16xbf16>
    %cst_18 = arith.constant dense<0.000000e+00> : vector<32x16xf32>
    %26 = tpu.matmul %14, %25, %cst_18 {dimension_numbers = #tpu.dot_dimension_numbers<[1], [0], [0], [1], [0, 0, 1, 1], [], []>} : vector<32x32xbf16>, vector<32x16xbf16>, vector<32x16xf32> -> vector<32x16xf32>
    %27 = arith.truncf %3 : vector<32x16xf32> to vector<32x16xbf16>
    %cst_19 = arith.constant dense<0.000000e+00> : vector<32x16xf32>
    %28 = tpu.matmul %21, %27, %cst_19 {dimension_numbers = #tpu.dot_dimension_numbers<[1], [0], [0], [1], [0, 0, 1, 1], [], []>} : vector<32x32xbf16>, vector<32x16xbf16>, vector<32x16xf32> -> vector<32x16xf32>
    %29 = tpu.concatenate %26, %28 in 0 : vector<32x16xf32>, vector<32x16xf32> -> vector<64x16xf32>
    %30 = arith.truncf %29 : vector<64x16xf32> to vector<64x16xbf16>
    %31 = tpu.concatenate %1, %3 in 0 : vector<32x16xf32>, vector<32x16xf32> -> vector<64x16xf32>
    %32 = arith.truncf %31 : vector<64x16xf32> to vector<64x16xbf16>
    %cst_20 = arith.constant dense<0.000000e+00> : vector<64x64xf32>
    %33 = tpu.matmul %30, %22, %cst_20 {dimension_numbers = #tpu.dot_dimension_numbers<[1], [0], [0], [1], [0, 0, 1, 1], [], []>} : vector<64x16xbf16>, vector<16x64xbf16>, vector<64x64xf32> -> vector<64x64xf32>
    %cst_21 = arith.constant dense<0.000000e+00> : vector<64x64xf32>
    %34 = tpu.matmul %32, %23, %cst_21 {dimension_numbers = #tpu.dot_dimension_numbers<[1], [0], [0], [1], [0, 0, 1, 1], [], []>} : vector<64x16xbf16>, vector<16x64xbf16>, vector<64x64xf32> -> vector<64x64xf32>
    %35 = arith.addf %33, %34 : vector<64x64xf32>
    %36 = vector.broadcast %24 : vector<1x64xf32> to vector<64x64xf32>
    %37 = arith.addf %35, %36 : vector<64x64xf32>
    %cst_22 = arith.constant 0.000000e+00 : f32
    %38 = vector.broadcast %cst_22 : f32 to vector<64x64xf32>
    %39 = arith.maximumf %37, %38 : vector<64x64xf32>
    %cst_23 = arith.constant dense<0.000000e+00> : vector<64xf32>
    %40 = vector.multi_reduction <add>, %39, %cst_23 [0] : vector<64x64xf32> to vector<64xf32>
    %41 = vector.shape_cast %40 : vector<64xf32> to vector<1x64xf32>
    %cst_24 = arith.constant 1.562500e-02 : f32
    %42 = vector.broadcast %cst_24 : f32 to vector<1x64xf32>
    %43 = arith.mulf %41, %42 : vector<1x64xf32>
    %44 = vector.broadcast %43 : vector<1x64xf32> to vector<64x64xf32>
    %45 = arith.subf %39, %44 : vector<64x64xf32>
    %46 = arith.mulf %45, %45 : vector<64x64xf32>
    %cst_25 = arith.constant dense<0.000000e+00> : vector<64xf32>
    %47 = vector.multi_reduction <add>, %46, %cst_25 [0] : vector<64x64xf32> to vector<64xf32>
    %48 = vector.shape_cast %47 : vector<64xf32> to vector<1x64xf32>
    %cst_26 = arith.constant 1.562500e-02 : f32
    %49 = vector.broadcast %cst_26 : f32 to vector<1x64xf32>
    %50 = arith.mulf %48, %49 : vector<1x64xf32>
    %cst_27 = arith.constant 9.99999974E-6 : f32
    %51 = vector.broadcast %cst_27 : f32 to vector<1x64xf32>
    %52 = arith.addf %50, %51 : vector<1x64xf32>
    %53 = math.rsqrt %52 : vector<1x64xf32>
    %c0_28 = arith.constant 0 : index
    %c0_29 = arith.constant 0 : index
    %54 = vector.load %arg4[%c0_28, %c0_29] : memref<1x64xf32, #tpu.memory_space<vmem>>, vector<1x64xf32>
    %55 = arith.mulf %53, %54 : vector<1x64xf32>
    %c0_30 = arith.constant 0 : index
    %c0_31 = arith.constant 0 : index
    %56 = vector.load %arg5[%c0_30, %c0_31] : memref<1x64xf32, #tpu.memory_space<vmem>>, vector<1x64xf32>
    %57 = arith.mulf %43, %55 : vector<1x64xf32>
    %58 = arith.subf %56, %57 : vector<1x64xf32>
    %59 = vector.broadcast %55 : vector<1x64xf32> to vector<64x64xf32>
    %60 = arith.mulf %39, %59 : vector<64x64xf32>
    %61 = vector.broadcast %58 : vector<1x64xf32> to vector<64x64xf32>
    %62 = arith.addf %60, %61 : vector<64x64xf32>
    %63 = vector.extract_strided_slice %62 {offsets = [0, 0], sizes = [32, 64], strides = [1, 1]} : vector<64x64xf32> to vector<32x64xf32>
    %64 = vector.extract_strided_slice %62 {offsets = [32, 0], sizes = [32, 64], strides = [1, 1]} : vector<64x64xf32> to vector<32x64xf32>
    %c0_32 = arith.constant 0 : index
    %c0_33 = arith.constant 0 : index
    %65 = vector.load %arg6[%c0_32, %c0_33] : memref<128x64xbf16, #tpu.memory_space<vmem>>, vector<64x64xbf16>
    %c64 = arith.constant 64 : index
    %c0_34 = arith.constant 0 : index
    %66 = vector.load %arg6[%c64, %c0_34] : memref<128x64xbf16, #tpu.memory_space<vmem>>, vector<64x64xbf16>
    %c0_35 = arith.constant 0 : index
    %c0_36 = arith.constant 0 : index
    %67 = vector.load %arg7[%c0_35, %c0_36] : memref<1x64xf32, #tpu.memory_space<vmem>>, vector<1x64xf32>
    %68 = arith.truncf %63 : vector<32x64xf32> to vector<32x64xbf16>
    %cst_37 = arith.constant dense<0.000000e+00> : vector<32x64xf32>
    %69 = tpu.matmul %14, %68, %cst_37 {dimension_numbers = #tpu.dot_dimension_numbers<[1], [0], [0], [1], [0, 0, 1, 1], [], []>} : vector<32x32xbf16>, vector<32x64xbf16>, vector<32x64xf32> -> vector<32x64xf32>
    %70 = arith.truncf %64 : vector<32x64xf32> to vector<32x64xbf16>
    %cst_38 = arith.constant dense<0.000000e+00> : vector<32x64xf32>
    %71 = tpu.matmul %21, %70, %cst_38 {dimension_numbers = #tpu.dot_dimension_numbers<[1], [0], [0], [1], [0, 0, 1, 1], [], []>} : vector<32x32xbf16>, vector<32x64xbf16>, vector<32x64xf32> -> vector<32x64xf32>
    %72 = tpu.concatenate %69, %71 in 0 : vector<32x64xf32>, vector<32x64xf32> -> vector<64x64xf32>
    %73 = arith.truncf %72 : vector<64x64xf32> to vector<64x64xbf16>
    %74 = tpu.concatenate %63, %64 in 0 : vector<32x64xf32>, vector<32x64xf32> -> vector<64x64xf32>
    %75 = arith.truncf %74 : vector<64x64xf32> to vector<64x64xbf16>
    %cst_39 = arith.constant dense<0.000000e+00> : vector<64x64xf32>
    %76 = tpu.matmul %73, %65, %cst_39 {dimension_numbers = #tpu.dot_dimension_numbers<[1], [0], [0], [1], [0, 0, 1, 1], [], []>} : vector<64x64xbf16>, vector<64x64xbf16>, vector<64x64xf32> -> vector<64x64xf32>
    %cst_40 = arith.constant dense<0.000000e+00> : vector<64x64xf32>
    %77 = tpu.matmul %75, %66, %cst_40 {dimension_numbers = #tpu.dot_dimension_numbers<[1], [0], [0], [1], [0, 0, 1, 1], [], []>} : vector<64x64xbf16>, vector<64x64xbf16>, vector<64x64xf32> -> vector<64x64xf32>
    %78 = arith.addf %76, %77 : vector<64x64xf32>
    %79 = vector.broadcast %67 : vector<1x64xf32> to vector<64x64xf32>
    %80 = arith.addf %78, %79 : vector<64x64xf32>
    %cst_41 = arith.constant 0.000000e+00 : f32
    %81 = vector.broadcast %cst_41 : f32 to vector<64x64xf32>
    %82 = arith.maximumf %80, %81 : vector<64x64xf32>
    %cst_42 = arith.constant dense<0.000000e+00> : vector<64xf32>
    %83 = vector.multi_reduction <add>, %82, %cst_42 [0] : vector<64x64xf32> to vector<64xf32>
    %84 = vector.shape_cast %83 : vector<64xf32> to vector<1x64xf32>
    %cst_43 = arith.constant 1.562500e-02 : f32
    %85 = vector.broadcast %cst_43 : f32 to vector<1x64xf32>
    %86 = arith.mulf %84, %85 : vector<1x64xf32>
    %87 = vector.broadcast %86 : vector<1x64xf32> to vector<64x64xf32>
    %88 = arith.subf %82, %87 : vector<64x64xf32>
    %89 = arith.mulf %88, %88 : vector<64x64xf32>
    %cst_44 = arith.constant dense<0.000000e+00> : vector<64xf32>
    %90 = vector.multi_reduction <add>, %89, %cst_44 [0] : vector<64x64xf32> to vector<64xf32>
    %91 = vector.shape_cast %90 : vector<64xf32> to vector<1x64xf32>
    %cst_45 = arith.constant 1.562500e-02 : f32
    %92 = vector.broadcast %cst_45 : f32 to vector<1x64xf32>
    %93 = arith.mulf %91, %92 : vector<1x64xf32>
    %cst_46 = arith.constant 9.99999974E-6 : f32
    %94 = vector.broadcast %cst_46 : f32 to vector<1x64xf32>
    %95 = arith.addf %93, %94 : vector<1x64xf32>
    %96 = math.rsqrt %95 : vector<1x64xf32>
    %c0_47 = arith.constant 0 : index
    %c0_48 = arith.constant 0 : index
    %97 = vector.load %arg8[%c0_47, %c0_48] : memref<1x64xf32, #tpu.memory_space<vmem>>, vector<1x64xf32>
    %98 = arith.mulf %96, %97 : vector<1x64xf32>
    %c0_49 = arith.constant 0 : index
    %c0_50 = arith.constant 0 : index
    %99 = vector.load %arg9[%c0_49, %c0_50] : memref<1x64xf32, #tpu.memory_space<vmem>>, vector<1x64xf32>
    %100 = arith.mulf %86, %98 : vector<1x64xf32>
    %101 = arith.subf %99, %100 : vector<1x64xf32>
    %102 = vector.broadcast %98 : vector<1x64xf32> to vector<64x64xf32>
    %103 = arith.mulf %82, %102 : vector<64x64xf32>
    %104 = vector.broadcast %101 : vector<1x64xf32> to vector<64x64xf32>
    %105 = arith.addf %103, %104 : vector<64x64xf32>
    %106 = vector.extract_strided_slice %105 {offsets = [0, 0], sizes = [32, 64], strides = [1, 1]} : vector<64x64xf32> to vector<32x64xf32>
    %107 = vector.extract_strided_slice %105 {offsets = [32, 0], sizes = [32, 64], strides = [1, 1]} : vector<64x64xf32> to vector<32x64xf32>
    %c0_51 = arith.constant 0 : index
    %c0_52 = arith.constant 0 : index
    %108 = vector.load %arg10[%c0_51, %c0_52] : memref<128x8xbf16, #tpu.memory_space<vmem>>, vector<64x8xbf16>
    %c64_53 = arith.constant 64 : index
    %c0_54 = arith.constant 0 : index
    %109 = vector.load %arg10[%c64_53, %c0_54] : memref<128x8xbf16, #tpu.memory_space<vmem>>, vector<64x8xbf16>
    %c0_55 = arith.constant 0 : index
    %c0_56 = arith.constant 0 : index
    %110 = vector.load %arg11[%c0_55, %c0_56] : memref<1x8xf32, #tpu.memory_space<vmem>>, vector<1x8xf32>
    %111 = arith.truncf %106 : vector<32x64xf32> to vector<32x64xbf16>
    %cst_57 = arith.constant dense<0.000000e+00> : vector<32x64xf32>
    %112 = tpu.matmul %14, %111, %cst_57 {dimension_numbers = #tpu.dot_dimension_numbers<[1], [0], [0], [1], [0, 0, 1, 1], [], []>} : vector<32x32xbf16>, vector<32x64xbf16>, vector<32x64xf32> -> vector<32x64xf32>
    %113 = arith.truncf %107 : vector<32x64xf32> to vector<32x64xbf16>
    %cst_58 = arith.constant dense<0.000000e+00> : vector<32x64xf32>
    %114 = tpu.matmul %21, %113, %cst_58 {dimension_numbers = #tpu.dot_dimension_numbers<[1], [0], [0], [1], [0, 0, 1, 1], [], []>} : vector<32x32xbf16>, vector<32x64xbf16>, vector<32x64xf32> -> vector<32x64xf32>
    %115 = tpu.concatenate %112, %114 in 0 : vector<32x64xf32>, vector<32x64xf32> -> vector<64x64xf32>
    %116 = arith.truncf %115 : vector<64x64xf32> to vector<64x64xbf16>
    %117 = tpu.concatenate %106, %107 in 0 : vector<32x64xf32>, vector<32x64xf32> -> vector<64x64xf32>
    %118 = arith.truncf %117 : vector<64x64xf32> to vector<64x64xbf16>
    %cst_59 = arith.constant dense<0.000000e+00> : vector<64x8xf32>
    %119 = tpu.matmul %116, %108, %cst_59 {dimension_numbers = #tpu.dot_dimension_numbers<[1], [0], [0], [1], [0, 0, 1, 1], [], []>} : vector<64x64xbf16>, vector<64x8xbf16>, vector<64x8xf32> -> vector<64x8xf32>
    %cst_60 = arith.constant dense<0.000000e+00> : vector<64x8xf32>
    %120 = tpu.matmul %118, %109, %cst_60 {dimension_numbers = #tpu.dot_dimension_numbers<[1], [0], [0], [1], [0, 0, 1, 1], [], []>} : vector<64x64xbf16>, vector<64x8xbf16>, vector<64x8xf32> -> vector<64x8xf32>
    %121 = arith.addf %119, %120 : vector<64x8xf32>
    %122 = vector.broadcast %110 : vector<1x8xf32> to vector<64x8xf32>
    %123 = arith.addf %121, %122 : vector<64x8xf32>
    %cst_61 = arith.constant 0.000000e+00 : f32
    %124 = vector.broadcast %cst_61 : f32 to vector<64x8xf32>
    %125 = arith.maximumf %123, %124 : vector<64x8xf32>
    %cst_62 = arith.constant dense<0.000000e+00> : vector<8xf32>
    %126 = vector.multi_reduction <add>, %125, %cst_62 [0] : vector<64x8xf32> to vector<8xf32>
    %127 = vector.shape_cast %126 : vector<8xf32> to vector<1x8xf32>
    %cst_63 = arith.constant 1.562500e-02 : f32
    %128 = vector.broadcast %cst_63 : f32 to vector<1x8xf32>
    %129 = arith.mulf %127, %128 : vector<1x8xf32>
    %130 = vector.broadcast %129 : vector<1x8xf32> to vector<64x8xf32>
    %131 = arith.subf %125, %130 : vector<64x8xf32>
    %132 = arith.mulf %131, %131 : vector<64x8xf32>
    %cst_64 = arith.constant dense<0.000000e+00> : vector<8xf32>
    %133 = vector.multi_reduction <add>, %132, %cst_64 [0] : vector<64x8xf32> to vector<8xf32>
    %134 = vector.shape_cast %133 : vector<8xf32> to vector<1x8xf32>
    %cst_65 = arith.constant 1.562500e-02 : f32
    %135 = vector.broadcast %cst_65 : f32 to vector<1x8xf32>
    %136 = arith.mulf %134, %135 : vector<1x8xf32>
    %cst_66 = arith.constant 9.99999974E-6 : f32
    %137 = vector.broadcast %cst_66 : f32 to vector<1x8xf32>
    %138 = arith.addf %136, %137 : vector<1x8xf32>
    %139 = math.rsqrt %138 : vector<1x8xf32>
    %c0_67 = arith.constant 0 : index
    %c0_68 = arith.constant 0 : index
    %140 = vector.load %arg12[%c0_67, %c0_68] : memref<1x8xf32, #tpu.memory_space<vmem>>, vector<1x8xf32>
    %141 = arith.mulf %139, %140 : vector<1x8xf32>
    %c0_69 = arith.constant 0 : index
    %c0_70 = arith.constant 0 : index
    %142 = vector.load %arg13[%c0_69, %c0_70] : memref<1x8xf32, #tpu.memory_space<vmem>>, vector<1x8xf32>
    %143 = arith.mulf %129, %141 : vector<1x8xf32>
    %144 = arith.subf %142, %143 : vector<1x8xf32>
    %145 = vector.broadcast %141 : vector<1x8xf32> to vector<64x8xf32>
    %146 = arith.mulf %125, %145 : vector<64x8xf32>
    %147 = vector.broadcast %144 : vector<1x8xf32> to vector<64x8xf32>
    %148 = arith.addf %146, %147 : vector<64x8xf32>
    %149 = vector.extract_strided_slice %148 {offsets = [0, 0], sizes = [32, 8], strides = [1, 1]} : vector<64x8xf32> to vector<32x8xf32>
    %150 = vector.extract_strided_slice %148 {offsets = [32, 0], sizes = [32, 8], strides = [1, 1]} : vector<64x8xf32> to vector<32x8xf32>
    %151 = tpu.concatenate %63, %106, %149 in 1 : vector<32x64xf32>, vector<32x64xf32>, vector<32x8xf32> -> vector<32x136xf32>
    %152 = tpu.concatenate %64, %107, %150 in 1 : vector<32x64xf32>, vector<32x64xf32>, vector<32x8xf32> -> vector<32x136xf32>
    %c0_71 = arith.constant 0 : index
    %c0_72 = arith.constant 0 : index
    %153 = vector.load %arg14[%c0_71, %c0_72] : memref<136x8xbf16, #tpu.memory_space<vmem>>, vector<136x8xbf16>
    %c0_73 = arith.constant 0 : index
    %c0_74 = arith.constant 0 : index
    %154 = vector.load %arg15[%c0_73, %c0_74] : memref<1x8xf32, #tpu.memory_space<vmem>>, vector<1x8xf32>
    %155 = tpu.concatenate %151, %152 in 0 : vector<32x136xf32>, vector<32x136xf32> -> vector<64x136xf32>
    %156 = arith.truncf %155 : vector<64x136xf32> to vector<64x136xbf16>
    %cst_75 = arith.constant dense<0.000000e+00> : vector<64x8xf32>
    %157 = tpu.matmul %156, %153, %cst_75 {dimension_numbers = #tpu.dot_dimension_numbers<[1], [0], [0], [1], [0, 0, 1, 1], [], []>} : vector<64x136xbf16>, vector<136x8xbf16>, vector<64x8xf32> -> vector<64x8xf32>
    %158 = vector.broadcast %154 : vector<1x8xf32> to vector<64x8xf32>
    %159 = arith.addf %157, %158 : vector<64x8xf32>
    %cst_76 = arith.constant 0.000000e+00 : f32
    %160 = vector.broadcast %cst_76 : f32 to vector<64x8xf32>
    %161 = arith.maximumf %159, %160 : vector<64x8xf32>
    %162 = vector.extract_strided_slice %161 {offsets = [0, 0], sizes = [32, 8], strides = [1, 1]} : vector<64x8xf32> to vector<32x8xf32>
    %163 = vector.extract_strided_slice %161 {offsets = [32, 0], sizes = [32, 8], strides = [1, 1]} : vector<64x8xf32> to vector<32x8xf32>
    %c0_77 = arith.constant 0 : index
    %c0_78 = arith.constant 0 : index
    %164 = vector.load %arg16[%c0_77, %c0_78] : memref<32x64xbf16, #tpu.memory_space<vmem>>, vector<16x64xbf16>
    %c16_79 = arith.constant 16 : index
    %c0_80 = arith.constant 0 : index
    %165 = vector.load %arg16[%c16_79, %c0_80] : memref<32x64xbf16, #tpu.memory_space<vmem>>, vector<16x64xbf16>
    %c0_81 = arith.constant 0 : index
    %c0_82 = arith.constant 0 : index
    %166 = vector.load %arg17[%c0_81, %c0_82] : memref<1x64xf32, #tpu.memory_space<vmem>>, vector<1x64xf32>
    %167 = arith.truncf %1 : vector<32x16xf32> to vector<32x16xbf16>
    %cst_83 = arith.constant dense<0.000000e+00> : vector<32x16xf32>
    %168 = tpu.matmul %14, %167, %cst_83 {dimension_numbers = #tpu.dot_dimension_numbers<[1], [0], [0], [1], [0, 0, 1, 1], [], []>} : vector<32x32xbf16>, vector<32x16xbf16>, vector<32x16xf32> -> vector<32x16xf32>
    %169 = arith.truncf %3 : vector<32x16xf32> to vector<32x16xbf16>
    %cst_84 = arith.constant dense<0.000000e+00> : vector<32x16xf32>
    %170 = tpu.matmul %21, %169, %cst_84 {dimension_numbers = #tpu.dot_dimension_numbers<[1], [0], [0], [1], [0, 0, 1, 1], [], []>} : vector<32x32xbf16>, vector<32x16xbf16>, vector<32x16xf32> -> vector<32x16xf32>
    %171 = tpu.concatenate %168, %170 in 0 : vector<32x16xf32>, vector<32x16xf32> -> vector<64x16xf32>
    %172 = arith.truncf %171 : vector<64x16xf32> to vector<64x16xbf16>
    %173 = tpu.concatenate %1, %3 in 0 : vector<32x16xf32>, vector<32x16xf32> -> vector<64x16xf32>
    %174 = arith.truncf %173 : vector<64x16xf32> to vector<64x16xbf16>
    %cst_85 = arith.constant dense<0.000000e+00> : vector<64x64xf32>
    %175 = tpu.matmul %172, %164, %cst_85 {dimension_numbers = #tpu.dot_dimension_numbers<[1], [0], [0], [1], [0, 0, 1, 1], [], []>} : vector<64x16xbf16>, vector<16x64xbf16>, vector<64x64xf32> -> vector<64x64xf32>
    %cst_86 = arith.constant dense<0.000000e+00> : vector<64x64xf32>
    %176 = tpu.matmul %174, %165, %cst_86 {dimension_numbers = #tpu.dot_dimension_numbers<[1], [0], [0], [1], [0, 0, 1, 1], [], []>} : vector<64x16xbf16>, vector<16x64xbf16>, vector<64x64xf32> -> vector<64x64xf32>
    %177 = arith.addf %175, %176 : vector<64x64xf32>
    %178 = vector.broadcast %166 : vector<1x64xf32> to vector<64x64xf32>
    %179 = arith.addf %177, %178 : vector<64x64xf32>
    %cst_87 = arith.constant 0.000000e+00 : f32
    %180 = vector.broadcast %cst_87 : f32 to vector<64x64xf32>
    %181 = arith.maximumf %179, %180 : vector<64x64xf32>
    %cst_88 = arith.constant dense<0.000000e+00> : vector<64xf32>
    %182 = vector.multi_reduction <add>, %181, %cst_88 [0] : vector<64x64xf32> to vector<64xf32>
    %183 = vector.shape_cast %182 : vector<64xf32> to vector<1x64xf32>
    %cst_89 = arith.constant 1.562500e-02 : f32
    %184 = vector.broadcast %cst_89 : f32 to vector<1x64xf32>
    %185 = arith.mulf %183, %184 : vector<1x64xf32>
    %186 = vector.broadcast %185 : vector<1x64xf32> to vector<64x64xf32>
    %187 = arith.subf %181, %186 : vector<64x64xf32>
    %188 = arith.mulf %187, %187 : vector<64x64xf32>
    %cst_90 = arith.constant dense<0.000000e+00> : vector<64xf32>
    %189 = vector.multi_reduction <add>, %188, %cst_90 [0] : vector<64x64xf32> to vector<64xf32>
    %190 = vector.shape_cast %189 : vector<64xf32> to vector<1x64xf32>
    %cst_91 = arith.constant 1.562500e-02 : f32
    %191 = vector.broadcast %cst_91 : f32 to vector<1x64xf32>
    %192 = arith.mulf %190, %191 : vector<1x64xf32>
    %cst_92 = arith.constant 9.99999974E-6 : f32
    %193 = vector.broadcast %cst_92 : f32 to vector<1x64xf32>
    %194 = arith.addf %192, %193 : vector<1x64xf32>
    %195 = math.rsqrt %194 : vector<1x64xf32>
    %c0_93 = arith.constant 0 : index
    %c0_94 = arith.constant 0 : index
    %196 = vector.load %arg18[%c0_93, %c0_94] : memref<1x64xf32, #tpu.memory_space<vmem>>, vector<1x64xf32>
    %197 = arith.mulf %195, %196 : vector<1x64xf32>
    %c0_95 = arith.constant 0 : index
    %c0_96 = arith.constant 0 : index
    %198 = vector.load %arg19[%c0_95, %c0_96] : memref<1x64xf32, #tpu.memory_space<vmem>>, vector<1x64xf32>
    %199 = arith.mulf %185, %197 : vector<1x64xf32>
    %200 = arith.subf %198, %199 : vector<1x64xf32>
    %201 = vector.broadcast %197 : vector<1x64xf32> to vector<64x64xf32>
    %202 = arith.mulf %181, %201 : vector<64x64xf32>
    %203 = vector.broadcast %200 : vector<1x64xf32> to vector<64x64xf32>
    %204 = arith.addf %202, %203 : vector<64x64xf32>
    %205 = vector.extract_strided_slice %204 {offsets = [0, 0], sizes = [32, 64], strides = [1, 1]} : vector<64x64xf32> to vector<32x64xf32>
    %206 = vector.extract_strided_slice %204 {offsets = [32, 0], sizes = [32, 64], strides = [1, 1]} : vector<64x64xf32> to vector<32x64xf32>
    %c0_97 = arith.constant 0 : index
    %c0_98 = arith.constant 0 : index
    %207 = vector.load %arg20[%c0_97, %c0_98] : memref<128x64xbf16, #tpu.memory_space<vmem>>, vector<64x64xbf16>
    %c64_99 = arith.constant 64 : index
    %c0_100 = arith.constant 0 : index
    %208 = vector.load %arg20[%c64_99, %c0_100] : memref<128x64xbf16, #tpu.memory_space<vmem>>, vector<64x64xbf16>
    %c0_101 = arith.constant 0 : index
    %c0_102 = arith.constant 0 : index
    %209 = vector.load %arg21[%c0_101, %c0_102] : memref<1x64xf32, #tpu.memory_space<vmem>>, vector<1x64xf32>
    %210 = arith.truncf %205 : vector<32x64xf32> to vector<32x64xbf16>
    %cst_103 = arith.constant dense<0.000000e+00> : vector<32x64xf32>
    %211 = tpu.matmul %14, %210, %cst_103 {dimension_numbers = #tpu.dot_dimension_numbers<[1], [0], [0], [1], [0, 0, 1, 1], [], []>} : vector<32x32xbf16>, vector<32x64xbf16>, vector<32x64xf32> -> vector<32x64xf32>
    %212 = arith.truncf %206 : vector<32x64xf32> to vector<32x64xbf16>
    %cst_104 = arith.constant dense<0.000000e+00> : vector<32x64xf32>
    %213 = tpu.matmul %21, %212, %cst_104 {dimension_numbers = #tpu.dot_dimension_numbers<[1], [0], [0], [1], [0, 0, 1, 1], [], []>} : vector<32x32xbf16>, vector<32x64xbf16>, vector<32x64xf32> -> vector<32x64xf32>
    %214 = tpu.concatenate %211, %213 in 0 : vector<32x64xf32>, vector<32x64xf32> -> vector<64x64xf32>
    %215 = arith.truncf %214 : vector<64x64xf32> to vector<64x64xbf16>
    %216 = tpu.concatenate %205, %206 in 0 : vector<32x64xf32>, vector<32x64xf32> -> vector<64x64xf32>
    %217 = arith.truncf %216 : vector<64x64xf32> to vector<64x64xbf16>
    %cst_105 = arith.constant dense<0.000000e+00> : vector<64x64xf32>
    %218 = tpu.matmul %215, %207, %cst_105 {dimension_numbers = #tpu.dot_dimension_numbers<[1], [0], [0], [1], [0, 0, 1, 1], [], []>} : vector<64x64xbf16>, vector<64x64xbf16>, vector<64x64xf32> -> vector<64x64xf32>
    %cst_106 = arith.constant dense<0.000000e+00> : vector<64x64xf32>
    %219 = tpu.matmul %217, %208, %cst_106 {dimension_numbers = #tpu.dot_dimension_numbers<[1], [0], [0], [1], [0, 0, 1, 1], [], []>} : vector<64x64xbf16>, vector<64x64xbf16>, vector<64x64xf32> -> vector<64x64xf32>
    %220 = arith.addf %218, %219 : vector<64x64xf32>
    %221 = vector.broadcast %209 : vector<1x64xf32> to vector<64x64xf32>
    %222 = arith.addf %220, %221 : vector<64x64xf32>
    %cst_107 = arith.constant 0.000000e+00 : f32
    %223 = vector.broadcast %cst_107 : f32 to vector<64x64xf32>
    %224 = arith.maximumf %222, %223 : vector<64x64xf32>
    %cst_108 = arith.constant dense<0.000000e+00> : vector<64xf32>
    %225 = vector.multi_reduction <add>, %224, %cst_108 [0] : vector<64x64xf32> to vector<64xf32>
    %226 = vector.shape_cast %225 : vector<64xf32> to vector<1x64xf32>
    %cst_109 = arith.constant 1.562500e-02 : f32
    %227 = vector.broadcast %cst_109 : f32 to vector<1x64xf32>
    %228 = arith.mulf %226, %227 : vector<1x64xf32>
    %229 = vector.broadcast %228 : vector<1x64xf32> to vector<64x64xf32>
    %230 = arith.subf %224, %229 : vector<64x64xf32>
    %231 = arith.mulf %230, %230 : vector<64x64xf32>
    %cst_110 = arith.constant dense<0.000000e+00> : vector<64xf32>
    %232 = vector.multi_reduction <add>, %231, %cst_110 [0] : vector<64x64xf32> to vector<64xf32>
    %233 = vector.shape_cast %232 : vector<64xf32> to vector<1x64xf32>
    %cst_111 = arith.constant 1.562500e-02 : f32
    %234 = vector.broadcast %cst_111 : f32 to vector<1x64xf32>
    %235 = arith.mulf %233, %234 : vector<1x64xf32>
    %cst_112 = arith.constant 9.99999974E-6 : f32
    %236 = vector.broadcast %cst_112 : f32 to vector<1x64xf32>
    %237 = arith.addf %235, %236 : vector<1x64xf32>
    %238 = math.rsqrt %237 : vector<1x64xf32>
    %c0_113 = arith.constant 0 : index
    %c0_114 = arith.constant 0 : index
    %239 = vector.load %arg22[%c0_113, %c0_114] : memref<1x64xf32, #tpu.memory_space<vmem>>, vector<1x64xf32>
    %240 = arith.mulf %238, %239 : vector<1x64xf32>
    %c0_115 = arith.constant 0 : index
    %c0_116 = arith.constant 0 : index
    %241 = vector.load %arg23[%c0_115, %c0_116] : memref<1x64xf32, #tpu.memory_space<vmem>>, vector<1x64xf32>
    %242 = arith.mulf %228, %240 : vector<1x64xf32>
    %243 = arith.subf %241, %242 : vector<1x64xf32>
    %244 = vector.broadcast %240 : vector<1x64xf32> to vector<64x64xf32>
    %245 = arith.mulf %224, %244 : vector<64x64xf32>
    %246 = vector.broadcast %243 : vector<1x64xf32> to vector<64x64xf32>
    %247 = arith.addf %245, %246 : vector<64x64xf32>
    %248 = vector.extract_strided_slice %247 {offsets = [0, 0], sizes = [32, 64], strides = [1, 1]} : vector<64x64xf32> to vector<32x64xf32>
    %249 = vector.extract_strided_slice %247 {offsets = [32, 0], sizes = [32, 64], strides = [1, 1]} : vector<64x64xf32> to vector<32x64xf32>
    %c0_117 = arith.constant 0 : index
    %c0_118 = arith.constant 0 : index
    %250 = vector.load %arg24[%c0_117, %c0_118] : memref<128x64xbf16, #tpu.memory_space<vmem>>, vector<64x64xbf16>
    %c64_119 = arith.constant 64 : index
    %c0_120 = arith.constant 0 : index
    %251 = vector.load %arg24[%c64_119, %c0_120] : memref<128x64xbf16, #tpu.memory_space<vmem>>, vector<64x64xbf16>
    %c0_121 = arith.constant 0 : index
    %c0_122 = arith.constant 0 : index
    %252 = vector.load %arg25[%c0_121, %c0_122] : memref<1x64xf32, #tpu.memory_space<vmem>>, vector<1x64xf32>
    %253 = arith.truncf %248 : vector<32x64xf32> to vector<32x64xbf16>
    %cst_123 = arith.constant dense<0.000000e+00> : vector<32x64xf32>
    %254 = tpu.matmul %14, %253, %cst_123 {dimension_numbers = #tpu.dot_dimension_numbers<[1], [0], [0], [1], [0, 0, 1, 1], [], []>} : vector<32x32xbf16>, vector<32x64xbf16>, vector<32x64xf32> -> vector<32x64xf32>
    %255 = arith.truncf %249 : vector<32x64xf32> to vector<32x64xbf16>
    %cst_124 = arith.constant dense<0.000000e+00> : vector<32x64xf32>
    %256 = tpu.matmul %21, %255, %cst_124 {dimension_numbers = #tpu.dot_dimension_numbers<[1], [0], [0], [1], [0, 0, 1, 1], [], []>} : vector<32x32xbf16>, vector<32x64xbf16>, vector<32x64xf32> -> vector<32x64xf32>
    %257 = tpu.concatenate %254, %256 in 0 : vector<32x64xf32>, vector<32x64xf32> -> vector<64x64xf32>
    %258 = arith.truncf %257 : vector<64x64xf32> to vector<64x64xbf16>
    %259 = tpu.concatenate %248, %249 in 0 : vector<32x64xf32>, vector<32x64xf32> -> vector<64x64xf32>
    %260 = arith.truncf %259 : vector<64x64xf32> to vector<64x64xbf16>
    %cst_125 = arith.constant dense<0.000000e+00> : vector<64x64xf32>
    %261 = tpu.matmul %258, %250, %cst_125 {dimension_numbers = #tpu.dot_dimension_numbers<[1], [0], [0], [1], [0, 0, 1, 1], [], []>} : vector<64x64xbf16>, vector<64x64xbf16>, vector<64x64xf32> -> vector<64x64xf32>
    %cst_126 = arith.constant dense<0.000000e+00> : vector<64x64xf32>
    %262 = tpu.matmul %260, %251, %cst_126 {dimension_numbers = #tpu.dot_dimension_numbers<[1], [0], [0], [1], [0, 0, 1, 1], [], []>} : vector<64x64xbf16>, vector<64x64xbf16>, vector<64x64xf32> -> vector<64x64xf32>
    %263 = arith.addf %261, %262 : vector<64x64xf32>
    %264 = vector.broadcast %252 : vector<1x64xf32> to vector<64x64xf32>
    %265 = arith.addf %263, %264 : vector<64x64xf32>
    %cst_127 = arith.constant 0.000000e+00 : f32
    %266 = vector.broadcast %cst_127 : f32 to vector<64x64xf32>
    %267 = arith.maximumf %265, %266 : vector<64x64xf32>
    %cst_128 = arith.constant dense<0.000000e+00> : vector<64xf32>
    %268 = vector.multi_reduction <add>, %267, %cst_128 [0] : vector<64x64xf32> to vector<64xf32>
    %269 = vector.shape_cast %268 : vector<64xf32> to vector<1x64xf32>
    %cst_129 = arith.constant 1.562500e-02 : f32
    %270 = vector.broadcast %cst_129 : f32 to vector<1x64xf32>
    %271 = arith.mulf %269, %270 : vector<1x64xf32>
    %272 = vector.broadcast %271 : vector<1x64xf32> to vector<64x64xf32>
    %273 = arith.subf %267, %272 : vector<64x64xf32>
    %274 = arith.mulf %273, %273 : vector<64x64xf32>
    %cst_130 = arith.constant dense<0.000000e+00> : vector<64xf32>
    %275 = vector.multi_reduction <add>, %274, %cst_130 [0] : vector<64x64xf32> to vector<64xf32>
    %276 = vector.shape_cast %275 : vector<64xf32> to vector<1x64xf32>
    %cst_131 = arith.constant 1.562500e-02 : f32
    %277 = vector.broadcast %cst_131 : f32 to vector<1x64xf32>
    %278 = arith.mulf %276, %277 : vector<1x64xf32>
    %cst_132 = arith.constant 9.99999974E-6 : f32
    %279 = vector.broadcast %cst_132 : f32 to vector<1x64xf32>
    %280 = arith.addf %278, %279 : vector<1x64xf32>
    %281 = math.rsqrt %280 : vector<1x64xf32>
    %c0_133 = arith.constant 0 : index
    %c0_134 = arith.constant 0 : index
    %282 = vector.load %arg26[%c0_133, %c0_134] : memref<1x64xf32, #tpu.memory_space<vmem>>, vector<1x64xf32>
    %283 = arith.mulf %281, %282 : vector<1x64xf32>
    %c0_135 = arith.constant 0 : index
    %c0_136 = arith.constant 0 : index
    %284 = vector.load %arg27[%c0_135, %c0_136] : memref<1x64xf32, #tpu.memory_space<vmem>>, vector<1x64xf32>
    %285 = arith.mulf %271, %283 : vector<1x64xf32>
    %286 = arith.subf %284, %285 : vector<1x64xf32>
    %287 = vector.broadcast %283 : vector<1x64xf32> to vector<64x64xf32>
    %288 = arith.mulf %267, %287 : vector<64x64xf32>
    %289 = vector.broadcast %286 : vector<1x64xf32> to vector<64x64xf32>
    %290 = arith.addf %288, %289 : vector<64x64xf32>
    %291 = vector.extract_strided_slice %290 {offsets = [0, 0], sizes = [32, 64], strides = [1, 1]} : vector<64x64xf32> to vector<32x64xf32>
    %292 = vector.extract_strided_slice %290 {offsets = [32, 0], sizes = [32, 64], strides = [1, 1]} : vector<64x64xf32> to vector<32x64xf32>
    %293 = tpu.concatenate %205, %248, %291 in 1 : vector<32x64xf32>, vector<32x64xf32>, vector<32x64xf32> -> vector<32x192xf32>
    %294 = tpu.concatenate %206, %249, %292 in 1 : vector<32x64xf32>, vector<32x64xf32>, vector<32x64xf32> -> vector<32x192xf32>
    %cst_137 = arith.constant 0.000000e+00 : f32
    %295 = vector.broadcast %cst_137 : f32 to vector<1x1xf32>
    %cst_138 = arith.constant 0.000000e+00 : f32
    %296 = vector.broadcast %cst_138 : f32 to vector<1x1xf32>
    %cst_139 = arith.constant dense<0xFF800000> : vector<32xf32>
    %297 = vector.multi_reduction <maximumf>, %162, %cst_139 [1] : vector<32x8xf32> to vector<32xf32>
    %298 = vector.shape_cast %297 : vector<32xf32> to vector<32x1xf32>
    %299 = vector.broadcast %298 : vector<32x1xf32> to vector<32x8xf32>
    %300 = arith.subf %162, %299 : vector<32x8xf32>
    %301 = math.exp %300 : vector<32x8xf32>
    %cst_140 = arith.constant dense<0.000000e+00> : vector<32xf32>
    %302 = vector.multi_reduction <add>, %301, %cst_140 [1] : vector<32x8xf32> to vector<32xf32>
    %303 = vector.shape_cast %302 : vector<32xf32> to vector<32x1xf32>
    %304 = vector.broadcast %303 : vector<32x1xf32> to vector<32x8xf32>
    %305 = arith.divf %301, %304 : vector<32x8xf32>
    %306 = tpu.transpose %305, [1, 0] : vector<32x8xf32> -> vector<8x32xf32>
    %307 = arith.truncf %305 : vector<32x8xf32> to vector<32x8xbf16>
    %308 = arith.truncf %306 : vector<8x32xf32> to vector<8x32xbf16>
    %309 = arith.truncf %293 : vector<32x192xf32> to vector<32x192xbf16>
    %cst_141 = arith.constant dense<0.000000e+00> : vector<8x192xf32>
    %310 = tpu.matmul %308, %309, %cst_141 {dimension_numbers = #tpu.dot_dimension_numbers<[1], [0], [0], [1], [0, 0, 1, 1], [], []>} : vector<8x32xbf16>, vector<32x192xbf16>, vector<8x192xf32> -> vector<8x192xf32>
    %311 = arith.truncf %5 : vector<32x32xf32> to vector<32x32xbf16>
    %cst_142 = arith.constant dense<0.000000e+00> : vector<8x32xf32>
    %312 = tpu.matmul %308, %311, %cst_142 {dimension_numbers = #tpu.dot_dimension_numbers<[1], [0], [0], [1], [0, 0, 1, 1], [], []>} : vector<8x32xbf16>, vector<32x32xbf16>, vector<8x32xf32> -> vector<8x32xf32>
    %313 = arith.truncf %312 : vector<8x32xf32> to vector<8x32xbf16>
    %cst_143 = arith.constant dense<0.000000e+00> : vector<8x8xf32>
    %314 = tpu.matmul %313, %307, %cst_143 {dimension_numbers = #tpu.dot_dimension_numbers<[1], [0], [0], [1], [0, 0, 1, 1], [], []>} : vector<8x32xbf16>, vector<32x8xbf16>, vector<8x8xf32> -> vector<8x8xf32>
    %cst_144 = arith.constant dense<0.000000e+00> : vector<32x32xf32>
    %315 = tpu.matmul %307, %308, %cst_144 {dimension_numbers = #tpu.dot_dimension_numbers<[1], [0], [0], [1], [0, 0, 1, 1], [], []>} : vector<32x8xbf16>, vector<8x32xbf16>, vector<32x32xf32> -> vector<32x32xf32>
    %316 = arith.subf %5, %315 : vector<32x32xf32>
    %317 = arith.mulf %316, %316 : vector<32x32xf32>
    %cst_145 = arith.constant dense<0.000000e+00> : vector<32xf32>
    %318 = vector.multi_reduction <add>, %317, %cst_145 [1] : vector<32x32xf32> to vector<32xf32>
    %319 = vector.shape_cast %318 : vector<32xf32> to vector<32x1xf32>
    %cst_146 = arith.constant dense<0.000000e+00> : vector<1xf32>
    %320 = vector.multi_reduction <add>, %319, %cst_146 [0] : vector<32x1xf32> to vector<1xf32>
    %321 = vector.shape_cast %320 : vector<1xf32> to vector<1x1xf32>
    %322 = arith.addf %295, %321 : vector<1x1xf32>
    %cst_147 = arith.constant 0.000000e+00 : f32
    %323 = vector.broadcast %cst_147 : f32 to vector<32x8xf32>
    %324 = arith.subf %323, %305 : vector<32x8xf32>
    %cst_148 = arith.constant 1.000000e-15 : f32
    %325 = vector.broadcast %cst_148 : f32 to vector<32x8xf32>
    %326 = arith.addf %305, %325 : vector<32x8xf32>
    %327 = math.log %326 : vector<32x8xf32>
    %328 = arith.mulf %324, %327 : vector<32x8xf32>
    %cst_149 = arith.constant dense<0.000000e+00> : vector<32xf32>
    %329 = vector.multi_reduction <add>, %328, %cst_149 [1] : vector<32x8xf32> to vector<32xf32>
    %330 = vector.shape_cast %329 : vector<32xf32> to vector<32x1xf32>
    %cst_150 = arith.constant dense<0.000000e+00> : vector<1xf32>
    %331 = vector.multi_reduction <add>, %330, %cst_150 [0] : vector<32x1xf32> to vector<1xf32>
    %332 = vector.shape_cast %331 : vector<1xf32> to vector<1x1xf32>
    %333 = arith.addf %296, %332 : vector<1x1xf32>
    %cst_151 = arith.constant dense<0xFF800000> : vector<32xf32>
    %334 = vector.multi_reduction <maximumf>, %163, %cst_151 [1] : vector<32x8xf32> to vector<32xf32>
    %335 = vector.shape_cast %334 : vector<32xf32> to vector<32x1xf32>
    %336 = vector.broadcast %335 : vector<32x1xf32> to vector<32x8xf32>
    %337 = arith.subf %163, %336 : vector<32x8xf32>
    %338 = math.exp %337 : vector<32x8xf32>
    %cst_152 = arith.constant dense<0.000000e+00> : vector<32xf32>
    %339 = vector.multi_reduction <add>, %338, %cst_152 [1] : vector<32x8xf32> to vector<32xf32>
    %340 = vector.shape_cast %339 : vector<32xf32> to vector<32x1xf32>
    %341 = vector.broadcast %340 : vector<32x1xf32> to vector<32x8xf32>
    %342 = arith.divf %338, %341 : vector<32x8xf32>
    %343 = tpu.transpose %342, [1, 0] : vector<32x8xf32> -> vector<8x32xf32>
    %344 = arith.truncf %342 : vector<32x8xf32> to vector<32x8xbf16>
    %345 = arith.truncf %343 : vector<8x32xf32> to vector<8x32xbf16>
    %346 = arith.truncf %294 : vector<32x192xf32> to vector<32x192xbf16>
    %cst_153 = arith.constant dense<0.000000e+00> : vector<8x192xf32>
    %347 = tpu.matmul %345, %346, %cst_153 {dimension_numbers = #tpu.dot_dimension_numbers<[1], [0], [0], [1], [0, 0, 1, 1], [], []>} : vector<8x32xbf16>, vector<32x192xbf16>, vector<8x192xf32> -> vector<8x192xf32>
    %348 = arith.truncf %7 : vector<32x32xf32> to vector<32x32xbf16>
    %cst_154 = arith.constant dense<0.000000e+00> : vector<8x32xf32>
    %349 = tpu.matmul %345, %348, %cst_154 {dimension_numbers = #tpu.dot_dimension_numbers<[1], [0], [0], [1], [0, 0, 1, 1], [], []>} : vector<8x32xbf16>, vector<32x32xbf16>, vector<8x32xf32> -> vector<8x32xf32>
    %350 = arith.truncf %349 : vector<8x32xf32> to vector<8x32xbf16>
    %cst_155 = arith.constant dense<0.000000e+00> : vector<8x8xf32>
    %351 = tpu.matmul %350, %344, %cst_155 {dimension_numbers = #tpu.dot_dimension_numbers<[1], [0], [0], [1], [0, 0, 1, 1], [], []>} : vector<8x32xbf16>, vector<32x8xbf16>, vector<8x8xf32> -> vector<8x8xf32>
    %cst_156 = arith.constant dense<0.000000e+00> : vector<32x32xf32>
    %352 = tpu.matmul %344, %345, %cst_156 {dimension_numbers = #tpu.dot_dimension_numbers<[1], [0], [0], [1], [0, 0, 1, 1], [], []>} : vector<32x8xbf16>, vector<8x32xbf16>, vector<32x32xf32> -> vector<32x32xf32>
    %353 = arith.subf %7, %352 : vector<32x32xf32>
    %354 = arith.mulf %353, %353 : vector<32x32xf32>
    %cst_157 = arith.constant dense<0.000000e+00> : vector<32xf32>
    %355 = vector.multi_reduction <add>, %354, %cst_157 [1] : vector<32x32xf32> to vector<32xf32>
    %356 = vector.shape_cast %355 : vector<32xf32> to vector<32x1xf32>
    %cst_158 = arith.constant dense<0.000000e+00> : vector<1xf32>
    %357 = vector.multi_reduction <add>, %356, %cst_158 [0] : vector<32x1xf32> to vector<1xf32>
    %358 = vector.shape_cast %357 : vector<1xf32> to vector<1x1xf32>
    %359 = arith.addf %322, %358 : vector<1x1xf32>
    %cst_159 = arith.constant 0.000000e+00 : f32
    %360 = vector.broadcast %cst_159 : f32 to vector<32x8xf32>
    %361 = arith.subf %360, %342 : vector<32x8xf32>
    %cst_160 = arith.constant 1.000000e-15 : f32
    %362 = vector.broadcast %cst_160 : f32 to vector<32x8xf32>
    %363 = arith.addf %342, %362 : vector<32x8xf32>
    %364 = math.log %363 : vector<32x8xf32>
    %365 = arith.mulf %361, %364 : vector<32x8xf32>
    %cst_161 = arith.constant dense<0.000000e+00> : vector<32xf32>
    %366 = vector.multi_reduction <add>, %365, %cst_161 [1] : vector<32x8xf32> to vector<32xf32>
    %367 = vector.shape_cast %366 : vector<32xf32> to vector<32x1xf32>
    %cst_162 = arith.constant dense<0.000000e+00> : vector<1xf32>
    %368 = vector.multi_reduction <add>, %367, %cst_162 [0] : vector<32x1xf32> to vector<1xf32>
    %369 = vector.shape_cast %368 : vector<1xf32> to vector<1x1xf32>
    %370 = arith.addf %333, %369 : vector<1x1xf32>
    %371 = math.sqrt %359 : vector<1x1xf32>
    %cst_163 = arith.constant 4.8828125E-4 : f32
    %372 = vector.broadcast %cst_163 : f32 to vector<1x1xf32>
    %373 = arith.mulf %371, %372 : vector<1x1xf32>
    %cst_164 = arith.constant 1.562500e-02 : f32
    %374 = vector.broadcast %cst_164 : f32 to vector<1x1xf32>
    %375 = arith.mulf %370, %374 : vector<1x1xf32>
    %cst_165 = arith.constant dense<0.000000e+00> : vector<8xf32>
    %376 = vector.multi_reduction <add>, %314, %cst_165 [1] : vector<8x8xf32> to vector<8xf32>
    %377 = vector.shape_cast %376 : vector<8xf32> to vector<8x1xf32>
    %cst_166 = arith.constant 1.000000e+00 : f32
    %378 = vector.broadcast %cst_166 : f32 to vector<8x1xf32>
    %379 = arith.maximumf %377, %378 : vector<8x1xf32>
    %380 = vector.broadcast %379 : vector<8x1xf32> to vector<8x8xf32>
    %381 = arith.divf %314, %380 : vector<8x8xf32>
    %382 = arith.truncf %381 : vector<8x8xf32> to vector<8x8xbf16>
    %cst_167 = arith.constant dense<0.000000e+00> : vector<8xf32>
    %383 = vector.multi_reduction <add>, %351, %cst_167 [1] : vector<8x8xf32> to vector<8xf32>
    %384 = vector.shape_cast %383 : vector<8xf32> to vector<8x1xf32>
    %cst_168 = arith.constant 1.000000e+00 : f32
    %385 = vector.broadcast %cst_168 : f32 to vector<8x1xf32>
    %386 = arith.maximumf %384, %385 : vector<8x1xf32>
    %387 = vector.broadcast %386 : vector<8x1xf32> to vector<8x8xf32>
    %388 = arith.divf %351, %387 : vector<8x8xf32>
    %389 = arith.truncf %388 : vector<8x8xf32> to vector<8x8xbf16>
    %c0_169 = arith.constant 0 : index
    %c0_170 = arith.constant 0 : index
    %390 = vector.load %arg28[%c0_169, %c0_170] : memref<384x64xbf16, #tpu.memory_space<vmem>>, vector<192x64xbf16>
    %c192 = arith.constant 192 : index
    %c0_171 = arith.constant 0 : index
    %391 = vector.load %arg28[%c192, %c0_171] : memref<384x64xbf16, #tpu.memory_space<vmem>>, vector<192x64xbf16>
    %c0_172 = arith.constant 0 : index
    %c0_173 = arith.constant 0 : index
    %392 = vector.load %arg29[%c0_172, %c0_173] : memref<1x64xf32, #tpu.memory_space<vmem>>, vector<1x64xf32>
    %393 = arith.truncf %310 : vector<8x192xf32> to vector<8x192xbf16>
    %cst_174 = arith.constant dense<0.000000e+00> : vector<8x192xf32>
    %394 = tpu.matmul %382, %393, %cst_174 {dimension_numbers = #tpu.dot_dimension_numbers<[1], [0], [0], [1], [0, 0, 1, 1], [], []>} : vector<8x8xbf16>, vector<8x192xbf16>, vector<8x192xf32> -> vector<8x192xf32>
    %395 = arith.truncf %347 : vector<8x192xf32> to vector<8x192xbf16>
    %cst_175 = arith.constant dense<0.000000e+00> : vector<8x192xf32>
    %396 = tpu.matmul %389, %395, %cst_175 {dimension_numbers = #tpu.dot_dimension_numbers<[1], [0], [0], [1], [0, 0, 1, 1], [], []>} : vector<8x8xbf16>, vector<8x192xbf16>, vector<8x192xf32> -> vector<8x192xf32>
    %397 = tpu.concatenate %394, %396 in 0 : vector<8x192xf32>, vector<8x192xf32> -> vector<16x192xf32>
    %398 = arith.truncf %397 : vector<16x192xf32> to vector<16x192xbf16>
    %399 = tpu.concatenate %310, %347 in 0 : vector<8x192xf32>, vector<8x192xf32> -> vector<16x192xf32>
    %400 = arith.truncf %399 : vector<16x192xf32> to vector<16x192xbf16>
    %cst_176 = arith.constant dense<0.000000e+00> : vector<16x64xf32>
    %401 = tpu.matmul %398, %390, %cst_176 {dimension_numbers = #tpu.dot_dimension_numbers<[1], [0], [0], [1], [0, 0, 1, 1], [], []>} : vector<16x192xbf16>, vector<192x64xbf16>, vector<16x64xf32> -> vector<16x64xf32>
    %cst_177 = arith.constant dense<0.000000e+00> : vector<16x64xf32>
    %402 = tpu.matmul %400, %391, %cst_177 {dimension_numbers = #tpu.dot_dimension_numbers<[1], [0], [0], [1], [0, 0, 1, 1], [], []>} : vector<16x192xbf16>, vector<192x64xbf16>, vector<16x64xf32> -> vector<16x64xf32>
    %403 = arith.addf %401, %402 : vector<16x64xf32>
    %404 = vector.broadcast %392 : vector<1x64xf32> to vector<16x64xf32>
    %405 = arith.addf %403, %404 : vector<16x64xf32>
    %cst_178 = arith.constant 0.000000e+00 : f32
    %406 = vector.broadcast %cst_178 : f32 to vector<16x64xf32>
    %407 = arith.maximumf %405, %406 : vector<16x64xf32>
    %cst_179 = arith.constant dense<0.000000e+00> : vector<64xf32>
    %408 = vector.multi_reduction <add>, %407, %cst_179 [0] : vector<16x64xf32> to vector<64xf32>
    %409 = vector.shape_cast %408 : vector<64xf32> to vector<1x64xf32>
    %cst_180 = arith.constant 6.250000e-02 : f32
    %410 = vector.broadcast %cst_180 : f32 to vector<1x64xf32>
    %411 = arith.mulf %409, %410 : vector<1x64xf32>
    %412 = vector.broadcast %411 : vector<1x64xf32> to vector<16x64xf32>
    %413 = arith.subf %407, %412 : vector<16x64xf32>
    %414 = arith.mulf %413, %413 : vector<16x64xf32>
    %cst_181 = arith.constant dense<0.000000e+00> : vector<64xf32>
    %415 = vector.multi_reduction <add>, %414, %cst_181 [0] : vector<16x64xf32> to vector<64xf32>
    %416 = vector.shape_cast %415 : vector<64xf32> to vector<1x64xf32>
    %cst_182 = arith.constant 6.250000e-02 : f32
    %417 = vector.broadcast %cst_182 : f32 to vector<1x64xf32>
    %418 = arith.mulf %416, %417 : vector<1x64xf32>
    %cst_183 = arith.constant 9.99999974E-6 : f32
    %419 = vector.broadcast %cst_183 : f32 to vector<1x64xf32>
    %420 = arith.addf %418, %419 : vector<1x64xf32>
    %421 = math.rsqrt %420 : vector<1x64xf32>
    %c0_184 = arith.constant 0 : index
    %c0_185 = arith.constant 0 : index
    %422 = vector.load %arg30[%c0_184, %c0_185] : memref<1x64xf32, #tpu.memory_space<vmem>>, vector<1x64xf32>
    %423 = arith.mulf %421, %422 : vector<1x64xf32>
    %c0_186 = arith.constant 0 : index
    %c0_187 = arith.constant 0 : index
    %424 = vector.load %arg31[%c0_186, %c0_187] : memref<1x64xf32, #tpu.memory_space<vmem>>, vector<1x64xf32>
    %425 = arith.mulf %411, %423 : vector<1x64xf32>
    %426 = arith.subf %424, %425 : vector<1x64xf32>
    %427 = vector.broadcast %423 : vector<1x64xf32> to vector<16x64xf32>
    %428 = arith.mulf %407, %427 : vector<16x64xf32>
    %429 = vector.broadcast %426 : vector<1x64xf32> to vector<16x64xf32>
    %430 = arith.addf %428, %429 : vector<16x64xf32>
    %431 = vector.extract_strided_slice %430 {offsets = [0, 0], sizes = [8, 64], strides = [1, 1]} : vector<16x64xf32> to vector<8x64xf32>
    %432 = vector.extract_strided_slice %430 {offsets = [8, 0], sizes = [8, 64], strides = [1, 1]} : vector<16x64xf32> to vector<8x64xf32>
    %c0_188 = arith.constant 0 : index
    %c0_189 = arith.constant 0 : index
    %433 = vector.load %arg32[%c0_188, %c0_189] : memref<128x64xbf16, #tpu.memory_space<vmem>>, vector<64x64xbf16>
    %c64_190 = arith.constant 64 : index
    %c0_191 = arith.constant 0 : index
    %434 = vector.load %arg32[%c64_190, %c0_191] : memref<128x64xbf16, #tpu.memory_space<vmem>>, vector<64x64xbf16>
    %c0_192 = arith.constant 0 : index
    %c0_193 = arith.constant 0 : index
    %435 = vector.load %arg33[%c0_192, %c0_193] : memref<1x64xf32, #tpu.memory_space<vmem>>, vector<1x64xf32>
    %436 = arith.truncf %431 : vector<8x64xf32> to vector<8x64xbf16>
    %cst_194 = arith.constant dense<0.000000e+00> : vector<8x64xf32>
    %437 = tpu.matmul %382, %436, %cst_194 {dimension_numbers = #tpu.dot_dimension_numbers<[1], [0], [0], [1], [0, 0, 1, 1], [], []>} : vector<8x8xbf16>, vector<8x64xbf16>, vector<8x64xf32> -> vector<8x64xf32>
    %438 = arith.truncf %432 : vector<8x64xf32> to vector<8x64xbf16>
    %cst_195 = arith.constant dense<0.000000e+00> : vector<8x64xf32>
    %439 = tpu.matmul %389, %438, %cst_195 {dimension_numbers = #tpu.dot_dimension_numbers<[1], [0], [0], [1], [0, 0, 1, 1], [], []>} : vector<8x8xbf16>, vector<8x64xbf16>, vector<8x64xf32> -> vector<8x64xf32>
    %440 = tpu.concatenate %437, %439 in 0 : vector<8x64xf32>, vector<8x64xf32> -> vector<16x64xf32>
    %441 = arith.truncf %440 : vector<16x64xf32> to vector<16x64xbf16>
    %442 = tpu.concatenate %431, %432 in 0 : vector<8x64xf32>, vector<8x64xf32> -> vector<16x64xf32>
    %443 = arith.truncf %442 : vector<16x64xf32> to vector<16x64xbf16>
    %cst_196 = arith.constant dense<0.000000e+00> : vector<16x64xf32>
    %444 = tpu.matmul %441, %433, %cst_196 {dimension_numbers = #tpu.dot_dimension_numbers<[1], [0], [0], [1], [0, 0, 1, 1], [], []>} : vector<16x64xbf16>, vector<64x64xbf16>, vector<16x64xf32> -> vector<16x64xf32>
    %cst_197 = arith.constant dense<0.000000e+00> : vector<16x64xf32>
    %445 = tpu.matmul %443, %434, %cst_197 {dimension_numbers = #tpu.dot_dimension_numbers<[1], [0], [0], [1], [0, 0, 1, 1], [], []>} : vector<16x64xbf16>, vector<64x64xbf16>, vector<16x64xf32> -> vector<16x64xf32>
    %446 = arith.addf %444, %445 : vector<16x64xf32>
    %447 = vector.broadcast %435 : vector<1x64xf32> to vector<16x64xf32>
    %448 = arith.addf %446, %447 : vector<16x64xf32>
    %cst_198 = arith.constant 0.000000e+00 : f32
    %449 = vector.broadcast %cst_198 : f32 to vector<16x64xf32>
    %450 = arith.maximumf %448, %449 : vector<16x64xf32>
    %cst_199 = arith.constant dense<0.000000e+00> : vector<64xf32>
    %451 = vector.multi_reduction <add>, %450, %cst_199 [0] : vector<16x64xf32> to vector<64xf32>
    %452 = vector.shape_cast %451 : vector<64xf32> to vector<1x64xf32>
    %cst_200 = arith.constant 6.250000e-02 : f32
    %453 = vector.broadcast %cst_200 : f32 to vector<1x64xf32>
    %454 = arith.mulf %452, %453 : vector<1x64xf32>
    %455 = vector.broadcast %454 : vector<1x64xf32> to vector<16x64xf32>
    %456 = arith.subf %450, %455 : vector<16x64xf32>
    %457 = arith.mulf %456, %456 : vector<16x64xf32>
    %cst_201 = arith.constant dense<0.000000e+00> : vector<64xf32>
    %458 = vector.multi_reduction <add>, %457, %cst_201 [0] : vector<16x64xf32> to vector<64xf32>
    %459 = vector.shape_cast %458 : vector<64xf32> to vector<1x64xf32>
    %cst_202 = arith.constant 6.250000e-02 : f32
    %460 = vector.broadcast %cst_202 : f32 to vector<1x64xf32>
    %461 = arith.mulf %459, %460 : vector<1x64xf32>
    %cst_203 = arith.constant 9.99999974E-6 : f32
    %462 = vector.broadcast %cst_203 : f32 to vector<1x64xf32>
    %463 = arith.addf %461, %462 : vector<1x64xf32>
    %464 = math.rsqrt %463 : vector<1x64xf32>
    %c0_204 = arith.constant 0 : index
    %c0_205 = arith.constant 0 : index
    %465 = vector.load %arg34[%c0_204, %c0_205] : memref<1x64xf32, #tpu.memory_space<vmem>>, vector<1x64xf32>
    %466 = arith.mulf %464, %465 : vector<1x64xf32>
    %c0_206 = arith.constant 0 : index
    %c0_207 = arith.constant 0 : index
    %467 = vector.load %arg35[%c0_206, %c0_207] : memref<1x64xf32, #tpu.memory_space<vmem>>, vector<1x64xf32>
    %468 = arith.mulf %454, %466 : vector<1x64xf32>
    %469 = arith.subf %467, %468 : vector<1x64xf32>
    %470 = vector.broadcast %466 : vector<1x64xf32> to vector<16x64xf32>
    %471 = arith.mulf %450, %470 : vector<16x64xf32>
    %472 = vector.broadcast %469 : vector<1x64xf32> to vector<16x64xf32>
    %473 = arith.addf %471, %472 : vector<16x64xf32>
    %474 = vector.extract_strided_slice %473 {offsets = [0, 0], sizes = [8, 64], strides = [1, 1]} : vector<16x64xf32> to vector<8x64xf32>
    %475 = vector.extract_strided_slice %473 {offsets = [8, 0], sizes = [8, 64], strides = [1, 1]} : vector<16x64xf32> to vector<8x64xf32>
    %c0_208 = arith.constant 0 : index
    %c0_209 = arith.constant 0 : index
    %476 = vector.load %arg36[%c0_208, %c0_209] : memref<128x2xbf16, #tpu.memory_space<vmem>>, vector<64x2xbf16>
    %c64_210 = arith.constant 64 : index
    %c0_211 = arith.constant 0 : index
    %477 = vector.load %arg36[%c64_210, %c0_211] : memref<128x2xbf16, #tpu.memory_space<vmem>>, vector<64x2xbf16>
    %c0_212 = arith.constant 0 : index
    %c0_213 = arith.constant 0 : index
    %478 = vector.load %arg37[%c0_212, %c0_213] : memref<1x2xf32, #tpu.memory_space<vmem>>, vector<1x2xf32>
    %479 = arith.truncf %474 : vector<8x64xf32> to vector<8x64xbf16>
    %cst_214 = arith.constant dense<0.000000e+00> : vector<8x64xf32>
    %480 = tpu.matmul %382, %479, %cst_214 {dimension_numbers = #tpu.dot_dimension_numbers<[1], [0], [0], [1], [0, 0, 1, 1], [], []>} : vector<8x8xbf16>, vector<8x64xbf16>, vector<8x64xf32> -> vector<8x64xf32>
    %481 = arith.truncf %475 : vector<8x64xf32> to vector<8x64xbf16>
    %cst_215 = arith.constant dense<0.000000e+00> : vector<8x64xf32>
    %482 = tpu.matmul %389, %481, %cst_215 {dimension_numbers = #tpu.dot_dimension_numbers<[1], [0], [0], [1], [0, 0, 1, 1], [], []>} : vector<8x8xbf16>, vector<8x64xbf16>, vector<8x64xf32> -> vector<8x64xf32>
    %483 = tpu.concatenate %480, %482 in 0 : vector<8x64xf32>, vector<8x64xf32> -> vector<16x64xf32>
    %484 = arith.truncf %483 : vector<16x64xf32> to vector<16x64xbf16>
    %485 = tpu.concatenate %474, %475 in 0 : vector<8x64xf32>, vector<8x64xf32> -> vector<16x64xf32>
    %486 = arith.truncf %485 : vector<16x64xf32> to vector<16x64xbf16>
    %cst_216 = arith.constant dense<0.000000e+00> : vector<16x2xf32>
    %487 = tpu.matmul %484, %476, %cst_216 {dimension_numbers = #tpu.dot_dimension_numbers<[1], [0], [0], [1], [0, 0, 1, 1], [], []>} : vector<16x64xbf16>, vector<64x2xbf16>, vector<16x2xf32> -> vector<16x2xf32>
    %cst_217 = arith.constant dense<0.000000e+00> : vector<16x2xf32>
    %488 = tpu.matmul %486, %477, %cst_217 {dimension_numbers = #tpu.dot_dimension_numbers<[1], [0], [0], [1], [0, 0, 1, 1], [], []>} : vector<16x64xbf16>, vector<64x2xbf16>, vector<16x2xf32> -> vector<16x2xf32>
    %489 = arith.addf %487, %488 : vector<16x2xf32>
    %490 = vector.broadcast %478 : vector<1x2xf32> to vector<16x2xf32>
    %491 = arith.addf %489, %490 : vector<16x2xf32>
    %cst_218 = arith.constant 0.000000e+00 : f32
    %492 = vector.broadcast %cst_218 : f32 to vector<16x2xf32>
    %493 = arith.maximumf %491, %492 : vector<16x2xf32>
    %cst_219 = arith.constant dense<0.000000e+00> : vector<2xf32>
    %494 = vector.multi_reduction <add>, %493, %cst_219 [0] : vector<16x2xf32> to vector<2xf32>
    %495 = vector.shape_cast %494 : vector<2xf32> to vector<1x2xf32>
    %cst_220 = arith.constant 6.250000e-02 : f32
    %496 = vector.broadcast %cst_220 : f32 to vector<1x2xf32>
    %497 = arith.mulf %495, %496 : vector<1x2xf32>
    %498 = vector.broadcast %497 : vector<1x2xf32> to vector<16x2xf32>
    %499 = arith.subf %493, %498 : vector<16x2xf32>
    %500 = arith.mulf %499, %499 : vector<16x2xf32>
    %cst_221 = arith.constant dense<0.000000e+00> : vector<2xf32>
    %501 = vector.multi_reduction <add>, %500, %cst_221 [0] : vector<16x2xf32> to vector<2xf32>
    %502 = vector.shape_cast %501 : vector<2xf32> to vector<1x2xf32>
    %cst_222 = arith.constant 6.250000e-02 : f32
    %503 = vector.broadcast %cst_222 : f32 to vector<1x2xf32>
    %504 = arith.mulf %502, %503 : vector<1x2xf32>
    %cst_223 = arith.constant 9.99999974E-6 : f32
    %505 = vector.broadcast %cst_223 : f32 to vector<1x2xf32>
    %506 = arith.addf %504, %505 : vector<1x2xf32>
    %507 = math.rsqrt %506 : vector<1x2xf32>
    %c0_224 = arith.constant 0 : index
    %c0_225 = arith.constant 0 : index
    %508 = vector.load %arg38[%c0_224, %c0_225] : memref<1x2xf32, #tpu.memory_space<vmem>>, vector<1x2xf32>
    %509 = arith.mulf %507, %508 : vector<1x2xf32>
    %c0_226 = arith.constant 0 : index
    %c0_227 = arith.constant 0 : index
    %510 = vector.load %arg39[%c0_226, %c0_227] : memref<1x2xf32, #tpu.memory_space<vmem>>, vector<1x2xf32>
    %511 = arith.mulf %497, %509 : vector<1x2xf32>
    %512 = arith.subf %510, %511 : vector<1x2xf32>
    %513 = vector.broadcast %509 : vector<1x2xf32> to vector<16x2xf32>
    %514 = arith.mulf %493, %513 : vector<16x2xf32>
    %515 = vector.broadcast %512 : vector<1x2xf32> to vector<16x2xf32>
    %516 = arith.addf %514, %515 : vector<16x2xf32>
    %517 = vector.extract_strided_slice %516 {offsets = [0, 0], sizes = [8, 2], strides = [1, 1]} : vector<16x2xf32> to vector<8x2xf32>
    %518 = vector.extract_strided_slice %516 {offsets = [8, 0], sizes = [8, 2], strides = [1, 1]} : vector<16x2xf32> to vector<8x2xf32>
    %519 = tpu.concatenate %431, %474, %517 in 1 : vector<8x64xf32>, vector<8x64xf32>, vector<8x2xf32> -> vector<8x130xf32>
    %520 = tpu.concatenate %432, %475, %518 in 1 : vector<8x64xf32>, vector<8x64xf32>, vector<8x2xf32> -> vector<8x130xf32>
    %c0_228 = arith.constant 0 : index
    %c0_229 = arith.constant 0 : index
    %521 = vector.load %arg40[%c0_228, %c0_229] : memref<130x2xbf16, #tpu.memory_space<vmem>>, vector<130x2xbf16>
    %c0_230 = arith.constant 0 : index
    %c0_231 = arith.constant 0 : index
    %522 = vector.load %arg41[%c0_230, %c0_231] : memref<1x2xf32, #tpu.memory_space<vmem>>, vector<1x2xf32>
    %523 = tpu.concatenate %519, %520 in 0 : vector<8x130xf32>, vector<8x130xf32> -> vector<16x130xf32>
    %524 = arith.truncf %523 : vector<16x130xf32> to vector<16x130xbf16>
    %cst_232 = arith.constant dense<0.000000e+00> : vector<16x2xf32>
    %525 = tpu.matmul %524, %521, %cst_232 {dimension_numbers = #tpu.dot_dimension_numbers<[1], [0], [0], [1], [0, 0, 1, 1], [], []>} : vector<16x130xbf16>, vector<130x2xbf16>, vector<16x2xf32> -> vector<16x2xf32>
    %526 = vector.broadcast %522 : vector<1x2xf32> to vector<16x2xf32>
    %527 = arith.addf %525, %526 : vector<16x2xf32>
    %cst_233 = arith.constant 0.000000e+00 : f32
    %528 = vector.broadcast %cst_233 : f32 to vector<16x2xf32>
    %529 = arith.maximumf %527, %528 : vector<16x2xf32>
    %530 = vector.extract_strided_slice %529 {offsets = [0, 0], sizes = [8, 2], strides = [1, 1]} : vector<16x2xf32> to vector<8x2xf32>
    %531 = vector.extract_strided_slice %529 {offsets = [8, 0], sizes = [8, 2], strides = [1, 1]} : vector<16x2xf32> to vector<8x2xf32>
    %c0_234 = arith.constant 0 : index
    %c0_235 = arith.constant 0 : index
    %532 = vector.load %arg42[%c0_234, %c0_235] : memref<384x64xbf16, #tpu.memory_space<vmem>>, vector<192x64xbf16>
    %c192_236 = arith.constant 192 : index
    %c0_237 = arith.constant 0 : index
    %533 = vector.load %arg42[%c192_236, %c0_237] : memref<384x64xbf16, #tpu.memory_space<vmem>>, vector<192x64xbf16>
    %c0_238 = arith.constant 0 : index
    %c0_239 = arith.constant 0 : index
    %534 = vector.load %arg43[%c0_238, %c0_239] : memref<1x64xf32, #tpu.memory_space<vmem>>, vector<1x64xf32>
    %535 = arith.truncf %310 : vector<8x192xf32> to vector<8x192xbf16>
    %cst_240 = arith.constant dense<0.000000e+00> : vector<8x192xf32>
    %536 = tpu.matmul %382, %535, %cst_240 {dimension_numbers = #tpu.dot_dimension_numbers<[1], [0], [0], [1], [0, 0, 1, 1], [], []>} : vector<8x8xbf16>, vector<8x192xbf16>, vector<8x192xf32> -> vector<8x192xf32>
    %537 = arith.truncf %347 : vector<8x192xf32> to vector<8x192xbf16>
    %cst_241 = arith.constant dense<0.000000e+00> : vector<8x192xf32>
    %538 = tpu.matmul %389, %537, %cst_241 {dimension_numbers = #tpu.dot_dimension_numbers<[1], [0], [0], [1], [0, 0, 1, 1], [], []>} : vector<8x8xbf16>, vector<8x192xbf16>, vector<8x192xf32> -> vector<8x192xf32>
    %539 = tpu.concatenate %536, %538 in 0 : vector<8x192xf32>, vector<8x192xf32> -> vector<16x192xf32>
    %540 = arith.truncf %539 : vector<16x192xf32> to vector<16x192xbf16>
    %541 = tpu.concatenate %310, %347 in 0 : vector<8x192xf32>, vector<8x192xf32> -> vector<16x192xf32>
    %542 = arith.truncf %541 : vector<16x192xf32> to vector<16x192xbf16>
    %cst_242 = arith.constant dense<0.000000e+00> : vector<16x64xf32>
    %543 = tpu.matmul %540, %532, %cst_242 {dimension_numbers = #tpu.dot_dimension_numbers<[1], [0], [0], [1], [0, 0, 1, 1], [], []>} : vector<16x192xbf16>, vector<192x64xbf16>, vector<16x64xf32> -> vector<16x64xf32>
    %cst_243 = arith.constant dense<0.000000e+00> : vector<16x64xf32>
    %544 = tpu.matmul %542, %533, %cst_243 {dimension_numbers = #tpu.dot_dimension_numbers<[1], [0], [0], [1], [0, 0, 1, 1], [], []>} : vector<16x192xbf16>, vector<192x64xbf16>, vector<16x64xf32> -> vector<16x64xf32>
    %545 = arith.addf %543, %544 : vector<16x64xf32>
    %546 = vector.broadcast %534 : vector<1x64xf32> to vector<16x64xf32>
    %547 = arith.addf %545, %546 : vector<16x64xf32>
    %cst_244 = arith.constant 0.000000e+00 : f32
    %548 = vector.broadcast %cst_244 : f32 to vector<16x64xf32>
    %549 = arith.maximumf %547, %548 : vector<16x64xf32>
    %cst_245 = arith.constant dense<0.000000e+00> : vector<64xf32>
    %550 = vector.multi_reduction <add>, %549, %cst_245 [0] : vector<16x64xf32> to vector<64xf32>
    %551 = vector.shape_cast %550 : vector<64xf32> to vector<1x64xf32>
    %cst_246 = arith.constant 6.250000e-02 : f32
    %552 = vector.broadcast %cst_246 : f32 to vector<1x64xf32>
    %553 = arith.mulf %551, %552 : vector<1x64xf32>
    %554 = vector.broadcast %553 : vector<1x64xf32> to vector<16x64xf32>
    %555 = arith.subf %549, %554 : vector<16x64xf32>
    %556 = arith.mulf %555, %555 : vector<16x64xf32>
    %cst_247 = arith.constant dense<0.000000e+00> : vector<64xf32>
    %557 = vector.multi_reduction <add>, %556, %cst_247 [0] : vector<16x64xf32> to vector<64xf32>
    %558 = vector.shape_cast %557 : vector<64xf32> to vector<1x64xf32>
    %cst_248 = arith.constant 6.250000e-02 : f32
    %559 = vector.broadcast %cst_248 : f32 to vector<1x64xf32>
    %560 = arith.mulf %558, %559 : vector<1x64xf32>
    %cst_249 = arith.constant 9.99999974E-6 : f32
    %561 = vector.broadcast %cst_249 : f32 to vector<1x64xf32>
    %562 = arith.addf %560, %561 : vector<1x64xf32>
    %563 = math.rsqrt %562 : vector<1x64xf32>
    %c0_250 = arith.constant 0 : index
    %c0_251 = arith.constant 0 : index
    %564 = vector.load %arg44[%c0_250, %c0_251] : memref<1x64xf32, #tpu.memory_space<vmem>>, vector<1x64xf32>
    %565 = arith.mulf %563, %564 : vector<1x64xf32>
    %c0_252 = arith.constant 0 : index
    %c0_253 = arith.constant 0 : index
    %566 = vector.load %arg45[%c0_252, %c0_253] : memref<1x64xf32, #tpu.memory_space<vmem>>, vector<1x64xf32>
    %567 = arith.mulf %553, %565 : vector<1x64xf32>
    %568 = arith.subf %566, %567 : vector<1x64xf32>
    %569 = vector.broadcast %565 : vector<1x64xf32> to vector<16x64xf32>
    %570 = arith.mulf %549, %569 : vector<16x64xf32>
    %571 = vector.broadcast %568 : vector<1x64xf32> to vector<16x64xf32>
    %572 = arith.addf %570, %571 : vector<16x64xf32>
    %573 = vector.extract_strided_slice %572 {offsets = [0, 0], sizes = [8, 64], strides = [1, 1]} : vector<16x64xf32> to vector<8x64xf32>
    %574 = vector.extract_strided_slice %572 {offsets = [8, 0], sizes = [8, 64], strides = [1, 1]} : vector<16x64xf32> to vector<8x64xf32>
    %c0_254 = arith.constant 0 : index
    %c0_255 = arith.constant 0 : index
    %575 = vector.load %arg46[%c0_254, %c0_255] : memref<128x64xbf16, #tpu.memory_space<vmem>>, vector<64x64xbf16>
    %c64_256 = arith.constant 64 : index
    %c0_257 = arith.constant 0 : index
    %576 = vector.load %arg46[%c64_256, %c0_257] : memref<128x64xbf16, #tpu.memory_space<vmem>>, vector<64x64xbf16>
    %c0_258 = arith.constant 0 : index
    %c0_259 = arith.constant 0 : index
    %577 = vector.load %arg47[%c0_258, %c0_259] : memref<1x64xf32, #tpu.memory_space<vmem>>, vector<1x64xf32>
    %578 = arith.truncf %573 : vector<8x64xf32> to vector<8x64xbf16>
    %cst_260 = arith.constant dense<0.000000e+00> : vector<8x64xf32>
    %579 = tpu.matmul %382, %578, %cst_260 {dimension_numbers = #tpu.dot_dimension_numbers<[1], [0], [0], [1], [0, 0, 1, 1], [], []>} : vector<8x8xbf16>, vector<8x64xbf16>, vector<8x64xf32> -> vector<8x64xf32>
    %580 = arith.truncf %574 : vector<8x64xf32> to vector<8x64xbf16>
    %cst_261 = arith.constant dense<0.000000e+00> : vector<8x64xf32>
    %581 = tpu.matmul %389, %580, %cst_261 {dimension_numbers = #tpu.dot_dimension_numbers<[1], [0], [0], [1], [0, 0, 1, 1], [], []>} : vector<8x8xbf16>, vector<8x64xbf16>, vector<8x64xf32> -> vector<8x64xf32>
    %582 = tpu.concatenate %579, %581 in 0 : vector<8x64xf32>, vector<8x64xf32> -> vector<16x64xf32>
    %583 = arith.truncf %582 : vector<16x64xf32> to vector<16x64xbf16>
    %584 = tpu.concatenate %573, %574 in 0 : vector<8x64xf32>, vector<8x64xf32> -> vector<16x64xf32>
    %585 = arith.truncf %584 : vector<16x64xf32> to vector<16x64xbf16>
    %cst_262 = arith.constant dense<0.000000e+00> : vector<16x64xf32>
    %586 = tpu.matmul %583, %575, %cst_262 {dimension_numbers = #tpu.dot_dimension_numbers<[1], [0], [0], [1], [0, 0, 1, 1], [], []>} : vector<16x64xbf16>, vector<64x64xbf16>, vector<16x64xf32> -> vector<16x64xf32>
    %cst_263 = arith.constant dense<0.000000e+00> : vector<16x64xf32>
    %587 = tpu.matmul %585, %576, %cst_263 {dimension_numbers = #tpu.dot_dimension_numbers<[1], [0], [0], [1], [0, 0, 1, 1], [], []>} : vector<16x64xbf16>, vector<64x64xbf16>, vector<16x64xf32> -> vector<16x64xf32>
    %588 = arith.addf %586, %587 : vector<16x64xf32>
    %589 = vector.broadcast %577 : vector<1x64xf32> to vector<16x64xf32>
    %590 = arith.addf %588, %589 : vector<16x64xf32>
    %cst_264 = arith.constant 0.000000e+00 : f32
    %591 = vector.broadcast %cst_264 : f32 to vector<16x64xf32>
    %592 = arith.maximumf %590, %591 : vector<16x64xf32>
    %cst_265 = arith.constant dense<0.000000e+00> : vector<64xf32>
    %593 = vector.multi_reduction <add>, %592, %cst_265 [0] : vector<16x64xf32> to vector<64xf32>
    %594 = vector.shape_cast %593 : vector<64xf32> to vector<1x64xf32>
    %cst_266 = arith.constant 6.250000e-02 : f32
    %595 = vector.broadcast %cst_266 : f32 to vector<1x64xf32>
    %596 = arith.mulf %594, %595 : vector<1x64xf32>
    %597 = vector.broadcast %596 : vector<1x64xf32> to vector<16x64xf32>
    %598 = arith.subf %592, %597 : vector<16x64xf32>
    %599 = arith.mulf %598, %598 : vector<16x64xf32>
    %cst_267 = arith.constant dense<0.000000e+00> : vector<64xf32>
    %600 = vector.multi_reduction <add>, %599, %cst_267 [0] : vector<16x64xf32> to vector<64xf32>
    %601 = vector.shape_cast %600 : vector<64xf32> to vector<1x64xf32>
    %cst_268 = arith.constant 6.250000e-02 : f32
    %602 = vector.broadcast %cst_268 : f32 to vector<1x64xf32>
    %603 = arith.mulf %601, %602 : vector<1x64xf32>
    %cst_269 = arith.constant 9.99999974E-6 : f32
    %604 = vector.broadcast %cst_269 : f32 to vector<1x64xf32>
    %605 = arith.addf %603, %604 : vector<1x64xf32>
    %606 = math.rsqrt %605 : vector<1x64xf32>
    %c0_270 = arith.constant 0 : index
    %c0_271 = arith.constant 0 : index
    %607 = vector.load %arg48[%c0_270, %c0_271] : memref<1x64xf32, #tpu.memory_space<vmem>>, vector<1x64xf32>
    %608 = arith.mulf %606, %607 : vector<1x64xf32>
    %c0_272 = arith.constant 0 : index
    %c0_273 = arith.constant 0 : index
    %609 = vector.load %arg49[%c0_272, %c0_273] : memref<1x64xf32, #tpu.memory_space<vmem>>, vector<1x64xf32>
    %610 = arith.mulf %596, %608 : vector<1x64xf32>
    %611 = arith.subf %609, %610 : vector<1x64xf32>
    %612 = vector.broadcast %608 : vector<1x64xf32> to vector<16x64xf32>
    %613 = arith.mulf %592, %612 : vector<16x64xf32>
    %614 = vector.broadcast %611 : vector<1x64xf32> to vector<16x64xf32>
    %615 = arith.addf %613, %614 : vector<16x64xf32>
    %616 = vector.extract_strided_slice %615 {offsets = [0, 0], sizes = [8, 64], strides = [1, 1]} : vector<16x64xf32> to vector<8x64xf32>
    %617 = vector.extract_strided_slice %615 {offsets = [8, 0], sizes = [8, 64], strides = [1, 1]} : vector<16x64xf32> to vector<8x64xf32>
    %c0_274 = arith.constant 0 : index
    %c0_275 = arith.constant 0 : index
    %618 = vector.load %arg50[%c0_274, %c0_275] : memref<128x64xbf16, #tpu.memory_space<vmem>>, vector<64x64xbf16>
    %c64_276 = arith.constant 64 : index
    %c0_277 = arith.constant 0 : index
    %619 = vector.load %arg50[%c64_276, %c0_277] : memref<128x64xbf16, #tpu.memory_space<vmem>>, vector<64x64xbf16>
    %c0_278 = arith.constant 0 : index
    %c0_279 = arith.constant 0 : index
    %620 = vector.load %arg51[%c0_278, %c0_279] : memref<1x64xf32, #tpu.memory_space<vmem>>, vector<1x64xf32>
    %621 = arith.truncf %616 : vector<8x64xf32> to vector<8x64xbf16>
    %cst_280 = arith.constant dense<0.000000e+00> : vector<8x64xf32>
    %622 = tpu.matmul %382, %621, %cst_280 {dimension_numbers = #tpu.dot_dimension_numbers<[1], [0], [0], [1], [0, 0, 1, 1], [], []>} : vector<8x8xbf16>, vector<8x64xbf16>, vector<8x64xf32> -> vector<8x64xf32>
    %623 = arith.truncf %617 : vector<8x64xf32> to vector<8x64xbf16>
    %cst_281 = arith.constant dense<0.000000e+00> : vector<8x64xf32>
    %624 = tpu.matmul %389, %623, %cst_281 {dimension_numbers = #tpu.dot_dimension_numbers<[1], [0], [0], [1], [0, 0, 1, 1], [], []>} : vector<8x8xbf16>, vector<8x64xbf16>, vector<8x64xf32> -> vector<8x64xf32>
    %625 = tpu.concatenate %622, %624 in 0 : vector<8x64xf32>, vector<8x64xf32> -> vector<16x64xf32>
    %626 = arith.truncf %625 : vector<16x64xf32> to vector<16x64xbf16>
    %627 = tpu.concatenate %616, %617 in 0 : vector<8x64xf32>, vector<8x64xf32> -> vector<16x64xf32>
    %628 = arith.truncf %627 : vector<16x64xf32> to vector<16x64xbf16>
    %cst_282 = arith.constant dense<0.000000e+00> : vector<16x64xf32>
    %629 = tpu.matmul %626, %618, %cst_282 {dimension_numbers = #tpu.dot_dimension_numbers<[1], [0], [0], [1], [0, 0, 1, 1], [], []>} : vector<16x64xbf16>, vector<64x64xbf16>, vector<16x64xf32> -> vector<16x64xf32>
    %cst_283 = arith.constant dense<0.000000e+00> : vector<16x64xf32>
    %630 = tpu.matmul %628, %619, %cst_283 {dimension_numbers = #tpu.dot_dimension_numbers<[1], [0], [0], [1], [0, 0, 1, 1], [], []>} : vector<16x64xbf16>, vector<64x64xbf16>, vector<16x64xf32> -> vector<16x64xf32>
    %631 = arith.addf %629, %630 : vector<16x64xf32>
    %632 = vector.broadcast %620 : vector<1x64xf32> to vector<16x64xf32>
    %633 = arith.addf %631, %632 : vector<16x64xf32>
    %cst_284 = arith.constant 0.000000e+00 : f32
    %634 = vector.broadcast %cst_284 : f32 to vector<16x64xf32>
    %635 = arith.maximumf %633, %634 : vector<16x64xf32>
    %cst_285 = arith.constant dense<0.000000e+00> : vector<64xf32>
    %636 = vector.multi_reduction <add>, %635, %cst_285 [0] : vector<16x64xf32> to vector<64xf32>
    %637 = vector.shape_cast %636 : vector<64xf32> to vector<1x64xf32>
    %cst_286 = arith.constant 6.250000e-02 : f32
    %638 = vector.broadcast %cst_286 : f32 to vector<1x64xf32>
    %639 = arith.mulf %637, %638 : vector<1x64xf32>
    %640 = vector.broadcast %639 : vector<1x64xf32> to vector<16x64xf32>
    %641 = arith.subf %635, %640 : vector<16x64xf32>
    %642 = arith.mulf %641, %641 : vector<16x64xf32>
    %cst_287 = arith.constant dense<0.000000e+00> : vector<64xf32>
    %643 = vector.multi_reduction <add>, %642, %cst_287 [0] : vector<16x64xf32> to vector<64xf32>
    %644 = vector.shape_cast %643 : vector<64xf32> to vector<1x64xf32>
    %cst_288 = arith.constant 6.250000e-02 : f32
    %645 = vector.broadcast %cst_288 : f32 to vector<1x64xf32>
    %646 = arith.mulf %644, %645 : vector<1x64xf32>
    %cst_289 = arith.constant 9.99999974E-6 : f32
    %647 = vector.broadcast %cst_289 : f32 to vector<1x64xf32>
    %648 = arith.addf %646, %647 : vector<1x64xf32>
    %649 = math.rsqrt %648 : vector<1x64xf32>
    %c0_290 = arith.constant 0 : index
    %c0_291 = arith.constant 0 : index
    %650 = vector.load %arg52[%c0_290, %c0_291] : memref<1x64xf32, #tpu.memory_space<vmem>>, vector<1x64xf32>
    %651 = arith.mulf %649, %650 : vector<1x64xf32>
    %c0_292 = arith.constant 0 : index
    %c0_293 = arith.constant 0 : index
    %652 = vector.load %arg53[%c0_292, %c0_293] : memref<1x64xf32, #tpu.memory_space<vmem>>, vector<1x64xf32>
    %653 = arith.mulf %639, %651 : vector<1x64xf32>
    %654 = arith.subf %652, %653 : vector<1x64xf32>
    %655 = vector.broadcast %651 : vector<1x64xf32> to vector<16x64xf32>
    %656 = arith.mulf %635, %655 : vector<16x64xf32>
    %657 = vector.broadcast %654 : vector<1x64xf32> to vector<16x64xf32>
    %658 = arith.addf %656, %657 : vector<16x64xf32>
    %659 = vector.extract_strided_slice %658 {offsets = [0, 0], sizes = [8, 64], strides = [1, 1]} : vector<16x64xf32> to vector<8x64xf32>
    %660 = vector.extract_strided_slice %658 {offsets = [8, 0], sizes = [8, 64], strides = [1, 1]} : vector<16x64xf32> to vector<8x64xf32>
    %661 = tpu.concatenate %573, %616, %659 in 1 : vector<8x64xf32>, vector<8x64xf32>, vector<8x64xf32> -> vector<8x192xf32>
    %662 = tpu.concatenate %574, %617, %660 in 1 : vector<8x64xf32>, vector<8x64xf32>, vector<8x64xf32> -> vector<8x192xf32>
    %cst_294 = arith.constant 0.000000e+00 : f32
    %663 = vector.broadcast %cst_294 : f32 to vector<1x1xf32>
    %cst_295 = arith.constant 0.000000e+00 : f32
    %664 = vector.broadcast %cst_295 : f32 to vector<1x1xf32>
    %cst_296 = arith.constant dense<0xFF800000> : vector<8xf32>
    %665 = vector.multi_reduction <maximumf>, %530, %cst_296 [1] : vector<8x2xf32> to vector<8xf32>
    %666 = vector.shape_cast %665 : vector<8xf32> to vector<8x1xf32>
    %667 = vector.broadcast %666 : vector<8x1xf32> to vector<8x2xf32>
    %668 = arith.subf %530, %667 : vector<8x2xf32>
    %669 = math.exp %668 : vector<8x2xf32>
    %cst_297 = arith.constant dense<0.000000e+00> : vector<8xf32>
    %670 = vector.multi_reduction <add>, %669, %cst_297 [1] : vector<8x2xf32> to vector<8xf32>
    %671 = vector.shape_cast %670 : vector<8xf32> to vector<8x1xf32>
    %672 = vector.broadcast %671 : vector<8x1xf32> to vector<8x2xf32>
    %673 = arith.divf %669, %672 : vector<8x2xf32>
    %674 = tpu.transpose %673, [1, 0] : vector<8x2xf32> -> vector<2x8xf32>
    %675 = arith.truncf %673 : vector<8x2xf32> to vector<8x2xbf16>
    %676 = arith.truncf %674 : vector<2x8xf32> to vector<2x8xbf16>
    %677 = arith.truncf %661 : vector<8x192xf32> to vector<8x192xbf16>
    %cst_298 = arith.constant dense<0.000000e+00> : vector<2x192xf32>
    %678 = tpu.matmul %676, %677, %cst_298 {dimension_numbers = #tpu.dot_dimension_numbers<[1], [0], [0], [1], [0, 0, 1, 1], [], []>} : vector<2x8xbf16>, vector<8x192xbf16>, vector<2x192xf32> -> vector<2x192xf32>
    %679 = arith.truncf %314 : vector<8x8xf32> to vector<8x8xbf16>
    %cst_299 = arith.constant dense<0.000000e+00> : vector<2x8xf32>
    %680 = tpu.matmul %676, %679, %cst_299 {dimension_numbers = #tpu.dot_dimension_numbers<[1], [0], [0], [1], [0, 0, 1, 1], [], []>} : vector<2x8xbf16>, vector<8x8xbf16>, vector<2x8xf32> -> vector<2x8xf32>
    %681 = arith.truncf %680 : vector<2x8xf32> to vector<2x8xbf16>
    %cst_300 = arith.constant dense<0.000000e+00> : vector<2x2xf32>
    %682 = tpu.matmul %681, %675, %cst_300 {dimension_numbers = #tpu.dot_dimension_numbers<[1], [0], [0], [1], [0, 0, 1, 1], [], []>} : vector<2x8xbf16>, vector<8x2xbf16>, vector<2x2xf32> -> vector<2x2xf32>
    %cst_301 = arith.constant dense<0.000000e+00> : vector<8x8xf32>
    %683 = tpu.matmul %675, %676, %cst_301 {dimension_numbers = #tpu.dot_dimension_numbers<[1], [0], [0], [1], [0, 0, 1, 1], [], []>} : vector<8x2xbf16>, vector<2x8xbf16>, vector<8x8xf32> -> vector<8x8xf32>
    %684 = arith.subf %314, %683 : vector<8x8xf32>
    %685 = arith.mulf %684, %684 : vector<8x8xf32>
    %cst_302 = arith.constant dense<0.000000e+00> : vector<8xf32>
    %686 = vector.multi_reduction <add>, %685, %cst_302 [1] : vector<8x8xf32> to vector<8xf32>
    %687 = vector.shape_cast %686 : vector<8xf32> to vector<8x1xf32>
    %cst_303 = arith.constant dense<0.000000e+00> : vector<1xf32>
    %688 = vector.multi_reduction <add>, %687, %cst_303 [0] : vector<8x1xf32> to vector<1xf32>
    %689 = vector.shape_cast %688 : vector<1xf32> to vector<1x1xf32>
    %690 = arith.addf %663, %689 : vector<1x1xf32>
    %cst_304 = arith.constant 0.000000e+00 : f32
    %691 = vector.broadcast %cst_304 : f32 to vector<8x2xf32>
    %692 = arith.subf %691, %673 : vector<8x2xf32>
    %cst_305 = arith.constant 1.000000e-15 : f32
    %693 = vector.broadcast %cst_305 : f32 to vector<8x2xf32>
    %694 = arith.addf %673, %693 : vector<8x2xf32>
    %695 = math.log %694 : vector<8x2xf32>
    %696 = arith.mulf %692, %695 : vector<8x2xf32>
    %cst_306 = arith.constant dense<0.000000e+00> : vector<8xf32>
    %697 = vector.multi_reduction <add>, %696, %cst_306 [1] : vector<8x2xf32> to vector<8xf32>
    %698 = vector.shape_cast %697 : vector<8xf32> to vector<8x1xf32>
    %cst_307 = arith.constant dense<0.000000e+00> : vector<1xf32>
    %699 = vector.multi_reduction <add>, %698, %cst_307 [0] : vector<8x1xf32> to vector<1xf32>
    %700 = vector.shape_cast %699 : vector<1xf32> to vector<1x1xf32>
    %701 = arith.addf %664, %700 : vector<1x1xf32>
    %cst_308 = arith.constant dense<0xFF800000> : vector<8xf32>
    %702 = vector.multi_reduction <maximumf>, %531, %cst_308 [1] : vector<8x2xf32> to vector<8xf32>
    %703 = vector.shape_cast %702 : vector<8xf32> to vector<8x1xf32>
    %704 = vector.broadcast %703 : vector<8x1xf32> to vector<8x2xf32>
    %705 = arith.subf %531, %704 : vector<8x2xf32>
    %706 = math.exp %705 : vector<8x2xf32>
    %cst_309 = arith.constant dense<0.000000e+00> : vector<8xf32>
    %707 = vector.multi_reduction <add>, %706, %cst_309 [1] : vector<8x2xf32> to vector<8xf32>
    %708 = vector.shape_cast %707 : vector<8xf32> to vector<8x1xf32>
    %709 = vector.broadcast %708 : vector<8x1xf32> to vector<8x2xf32>
    %710 = arith.divf %706, %709 : vector<8x2xf32>
    %711 = tpu.transpose %710, [1, 0] : vector<8x2xf32> -> vector<2x8xf32>
    %712 = arith.truncf %710 : vector<8x2xf32> to vector<8x2xbf16>
    %713 = arith.truncf %711 : vector<2x8xf32> to vector<2x8xbf16>
    %714 = arith.truncf %662 : vector<8x192xf32> to vector<8x192xbf16>
    %cst_310 = arith.constant dense<0.000000e+00> : vector<2x192xf32>
    %715 = tpu.matmul %713, %714, %cst_310 {dimension_numbers = #tpu.dot_dimension_numbers<[1], [0], [0], [1], [0, 0, 1, 1], [], []>} : vector<2x8xbf16>, vector<8x192xbf16>, vector<2x192xf32> -> vector<2x192xf32>
    %716 = arith.truncf %351 : vector<8x8xf32> to vector<8x8xbf16>
    %cst_311 = arith.constant dense<0.000000e+00> : vector<2x8xf32>
    %717 = tpu.matmul %713, %716, %cst_311 {dimension_numbers = #tpu.dot_dimension_numbers<[1], [0], [0], [1], [0, 0, 1, 1], [], []>} : vector<2x8xbf16>, vector<8x8xbf16>, vector<2x8xf32> -> vector<2x8xf32>
    %718 = arith.truncf %717 : vector<2x8xf32> to vector<2x8xbf16>
    %cst_312 = arith.constant dense<0.000000e+00> : vector<2x2xf32>
    %719 = tpu.matmul %718, %712, %cst_312 {dimension_numbers = #tpu.dot_dimension_numbers<[1], [0], [0], [1], [0, 0, 1, 1], [], []>} : vector<2x8xbf16>, vector<8x2xbf16>, vector<2x2xf32> -> vector<2x2xf32>
    %cst_313 = arith.constant dense<0.000000e+00> : vector<8x8xf32>
    %720 = tpu.matmul %712, %713, %cst_313 {dimension_numbers = #tpu.dot_dimension_numbers<[1], [0], [0], [1], [0, 0, 1, 1], [], []>} : vector<8x2xbf16>, vector<2x8xbf16>, vector<8x8xf32> -> vector<8x8xf32>
    %721 = arith.subf %351, %720 : vector<8x8xf32>
    %722 = arith.mulf %721, %721 : vector<8x8xf32>
    %cst_314 = arith.constant dense<0.000000e+00> : vector<8xf32>
    %723 = vector.multi_reduction <add>, %722, %cst_314 [1] : vector<8x8xf32> to vector<8xf32>
    %724 = vector.shape_cast %723 : vector<8xf32> to vector<8x1xf32>
    %cst_315 = arith.constant dense<0.000000e+00> : vector<1xf32>
    %725 = vector.multi_reduction <add>, %724, %cst_315 [0] : vector<8x1xf32> to vector<1xf32>
    %726 = vector.shape_cast %725 : vector<1xf32> to vector<1x1xf32>
    %727 = arith.addf %690, %726 : vector<1x1xf32>
    %cst_316 = arith.constant 0.000000e+00 : f32
    %728 = vector.broadcast %cst_316 : f32 to vector<8x2xf32>
    %729 = arith.subf %728, %710 : vector<8x2xf32>
    %cst_317 = arith.constant 1.000000e-15 : f32
    %730 = vector.broadcast %cst_317 : f32 to vector<8x2xf32>
    %731 = arith.addf %710, %730 : vector<8x2xf32>
    %732 = math.log %731 : vector<8x2xf32>
    %733 = arith.mulf %729, %732 : vector<8x2xf32>
    %cst_318 = arith.constant dense<0.000000e+00> : vector<8xf32>
    %734 = vector.multi_reduction <add>, %733, %cst_318 [1] : vector<8x2xf32> to vector<8xf32>
    %735 = vector.shape_cast %734 : vector<8xf32> to vector<8x1xf32>
    %cst_319 = arith.constant dense<0.000000e+00> : vector<1xf32>
    %736 = vector.multi_reduction <add>, %735, %cst_319 [0] : vector<8x1xf32> to vector<1xf32>
    %737 = vector.shape_cast %736 : vector<1xf32> to vector<1x1xf32>
    %738 = arith.addf %701, %737 : vector<1x1xf32>
    %739 = math.sqrt %727 : vector<1x1xf32>
    %cst_320 = arith.constant 7.812500e-03 : f32
    %740 = vector.broadcast %cst_320 : f32 to vector<1x1xf32>
    %741 = arith.mulf %739, %740 : vector<1x1xf32>
    %cst_321 = arith.constant 6.250000e-02 : f32
    %742 = vector.broadcast %cst_321 : f32 to vector<1x1xf32>
    %743 = arith.mulf %738, %742 : vector<1x1xf32>
    %cst_322 = arith.constant dense<0.000000e+00> : vector<2xf32>
    %744 = vector.multi_reduction <add>, %682, %cst_322 [1] : vector<2x2xf32> to vector<2xf32>
    %745 = vector.shape_cast %744 : vector<2xf32> to vector<2x1xf32>
    %cst_323 = arith.constant 1.000000e+00 : f32
    %746 = vector.broadcast %cst_323 : f32 to vector<2x1xf32>
    %747 = arith.maximumf %745, %746 : vector<2x1xf32>
    %748 = vector.broadcast %747 : vector<2x1xf32> to vector<2x2xf32>
    %749 = arith.divf %682, %748 : vector<2x2xf32>
    %750 = arith.truncf %749 : vector<2x2xf32> to vector<2x2xbf16>
    %cst_324 = arith.constant dense<0.000000e+00> : vector<2xf32>
    %751 = vector.multi_reduction <add>, %719, %cst_324 [1] : vector<2x2xf32> to vector<2xf32>
    %752 = vector.shape_cast %751 : vector<2xf32> to vector<2x1xf32>
    %cst_325 = arith.constant 1.000000e+00 : f32
    %753 = vector.broadcast %cst_325 : f32 to vector<2x1xf32>
    %754 = arith.maximumf %752, %753 : vector<2x1xf32>
    %755 = vector.broadcast %754 : vector<2x1xf32> to vector<2x2xf32>
    %756 = arith.divf %719, %755 : vector<2x2xf32>
    %757 = arith.truncf %756 : vector<2x2xf32> to vector<2x2xbf16>
    %c0_326 = arith.constant 0 : index
    %c0_327 = arith.constant 0 : index
    %758 = vector.load %arg54[%c0_326, %c0_327] : memref<384x64xbf16, #tpu.memory_space<vmem>>, vector<192x64xbf16>
    %c192_328 = arith.constant 192 : index
    %c0_329 = arith.constant 0 : index
    %759 = vector.load %arg54[%c192_328, %c0_329] : memref<384x64xbf16, #tpu.memory_space<vmem>>, vector<192x64xbf16>
    %c0_330 = arith.constant 0 : index
    %c0_331 = arith.constant 0 : index
    %760 = vector.load %arg55[%c0_330, %c0_331] : memref<1x64xf32, #tpu.memory_space<vmem>>, vector<1x64xf32>
    %761 = arith.truncf %678 : vector<2x192xf32> to vector<2x192xbf16>
    %cst_332 = arith.constant dense<0.000000e+00> : vector<2x192xf32>
    %762 = tpu.matmul %750, %761, %cst_332 {dimension_numbers = #tpu.dot_dimension_numbers<[1], [0], [0], [1], [0, 0, 1, 1], [], []>} : vector<2x2xbf16>, vector<2x192xbf16>, vector<2x192xf32> -> vector<2x192xf32>
    %763 = arith.truncf %715 : vector<2x192xf32> to vector<2x192xbf16>
    %cst_333 = arith.constant dense<0.000000e+00> : vector<2x192xf32>
    %764 = tpu.matmul %757, %763, %cst_333 {dimension_numbers = #tpu.dot_dimension_numbers<[1], [0], [0], [1], [0, 0, 1, 1], [], []>} : vector<2x2xbf16>, vector<2x192xbf16>, vector<2x192xf32> -> vector<2x192xf32>
    %765 = arith.truncf %762 : vector<2x192xf32> to vector<2x192xbf16>
    %cst_334 = arith.constant dense<0.000000e+00> : vector<2x64xf32>
    %766 = tpu.matmul %765, %758, %cst_334 {dimension_numbers = #tpu.dot_dimension_numbers<[1], [0], [0], [1], [0, 0, 1, 1], [], []>} : vector<2x192xbf16>, vector<192x64xbf16>, vector<2x64xf32> -> vector<2x64xf32>
    %767 = arith.truncf %678 : vector<2x192xf32> to vector<2x192xbf16>
    %cst_335 = arith.constant dense<0.000000e+00> : vector<2x64xf32>
    %768 = tpu.matmul %767, %759, %cst_335 {dimension_numbers = #tpu.dot_dimension_numbers<[1], [0], [0], [1], [0, 0, 1, 1], [], []>} : vector<2x192xbf16>, vector<192x64xbf16>, vector<2x64xf32> -> vector<2x64xf32>
    %769 = arith.addf %766, %768 : vector<2x64xf32>
    %770 = vector.broadcast %760 : vector<1x64xf32> to vector<2x64xf32>
    %771 = arith.addf %769, %770 : vector<2x64xf32>
    %cst_336 = arith.constant 0.000000e+00 : f32
    %772 = vector.broadcast %cst_336 : f32 to vector<2x64xf32>
    %773 = arith.maximumf %771, %772 : vector<2x64xf32>
    %774 = arith.truncf %764 : vector<2x192xf32> to vector<2x192xbf16>
    %cst_337 = arith.constant dense<0.000000e+00> : vector<2x64xf32>
    %775 = tpu.matmul %774, %758, %cst_337 {dimension_numbers = #tpu.dot_dimension_numbers<[1], [0], [0], [1], [0, 0, 1, 1], [], []>} : vector<2x192xbf16>, vector<192x64xbf16>, vector<2x64xf32> -> vector<2x64xf32>
    %776 = arith.truncf %715 : vector<2x192xf32> to vector<2x192xbf16>
    %cst_338 = arith.constant dense<0.000000e+00> : vector<2x64xf32>
    %777 = tpu.matmul %776, %759, %cst_338 {dimension_numbers = #tpu.dot_dimension_numbers<[1], [0], [0], [1], [0, 0, 1, 1], [], []>} : vector<2x192xbf16>, vector<192x64xbf16>, vector<2x64xf32> -> vector<2x64xf32>
    %778 = arith.addf %775, %777 : vector<2x64xf32>
    %779 = vector.broadcast %760 : vector<1x64xf32> to vector<2x64xf32>
    %780 = arith.addf %778, %779 : vector<2x64xf32>
    %cst_339 = arith.constant 0.000000e+00 : f32
    %781 = vector.broadcast %cst_339 : f32 to vector<2x64xf32>
    %782 = arith.maximumf %780, %781 : vector<2x64xf32>
    %cst_340 = arith.constant dense<0.000000e+00> : vector<64xf32>
    %783 = vector.multi_reduction <add>, %773, %cst_340 [0] : vector<2x64xf32> to vector<64xf32>
    %784 = vector.shape_cast %783 : vector<64xf32> to vector<1x64xf32>
    %cst_341 = arith.constant 0.000000e+00 : f32
    %785 = vector.broadcast %cst_341 : f32 to vector<1x64xf32>
    %786 = arith.addf %785, %784 : vector<1x64xf32>
    %cst_342 = arith.constant dense<0.000000e+00> : vector<64xf32>
    %787 = vector.multi_reduction <add>, %782, %cst_342 [0] : vector<2x64xf32> to vector<64xf32>
    %788 = vector.shape_cast %787 : vector<64xf32> to vector<1x64xf32>
    %789 = arith.addf %786, %788 : vector<1x64xf32>
    %cst_343 = arith.constant 2.500000e-01 : f32
    %790 = vector.broadcast %cst_343 : f32 to vector<1x64xf32>
    %791 = arith.mulf %789, %790 : vector<1x64xf32>
    %792 = vector.broadcast %791 : vector<1x64xf32> to vector<2x64xf32>
    %793 = arith.subf %773, %792 : vector<2x64xf32>
    %794 = arith.mulf %793, %793 : vector<2x64xf32>
    %cst_344 = arith.constant dense<0.000000e+00> : vector<64xf32>
    %795 = vector.multi_reduction <add>, %794, %cst_344 [0] : vector<2x64xf32> to vector<64xf32>
    %796 = vector.shape_cast %795 : vector<64xf32> to vector<1x64xf32>
    %cst_345 = arith.constant 0.000000e+00 : f32
    %797 = vector.broadcast %cst_345 : f32 to vector<1x64xf32>
    %798 = arith.addf %797, %796 : vector<1x64xf32>
    %799 = vector.broadcast %791 : vector<1x64xf32> to vector<2x64xf32>
    %800 = arith.subf %782, %799 : vector<2x64xf32>
    %801 = arith.mulf %800, %800 : vector<2x64xf32>
    %cst_346 = arith.constant dense<0.000000e+00> : vector<64xf32>
    %802 = vector.multi_reduction <add>, %801, %cst_346 [0] : vector<2x64xf32> to vector<64xf32>
    %803 = vector.shape_cast %802 : vector<64xf32> to vector<1x64xf32>
    %804 = arith.addf %798, %803 : vector<1x64xf32>
    %cst_347 = arith.constant 2.500000e-01 : f32
    %805 = vector.broadcast %cst_347 : f32 to vector<1x64xf32>
    %806 = arith.mulf %804, %805 : vector<1x64xf32>
    %cst_348 = arith.constant 9.99999974E-6 : f32
    %807 = vector.broadcast %cst_348 : f32 to vector<1x64xf32>
    %808 = arith.addf %806, %807 : vector<1x64xf32>
    %809 = math.rsqrt %808 : vector<1x64xf32>
    %c0_349 = arith.constant 0 : index
    %c0_350 = arith.constant 0 : index
    %810 = vector.load %arg56[%c0_349, %c0_350] : memref<1x64xf32, #tpu.memory_space<vmem>>, vector<1x64xf32>
    %811 = arith.mulf %809, %810 : vector<1x64xf32>
    %c0_351 = arith.constant 0 : index
    %c0_352 = arith.constant 0 : index
    %812 = vector.load %arg57[%c0_351, %c0_352] : memref<1x64xf32, #tpu.memory_space<vmem>>, vector<1x64xf32>
    %813 = arith.mulf %791, %811 : vector<1x64xf32>
    %814 = arith.subf %812, %813 : vector<1x64xf32>
    %815 = vector.broadcast %811 : vector<1x64xf32> to vector<2x64xf32>
    %816 = arith.mulf %773, %815 : vector<2x64xf32>
    %817 = vector.broadcast %814 : vector<1x64xf32> to vector<2x64xf32>
    %818 = arith.addf %816, %817 : vector<2x64xf32>
    %819 = vector.broadcast %811 : vector<1x64xf32> to vector<2x64xf32>
    %820 = arith.mulf %782, %819 : vector<2x64xf32>
    %821 = vector.broadcast %814 : vector<1x64xf32> to vector<2x64xf32>
    %822 = arith.addf %820, %821 : vector<2x64xf32>
    %c0_353 = arith.constant 0 : index
    %c0_354 = arith.constant 0 : index
    %823 = vector.load %arg58[%c0_353, %c0_354] : memref<128x64xbf16, #tpu.memory_space<vmem>>, vector<64x64xbf16>
    %c64_355 = arith.constant 64 : index
    %c0_356 = arith.constant 0 : index
    %824 = vector.load %arg58[%c64_355, %c0_356] : memref<128x64xbf16, #tpu.memory_space<vmem>>, vector<64x64xbf16>
    %c0_357 = arith.constant 0 : index
    %c0_358 = arith.constant 0 : index
    %825 = vector.load %arg59[%c0_357, %c0_358] : memref<1x64xf32, #tpu.memory_space<vmem>>, vector<1x64xf32>
    %826 = arith.truncf %818 : vector<2x64xf32> to vector<2x64xbf16>
    %cst_359 = arith.constant dense<0.000000e+00> : vector<2x64xf32>
    %827 = tpu.matmul %750, %826, %cst_359 {dimension_numbers = #tpu.dot_dimension_numbers<[1], [0], [0], [1], [0, 0, 1, 1], [], []>} : vector<2x2xbf16>, vector<2x64xbf16>, vector<2x64xf32> -> vector<2x64xf32>
    %828 = arith.truncf %822 : vector<2x64xf32> to vector<2x64xbf16>
    %cst_360 = arith.constant dense<0.000000e+00> : vector<2x64xf32>
    %829 = tpu.matmul %757, %828, %cst_360 {dimension_numbers = #tpu.dot_dimension_numbers<[1], [0], [0], [1], [0, 0, 1, 1], [], []>} : vector<2x2xbf16>, vector<2x64xbf16>, vector<2x64xf32> -> vector<2x64xf32>
    %830 = arith.truncf %827 : vector<2x64xf32> to vector<2x64xbf16>
    %cst_361 = arith.constant dense<0.000000e+00> : vector<2x64xf32>
    %831 = tpu.matmul %830, %823, %cst_361 {dimension_numbers = #tpu.dot_dimension_numbers<[1], [0], [0], [1], [0, 0, 1, 1], [], []>} : vector<2x64xbf16>, vector<64x64xbf16>, vector<2x64xf32> -> vector<2x64xf32>
    %832 = arith.truncf %818 : vector<2x64xf32> to vector<2x64xbf16>
    %cst_362 = arith.constant dense<0.000000e+00> : vector<2x64xf32>
    %833 = tpu.matmul %832, %824, %cst_362 {dimension_numbers = #tpu.dot_dimension_numbers<[1], [0], [0], [1], [0, 0, 1, 1], [], []>} : vector<2x64xbf16>, vector<64x64xbf16>, vector<2x64xf32> -> vector<2x64xf32>
    %834 = arith.addf %831, %833 : vector<2x64xf32>
    %835 = vector.broadcast %825 : vector<1x64xf32> to vector<2x64xf32>
    %836 = arith.addf %834, %835 : vector<2x64xf32>
    %cst_363 = arith.constant 0.000000e+00 : f32
    %837 = vector.broadcast %cst_363 : f32 to vector<2x64xf32>
    %838 = arith.maximumf %836, %837 : vector<2x64xf32>
    %839 = arith.truncf %829 : vector<2x64xf32> to vector<2x64xbf16>
    %cst_364 = arith.constant dense<0.000000e+00> : vector<2x64xf32>
    %840 = tpu.matmul %839, %823, %cst_364 {dimension_numbers = #tpu.dot_dimension_numbers<[1], [0], [0], [1], [0, 0, 1, 1], [], []>} : vector<2x64xbf16>, vector<64x64xbf16>, vector<2x64xf32> -> vector<2x64xf32>
    %841 = arith.truncf %822 : vector<2x64xf32> to vector<2x64xbf16>
    %cst_365 = arith.constant dense<0.000000e+00> : vector<2x64xf32>
    %842 = tpu.matmul %841, %824, %cst_365 {dimension_numbers = #tpu.dot_dimension_numbers<[1], [0], [0], [1], [0, 0, 1, 1], [], []>} : vector<2x64xbf16>, vector<64x64xbf16>, vector<2x64xf32> -> vector<2x64xf32>
    %843 = arith.addf %840, %842 : vector<2x64xf32>
    %844 = vector.broadcast %825 : vector<1x64xf32> to vector<2x64xf32>
    %845 = arith.addf %843, %844 : vector<2x64xf32>
    %cst_366 = arith.constant 0.000000e+00 : f32
    %846 = vector.broadcast %cst_366 : f32 to vector<2x64xf32>
    %847 = arith.maximumf %845, %846 : vector<2x64xf32>
    %cst_367 = arith.constant dense<0.000000e+00> : vector<64xf32>
    %848 = vector.multi_reduction <add>, %838, %cst_367 [0] : vector<2x64xf32> to vector<64xf32>
    %849 = vector.shape_cast %848 : vector<64xf32> to vector<1x64xf32>
    %cst_368 = arith.constant 0.000000e+00 : f32
    %850 = vector.broadcast %cst_368 : f32 to vector<1x64xf32>
    %851 = arith.addf %850, %849 : vector<1x64xf32>
    %cst_369 = arith.constant dense<0.000000e+00> : vector<64xf32>
    %852 = vector.multi_reduction <add>, %847, %cst_369 [0] : vector<2x64xf32> to vector<64xf32>
    %853 = vector.shape_cast %852 : vector<64xf32> to vector<1x64xf32>
    %854 = arith.addf %851, %853 : vector<1x64xf32>
    %cst_370 = arith.constant 2.500000e-01 : f32
    %855 = vector.broadcast %cst_370 : f32 to vector<1x64xf32>
    %856 = arith.mulf %854, %855 : vector<1x64xf32>
    %857 = vector.broadcast %856 : vector<1x64xf32> to vector<2x64xf32>
    %858 = arith.subf %838, %857 : vector<2x64xf32>
    %859 = arith.mulf %858, %858 : vector<2x64xf32>
    %cst_371 = arith.constant dense<0.000000e+00> : vector<64xf32>
    %860 = vector.multi_reduction <add>, %859, %cst_371 [0] : vector<2x64xf32> to vector<64xf32>
    %861 = vector.shape_cast %860 : vector<64xf32> to vector<1x64xf32>
    %cst_372 = arith.constant 0.000000e+00 : f32
    %862 = vector.broadcast %cst_372 : f32 to vector<1x64xf32>
    %863 = arith.addf %862, %861 : vector<1x64xf32>
    %864 = vector.broadcast %856 : vector<1x64xf32> to vector<2x64xf32>
    %865 = arith.subf %847, %864 : vector<2x64xf32>
    %866 = arith.mulf %865, %865 : vector<2x64xf32>
    %cst_373 = arith.constant dense<0.000000e+00> : vector<64xf32>
    %867 = vector.multi_reduction <add>, %866, %cst_373 [0] : vector<2x64xf32> to vector<64xf32>
    %868 = vector.shape_cast %867 : vector<64xf32> to vector<1x64xf32>
    %869 = arith.addf %863, %868 : vector<1x64xf32>
    %cst_374 = arith.constant 2.500000e-01 : f32
    %870 = vector.broadcast %cst_374 : f32 to vector<1x64xf32>
    %871 = arith.mulf %869, %870 : vector<1x64xf32>
    %cst_375 = arith.constant 9.99999974E-6 : f32
    %872 = vector.broadcast %cst_375 : f32 to vector<1x64xf32>
    %873 = arith.addf %871, %872 : vector<1x64xf32>
    %874 = math.rsqrt %873 : vector<1x64xf32>
    %c0_376 = arith.constant 0 : index
    %c0_377 = arith.constant 0 : index
    %875 = vector.load %arg60[%c0_376, %c0_377] : memref<1x64xf32, #tpu.memory_space<vmem>>, vector<1x64xf32>
    %876 = arith.mulf %874, %875 : vector<1x64xf32>
    %c0_378 = arith.constant 0 : index
    %c0_379 = arith.constant 0 : index
    %877 = vector.load %arg61[%c0_378, %c0_379] : memref<1x64xf32, #tpu.memory_space<vmem>>, vector<1x64xf32>
    %878 = arith.mulf %856, %876 : vector<1x64xf32>
    %879 = arith.subf %877, %878 : vector<1x64xf32>
    %880 = vector.broadcast %876 : vector<1x64xf32> to vector<2x64xf32>
    %881 = arith.mulf %838, %880 : vector<2x64xf32>
    %882 = vector.broadcast %879 : vector<1x64xf32> to vector<2x64xf32>
    %883 = arith.addf %881, %882 : vector<2x64xf32>
    %884 = vector.broadcast %876 : vector<1x64xf32> to vector<2x64xf32>
    %885 = arith.mulf %847, %884 : vector<2x64xf32>
    %886 = vector.broadcast %879 : vector<1x64xf32> to vector<2x64xf32>
    %887 = arith.addf %885, %886 : vector<2x64xf32>
    %c0_380 = arith.constant 0 : index
    %c0_381 = arith.constant 0 : index
    %888 = vector.load %arg62[%c0_380, %c0_381] : memref<128x64xbf16, #tpu.memory_space<vmem>>, vector<64x64xbf16>
    %c64_382 = arith.constant 64 : index
    %c0_383 = arith.constant 0 : index
    %889 = vector.load %arg62[%c64_382, %c0_383] : memref<128x64xbf16, #tpu.memory_space<vmem>>, vector<64x64xbf16>
    %c0_384 = arith.constant 0 : index
    %c0_385 = arith.constant 0 : index
    %890 = vector.load %arg63[%c0_384, %c0_385] : memref<1x64xf32, #tpu.memory_space<vmem>>, vector<1x64xf32>
    %891 = arith.truncf %883 : vector<2x64xf32> to vector<2x64xbf16>
    %cst_386 = arith.constant dense<0.000000e+00> : vector<2x64xf32>
    %892 = tpu.matmul %750, %891, %cst_386 {dimension_numbers = #tpu.dot_dimension_numbers<[1], [0], [0], [1], [0, 0, 1, 1], [], []>} : vector<2x2xbf16>, vector<2x64xbf16>, vector<2x64xf32> -> vector<2x64xf32>
    %893 = arith.truncf %887 : vector<2x64xf32> to vector<2x64xbf16>
    %cst_387 = arith.constant dense<0.000000e+00> : vector<2x64xf32>
    %894 = tpu.matmul %757, %893, %cst_387 {dimension_numbers = #tpu.dot_dimension_numbers<[1], [0], [0], [1], [0, 0, 1, 1], [], []>} : vector<2x2xbf16>, vector<2x64xbf16>, vector<2x64xf32> -> vector<2x64xf32>
    %895 = arith.truncf %892 : vector<2x64xf32> to vector<2x64xbf16>
    %cst_388 = arith.constant dense<0.000000e+00> : vector<2x64xf32>
    %896 = tpu.matmul %895, %888, %cst_388 {dimension_numbers = #tpu.dot_dimension_numbers<[1], [0], [0], [1], [0, 0, 1, 1], [], []>} : vector<2x64xbf16>, vector<64x64xbf16>, vector<2x64xf32> -> vector<2x64xf32>
    %897 = arith.truncf %883 : vector<2x64xf32> to vector<2x64xbf16>
    %cst_389 = arith.constant dense<0.000000e+00> : vector<2x64xf32>
    %898 = tpu.matmul %897, %889, %cst_389 {dimension_numbers = #tpu.dot_dimension_numbers<[1], [0], [0], [1], [0, 0, 1, 1], [], []>} : vector<2x64xbf16>, vector<64x64xbf16>, vector<2x64xf32> -> vector<2x64xf32>
    %899 = arith.addf %896, %898 : vector<2x64xf32>
    %900 = vector.broadcast %890 : vector<1x64xf32> to vector<2x64xf32>
    %901 = arith.addf %899, %900 : vector<2x64xf32>
    %cst_390 = arith.constant 0.000000e+00 : f32
    %902 = vector.broadcast %cst_390 : f32 to vector<2x64xf32>
    %903 = arith.maximumf %901, %902 : vector<2x64xf32>
    %904 = arith.truncf %894 : vector<2x64xf32> to vector<2x64xbf16>
    %cst_391 = arith.constant dense<0.000000e+00> : vector<2x64xf32>
    %905 = tpu.matmul %904, %888, %cst_391 {dimension_numbers = #tpu.dot_dimension_numbers<[1], [0], [0], [1], [0, 0, 1, 1], [], []>} : vector<2x64xbf16>, vector<64x64xbf16>, vector<2x64xf32> -> vector<2x64xf32>
    %906 = arith.truncf %887 : vector<2x64xf32> to vector<2x64xbf16>
    %cst_392 = arith.constant dense<0.000000e+00> : vector<2x64xf32>
    %907 = tpu.matmul %906, %889, %cst_392 {dimension_numbers = #tpu.dot_dimension_numbers<[1], [0], [0], [1], [0, 0, 1, 1], [], []>} : vector<2x64xbf16>, vector<64x64xbf16>, vector<2x64xf32> -> vector<2x64xf32>
    %908 = arith.addf %905, %907 : vector<2x64xf32>
    %909 = vector.broadcast %890 : vector<1x64xf32> to vector<2x64xf32>
    %910 = arith.addf %908, %909 : vector<2x64xf32>
    %cst_393 = arith.constant 0.000000e+00 : f32
    %911 = vector.broadcast %cst_393 : f32 to vector<2x64xf32>
    %912 = arith.maximumf %910, %911 : vector<2x64xf32>
    %cst_394 = arith.constant dense<0.000000e+00> : vector<64xf32>
    %913 = vector.multi_reduction <add>, %903, %cst_394 [0] : vector<2x64xf32> to vector<64xf32>
    %914 = vector.shape_cast %913 : vector<64xf32> to vector<1x64xf32>
    %cst_395 = arith.constant 0.000000e+00 : f32
    %915 = vector.broadcast %cst_395 : f32 to vector<1x64xf32>
    %916 = arith.addf %915, %914 : vector<1x64xf32>
    %cst_396 = arith.constant dense<0.000000e+00> : vector<64xf32>
    %917 = vector.multi_reduction <add>, %912, %cst_396 [0] : vector<2x64xf32> to vector<64xf32>
    %918 = vector.shape_cast %917 : vector<64xf32> to vector<1x64xf32>
    %919 = arith.addf %916, %918 : vector<1x64xf32>
    %cst_397 = arith.constant 2.500000e-01 : f32
    %920 = vector.broadcast %cst_397 : f32 to vector<1x64xf32>
    %921 = arith.mulf %919, %920 : vector<1x64xf32>
    %922 = vector.broadcast %921 : vector<1x64xf32> to vector<2x64xf32>
    %923 = arith.subf %903, %922 : vector<2x64xf32>
    %924 = arith.mulf %923, %923 : vector<2x64xf32>
    %cst_398 = arith.constant dense<0.000000e+00> : vector<64xf32>
    %925 = vector.multi_reduction <add>, %924, %cst_398 [0] : vector<2x64xf32> to vector<64xf32>
    %926 = vector.shape_cast %925 : vector<64xf32> to vector<1x64xf32>
    %cst_399 = arith.constant 0.000000e+00 : f32
    %927 = vector.broadcast %cst_399 : f32 to vector<1x64xf32>
    %928 = arith.addf %927, %926 : vector<1x64xf32>
    %929 = vector.broadcast %921 : vector<1x64xf32> to vector<2x64xf32>
    %930 = arith.subf %912, %929 : vector<2x64xf32>
    %931 = arith.mulf %930, %930 : vector<2x64xf32>
    %cst_400 = arith.constant dense<0.000000e+00> : vector<64xf32>
    %932 = vector.multi_reduction <add>, %931, %cst_400 [0] : vector<2x64xf32> to vector<64xf32>
    %933 = vector.shape_cast %932 : vector<64xf32> to vector<1x64xf32>
    %934 = arith.addf %928, %933 : vector<1x64xf32>
    %cst_401 = arith.constant 2.500000e-01 : f32
    %935 = vector.broadcast %cst_401 : f32 to vector<1x64xf32>
    %936 = arith.mulf %934, %935 : vector<1x64xf32>
    %cst_402 = arith.constant 9.99999974E-6 : f32
    %937 = vector.broadcast %cst_402 : f32 to vector<1x64xf32>
    %938 = arith.addf %936, %937 : vector<1x64xf32>
    %939 = math.rsqrt %938 : vector<1x64xf32>
    %c0_403 = arith.constant 0 : index
    %c0_404 = arith.constant 0 : index
    %940 = vector.load %arg64[%c0_403, %c0_404] : memref<1x64xf32, #tpu.memory_space<vmem>>, vector<1x64xf32>
    %941 = arith.mulf %939, %940 : vector<1x64xf32>
    %c0_405 = arith.constant 0 : index
    %c0_406 = arith.constant 0 : index
    %942 = vector.load %arg65[%c0_405, %c0_406] : memref<1x64xf32, #tpu.memory_space<vmem>>, vector<1x64xf32>
    %943 = arith.mulf %921, %941 : vector<1x64xf32>
    %944 = arith.subf %942, %943 : vector<1x64xf32>
    %945 = vector.broadcast %941 : vector<1x64xf32> to vector<2x64xf32>
    %946 = arith.mulf %903, %945 : vector<2x64xf32>
    %947 = vector.broadcast %944 : vector<1x64xf32> to vector<2x64xf32>
    %948 = arith.addf %946, %947 : vector<2x64xf32>
    %949 = vector.broadcast %941 : vector<1x64xf32> to vector<2x64xf32>
    %950 = arith.mulf %912, %949 : vector<2x64xf32>
    %951 = vector.broadcast %944 : vector<1x64xf32> to vector<2x64xf32>
    %952 = arith.addf %950, %951 : vector<2x64xf32>
    %953 = tpu.concatenate %818, %883, %948 in 1 : vector<2x64xf32>, vector<2x64xf32>, vector<2x64xf32> -> vector<2x192xf32>
    %954 = tpu.concatenate %822, %887, %952 in 1 : vector<2x64xf32>, vector<2x64xf32>, vector<2x64xf32> -> vector<2x192xf32>
    %c0_407 = arith.constant 0 : index
    %c0_408 = arith.constant 0 : index
    %955 = vector.load %arg66[%c0_407, %c0_408] : memref<192x64xbf16, #tpu.memory_space<vmem>>, vector<192x64xbf16>
    %c0_409 = arith.constant 0 : index
    %c0_410 = arith.constant 0 : index
    %956 = vector.load %arg67[%c0_409, %c0_410] : memref<1x64xf32, #tpu.memory_space<vmem>>, vector<1x64xf32>
    %c0_411 = arith.constant 0 : index
    %c0_412 = arith.constant 0 : index
    %957 = vector.load %arg68[%c0_411, %c0_412] : memref<64x4xbf16, #tpu.memory_space<vmem>>, vector<64x4xbf16>
    %c0_413 = arith.constant 0 : index
    %c0_414 = arith.constant 0 : index
    %958 = vector.load %arg69[%c0_413, %c0_414] : memref<1x4xf32, #tpu.memory_space<vmem>>, vector<1x4xf32>
    %cst_415 = arith.constant dense<0.000000e+00> : vector<192xf32>
    %959 = vector.multi_reduction <add>, %953, %cst_415 [0] : vector<2x192xf32> to vector<192xf32>
    %960 = vector.shape_cast %959 : vector<192xf32> to vector<1x192xf32>
    %cst_416 = arith.constant 2.000000e+00 : f32
    %961 = vector.broadcast %cst_416 : f32 to vector<1x192xf32>
    %962 = arith.divf %960, %961 : vector<1x192xf32>
    %963 = arith.truncf %962 : vector<1x192xf32> to vector<1x192xbf16>
    %cst_417 = arith.constant dense<0.000000e+00> : vector<1x64xf32>
    %964 = tpu.matmul %963, %955, %cst_417 {dimension_numbers = #tpu.dot_dimension_numbers<[1], [0], [0], [1], [0, 0, 1, 1], [], []>} : vector<1x192xbf16>, vector<192x64xbf16>, vector<1x64xf32> -> vector<1x64xf32>
    %965 = arith.addf %964, %956 : vector<1x64xf32>
    %cst_418 = arith.constant 0.000000e+00 : f32
    %966 = vector.broadcast %cst_418 : f32 to vector<1x64xf32>
    %967 = arith.maximumf %965, %966 : vector<1x64xf32>
    %968 = arith.truncf %967 : vector<1x64xf32> to vector<1x64xbf16>
    %cst_419 = arith.constant dense<0.000000e+00> : vector<1x4xf32>
    %969 = tpu.matmul %968, %957, %cst_419 {dimension_numbers = #tpu.dot_dimension_numbers<[1], [0], [0], [1], [0, 0, 1, 1], [], []>} : vector<1x64xbf16>, vector<64x4xbf16>, vector<1x4xf32> -> vector<1x4xf32>
    %970 = arith.addf %969, %958 : vector<1x4xf32>
    %cst_420 = arith.constant dense<0xFF800000> : vector<1xf32>
    %971 = vector.multi_reduction <maximumf>, %970, %cst_420 [1] : vector<1x4xf32> to vector<1xf32>
    %972 = vector.shape_cast %971 : vector<1xf32> to vector<1x1xf32>
    %973 = vector.broadcast %972 : vector<1x1xf32> to vector<1x4xf32>
    %974 = arith.subf %970, %973 : vector<1x4xf32>
    %975 = math.exp %974 : vector<1x4xf32>
    %cst_421 = arith.constant dense<0.000000e+00> : vector<1xf32>
    %976 = vector.multi_reduction <add>, %975, %cst_421 [1] : vector<1x4xf32> to vector<1xf32>
    %977 = vector.shape_cast %976 : vector<1xf32> to vector<1x1xf32>
    %978 = math.log %977 : vector<1x1xf32>
    %979 = vector.broadcast %978 : vector<1x1xf32> to vector<1x4xf32>
    %980 = arith.subf %974, %979 : vector<1x4xf32>
    %c0_422 = arith.constant 0 : index
    %c0_423 = arith.constant 0 : index
    %c0_424 = arith.constant 0 : index
    %981 = vector.load %arg70[%c0_422, %c0_423, %c0_424] : memref<2x1x4xf32, #tpu.memory_space<vmem>>, vector<1x1x4xf32>
    %982 = vector.shape_cast %981 : vector<1x1x4xf32> to vector<1x4xf32>
    %983 = vector.shape_cast %980 : vector<1x4xf32> to vector<1x1x4xf32>
    tpu.vector_store %arg70[%c0_422, %c0_423, %c0_424], %983 {strides = array<i32>} : memref<2x1x4xf32, #tpu.memory_space<vmem>>, vector<1x1x4xf32>,
    %cst_425 = arith.constant dense<0.000000e+00> : vector<192xf32>
    %984 = vector.multi_reduction <add>, %954, %cst_425 [0] : vector<2x192xf32> to vector<192xf32>
    %985 = vector.shape_cast %984 : vector<192xf32> to vector<1x192xf32>
    %cst_426 = arith.constant 2.000000e+00 : f32
    %986 = vector.broadcast %cst_426 : f32 to vector<1x192xf32>
    %987 = arith.divf %985, %986 : vector<1x192xf32>
    %988 = arith.truncf %987 : vector<1x192xf32> to vector<1x192xbf16>
    %cst_427 = arith.constant dense<0.000000e+00> : vector<1x64xf32>
    %989 = tpu.matmul %988, %955, %cst_427 {dimension_numbers = #tpu.dot_dimension_numbers<[1], [0], [0], [1], [0, 0, 1, 1], [], []>} : vector<1x192xbf16>, vector<192x64xbf16>, vector<1x64xf32> -> vector<1x64xf32>
    %990 = arith.addf %989, %956 : vector<1x64xf32>
    %cst_428 = arith.constant 0.000000e+00 : f32
    %991 = vector.broadcast %cst_428 : f32 to vector<1x64xf32>
    %992 = arith.maximumf %990, %991 : vector<1x64xf32>
    %993 = arith.truncf %992 : vector<1x64xf32> to vector<1x64xbf16>
    %cst_429 = arith.constant dense<0.000000e+00> : vector<1x4xf32>
    %994 = tpu.matmul %993, %957, %cst_429 {dimension_numbers = #tpu.dot_dimension_numbers<[1], [0], [0], [1], [0, 0, 1, 1], [], []>} : vector<1x64xbf16>, vector<64x4xbf16>, vector<1x4xf32> -> vector<1x4xf32>
    %995 = arith.addf %994, %958 : vector<1x4xf32>
    %cst_430 = arith.constant dense<0xFF800000> : vector<1xf32>
    %996 = vector.multi_reduction <maximumf>, %995, %cst_430 [1] : vector<1x4xf32> to vector<1xf32>
    %997 = vector.shape_cast %996 : vector<1xf32> to vector<1x1xf32>
    %998 = vector.broadcast %997 : vector<1x1xf32> to vector<1x4xf32>
    %999 = arith.subf %995, %998 : vector<1x4xf32>
    %1000 = math.exp %999 : vector<1x4xf32>
    %cst_431 = arith.constant dense<0.000000e+00> : vector<1xf32>
    %1001 = vector.multi_reduction <add>, %1000, %cst_431 [1] : vector<1x4xf32> to vector<1xf32>
    %1002 = vector.shape_cast %1001 : vector<1xf32> to vector<1x1xf32>
    %1003 = math.log %1002 : vector<1x1xf32>
    %1004 = vector.broadcast %1003 : vector<1x1xf32> to vector<1x4xf32>
    %1005 = arith.subf %999, %1004 : vector<1x4xf32>
    %c1_432 = arith.constant 1 : index
    %c0_433 = arith.constant 0 : index
    %c0_434 = arith.constant 0 : index
    %1006 = vector.load %arg70[%c1_432, %c0_433, %c0_434] : memref<2x1x4xf32, #tpu.memory_space<vmem>>, vector<1x1x4xf32>
    %1007 = vector.shape_cast %1006 : vector<1x1x4xf32> to vector<1x4xf32>
    %1008 = vector.shape_cast %1005 : vector<1x4xf32> to vector<1x1x4xf32>
    tpu.vector_store %arg70[%c1_432, %c0_433, %c0_434], %1008 {strides = array<i32>} : memref<2x1x4xf32, #tpu.memory_space<vmem>>, vector<1x1x4xf32>,
    %1009 = arith.addf %373, %741 : vector<1x1xf32>
    %c0_435 = arith.constant 0 : index
    %c0_436 = arith.constant 0 : index
    %1010 = vector.load %arg71[%c0_435, %c0_436] : memref<1x1xf32, #tpu.memory_space<vmem>>, vector<1x1xf32>
    tpu.vector_store %arg71[%c0_435, %c0_436], %1009 {strides = array<i32>} : memref<1x1xf32, #tpu.memory_space<vmem>>, vector<1x1xf32>,
    %1011 = arith.addf %375, %743 : vector<1x1xf32>
    %c0_437 = arith.constant 0 : index
    %c0_438 = arith.constant 0 : index
    %1012 = vector.load %arg72[%c0_437, %c0_438] : memref<1x1xf32, #tpu.memory_space<vmem>>, vector<1x1xf32>
    tpu.vector_store %arg72[%c0_437, %c0_438], %1011 {strides = array<i32>} : memref<1x1xf32, #tpu.memory_space<vmem>>, vector<1x1xf32>,
    return
  }
}

</mosaic_0001>

<llo_original>
// kernel: net_forward.1
$region0: #{net_forward.1}
  #allocation0 [shape = 'u32[]', space=smem, size = 0x4, offset = 0x4, fixed_abs, tag = 'smem constant byte address 0x4 - core index']
  #allocation1 [shape = 'u32[144,128]{1,0:T(1,128)}', space=vmem, size = 0x12000, scoped, tag = 'internal scratch']
  %s0 = inlined_call_operand.smem [shape: u32[73], index: -1, kind: input, shape index: {}]
  %s1 = sld [smem:[%s0]]
  %s2 = scalar_lea.smem %s0, 1
  %s3 = sld [smem:[%s2]]
  %s4 = scalar_lea.smem %s0, 2
  %s5 = sld [smem:[%s4]]
  %s6 = scalar_lea.smem %s0, 3
  %s7 = sld [smem:[%s6]]
  %s8 = scalar_lea.smem %s0, 4
  %s9 = sld [smem:[%s8]]
  %s10 = scalar_lea.smem %s0, 5
  %s11 = sld [smem:[%s10]]
  %s12 = scalar_lea.smem %s0, 6
  %s13 = sld [smem:[%s12]]
  %s14 = scalar_lea.smem %s0, 7
  %s15 = sld [smem:[%s14]]
  %s16 = scalar_lea.smem %s0, 8
  %s17 = sld [smem:[%s16]]
  %s18 = scalar_lea.smem %s0, 9
  %s19 = sld [smem:[%s18]]
  %s20 = scalar_lea.smem %s0, 10
  %s21 = sld [smem:[%s20]]
  %s22 = scalar_lea.smem %s0, 11
  %s23 = sld [smem:[%s22]]
  %s24 = scalar_lea.smem %s0, 12
  %s25 = sld [smem:[%s24]]
  %s26 = scalar_lea.smem %s0, 13
  %s27 = sld [smem:[%s26]]
  %s28 = scalar_lea.smem %s0, 14
  %s29 = sld [smem:[%s28]]
  %s30 = scalar_lea.smem %s0, 15
  %s31 = sld [smem:[%s30]]
  %s32 = scalar_lea.smem %s0, 16
  %s33 = sld [smem:[%s32]]
  %s34 = scalar_lea.smem %s0, 17
  %s35 = sld [smem:[%s34]]
  %s36 = scalar_lea.smem %s0, 18
  %s37 = sld [smem:[%s36]]
  %s38 = scalar_lea.smem %s0, 19
  %s39 = sld [smem:[%s38]]
  %s40 = scalar_lea.smem %s0, 20
  %s41 = sld [smem:[%s40]]
  %s42 = scalar_lea.smem %s0, 21
  %s43 = sld [smem:[%s42]]
  %s44 = scalar_lea.smem %s0, 22
  %s45 = sld [smem:[%s44]]
  %s46 = scalar_lea.smem %s0, 23
  %s47 = sld [smem:[%s46]]
  %s48 = scalar_lea.smem %s0, 24
  %s49 = sld [smem:[%s48]]
  %s50 = scalar_lea.smem %s0, 25
  %s51 = sld [smem:[%s50]]
  %s52 = scalar_lea.smem %s0, 26
  %s53 = sld [smem:[%s52]]
  %s54 = scalar_lea.smem %s0, 27
  %s55 = sld [smem:[%s54]]
  %s56 = scalar_lea.smem %s0, 28
  %s57 = sld [smem:[%s56]]
  %s58 = scalar_lea.smem %s0, 29
  %s59 = sld [smem:[%s58]]
  %s60 = scalar_lea.smem %s0, 30
  %s61 = sld [smem:[%s60]]
  %s62 = scalar_lea.smem %s0, 31
  %s63 = sld [smem:[%s62]]
  %s64 = scalar_lea.smem %s0, 32
  %s65 = sld [smem:[%s64]]
  %s66 = scalar_lea.smem %s0, 33
  %s67 = sld [smem:[%s66]]
  %s68 = scalar_lea.smem %s0, 34
  %s69 = sld [smem:[%s68]]
  %s70 = scalar_lea.smem %s0, 35
  %s71 = sld [smem:[%s70]]
  %s72 = scalar_lea.smem %s0, 36
  %s73 = sld [smem:[%s72]]
  %s74 = scalar_lea.smem %s0, 37
  %s75 = sld [smem:[%s74]]
  %s76 = scalar_lea.smem %s0, 38
  %s77 = sld [smem:[%s76]]
  %s78 = scalar_lea.smem %s0, 39
  %s79 = sld [smem:[%s78]]
  %s80 = scalar_lea.smem %s0, 40
  %s81 = sld [smem:[%s80]]
  %s82 = scalar_lea.smem %s0, 41
  %s83 = sld [smem:[%s82]]
  %s84 = scalar_lea.smem %s0, 42
  %s85 = sld [smem:[%s84]]
  %s86 = scalar_lea.smem %s0, 43
  %s87 = sld [smem:[%s86]]
  %s88 = scalar_lea.smem %s0, 44
  %s89 = sld [smem:[%s88]]
  %s90 = scalar_lea.smem %s0, 45
  %s91 = sld [smem:[%s90]]
  %s92 = scalar_lea.smem %s0, 46
  %s93 = sld [smem:[%s92]]
  %s94 = scalar_lea.smem %s0, 47
  %s95 = sld [smem:[%s94]]
  %s96 = scalar_lea.smem %s0, 48
  %s97 = sld [smem:[%s96]]
  %s98 = scalar_lea.smem %s0, 49
  %s99 = sld [smem:[%s98]]
  %s100 = scalar_lea.smem %s0, 50
  %s101 = sld [smem:[%s100]]
  %s102 = scalar_lea.smem %s0, 51
  %s103 = sld [smem:[%s102]]
  %s104 = scalar_lea.smem %s0, 52
  %s105 = sld [smem:[%s104]]
  %s106 = scalar_lea.smem %s0, 53
  %s107 = sld [smem:[%s106]]
  %s108 = scalar_lea.smem %s0, 54
  %s109 = sld [smem:[%s108]]
  %s110 = scalar_lea.smem %s0, 55
  %s111 = sld [smem:[%s110]]
  %s112 = scalar_lea.smem %s0, 56
  %s113 = sld [smem:[%s112]]
  %s114 = scalar_lea.smem %s0, 57
  %s115 = sld [smem:[%s114]]
  %s116 = scalar_lea.smem %s0, 58
  %s117 = sld [smem:[%s116]]
  %s118 = scalar_lea.smem %s0, 59
  %s119 = sld [smem:[%s118]]
  %s120 = scalar_lea.smem %s0, 60
  %s121 = sld [smem:[%s120]]
  %s122 = scalar_lea.smem %s0, 61
  %s123 = sld [smem:[%s122]]
  %s124 = scalar_lea.smem %s0, 62
  %s125 = sld [smem:[%s124]]
  %s126 = scalar_lea.smem %s0, 63
  %s127 = sld [smem:[%s126]]
  %s128 = scalar_lea.smem %s0, 64
  %s129 = sld [smem:[%s128]]
  %s130 = scalar_lea.smem %s0, 65
  %s131 = sld [smem:[%s130]]
  %s132 = scalar_lea.smem %s0, 66
  %s133 = sld [smem:[%s132]]
  %s134 = scalar_lea.smem %s0, 67
  %s135 = sld [smem:[%s134]]
  %s136 = scalar_lea.smem %s0, 68
  %s137 = sld [smem:[%s136]]
  %s138 = scalar_lea.smem %s0, 69
  %s139 = sld [smem:[%s138]]
  %s140 = scalar_lea.smem %s0, 70
  %s141 = sld [smem:[%s140]]
  %s142 = scalar_lea.smem %s0, 71
  %s143 = sld [smem:[%s142]]
  %s144 = scalar_lea.smem %s0, 72
  %s145 = sld [smem:[%s144]]
  %146 = xla_tuple %s141, %s143, %s145
  %s147 = sld [smem:[#allocation0]]
  $region362: #{net_forward.1} parent=0
    _
  %s149 = ssub.s32 1, %s147
  %s150 = scalar_select 0, %s149, %s147
  $region1: #{net_forward.1} parent=0
    #allocation2 [shape = 'u8[512]{0}', space=vmem, size = 0x400, scoped, tag = 'input window, operand 51, single buffered']
    #allocation3 [shape = 's32[1]{0}', space=sflag, size = 0x4, scoped, tag = 'scoped memory for net_forward.1']
    #allocation4 [shape = 's32[1]{0}', space=sflag, size = 0x4, scoped, tag = 'scoped memory for net_forward.1']
    #allocation5 [shape = 'u8[512]{0}', space=vmem, size = 0x400, scoped, tag = 'input window, operand 52, single buffered']
    #allocation6 [shape = 's32[1]{0}', space=sflag, size = 0x4, scoped, tag = 'scoped memory for net_forward.1']
    #allocation7 [shape = 'u8[512]{0}', space=vmem, size = 0x400, scoped, tag = 'input window, operand 53, single buffered']
    #allocation8 [shape = 'u8[512]{0}', space=vmem, size = 0x400, scoped, tag = 'input window, operand 55, single buffered']
    #allocation9 [shape = 's32[1]{0}', space=sflag, size = 0x4, scoped, tag = 'scoped memory for net_forward.1']
    #allocation10 [shape = 'u8[512]{0}', space=vmem, size = 0x400, scoped, tag = 'input window, operand 56, single buffered']
    #allocation11 [shape = 'u8[512]{0}', space=vmem, size = 0x400, scoped, tag = 'input window, operand 57, single buffered']
    #allocation12 [shape = 's32[1]{0}', space=sflag, size = 0x4, scoped, tag = 'scoped memory for net_forward.1']
    #allocation13 [shape = 'u8[512]{0}', space=vmem, size = 0x400, scoped, tag = 'input window, operand 59, single buffered']
    #allocation14 [shape = 'u8[512]{0}', space=vmem, size = 0x400, scoped, tag = 'input window, operand 60, single buffered']
    #allocation15 [shape = 's32[1]{0}', space=sflag, size = 0x4, scoped, tag = 'scoped memory for net_forward.1']
    #allocation16 [shape = 'u8[512]{0}', space=vmem, size = 0x400, scoped, tag = 'input window, operand 61, single buffered']
    #allocation17 [shape = 'u8[512]{0}', space=vmem, size = 0x400, scoped, tag = 'input window, operand 63, single buffered']
    #allocation18 [shape = 's32[1]{0}', space=sflag, size = 0x4, scoped, tag = 'scoped memory for net_forward.1']
    #allocation19 [shape = 'u8[512]{0}', space=vmem, size = 0x400, scoped, tag = 'input window, operand 64, single buffered']
    #allocation20 [shape = 'u8[512]{0}', space=vmem, size = 0x400, scoped, tag = 'input window, operand 65, single buffered']
    #allocation21 [shape = 's32[1]{0}', space=sflag, size = 0x4, scoped, tag = 'scoped memory for net_forward.1']
    #allocation22 [shape = 'u8[512]{0}', space=vmem, size = 0x400, scoped, tag = 'input window, operand 67, single buffered']
    #allocation23 [shape = 'u8[512]{0}', space=vmem, size = 0x400, scoped, tag = 'input window, operand 69, single buffered']
    #allocation24 [shape = 's32[1]{0}', space=sflag, size = 0x4, scoped, tag = 'scoped memory for net_forward.1']
    #allocation25 [shape = 'u8[1024]{0}', space=vmem, size = 0x400, scoped, tag = 'output window, operand 0, single buffered']
    #allocation26 [shape = 'u8[512]{0}', space=vmem, size = 0x400, scoped, tag = 'output window, operand 1, single buffered']
    #allocation27 [shape = 's32[1]{0}', space=sflag, size = 0x4, scoped, tag = 'scoped memory for net_forward.1']
    #allocation28 [shape = 'u8[512]{0}', space=vmem, size = 0x400, scoped, tag = 'output window, operand 2, single buffered']
    %151 = vsyncpa [#allocation3], 0
    %152 = vsyncpa [#allocation6], 0
    %153 = vsyncpa [#allocation9], 0
    %154 = vsyncpa [#allocation12], 0
    %155 = vsyncpa [#allocation15], 0
    %156 = vsyncpa [#allocation18], 0
    %157 = vsyncpa [#allocation21], 0
    %158 = vsyncpa [#allocation24], 0
    %159 = vsyncpa [#allocation4], 0
    %160 = vsyncpa [#allocation27], 0
    // Predicated region
    $region2: #{net_forward.1} parent=1 // pred_check
      _
    $region3: #{net_forward.1} parent=1 // pred_check_branch
      %162 = sbr.rel (0) target = $region5
    $region4: #{net_forward.1} parent=1 // pred_region
      _
    $region5: #{net_forward.1} parent=1 // pred_fallthru
      _
    // Predicated region
    $region6: #{net_forward.1} parent=1 // pred_check
      _
    $region7: #{net_forward.1} parent=1 // pred_check_branch
      %164 = sbr.rel (0) target = $region9
    $region8: #{net_forward.1} parent=1 // pred_region
      _
    $region9: #{net_forward.1} parent=1 // pred_fallthru
      _
    // Predicated region
    $region10: #{net_forward.1} parent=1 // pred_check
      _
    $region11: #{net_forward.1} parent=1 // pred_check_branch
      %166 = sbr.rel (0) target = $region13
    $region12: #{net_forward.1} parent=1 // pred_region
      _
    $region13: #{net_forward.1} parent=1 // pred_fallthru
      _
    // Predicated region
    $region14: #{net_forward.1} parent=1 // pred_check
      _
    $region15: #{net_forward.1} parent=1 // pred_check_branch
      %168 = sbr.rel (0) target = $region17
    $region16: #{net_forward.1} parent=1 // pred_region
      _
    $region17: #{net_forward.1} parent=1 // pred_fallthru
      _
    // Predicated region
    $region18: #{net_forward.1} parent=1 // pred_check
      _
    $region19: #{net_forward.1} parent=1 // pred_check_branch
      %170 = sbr.rel (0) target = $region21
    $region20: #{net_forward.1} parent=1 // pred_region
      _
    $region21: #{net_forward.1} parent=1 // pred_fallthru
      _
    // Predicated region
    $region22: #{net_forward.1} parent=1 // pred_check
      _
    $region23: #{net_forward.1} parent=1 // pred_check_branch
      %172 = sbr.rel (0) target = $region25
    $region24: #{net_forward.1} parent=1 // pred_region
      _
    $region25: #{net_forward.1} parent=1 // pred_fallthru
      _
    // Predicated region
    $region26: #{net_forward.1} parent=1 // pred_check
      _
    $region27: #{net_forward.1} parent=1 // pred_check_branch
      %174 = sbr.rel (0) target = $region29
    $region28: #{net_forward.1} parent=1 // pred_region
      _
    $region29: #{net_forward.1} parent=1 // pred_fallthru
      _
    // Predicated region
    $region30: #{net_forward.1} parent=1 // pred_check
      _
    $region31: #{net_forward.1} parent=1 // pred_check_branch
      %176 = sbr.rel (0) target = $region33
    $region32: #{net_forward.1} parent=1 // pred_region
      _
    $region33: #{net_forward.1} parent=1 // pred_fallthru
      _
    // Predicated region
    $region34: #{net_forward.1} parent=1 // pred_check
      _
    $region35: #{net_forward.1} parent=1 // pred_check_branch
      %178 = sbr.rel (0) target = $region37
    $region36: #{net_forward.1} parent=1 // pred_region
      _
    $region37: #{net_forward.1} parent=1 // pred_fallthru
      _
    // Predicated region
    $region38: #{net_forward.1} parent=1 // pred_check
      _
    $region39: #{net_forward.1} parent=1 // pred_check_branch
      %180 = sbr.rel (0) target = $region41
    $region40: #{net_forward.1} parent=1 // pred_region
      _
    $region41: #{net_forward.1} parent=1 // pred_fallthru
      _
    // Predicated region
    $region42: #{net_forward.1} parent=1 // pred_check
      _
    $region43: #{net_forward.1} parent=1 // pred_check_branch
      %182 = sbr.rel (0) target = $region45
    $region44: #{net_forward.1} parent=1 // pred_region
      _
    $region45: #{net_forward.1} parent=1 // pred_fallthru
      _
    // Predicated region
    $region46: #{net_forward.1} parent=1 // pred_check
      _
    $region47: #{net_forward.1} parent=1 // pred_check_branch
      %184 = sbr.rel (0) target = $region49
    $region48: #{net_forward.1} parent=1 // pred_region
      _
    $region49: #{net_forward.1} parent=1 // pred_fallthru
      _
    // Predicated region
    $region50: #{net_forward.1} parent=1 // pred_check
      _
    $region51: #{net_forward.1} parent=1 // pred_check_branch
      %186 = sbr.rel (0) target = $region53
    $region52: #{net_forward.1} parent=1 // pred_region
      _
    $region53: #{net_forward.1} parent=1 // pred_fallthru
      _
    // Predicated region
    $region54: #{net_forward.1} parent=1 // pred_check
      _
    $region55: #{net_forward.1} parent=1 // pred_check_branch
      %188 = sbr.rel (0) target = $region57
    $region56: #{net_forward.1} parent=1 // pred_region
      _
    $region57: #{net_forward.1} parent=1 // pred_fallthru
      _
    // Predicated region
    $region58: #{net_forward.1} parent=1 // pred_check
      _
    $region59: #{net_forward.1} parent=1 // pred_check_branch
      %190 = sbr.rel (0) target = $region61
    $region60: #{net_forward.1} parent=1 // pred_region
      _
    $region61: #{net_forward.1} parent=1 // pred_fallthru
      _
    // Predicated region
    $region62: #{net_forward.1} parent=1 // pred_check
      _
    $region63: #{net_forward.1} parent=1 // pred_check_branch
      %192 = sbr.rel (0) target = $region65
    $region64: #{net_forward.1} parent=1 // pred_region
      _
    $region65: #{net_forward.1} parent=1 // pred_fallthru
      _
    // Predicated region
    $region66: #{net_forward.1} parent=1 // pred_check
      _
    $region67: #{net_forward.1} parent=1 // pred_check_branch
      %194 = sbr.rel (0) target = $region69
    $region68: #{net_forward.1} parent=1 // pred_region
      _
    $region69: #{net_forward.1} parent=1 // pred_fallthru
      _
    // Predicated region
    $region70: #{net_forward.1} parent=1 // pred_check
      _
    $region71: #{net_forward.1} parent=1 // pred_check_branch
      %196 = sbr.rel (0) target = $region73
    $region72: #{net_forward.1} parent=1 // pred_region
      _
    $region73: #{net_forward.1} parent=1 // pred_fallthru
      _
    // Predicated region
    $region74: #{net_forward.1} parent=1 // pred_check
      _
    $region75: #{net_forward.1} parent=1 // pred_check_branch
      %198 = sbr.rel (0) target = $region77
    $region76: #{net_forward.1} parent=1 // pred_region
      _
    $region77: #{net_forward.1} parent=1 // pred_fallthru
      _
    // Predicated region
    $region78: #{net_forward.1} parent=1 // pred_check
      _
    $region79: #{net_forward.1} parent=1 // pred_check_branch
      %200 = sbr.rel (0) target = $region81
    $region80: #{net_forward.1} parent=1 // pred_region
      _
    $region81: #{net_forward.1} parent=1 // pred_fallthru
      _
    // Predicated region
    $region82: #{net_forward.1} parent=1 // pred_check
      _
    $region83: #{net_forward.1} parent=1 // pred_check_branch
      %202 = sbr.rel (0) target = $region85
    $region84: #{net_forward.1} parent=1 // pred_region
      _
    $region85: #{net_forward.1} parent=1 // pred_fallthru
      _
    // Predicated region
    $region86: #{net_forward.1} parent=1 // pred_check
      _
    $region87: #{net_forward.1} parent=1 // pred_check_branch
      %204 = sbr.rel (0) target = $region89
    $region88: #{net_forward.1} parent=1 // pred_region
      _
    $region89: #{net_forward.1} parent=1 // pred_fallthru
      _
    // Predicated region
    $region90: #{net_forward.1} parent=1 // pred_check
      _
    $region91: #{net_forward.1} parent=1 // pred_check_branch
      %206 = sbr.rel (0) target = $region93
    $region92: #{net_forward.1} parent=1 // pred_region
      _
    $region93: #{net_forward.1} parent=1 // pred_fallthru
      _
    // Predicated region
    $region94: #{net_forward.1} parent=1 // pred_check
      _
    $region95: #{net_forward.1} parent=1 // pred_check_branch
      %208 = sbr.rel (0) target = $region97
    $region96: #{net_forward.1} parent=1 // pred_region
      _
    $region97: #{net_forward.1} parent=1 // pred_fallthru
      _
    // Predicated region
    $region98: #{net_forward.1} parent=1 // pred_check
      _
    $region99: #{net_forward.1} parent=1 // pred_check_branch
      %210 = sbr.rel (0) target = $region101
    $region100: #{net_forward.1} parent=1 // pred_region
      _
    $region101: #{net_forward.1} parent=1 // pred_fallthru
      _
    // Predicated region
    $region102: #{net_forward.1} parent=1 // pred_check
      _
    $region103: #{net_forward.1} parent=1 // pred_check_branch
      %212 = sbr.rel (0) target = $region105
    $region104: #{net_forward.1} parent=1 // pred_region
      _
    $region105: #{net_forward.1} parent=1 // pred_fallthru
      _
    // Predicated region
    $region106: #{net_forward.1} parent=1 // pred_check
      _
    $region107: #{net_forward.1} parent=1 // pred_check_branch
      %214 = sbr.rel (0) target = $region109
    $region108: #{net_forward.1} parent=1 // pred_region
      _
    $region109: #{net_forward.1} parent=1 // pred_fallthru
      _
    // Predicated region
    $region110: #{net_forward.1} parent=1 // pred_check
      _
    $region111: #{net_forward.1} parent=1 // pred_check_branch
      %216 = sbr.rel (0) target = $region113
    $region112: #{net_forward.1} parent=1 // pred_region
      _
    $region113: #{net_forward.1} parent=1 // pred_fallthru
      _
    // Predicated region
    $region114: #{net_forward.1} parent=1 // pred_check
      _
    $region115: #{net_forward.1} parent=1 // pred_check_branch
      %218 = sbr.rel (0) target = $region117
    $region116: #{net_forward.1} parent=1 // pred_region
      _
    $region117: #{net_forward.1} parent=1 // pred_fallthru
      _
    // Predicated region
    $region118: #{net_forward.1} parent=1 // pred_check
      _
    $region119: #{net_forward.1} parent=1 // pred_check_branch
      %220 = sbr.rel (0) target = $region121
    $region120: #{net_forward.1} parent=1 // pred_region
      _
    $region121: #{net_forward.1} parent=1 // pred_fallthru
      _
    // Predicated region
    $region122: #{net_forward.1} parent=1 // pred_check
      _
    $region123: #{net_forward.1} parent=1 // pred_check_branch
      %222 = sbr.rel (0) target = $region125
    $region124: #{net_forward.1} parent=1 // pred_region
      _
    $region125: #{net_forward.1} parent=1 // pred_fallthru
      _
    // Predicated region
    $region126: #{net_forward.1} parent=1 // pred_check
      _
    $region127: #{net_forward.1} parent=1 // pred_check_branch
      %224 = sbr.rel (0) target = $region129
    $region128: #{net_forward.1} parent=1 // pred_region
      _
    $region129: #{net_forward.1} parent=1 // pred_fallthru
      _
    // Predicated region
    $region130: #{net_forward.1} parent=1 // pred_check
      _
    $region131: #{net_forward.1} parent=1 // pred_check_branch
      %226 = sbr.rel (0) target = $region133
    $region132: #{net_forward.1} parent=1 // pred_region
      _
    $region133: #{net_forward.1} parent=1 // pred_fallthru
      _
    // Predicated region
    $region134: #{net_forward.1} parent=1 // pred_check
      _
    $region135: #{net_forward.1} parent=1 // pred_check_branch
      %228 = sbr.rel (0) target = $region137
    $region136: #{net_forward.1} parent=1 // pred_region
      _
    $region137: #{net_forward.1} parent=1 // pred_fallthru
      _
    // Predicated region
    $region138: #{net_forward.1} parent=1 // pred_check
      _
    $region139: #{net_forward.1} parent=1 // pred_check_branch
      %230 = sbr.rel (0) target = $region141
    $region140: #{net_forward.1} parent=1 // pred_region
      _
    $region141: #{net_forward.1} parent=1 // pred_fallthru
      _
    // Predicated region
    $region142: #{net_forward.1} parent=1 // pred_check
      _
    $region143: #{net_forward.1} parent=1 // pred_check_branch
      %232 = sbr.rel (0) target = $region145
    $region144: #{net_forward.1} parent=1 // pred_region
      _
    $region145: #{net_forward.1} parent=1 // pred_fallthru
      _
    // Predicated region
    $region146: #{net_forward.1} parent=1 // pred_check
      _
    $region147: #{net_forward.1} parent=1 // pred_check_branch
      %234 = sbr.rel (0) target = $region149
    $region148: #{net_forward.1} parent=1 // pred_region
      _
    $region149: #{net_forward.1} parent=1 // pred_fallthru
      _
    // Predicated region
    $region150: #{net_forward.1} parent=1 // pred_check
      _
    $region151: #{net_forward.1} parent=1 // pred_check_branch
      %236 = sbr.rel (0) target = $region153
    $region152: #{net_forward.1} parent=1 // pred_region
      _
    $region153: #{net_forward.1} parent=1 // pred_fallthru
      _
    // Predicated region
    $region154: #{net_forward.1} parent=1 // pred_check
      _
    $region155: #{net_forward.1} parent=1 // pred_check_branch
      %238 = sbr.rel (0) target = $region157
    $region156: #{net_forward.1} parent=1 // pred_region
      _
    $region157: #{net_forward.1} parent=1 // pred_fallthru
      _
    // Predicated region
    $region158: #{net_forward.1} parent=1 // pred_check
      _
    $region159: #{net_forward.1} parent=1 // pred_check_branch
      %240 = sbr.rel (0) target = $region161
    $region160: #{net_forward.1} parent=1 // pred_region
      _
    $region161: #{net_forward.1} parent=1 // pred_fallthru
      _
    // Predicated region
    $region162: #{net_forward.1} parent=1 // pred_check
      _
    $region163: #{net_forward.1} parent=1 // pred_check_branch
      %242 = sbr.rel (0) target = $region165
    $region164: #{net_forward.1} parent=1 // pred_region
      _
    $region165: #{net_forward.1} parent=1 // pred_fallthru
      _
    // Predicated region
    $region166: #{net_forward.1} parent=1 // pred_check
      _
    $region167: #{net_forward.1} parent=1 // pred_check_branch
      %244 = sbr.rel (0) target = $region169
    $region168: #{net_forward.1} parent=1 // pred_region
      _
    $region169: #{net_forward.1} parent=1 // pred_fallthru
      _
    // Predicated region
    $region170: #{net_forward.1} parent=1 // pred_check
      _
    $region171: #{net_forward.1} parent=1 // pred_check_branch
      %246 = sbr.rel (0) target = $region173
    $region172: #{net_forward.1} parent=1 // pred_region
      _
    $region173: #{net_forward.1} parent=1 // pred_fallthru
      _
    // Predicated region
    $region174: #{net_forward.1} parent=1 // pred_check
      _
    $region175: #{net_forward.1} parent=1 // pred_check_branch
      %248 = sbr.rel (0) target = $region177
    $region176: #{net_forward.1} parent=1 // pred_region
      _
    $region177: #{net_forward.1} parent=1 // pred_fallthru
      _
    // Predicated region
    $region178: #{net_forward.1} parent=1 // pred_check
      _
    $region179: #{net_forward.1} parent=1 // pred_check_branch
      %250 = sbr.rel (0) target = $region181
    $region180: #{net_forward.1} parent=1 // pred_region
      _
    $region181: #{net_forward.1} parent=1 // pred_fallthru
      _
    // Predicated region
    $region182: #{net_forward.1} parent=1 // pred_check
      _
    $region183: #{net_forward.1} parent=1 // pred_check_branch
      %252 = sbr.rel (0) target = $region185
    $region184: #{net_forward.1} parent=1 // pred_region
      _
    $region185: #{net_forward.1} parent=1 // pred_fallthru
      _
    // Predicated region
    $region186: #{net_forward.1} parent=1 // pred_check
      _
    $region187: #{net_forward.1} parent=1 // pred_check_branch
      %254 = sbr.rel (0) target = $region189
    $region188: #{net_forward.1} parent=1 // pred_region
      _
    $region189: #{net_forward.1} parent=1 // pred_fallthru
      _
    // Predicated region
    $region190: #{net_forward.1} parent=1 // pred_check
      _
    $region191: #{net_forward.1} parent=1 // pred_check_branch
      %256 = sbr.rel (0) target = $region193
    $region192: #{net_forward.1} parent=1 // pred_region
      _
    $region193: #{net_forward.1} parent=1 // pred_fallthru
      _
    // Predicated region
    $region194: #{net_forward.1} parent=1 // pred_check
      _
    $region195: #{net_forward.1} parent=1 // pred_check_branch
      %258 = sbr.rel (0) target = $region197
    $region196: #{net_forward.1} parent=1 // pred_region
      _
    $region197: #{net_forward.1} parent=1 // pred_fallthru
      _
    // Predicated region
    $region198: #{net_forward.1} parent=1 // pred_check
      _
    $region199: #{net_forward.1} parent=1 // pred_check_branch
      %260 = sbr.rel (0) target = $region201
    $region200: #{net_forward.1} parent=1 // pred_region
      _
    $region201: #{net_forward.1} parent=1 // pred_fallthru
      _
    // Predicated region
    $region202: #{net_forward.1} parent=1 // pred_check
      _
    $region203: #{net_forward.1} parent=1 // pred_check_branch
      %262 = sbr.rel (0) target = $region205
    $region204: #{net_forward.1} parent=1 // pred_region
      _
    $region205: #{net_forward.1} parent=1 // pred_fallthru
      _
    // Predicated region
    $region206: #{net_forward.1} parent=1 // pred_check
      _
    $region207: #{net_forward.1} parent=1 // pred_check_branch
      %264 = sbr.rel (0) target = $region209
    $region208: #{net_forward.1} parent=1 // pred_region
      %s266 = ssub.s32 16, 16
      %267 = vsyncadd [#allocation3], %s266
      %s269 = sshll.u32 [#allocation2], 4
      %s270 = int_to_ptr.vmem [resolvable:$true] %s269
      %272 = dma.hbm_to_vmem [thread:$0]  %s103, 16, %s270, [#allocation3]
    $region209: #{net_forward.1} parent=1 // pred_fallthru
      _
    // Predicated region
    $region210: #{net_forward.1} parent=1 // pred_check
      _
    $region211: #{net_forward.1} parent=1 // pred_check_branch
      %274 = sbr.rel (0) target = $region213
    $region212: #{net_forward.1} parent=1 // pred_region
      %s276 = ssub.s32 16, 16
      %277 = vsyncadd [#allocation6], %s276
      %s279 = sshll.u32 [#allocation5], 4
      %s280 = int_to_ptr.vmem [resolvable:$true] %s279
      %282 = dma.hbm_to_vmem [thread:$0]  %s105, 16, %s280, [#allocation6]
    $region213: #{net_forward.1} parent=1 // pred_fallthru
      _
    // Predicated region
    $region214: #{net_forward.1} parent=1 // pred_check
      _
    $region215: #{net_forward.1} parent=1 // pred_check_branch
      %284 = sbr.rel (0) target = $region217
    $region216: #{net_forward.1} parent=1 // pred_region
      %s286 = ssub.s32 16, 16
      %287 = vsyncadd [#allocation6], %s286
      %s289 = sshll.u32 [#allocation7], 4
      %s290 = int_to_ptr.vmem [resolvable:$true] %s289
      %292 = dma.hbm_to_vmem [thread:$0]  %s107, 16, %s290, [#allocation6]
    $region217: #{net_forward.1} parent=1 // pred_fallthru
      _
    // Predicated region
    $region218: #{net_forward.1} parent=1 // pred_check
      _
    $region219: #{net_forward.1} parent=1 // pred_check_branch
      %294 = sbr.rel (0) target = $region221
    $region220: #{net_forward.1} parent=1 // pred_region
      _
    $region221: #{net_forward.1} parent=1 // pred_fallthru
      _
    // Predicated region
    $region222: #{net_forward.1} parent=1 // pred_check
      _
    $region223: #{net_forward.1} parent=1 // pred_check_branch
      %296 = sbr.rel (0) target = $region225
    $region224: #{net_forward.1} parent=1 // pred_region
      %s298 = ssub.s32 16, 16
      %299 = vsyncadd [#allocation9], %s298
      %s301 = sshll.u32 [#allocation8], 4
      %s302 = int_to_ptr.vmem [resolvable:$true] %s301
      %304 = dma.hbm_to_vmem [thread:$0]  %s111, 16, %s302, [#allocation9]
    $region225: #{net_forward.1} parent=1 // pred_fallthru
      _
    // Predicated region
    $region226: #{net_forward.1} parent=1 // pred_check
      _
    $region227: #{net_forward.1} parent=1 // pred_check_branch
      %306 = sbr.rel (0) target = $region229
    $region228: #{net_forward.1} parent=1 // pred_region
      %s308 = ssub.s32 16, 16
      %309 = vsyncadd [#allocation9], %s308
      %s311 = sshll.u32 [#allocation10], 4
      %s312 = int_to_ptr.vmem [resolvable:$true] %s311
      %314 = dma.hbm_to_vmem [thread:$0]  %s113, 16, %s312, [#allocation9]
    $region229: #{net_forward.1} parent=1 // pred_fallthru
      _
    // Predicated region
    $region230: #{net_forward.1} parent=1 // pred_check
      _
    $region231: #{net_forward.1} parent=1 // pred_check_branch
      %316 = sbr.rel (0) target = $region233
    $region232: #{net_forward.1} parent=1 // pred_region
      %s318 = ssub.s32 16, 16
      %319 = vsyncadd [#allocation12], %s318
      %s321 = sshll.u32 [#allocation11], 4
      %s322 = int_to_ptr.vmem [resolvable:$true] %s321
      %324 = dma.hbm_to_vmem [thread:$0]  %s115, 16, %s322, [#allocation12]
    $region233: #{net_forward.1} parent=1 // pred_fallthru
      _
    // Predicated region
    $region234: #{net_forward.1} parent=1 // pred_check
      _
    $region235: #{net_forward.1} parent=1 // pred_check_branch
      %326 = sbr.rel (0) target = $region237
    $region236: #{net_forward.1} parent=1 // pred_region
      _
    $region237: #{net_forward.1} parent=1 // pred_fallthru
      _
    // Predicated region
    $region238: #{net_forward.1} parent=1 // pred_check
      _
    $region239: #{net_forward.1} parent=1 // pred_check_branch
      %328 = sbr.rel (0) target = $region241
    $region240: #{net_forward.1} parent=1 // pred_region
      %s330 = ssub.s32 16, 16
      %331 = vsyncadd [#allocation12], %s330
      %s333 = sshll.u32 [#allocation13], 4
      %s334 = int_to_ptr.vmem [resolvable:$true] %s333
      %336 = dma.hbm_to_vmem [thread:$0]  %s119, 16, %s334, [#allocation12]
    $region241: #{net_forward.1} parent=1 // pred_fallthru
      _
    // Predicated region
    $region242: #{net_forward.1} parent=1 // pred_check
      _
    $region243: #{net_forward.1} parent=1 // pred_check_branch
      %338 = sbr.rel (0) target = $region245
    $region244: #{net_forward.1} parent=1 // pred_region
      %s340 = ssub.s32 16, 16
      %341 = vsyncadd [#allocation15], %s340
      %s343 = sshll.u32 [#allocation14], 4
      %s344 = int_to_ptr.vmem [resolvable:$true] %s343
      %346 = dma.hbm_to_vmem [thread:$0]  %s121, 16, %s344, [#allocation15]
    $region245: #{net_forward.1} parent=1 // pred_fallthru
      _
    // Predicated region
    $region246: #{net_forward.1} parent=1 // pred_check
      _
    $region247: #{net_forward.1} parent=1 // pred_check_branch
      %348 = sbr.rel (0) target = $region249
    $region248: #{net_forward.1} parent=1 // pred_region
      %s350 = ssub.s32 16, 16
      %351 = vsyncadd [#allocation15], %s350
      %s353 = sshll.u32 [#allocation16], 4
      %s354 = int_to_ptr.vmem [resolvable:$true] %s353
      %356 = dma.hbm_to_vmem [thread:$0]  %s123, 16, %s354, [#allocation15]
    $region249: #{net_forward.1} parent=1 // pred_fallthru
      _
    // Predicated region
    $region250: #{net_forward.1} parent=1 // pred_check
      _
    $region251: #{net_forward.1} parent=1 // pred_check_branch
      %358 = sbr.rel (0) target = $region253
    $region252: #{net_forward.1} parent=1 // pred_region
      _
    $region253: #{net_forward.1} parent=1 // pred_fallthru
      _
    // Predicated region
    $region254: #{net_forward.1} parent=1 // pred_check
      _
    $region255: #{net_forward.1} parent=1 // pred_check_branch
      %360 = sbr.rel (0) target = $region257
    $region256: #{net_forward.1} parent=1 // pred_region
      %s362 = ssub.s32 16, 16
      %363 = vsyncadd [#allocation18], %s362
      %s365 = sshll.u32 [#allocation17], 4
      %s366 = int_to_ptr.vmem [resolvable:$true] %s365
      %368 = dma.hbm_to_vmem [thread:$0]  %s127, 16, %s366, [#allocation18]
    $region257: #{net_forward.1} parent=1 // pred_fallthru
      _
    // Predicated region
    $region258: #{net_forward.1} parent=1 // pred_check
      _
    $region259: #{net_forward.1} parent=1 // pred_check_branch
      %370 = sbr.rel (0) target = $region261
    $region260: #{net_forward.1} parent=1 // pred_region
      %s372 = ssub.s32 16, 16
      %373 = vsyncadd [#allocation18], %s372
      %s375 = sshll.u32 [#allocation19], 4
      %s376 = int_to_ptr.vmem [resolvable:$true] %s375
      %378 = dma.hbm_to_vmem [thread:$0]  %s129, 16, %s376, [#allocation18]
    $region261: #{net_forward.1} parent=1 // pred_fallthru
      _
    // Predicated region
    $region262: #{net_forward.1} parent=1 // pred_check
      _
    $region263: #{net_forward.1} parent=1 // pred_check_branch
      %380 = sbr.rel (0) target = $region265
    $region264: #{net_forward.1} parent=1 // pred_region
      %s382 = ssub.s32 16, 16
      %383 = vsyncadd [#allocation21], %s382
      %s385 = sshll.u32 [#allocation20], 4
      %s386 = int_to_ptr.vmem [resolvable:$true] %s385
      %388 = dma.hbm_to_vmem [thread:$0]  %s131, 16, %s386, [#allocation21]
    $region265: #{net_forward.1} parent=1 // pred_fallthru
      _
    // Predicated region
    $region266: #{net_forward.1} parent=1 // pred_check
      _
    $region267: #{net_forward.1} parent=1 // pred_check_branch
      %390 = sbr.rel (0) target = $region269
    $region268: #{net_forward.1} parent=1 // pred_region
      _
    $region269: #{net_forward.1} parent=1 // pred_fallthru
      _
    // Predicated region
    $region270: #{net_forward.1} parent=1 // pred_check
      _
    $region271: #{net_forward.1} parent=1 // pred_check_branch
      %392 = sbr.rel (0) target = $region273
    $region272: #{net_forward.1} parent=1 // pred_region
      %s394 = ssub.s32 16, 16
      %395 = vsyncadd [#allocation21], %s394
      %s397 = sshll.u32 [#allocation22], 4
      %s398 = int_to_ptr.vmem [resolvable:$true] %s397
      %400 = dma.hbm_to_vmem [thread:$0]  %s135, 16, %s398, [#allocation21]
    $region273: #{net_forward.1} parent=1 // pred_fallthru
      _
    // Predicated region
    $region274: #{net_forward.1} parent=1 // pred_check
      _
    $region275: #{net_forward.1} parent=1 // pred_check_branch
      %402 = sbr.rel (0) target = $region277
    $region276: #{net_forward.1} parent=1 // pred_region
      _
    $region277: #{net_forward.1} parent=1 // pred_fallthru
      _
    // Predicated region
    $region278: #{net_forward.1} parent=1 // pred_check
      _
    $region279: #{net_forward.1} parent=1 // pred_check_branch
      %404 = sbr.rel (0) target = $region281
    $region280: #{net_forward.1} parent=1 // pred_region
      %s406 = ssub.s32 16, 16
      %407 = vsyncadd [#allocation24], %s406
      %s409 = sshll.u32 [#allocation23], 4
      %s410 = int_to_ptr.vmem [resolvable:$true] %s409
      %412 = dma.hbm_to_vmem [thread:$0]  %s139, 16, %s410, [#allocation24]
    $region281: #{net_forward.1} parent=1 // pred_fallthru
      _
    // Predicated region
    $region282: #{net_forward.1} parent=1 // pred_check
      _
    $region283: #{net_forward.1} parent=1 // pred_check_branch
      %414 = sbr.rel (0) target = $region285
    $region284: #{net_forward.1} parent=1 // pred_region
      %415 = dma.done [#allocation3], 16
    $region285: #{net_forward.1} parent=1 // pred_fallthru
      _
    // Predicated region
    $region286: #{net_forward.1} parent=1 // pred_check
      _
    $region287: #{net_forward.1} parent=1 // pred_check_branch
      %417 = sbr.rel (0) target = $region289
    $region288: #{net_forward.1} parent=1 // pred_region
      %418 = dma.done [#allocation6], 16
    $region289: #{net_forward.1} parent=1 // pred_fallthru
      _
    // Predicated region
    $region290: #{net_forward.1} parent=1 // pred_check
      _
    $region291: #{net_forward.1} parent=1 // pred_check_branch
      %420 = sbr.rel (0) target = $region293
    $region292: #{net_forward.1} parent=1 // pred_region
      %421 = dma.done [#allocation6], 16
    $region293: #{net_forward.1} parent=1 // pred_fallthru
      _
    // Predicated region
    $region294: #{net_forward.1} parent=1 // pred_check
      _
    $region295: #{net_forward.1} parent=1 // pred_check_branch
      %423 = sbr.rel (0) target = $region297
    $region296: #{net_forward.1} parent=1 // pred_region
      %424 = dma.done [#allocation9], 16
    $region297: #{net_forward.1} parent=1 // pred_fallthru
      _
    // Predicated region
    $region298: #{net_forward.1} parent=1 // pred_check
      _
    $region299: #{net_forward.1} parent=1 // pred_check_branch
      %426 = sbr.rel (0) target = $region301
    $region300: #{net_forward.1} parent=1 // pred_region
      %427 = dma.done [#allocation9], 16
    $region301: #{net_forward.1} parent=1 // pred_fallthru
      _
    // Predicated region
    $region302: #{net_forward.1} parent=1 // pred_check
      _
    $region303: #{net_forward.1} parent=1 // pred_check_branch
      %429 = sbr.rel (0) target = $region305
    $region304: #{net_forward.1} parent=1 // pred_region
      %430 = dma.done [#allocation12], 16
    $region305: #{net_forward.1} parent=1 // pred_fallthru
      _
    // Predicated region
    $region306: #{net_forward.1} parent=1 // pred_check
      _
    $region307: #{net_forward.1} parent=1 // pred_check_branch
      %432 = sbr.rel (0) target = $region309
    $region308: #{net_forward.1} parent=1 // pred_region
      %433 = dma.done [#allocation12], 16
    $region309: #{net_forward.1} parent=1 // pred_fallthru
      _
    // Predicated region
    $region310: #{net_forward.1} parent=1 // pred_check
      _
    $region311: #{net_forward.1} parent=1 // pred_check_branch
      %435 = sbr.rel (0) target = $region313
    $region312: #{net_forward.1} parent=1 // pred_region
      %436 = dma.done [#allocation15], 16
    $region313: #{net_forward.1} parent=1 // pred_fallthru
      _
    // Predicated region
    $region314: #{net_forward.1} parent=1 // pred_check
      _
    $region315: #{net_forward.1} parent=1 // pred_check_branch
      %438 = sbr.rel (0) target = $region317
    $region316: #{net_forward.1} parent=1 // pred_region
      %439 = dma.done [#allocation15], 16
    $region317: #{net_forward.1} parent=1 // pred_fallthru
      _
    // Predicated region
    $region318: #{net_forward.1} parent=1 // pred_check
      _
    $region319: #{net_forward.1} parent=1 // pred_check_branch
      %441 = sbr.rel (0) target = $region321
    $region320: #{net_forward.1} parent=1 // pred_region
      %442 = dma.done [#allocation18], 16
    $region321: #{net_forward.1} parent=1 // pred_fallthru
      _
    // Predicated region
    $region322: #{net_forward.1} parent=1 // pred_check
      _
    $region323: #{net_forward.1} parent=1 // pred_check_branch
      %444 = sbr.rel (0) target = $region325
    $region324: #{net_forward.1} parent=1 // pred_region
      %445 = dma.done [#allocation18], 16
    $region325: #{net_forward.1} parent=1 // pred_fallthru
      _
    // Predicated region
    $region326: #{net_forward.1} parent=1 // pred_check
      _
    $region327: #{net_forward.1} parent=1 // pred_check_branch
      %447 = sbr.rel (0) target = $region329
    $region328: #{net_forward.1} parent=1 // pred_region
      %448 = dma.done [#allocation21], 16
    $region329: #{net_forward.1} parent=1 // pred_fallthru
      _
    // Predicated region
    $region330: #{net_forward.1} parent=1 // pred_check
      _
    $region331: #{net_forward.1} parent=1 // pred_check_branch
      %450 = sbr.rel (0) target = $region333
    $region332: #{net_forward.1} parent=1 // pred_region
      %451 = dma.done [#allocation21], 16
    $region333: #{net_forward.1} parent=1 // pred_fallthru
      _
    // Predicated region
    $region334: #{net_forward.1} parent=1 // pred_check
      _
    $region335: #{net_forward.1} parent=1 // pred_check_branch
      %453 = sbr.rel (0) target = $region337
    $region336: #{net_forward.1} parent=1 // pred_region
      %454 = dma.done [#allocation24], 16
    $region337: #{net_forward.1} parent=1 // pred_fallthru
      _
    %v456 = vld [vmem:[%s1] sm:$0xff]
    %v457 = vld [vmem:[%s1 + $0x8] sm:$0xff]
    %v458 = vld [vmem:[%s1 + $0x10] sm:$0xff]
    %v459 = vld [vmem:[%s1 + $0x18] sm:$0xff]
    %s460 = scalar_lea.vmem %s1, 32
    %v461 = vld [vmem:[%s460] sm:$0xff]
    %v462 = vld [vmem:[%s460 + $0x8] sm:$0xff]
    %v463 = vld [vmem:[%s460 + $0x10] sm:$0xff]
    %v464 = vld [vmem:[%s460 + $0x18] sm:$0xff]
    %v465 = vld [vmem:[%s3] sm:$0xff]
    %v466 = vld [vmem:[%s3 + $0x8] sm:$0xff]
    %v467 = vld [vmem:[%s3 + $0x10] sm:$0xff]
    %v468 = vld [vmem:[%s3 + $0x18] sm:$0xff]
    %s469 = scalar_lea.vmem %s3, 32
    %v470 = vld [vmem:[%s469] sm:$0xff]
    %v471 = vld [vmem:[%s469 + $0x8] sm:$0xff]
    %v472 = vld [vmem:[%s469 + $0x10] sm:$0xff]
    %v473 = vld [vmem:[%s469 + $0x18] sm:$0xff]
    %vm474 = vcmask 261120
    %v475 = vsel %vm474, %v465, 0.0
    %476 = vadd.xlane.f32.xlu0 %v475
    %v477 = vpop.xlane.xlu0 %476
    %v478 = vsel %vm474, %v466, 0.0
    %479 = vadd.xlane.f32.xlu0 %v478
    %v480 = vpop.xlane.xlu0 %479
    %v481 = vsel %vm474, %v467, 0.0
    %482 = vadd.xlane.f32.xlu0 %v481
    %v483 = vpop.xlane.xlu0 %482
    %v484 = vsel %vm474, %v468, 0.0
    %485 = vadd.xlane.f32.xlu0 %v484
    %v486 = vpop.xlane.xlu0 %485
    %v487 = vmax.f32 %v477, 1.0
    %v488 = vmax.f32 %v480, 1.0
    %v489 = vmax.f32 %v483, 1.0
    %v490 = vmax.f32 %v486, 1.0
    %v491 = vrcp.pop %v487
    %v492 = vmul.f32 %v465, %v491
    %v493 = vrcp.pop %v488
    %v494 = vmul.f32 %v466, %v493
    %v495 = vrcp.pop %v489
    %v496 = vmul.f32 %v467, %v495
    %v497 = vrcp.pop %v490
    %v498 = vmul.f32 %v468, %v497
    %v499 = vpack.c.bf16 %v494, %v492
    %v500 = vpack.c.bf16 %v498, %v496
    %v501 = vsel %vm474, %v470, 0.0
    %502 = vadd.xlane.f32.xlu0 %v501
    %v503 = vpop.xlane.xlu0 %502
    %v504 = vsel %vm474, %v471, 0.0
    %505 = vadd.xlane.f32.xlu0 %v504
    %v506 = vpop.xlane.xlu0 %505
    %v507 = vsel %vm474, %v472, 0.0
    %508 = vadd.xlane.f32.xlu0 %v507
    %v509 = vpop.xlane.xlu0 %508
    %v510 = vsel %vm474, %v473, 0.0
    %511 = vadd.xlane.f32.xlu0 %v510
    %v512 = vpop.xlane.xlu0 %511
    %v513 = vmax.f32 %v503, 1.0
    %v514 = vmax.f32 %v506, 1.0
    %v515 = vmax.f32 %v509, 1.0
    %v516 = vmax.f32 %v512, 1.0
    %v517 = vrcp.pop %v513
    %v518 = vmul.f32 %v470, %v517
    %v519 = vrcp.pop %v514
    %v520 = vmul.f32 %v471, %v519
    %v521 = vrcp.pop %v515
    %v522 = vmul.f32 %v472, %v521
    %v523 = vrcp.pop %v516
    %v524 = vmul.f32 %v473, %v523
    %v525 = vpack.c.bf16 %v520, %v518
    %v526 = vpack.c.bf16 %v524, %v522
    %v527 = vld [vmem:[%s5] sm:$0xf]
    %v528 = vld [vmem:[%s5 + $0x4] sm:$0xf]
    %v529 = vld [vmem:[%s5 + $0x8] sm:$0xf]
    %v530 = vld [vmem:[%s5 + $0xc] sm:$0xf]
    %v531 = vld [vmem:[%s7] sm:$0x1]
    %v532 = vpack.c.bf16 %v457, %v456
    %v533 = vpack.c.bf16 %v459, %v458
    %v535 = vsel %vm474, %v499, 0
    %v538 = vsel %vm474, %v500, 0
    %540 = vmatprep.subr.bf16.mxu0 0
    %541 = vmatpush1.bf16.msra.mxu0 %v532
    %542 = vmatprep.subr.bf16.mxu0 0
    %543 = vmatpush1.bf16.msra.mxu0 %v533
    %544 = vmatprep.subr.bf16.mxu0 0
    %545 = vmatpush1.bf16.msra.mxu0 0
    %546 = vmatprep.subr.bf16.mxu0 0
    %547 = vmatpush1.bf16.msra.mxu0 0
    %548 = vmatprep.subr.bf16.mxu0 0
    %549 = vmatpush1.bf16.msra.mxu0 0
    %550 = vmatprep.subr.bf16.mxu0 0
    %551 = vmatpush1.bf16.msra.mxu0 0
    %552 = vmatprep.subr.bf16.mxu0 0
    %553 = vmatpush1.bf16.msra.mxu0 0
    %554 = vmatprep.subr.bf16.mxu0 0
    %555 = vmatpush1.bf16.msra.mxu0 0
    %556 = vmatprep.subr.bf16.mxu0 0
    %557 = vmatpush1.bf16.msra.mxu0 0
    %558 = vmatprep.subr.bf16.mxu0 0
    %559 = vmatpush1.bf16.msra.mxu0 0
    %560 = vmatprep.subr.bf16.mxu0 0
    %561 = vmatpush1.bf16.msra.mxu0 0
    %562 = vmatprep.subr.bf16.mxu0 0
    %563 = vmatpush1.bf16.msra.mxu0 0
    %564 = vmatprep.subr.bf16.mxu0 0
    %565 = vmatpush1.bf16.msra.mxu0 0
    %566 = vmatprep.subr.bf16.mxu0 0
    %567 = vmatpush1.bf16.msra.mxu0 0
    %568 = vmatprep.subr.bf16.mxu0 0
    %569 = vmatpush1.bf16.msra.mxu0 0
    %570 = vmatprep.subr.bf16.mxu0 0
    %571 = vmatpush1.bf16.msra.mxu0 0
    %572 = vmatprep.mubr.bf16.mxu0 0
    %573 = vmatmul.mubr.bf16.gmra.mrb[0].mxu0 %v535
    %v574 = vpop.f32.mrb[0].mxu0
    %v575 = vadd.f32 0.0, %v574
    %v576 = vpop.f32.mrb[0].mxu0
    %v577 = vpop.f32.mrb[0].mxu0
    %v578 = vadd.f32 0.0, %v577
    %v579 = vpop.f32.mrb[0].mxu0
    %580 = vmatprep.mubr.bf16.mxu0 0
    %581 = vmatmul.mubr.bf16.gmra.mrb[0].mxu0 %v538
    %v582 = vpop.f32.mrb[0].mxu0
    %v583 = vadd.f32 0.0, %v582
    %v584 = vpop.f32.mrb[0].mxu0
    %v585 = vpop.f32.mrb[0].mxu0
    %v586 = vadd.f32 0.0, %v585
    %v587 = vpop.f32.mrb[0].mxu0
    %588 = vdwg.mxu0
    %v589 = vpack.c.bf16 %v462, %v461
    %v590 = vpack.c.bf16 %v464, %v463
    %v592 = vsel %vm474, %v525, 0
    %v595 = vsel %vm474, %v526, 0
    %597 = vmatprep.subr.bf16.mxu0 0
    %598 = vmatpush1.bf16.msra.mxu0 %v589
    %599 = vmatprep.subr.bf16.mxu0 0
    %600 = vmatpush1.bf16.msra.mxu0 %v590
    %601 = vmatprep.subr.bf16.mxu0 0
    %602 = vmatpush1.bf16.msra.mxu0 0
    %603 = vmatprep.subr.bf16.mxu0 0
    %604 = vmatpush1.bf16.msra.mxu0 0
    %605 = vmatprep.subr.bf16.mxu0 0
    %606 = vmatpush1.bf16.msra.mxu0 0
    %607 = vmatprep.subr.bf16.mxu0 0
    %608 = vmatpush1.bf16.msra.mxu0 0
    %609 = vmatprep.subr.bf16.mxu0 0
    %610 = vmatpush1.bf16.msra.mxu0 0
    %611 = vmatprep.subr.bf16.mxu0 0
    %612 = vmatpush1.bf16.msra.mxu0 0
    %613 = vmatprep.subr.bf16.mxu0 0
    %614 = vmatpush1.bf16.msra.mxu0 0
    %615 = vmatprep.subr.bf16.mxu0 0
    %616 = vmatpush1.bf16.msra.mxu0 0
    %617 = vmatprep.subr.bf16.mxu0 0
    %618 = vmatpush1.bf16.msra.mxu0 0
    %619 = vmatprep.subr.bf16.mxu0 0
    %620 = vmatpush1.bf16.msra.mxu0 0
    %621 = vmatprep.subr.bf16.mxu0 0
    %622 = vmatpush1.bf16.msra.mxu0 0
    %623 = vmatprep.subr.bf16.mxu0 0
    %624 = vmatpush1.bf16.msra.mxu0 0
    %625 = vmatprep.subr.bf16.mxu0 0
    %626 = vmatpush1.bf16.msra.mxu0 0
    %627 = vmatprep.subr.bf16.mxu0 0
    %628 = vmatpush1.bf16.msra.mxu0 0
    %629 = vmatprep.mubr.bf16.mxu0 0
    %630 = vmatmul.mubr.bf16.gmra.mrb[0].mxu0 %v592
    %v631 = vpop.f32.mrb[0].mxu0
    %v632 = vadd.f32 0.0, %v631
    %v633 = vpop.f32.mrb[0].mxu0
    %v634 = vpop.f32.mrb[0].mxu0
    %v635 = vadd.f32 0.0, %v634
    %v636 = vpop.f32.mrb[0].mxu0
    %637 = vmatprep.mubr.bf16.mxu0 0
    %638 = vmatmul.mubr.bf16.gmra.mrb[0].mxu0 %v595
    %v639 = vpop.f32.mrb[0].mxu0
    %v640 = vadd.f32 0.0, %v639
    %v641 = vpop.f32.mrb[0].mxu0
    %v642 = vpop.f32.mrb[0].mxu0
    %v643 = vadd.f32 0.0, %v642
    %v644 = vpop.f32.mrb[0].mxu0
    %645 = vdwg.mxu0
    %v646 = vpack.c.bf16 %v578, %v575
    %v647 = vpack.c.bf16 %v586, %v583
    %v648 = vpack.c.bf16 %v635, %v632
    %v649 = vpack.c.bf16 %v643, %v640
    %v652 = vunpack.c.l.b16 %v529
    %v653 = vunpack.c.l.b16 %v530
    %v654 = vpack.c.b16 %v653, %v652
    %vm656 = vcmask 130048
    %v658 = vsel %vm656, %v532, 0
    %v661 = vsel %vm656, %v533, 0
    %v664 = vsel %vm656, %v589, 0
    %v667 = vsel %vm656, %v590, 0
    %669 = vmatprep.subr.bf16.mxu0 0
    %670 = vmatpush1.bf16.msra.mxu0 %v654
    %671 = vmatprep.subr.bf16.mxu0 0
    %672 = vmatpush1.bf16.msra.mxu0 0
    %673 = vmatprep.subr.bf16.mxu0 0
    %674 = vmatpush1.bf16.msra.mxu0 0
    %675 = vmatprep.subr.bf16.mxu0 0
    %676 = vmatpush1.bf16.msra.mxu0 0
    %677 = vmatprep.subr.bf16.mxu0 0
    %678 = vmatpush1.bf16.msra.mxu0 0
    %679 = vmatprep.subr.bf16.mxu0 0
    %680 = vmatpush1.bf16.msra.mxu0 0
    %681 = vmatprep.subr.bf16.mxu0 0
    %682 = vmatpush1.bf16.msra.mxu0 0
    %683 = vmatprep.subr.bf16.mxu0 0
    %684 = vmatpush1.bf16.msra.mxu0 0
    %685 = vmatprep.subr.bf16.mxu0 0
    %686 = vmatpush1.bf16.msra.mxu0 0
    %687 = vmatprep.subr.bf16.mxu0 0
    %688 = vmatpush1.bf16.msra.mxu0 0
    %689 = vmatprep.subr.bf16.mxu0 0
    %690 = vmatpush1.bf16.msra.mxu0 0
    %691 = vmatprep.subr.bf16.mxu0 0
    %692 = vmatpush1.bf16.msra.mxu0 0
    %693 = vmatprep.subr.bf16.mxu0 0
    %694 = vmatpush1.bf16.msra.mxu0 0
    %695 = vmatprep.subr.bf16.mxu0 0
    %696 = vmatpush1.bf16.msra.mxu0 0
    %697 = vmatprep.subr.bf16.mxu0 0
    %698 = vmatpush1.bf16.msra.mxu0 0
    %699 = vmatprep.subr.bf16.mxu0 0
    %700 = vmatpush1.bf16.msra.mxu0 0
    %701 = vmatprep.mubr.bf16.mxu0 0
    %702 = vmatmul.mubr.bf16.gmra.mrb[0].mxu0 %v658
    %v703 = vpop.f32.mrb[0].mxu0
    %v704 = vadd.f32 0.0, %v703
    %v705 = vpop.f32.mrb[0].mxu0
    %v706 = vpop.f32.mrb[0].mxu0
    %v707 = vadd.f32 0.0, %v706
    %v708 = vpop.f32.mrb[0].mxu0
    %709 = vmatprep.mubr.bf16.mxu0 0
    %710 = vmatmul.mubr.bf16.gmra.mrb[0].mxu0 %v661
    %v711 = vpop.f32.mrb[0].mxu0
    %v712 = vadd.f32 0.0, %v711
    %v713 = vpop.f32.mrb[0].mxu0
    %v714 = vpop.f32.mrb[0].mxu0
    %v715 = vadd.f32 0.0, %v714
    %v716 = vpop.f32.mrb[0].mxu0
    %717 = vmatprep.mubr.bf16.mxu0 0
    %718 = vmatmul.mubr.bf16.gmra.mrb[0].mxu0 %v664
    %v719 = vpop.f32.mrb[0].mxu0
    %v720 = vadd.f32 0.0, %v719
    %v721 = vpop.f32.mrb[0].mxu0
    %v722 = vpop.f32.mrb[0].mxu0
    %v723 = vadd.f32 0.0, %v722
    %v724 = vpop.f32.mrb[0].mxu0
    %725 = vmatprep.mubr.bf16.mxu0 0
    %726 = vmatmul.mubr.bf16.gmra.mrb[0].mxu0 %v667
    %v727 = vpop.f32.mrb[0].mxu0
    %v728 = vadd.f32 0.0, %v727
    %v729 = vpop.f32.mrb[0].mxu0
    %v730 = vpop.f32.mrb[0].mxu0
    %v731 = vadd.f32 0.0, %v730
    %v732 = vpop.f32.mrb[0].mxu0
    %733 = vdwg.mxu0
    %v736 = vunpack.c.l.b16 %v527
    %v737 = vunpack.c.l.b16 %v528
    %v738 = vpack.c.b16 %v737, %v736
    %v741 = vsel %vm656, %v646, 0
    %v744 = vsel %vm656, %v647, 0
    %v747 = vsel %vm656, %v648, 0
    %v750 = vsel %vm656, %v649, 0
    %752 = vmatprep.subr.bf16.mxu0 0
    %753 = vmatpush1.bf16.msra.mxu0 %v738
    %754 = vmatprep.subr.bf16.mxu0 0
    %755 = vmatpush1.bf16.msra.mxu0 0
    %756 = vmatprep.subr.bf16.mxu0 0
    %757 = vmatpush1.bf16.msra.mxu0 0
    %758 = vmatprep.subr.bf16.mxu0 0
    %759 = vmatpush1.bf16.msra.mxu0 0
    %760 = vmatprep.subr.bf16.mxu0 0
    %761 = vmatpush1.bf16.msra.mxu0 0
    %762 = vmatprep.subr.bf16.mxu0 0
    %763 = vmatpush1.bf16.msra.mxu0 0
    %764 = vmatprep.subr.bf16.mxu0 0
    %765 = vmatpush1.bf16.msra.mxu0 0
    %766 = vmatprep.subr.bf16.mxu0 0
    %767 = vmatpush1.bf16.msra.mxu0 0
    %768 = vmatprep.subr.bf16.mxu0 0
    %769 = vmatpush1.bf16.msra.mxu0 0
    %770 = vmatprep.subr.bf16.mxu0 0
    %771 = vmatpush1.bf16.msra.mxu0 0
    %772 = vmatprep.subr.bf16.mxu0 0
    %773 = vmatpush1.bf16.msra.mxu0 0
    %774 = vmatprep.subr.bf16.mxu0 0
    %775 = vmatpush1.bf16.msra.mxu0 0
    %776 = vmatprep.subr.bf16.mxu0 0
    %777 = vmatpush1.bf16.msra.mxu0 0
    %778 = vmatprep.subr.bf16.mxu0 0
    %779 = vmatpush1.bf16.msra.mxu0 0
    %780 = vmatprep.subr.bf16.mxu0 0
    %781 = vmatpush1.bf16.msra.mxu0 0
    %782 = vmatprep.subr.bf16.mxu0 0
    %783 = vmatpush1.bf16.msra.mxu0 0
    %784 = vmatprep.mubr.bf16.mxu0 0
    %785 = vmatmul.mubr.bf16.gmra.mrb[0].mxu0 %v741
    %v786 = vpop.f32.mrb[0].mxu0
    %v787 = vadd.f32 %v704, %v786
    %v788 = vpop.f32.mrb[0].mxu0
    %v789 = vpop.f32.mrb[0].mxu0
    %v790 = vadd.f32 %v707, %v789
    %v791 = vpop.f32.mrb[0].mxu0
    %792 = vmatprep.mubr.bf16.mxu0 0
    %793 = vmatmul.mubr.bf16.gmra.mrb[0].mxu0 %v744
    %v794 = vpop.f32.mrb[0].mxu0
    %v795 = vadd.f32 %v712, %v794
    %v796 = vpop.f32.mrb[0].mxu0
    %v797 = vpop.f32.mrb[0].mxu0
    %v798 = vadd.f32 %v715, %v797
    %v799 = vpop.f32.mrb[0].mxu0
    %800 = vmatprep.mubr.bf16.mxu0 0
    %801 = vmatmul.mubr.bf16.gmra.mrb[0].mxu0 %v747
    %v802 = vpop.f32.mrb[0].mxu0
    %v803 = vadd.f32 %v720, %v802
    %v804 = vpop.f32.mrb[0].mxu0
    %v805 = vpop.f32.mrb[0].mxu0
    %v806 = vadd.f32 %v723, %v805
    %v807 = vpop.f32.mrb[0].mxu0
    %808 = vmatprep.mubr.bf16.mxu0 0
    %809 = vmatmul.mubr.bf16.gmra.mrb[0].mxu0 %v750
    %v810 = vpop.f32.mrb[0].mxu0
    %v811 = vadd.f32 %v728, %v810
    %v812 = vpop.f32.mrb[0].mxu0
    %v813 = vpop.f32.mrb[0].mxu0
    %v814 = vadd.f32 %v731, %v813
    %v815 = vpop.f32.mrb[0].mxu0
    %816 = vdwg.mxu0
    %v818 = vlaneseq
    %v819 = vshrl.u32 %v818, 7
    %v820 = vsub.s32 0, %v819
    %v821 = vrot.slane %v531, %v820
    %v823 = vadd.f32 %v787, %v821
    %v824 = vadd.f32 %v790, %v821
    %v825 = vadd.f32 %v795, %v821
    %v826 = vadd.f32 %v798, %v821
    %v827 = vadd.f32 %v803, %v821
    %v828 = vadd.f32 %v806, %v821
    %v829 = vadd.f32 %v811, %v821
    %v830 = vadd.f32 %v814, %v821
    %v831 = vmax.f32 %v823, 0.0
    %v832 = vmax.f32 %v824, 0.0
    %v833 = vmax.f32 %v825, 0.0
    %v834 = vmax.f32 %v826, 0.0
    %v835 = vmax.f32 %v827, 0.0
    %v836 = vmax.f32 %v828, 0.0
    %v837 = vmax.f32 %v829, 0.0
    %v838 = vmax.f32 %v830, 0.0
    %vm839 = vcmask 523264
    %v840 = vsel %vm839, %v831, 0.0
    %v841 = vsel %vm839, %v832, 0.0
    %v842 = vadd.f32 %v840, %v841
    %v843 = vsel %vm839, %v833, 0.0
    %v844 = vadd.f32 %v842, %v843
    %v845 = vsel %vm839, %v834, 0.0
    %v846 = vadd.f32 %v844, %v845
    %v847 = vsel %vm839, %v835, 0.0
    %v848 = vadd.f32 %v846, %v847
    %v849 = vsel %vm839, %v836, 0.0
    %v850 = vadd.f32 %v848, %v849
    %v851 = vsel %vm839, %v837, 0.0
    %v852 = vadd.f32 %v850, %v851
    %v853 = vsel %vm839, %v838, 0.0
    %v854 = vadd.f32 %v852, %v853
    %v855 = vrot.slane %v854, 4
    %v856 = vadd.f32 %v854, %v855
    %v857 = vrot.slane %v856, 2
    %v858 = vadd.f32 %v856, %v857
    %v859 = vrot.slane %v858, 1
    %v860 = vadd.f32 %v858, %v859
    %v861 = vmul.f32 %v860, 0.015625
    %v862 = vsub.f32 %v831, %v861
    %v863 = vsub.f32 %v832, %v861
    %v864 = vsub.f32 %v833, %v861
    %v865 = vsub.f32 %v834, %v861
    %v866 = vsub.f32 %v835, %v861
    %v867 = vsub.f32 %v836, %v861
    %v868 = vsub.f32 %v837, %v861
    %v869 = vsub.f32 %v838, %v861
    %v870 = vmul.f32 %v862, %v862
    %v871 = vmul.f32 %v863, %v863
    %v872 = vmul.f32 %v864, %v864
    %v873 = vmul.f32 %v865, %v865
    %v874 = vmul.f32 %v866, %v866
    %v875 = vmul.f32 %v867, %v867
    %v876 = vmul.f32 %v868, %v868
    %v877 = vmul.f32 %v869, %v869
    %v878 = vsel %vm839, %v870, 0.0
    %v879 = vsel %vm839, %v871, 0.0
    %v880 = vadd.f32 %v878, %v879
    %v881 = vsel %vm839, %v872, 0.0
    %v882 = vadd.f32 %v880, %v881
    %v883 = vsel %vm839, %v873, 0.0
    %v884 = vadd.f32 %v882, %v883
    %v885 = vsel %vm839, %v874, 0.0
    %v886 = vadd.f32 %v884, %v885
    %v887 = vsel %vm839, %v875, 0.0
    %v888 = vadd.f32 %v886, %v887
    %v889 = vsel %vm839, %v876, 0.0
    %v890 = vadd.f32 %v888, %v889
    %v891 = vsel %vm839, %v877, 0.0
    %v892 = vadd.f32 %v890, %v891
    %v893 = vrot.slane %v892, 4
    %v894 = vadd.f32 %v892, %v893
    %v895 = vrot.slane %v894, 2
    %v896 = vadd.f32 %v894, %v895
    %v897 = vrot.slane %v896, 1
    %v898 = vadd.f32 %v896, %v897
    %v899 = vmul.f32 %v898, 0.015625
    %v900 = vadd.f32 %v899, 1e-05
    %v901 = vrsqrt.pop %v900
    %v902 = vld [vmem:[%s9] sm:$0x1]
    %v903 = vmul.f32 %v901, %v902
    %v904 = vld [vmem:[%s11] sm:$0x1]
    %v905 = vmul.f32 %v861, %v903
    %v906 = vsub.f32 %v904, %v905
    %v907 = vlaneseq
    %v908 = vshrl.u32 %v907, 7
    %v909 = vsub.s32 0, %v908
    %v910 = vrot.slane %v903, %v909
    %v911 = vmul.f32 %v831, %v910
    %v912 = vmul.f32 %v832, %v910
    %v913 = vmul.f32 %v833, %v910
    %v914 = vmul.f32 %v834, %v910
    %v915 = vmul.f32 %v835, %v910
    %v916 = vmul.f32 %v836, %v910
    %v917 = vmul.f32 %v837, %v910
    %v918 = vmul.f32 %v838, %v910
    %v920 = vlaneseq
    %v921 = vshrl.u32 %v920, 7
    %v922 = vsub.s32 0, %v921
    %v923 = vrot.slane %v906, %v922
    %v925 = vadd.f32 %v911, %v923
    %v926 = vadd.f32 %v912, %v923
    %v927 = vadd.f32 %v913, %v923
    %v928 = vadd.f32 %v914, %v923
    %v929 = vadd.f32 %v915, %v923
    %v930 = vadd.f32 %v916, %v923
    %v931 = vadd.f32 %v917, %v923
    %v932 = vadd.f32 %v918, %v923
    %v933 = vld [vmem:[%s13] sm:$0xf]
    %v934 = vld [vmem:[%s13 + $0x4] sm:$0xf]
    %v935 = vld [vmem:[%s13 + $0x8] sm:$0xf]
    %v936 = vld [vmem:[%s13 + $0xc] sm:$0xf]
    %v937 = vld [vmem:[%s13 + $0x10] sm:$0xf]
    %v938 = vld [vmem:[%s13 + $0x14] sm:$0xf]
    %v939 = vld [vmem:[%s13 + $0x18] sm:$0xf]
    %v940 = vld [vmem:[%s13 + $0x1c] sm:$0xf]
    %v941 = vld [vmem:[%s13 + $0x20] sm:$0xf]
    %v942 = vld [vmem:[%s13 + $0x24] sm:$0xf]
    %v943 = vld [vmem:[%s13 + $0x28] sm:$0xf]
    %v944 = vld [vmem:[%s13 + $0x2c] sm:$0xf]
    %v945 = vld [vmem:[%s13 + $0x30] sm:$0xf]
    %v946 = vld [vmem:[%s13 + $0x34] sm:$0xf]
    %v947 = vld [vmem:[%s13 + $0x38] sm:$0xf]
    %v948 = vld [vmem:[%s13 + $0x3c] sm:$0xf]
    %v949 = vld [vmem:[%s15] sm:$0x1]
    %v950 = vpack.c.bf16 %v926, %v925
    %v951 = vpack.c.bf16 %v928, %v927
    %952 = vmatprep.subr.bf16.mxu0 0
    %953 = vmatpush1.bf16.msra.mxu0 %v950
    %954 = vmatprep.subr.bf16.mxu0 0
    %955 = vmatpush1.bf16.msra.mxu0 %v951
    %956 = vmatprep.subr.bf16.mxu0 0
    %957 = vmatpush1.bf16.msra.mxu0 0
    %958 = vmatprep.subr.bf16.mxu0 0
    %959 = vmatpush1.bf16.msra.mxu0 0
    %960 = vmatprep.subr.bf16.mxu0 0
    %961 = vmatpush1.bf16.msra.mxu0 0
    %962 = vmatprep.subr.bf16.mxu0 0
    %963 = vmatpush1.bf16.msra.mxu0 0
    %964 = vmatprep.subr.bf16.mxu0 0
    %965 = vmatpush1.bf16.msra.mxu0 0
    %966 = vmatprep.subr.bf16.mxu0 0
    %967 = vmatpush1.bf16.msra.mxu0 0
    %968 = vmatprep.subr.bf16.mxu0 0
    %969 = vmatpush1.bf16.msra.mxu0 0
    %970 = vmatprep.subr.bf16.mxu0 0
    %971 = vmatpush1.bf16.msra.mxu0 0
    %972 = vmatprep.subr.bf16.mxu0 0
    %973 = vmatpush1.bf16.msra.mxu0 0
    %974 = vmatprep.subr.bf16.mxu0 0
    %975 = vmatpush1.bf16.msra.mxu0 0
    %976 = vmatprep.subr.bf16.mxu0 0
    %977 = vmatpush1.bf16.msra.mxu0 0
    %978 = vmatprep.subr.bf16.mxu0 0
    %979 = vmatpush1.bf16.msra.mxu0 0
    %980 = vmatprep.subr.bf16.mxu0 0
    %981 = vmatpush1.bf16.msra.mxu0 0
    %982 = vmatprep.subr.bf16.mxu0 0
    %983 = vmatpush1.bf16.msra.mxu0 0
    %984 = vmatprep.mubr.bf16.mxu0 0
    %985 = vmatmul.mubr.bf16.gmra.mrb[0].mxu0 %v535
    %v986 = vpop.f32.mrb[0].mxu0
    %v987 = vadd.f32 0.0, %v986
    %v988 = vpop.f32.mrb[0].mxu0
    %v989 = vpop.f32.mrb[0].mxu0
    %v990 = vadd.f32 0.0, %v989
    %v991 = vpop.f32.mrb[0].mxu0
    %992 = vmatprep.mubr.bf16.mxu0 0
    %993 = vmatmul.mubr.bf16.gmra.mrb[0].mxu0 %v538
    %v994 = vpop.f32.mrb[0].mxu0
    %v995 = vadd.f32 0.0, %v994
    %v996 = vpop.f32.mrb[0].mxu0
    %v997 = vpop.f32.mrb[0].mxu0
    %v998 = vadd.f32 0.0, %v997
    %v999 = vpop.f32.mrb[0].mxu0
    %1000 = vdwg.mxu0
    %v1001 = vpack.c.bf16 %v930, %v929
    %v1002 = vpack.c.bf16 %v932, %v931
    %1003 = vmatprep.subr.bf16.mxu0 0
    %1004 = vmatpush1.bf16.msra.mxu0 %v1001
    %1005 = vmatprep.subr.bf16.mxu0 0
    %1006 = vmatpush1.bf16.msra.mxu0 %v1002
    %1007 = vmatprep.subr.bf16.mxu0 0
    %1008 = vmatpush1.bf16.msra.mxu0 0
    %1009 = vmatprep.subr.bf16.mxu0 0
    %1010 = vmatpush1.bf16.msra.mxu0 0
    %1011 = vmatprep.subr.bf16.mxu0 0
    %1012 = vmatpush1.bf16.msra.mxu0 0
    %1013 = vmatprep.subr.bf16.mxu0 0
    %1014 = vmatpush1.bf16.msra.mxu0 0
    %1015 = vmatprep.subr.bf16.mxu0 0
    %1016 = vmatpush1.bf16.msra.mxu0 0
    %1017 = vmatprep.subr.bf16.mxu0 0
    %1018 = vmatpush1.bf16.msra.mxu0 0
    %1019 = vmatprep.subr.bf16.mxu0 0
    %1020 = vmatpush1.bf16.msra.mxu0 0
    %1021 = vmatprep.subr.bf16.mxu0 0
    %1022 = vmatpush1.bf16.msra.mxu0 0
    %1023 = vmatprep.subr.bf16.mxu0 0
    %1024 = vmatpush1.bf16.msra.mxu0 0
    %1025 = vmatprep.subr.bf16.mxu0 0
    %1026 = vmatpush1.bf16.msra.mxu0 0
    %1027 = vmatprep.subr.bf16.mxu0 0
    %1028 = vmatpush1.bf16.msra.mxu0 0
    %1029 = vmatprep.subr.bf16.mxu0 0
    %1030 = vmatpush1.bf16.msra.mxu0 0
    %1031 = vmatprep.subr.bf16.mxu0 0
    %1032 = vmatpush1.bf16.msra.mxu0 0
    %1033 = vmatprep.subr.bf16.mxu0 0
    %1034 = vmatpush1.bf16.msra.mxu0 0
    %1035 = vmatprep.mubr.bf16.mxu0 0
    %1036 = vmatmul.mubr.bf16.gmra.mrb[0].mxu0 %v592
    %v1037 = vpop.f32.mrb[0].mxu0
    %v1038 = vadd.f32 0.0, %v1037
    %v1039 = vpop.f32.mrb[0].mxu0
    %v1040 = vpop.f32.mrb[0].mxu0
    %v1041 = vadd.f32 0.0, %v1040
    %v1042 = vpop.f32.mrb[0].mxu0
    %1043 = vmatprep.mubr.bf16.mxu0 0
    %1044 = vmatmul.mubr.bf16.gmra.mrb[0].mxu0 %v595
    %v1045 = vpop.f32.mrb[0].mxu0
    %v1046 = vadd.f32 0.0, %v1045
    %v1047 = vpop.f32.mrb[0].mxu0
    %v1048 = vpop.f32.mrb[0].mxu0
    %v1049 = vadd.f32 0.0, %v1048
    %v1050 = vpop.f32.mrb[0].mxu0
    %1051 = vdwg.mxu0
    %v1052 = vpack.c.bf16 %v990, %v987
    %v1053 = vpack.c.bf16 %v998, %v995
    %v1054 = vpack.c.bf16 %v1041, %v1038
    %v1055 = vpack.c.bf16 %v1049, %v1046
    %v1064 = vunpack.c.l.b16 %v941
    %v1065 = vunpack.c.l.b16 %v942
    %v1066 = vunpack.c.l.b16 %v943
    %v1067 = vunpack.c.l.b16 %v944
    %v1068 = vunpack.c.l.b16 %v945
    %v1069 = vunpack.c.l.b16 %v946
    %v1070 = vunpack.c.l.b16 %v947
    %v1071 = vunpack.c.l.b16 %v948
    %v1072 = vpack.c.b16 %v1065, %v1064
    %v1073 = vpack.c.b16 %v1067, %v1066
    %v1074 = vpack.c.b16 %v1069, %v1068
    %v1075 = vpack.c.b16 %v1071, %v1070
    %v1081 = vsel %vm839, %v950, 0
    %v1084 = vsel %vm839, %v951, 0
    %v1087 = vsel %vm839, %v1001, 0
    %v1090 = vsel %vm839, %v1002, 0
    %1092 = vmatprep.subr.bf16.mxu0 0
    %1093 = vmatpush1.bf16.msra.mxu0 %v1072
    %1094 = vmatprep.subr.bf16.mxu0 0
    %1095 = vmatpush1.bf16.msra.mxu0 %v1073
    %1096 = vmatprep.subr.bf16.mxu0 0
    %1097 = vmatpush1.bf16.msra.mxu0 %v1074
    %1098 = vmatprep.subr.bf16.mxu0 0
    %1099 = vmatpush1.bf16.msra.mxu0 %v1075
    %1100 = vmatprep.subr.bf16.mxu0 0
    %1101 = vmatpush1.bf16.msra.mxu0 0
    %1102 = vmatprep.subr.bf16.mxu0 0
    %1103 = vmatpush1.bf16.msra.mxu0 0
    %1104 = vmatprep.subr.bf16.mxu0 0
    %1105 = vmatpush1.bf16.msra.mxu0 0
    %1106 = vmatprep.subr.bf16.mxu0 0
    %1107 = vmatpush1.bf16.msra.mxu0 0
    %1108 = vmatprep.subr.bf16.mxu0 0
    %1109 = vmatpush1.bf16.msra.mxu0 0
    %1110 = vmatprep.subr.bf16.mxu0 0
    %1111 = vmatpush1.bf16.msra.mxu0 0
    %1112 = vmatprep.subr.bf16.mxu0 0
    %1113 = vmatpush1.bf16.msra.mxu0 0
    %1114 = vmatprep.subr.bf16.mxu0 0
    %1115 = vmatpush1.bf16.msra.mxu0 0
    %1116 = vmatprep.subr.bf16.mxu0 0
    %1117 = vmatpush1.bf16.msra.mxu0 0
    %1118 = vmatprep.subr.bf16.mxu0 0
    %1119 = vmatpush1.bf16.msra.mxu0 0
    %1120 = vmatprep.subr.bf16.mxu0 0
    %1121 = vmatpush1.bf16.msra.mxu0 0
    %1122 = vmatprep.subr.bf16.mxu0 0
    %1123 = vmatpush1.bf16.msra.mxu0 0
    %1124 = vmatprep.mubr.bf16.mxu0 0
    %1125 = vmatmul.mubr.bf16.gmra.mrb[0].mxu0 %v1081
    %v1126 = vpop.f32.mrb[0].mxu0
    %v1127 = vadd.f32 0.0, %v1126
    %v1128 = vpop.f32.mrb[0].mxu0
    %v1129 = vpop.f32.mrb[0].mxu0
    %v1130 = vadd.f32 0.0, %v1129
    %v1131 = vpop.f32.mrb[0].mxu0
    %1132 = vmatprep.mubr.bf16.mxu0 0
    %1133 = vmatmul.mubr.bf16.gmra.mrb[0].mxu0 %v1084
    %v1134 = vpop.f32.mrb[0].mxu0
    %v1135 = vadd.f32 0.0, %v1134
    %v1136 = vpop.f32.mrb[0].mxu0
    %v1137 = vpop.f32.mrb[0].mxu0
    %v1138 = vadd.f32 0.0, %v1137
    %v1139 = vpop.f32.mrb[0].mxu0
    %1140 = vmatprep.mubr.bf16.mxu0 0
    %1141 = vmatmul.mubr.bf16.gmra.mrb[0].mxu0 %v1087
    %v1142 = vpop.f32.mrb[0].mxu0
    %v1143 = vadd.f32 0.0, %v1142
    %v1144 = vpop.f32.mrb[0].mxu0
    %v1145 = vpop.f32.mrb[0].mxu0
    %v1146 = vadd.f32 0.0, %v1145
    %v1147 = vpop.f32.mrb[0].mxu0
    %1148 = vmatprep.mubr.bf16.mxu0 0
    %1149 = vmatmul.mubr.bf16.gmra.mrb[0].mxu0 %v1090
    %v1150 = vpop.f32.mrb[0].mxu0
    %v1151 = vadd.f32 0.0, %v1150
    %v1152 = vpop.f32.mrb[0].mxu0
    %v1153 = vpop.f32.mrb[0].mxu0
    %v1154 = vadd.f32 0.0, %v1153
    %v1155 = vpop.f32.mrb[0].mxu0
    %1156 = vdwg.mxu0
    %v1165 = vunpack.c.l.b16 %v933
    %v1166 = vunpack.c.l.b16 %v934
    %v1167 = vunpack.c.l.b16 %v935
    %v1168 = vunpack.c.l.b16 %v936
    %v1169 = vunpack.c.l.b16 %v937
    %v1170 = vunpack.c.l.b16 %v938
    %v1171 = vunpack.c.l.b16 %v939
    %v1172 = vunpack.c.l.b16 %v940
    %v1173 = vpack.c.b16 %v1166, %v1165
    %v1174 = vpack.c.b16 %v1168, %v1167
    %v1175 = vpack.c.b16 %v1170, %v1169
    %v1176 = vpack.c.b16 %v1172, %v1171
    %v1182 = vsel %vm839, %v1052, 0
    %v1185 = vsel %vm839, %v1053, 0
    %v1188 = vsel %vm839, %v1054, 0
    %v1191 = vsel %vm839, %v1055, 0
    %1193 = vmatprep.subr.bf16.mxu0 0
    %1194 = vmatpush1.bf16.msra.mxu0 %v1173
    %1195 = vmatprep.subr.bf16.mxu0 0
    %1196 = vmatpush1.bf16.msra.mxu0 %v1174
    %1197 = vmatprep.subr.bf16.mxu0 0
    %1198 = vmatpush1.bf16.msra.mxu0 %v1175
    %1199 = vmatprep.subr.bf16.mxu0 0
    %1200 = vmatpush1.bf16.msra.mxu0 %v1176
    %1201 = vmatprep.subr.bf16.mxu0 0
    %1202 = vmatpush1.bf16.msra.mxu0 0
    %1203 = vmatprep.subr.bf16.mxu0 0
    %1204 = vmatpush1.bf16.msra.mxu0 0
    %1205 = vmatprep.subr.bf16.mxu0 0
    %1206 = vmatpush1.bf16.msra.mxu0 0
    %1207 = vmatprep.subr.bf16.mxu0 0
    %1208 = vmatpush1.bf16.msra.mxu0 0
    %1209 = vmatprep.subr.bf16.mxu0 0
    %1210 = vmatpush1.bf16.msra.mxu0 0
    %1211 = vmatprep.subr.bf16.mxu0 0
    %1212 = vmatpush1.bf16.msra.mxu0 0
    %1213 = vmatprep.subr.bf16.mxu0 0
    %1214 = vmatpush1.bf16.msra.mxu0 0
    %1215 = vmatprep.subr.bf16.mxu0 0
    %1216 = vmatpush1.bf16.msra.mxu0 0
    %1217 = vmatprep.subr.bf16.mxu0 0
    %1218 = vmatpush1.bf16.msra.mxu0 0
    %1219 = vmatprep.subr.bf16.mxu0 0
    %1220 = vmatpush1.bf16.msra.mxu0 0
    %1221 = vmatprep.subr.bf16.mxu0 0
    %1222 = vmatpush1.bf16.msra.mxu0 0
    %1223 = vmatprep.subr.bf16.mxu0 0
    %1224 = vmatpush1.bf16.msra.mxu0 0
    %1225 = vmatprep.mubr.bf16.mxu0 0
    %1226 = vmatmul.mubr.bf16.gmra.mrb[0].mxu0 %v1182
    %v1227 = vpop.f32.mrb[0].mxu0
    %v1228 = vadd.f32 %v1127, %v1227
    %v1229 = vpop.f32.mrb[0].mxu0
    %v1230 = vpop.f32.mrb[0].mxu0
    %v1231 = vadd.f32 %v1130, %v1230
    %v1232 = vpop.f32.mrb[0].mxu0
    %1233 = vmatprep.mubr.bf16.mxu0 0
    %1234 = vmatmul.mubr.bf16.gmra.mrb[0].mxu0 %v1185
    %v1235 = vpop.f32.mrb[0].mxu0
    %v1236 = vadd.f32 %v1135, %v1235
    %v1237 = vpop.f32.mrb[0].mxu0
    %v1238 = vpop.f32.mrb[0].mxu0
    %v1239 = vadd.f32 %v1138, %v1238
    %v1240 = vpop.f32.mrb[0].mxu0
    %1241 = vmatprep.mubr.bf16.mxu0 0
    %1242 = vmatmul.mubr.bf16.gmra.mrb[0].mxu0 %v1188
    %v1243 = vpop.f32.mrb[0].mxu0
    %v1244 = vadd.f32 %v1143, %v1243
    %v1245 = vpop.f32.mrb[0].mxu0
    %v1246 = vpop.f32.mrb[0].mxu0
    %v1247 = vadd.f32 %v1146, %v1246
    %v1248 = vpop.f32.mrb[0].mxu0
    %1249 = vmatprep.mubr.bf16.mxu0 0
    %1250 = vmatmul.mubr.bf16.gmra.mrb[0].mxu0 %v1191
    %v1251 = vpop.f32.mrb[0].mxu0
    %v1252 = vadd.f32 %v1151, %v1251
    %v1253 = vpop.f32.mrb[0].mxu0
    %v1254 = vpop.f32.mrb[0].mxu0
    %v1255 = vadd.f32 %v1154, %v1254
    %v1256 = vpop.f32.mrb[0].mxu0
    %1257 = vdwg.mxu0
    %v1259 = vlaneseq
    %v1260 = vshrl.u32 %v1259, 7
    %v1261 = vsub.s32 0, %v1260
    %v1262 = vrot.slane %v949, %v1261
    %v1264 = vadd.f32 %v1228, %v1262
    %v1265 = vadd.f32 %v1231, %v1262
    %v1266 = vadd.f32 %v1236, %v1262
    %v1267 = vadd.f32 %v1239, %v1262
    %v1268 = vadd.f32 %v1244, %v1262
    %v1269 = vadd.f32 %v1247, %v1262
    %v1270 = vadd.f32 %v1252, %v1262
    %v1271 = vadd.f32 %v1255, %v1262
    %v1272 = vmax.f32 %v1264, 0.0
    %v1273 = vmax.f32 %v1265, 0.0
    %v1274 = vmax.f32 %v1266, 0.0
    %v1275 = vmax.f32 %v1267, 0.0
    %v1276 = vmax.f32 %v1268, 0.0
    %v1277 = vmax.f32 %v1269, 0.0
    %v1278 = vmax.f32 %v1270, 0.0
    %v1279 = vmax.f32 %v1271, 0.0
    %v1280 = vsel %vm839, %v1272, 0.0
    %v1281 = vsel %vm839, %v1273, 0.0
    %v1282 = vadd.f32 %v1280, %v1281
    %v1283 = vsel %vm839, %v1274, 0.0
    %v1284 = vadd.f32 %v1282, %v1283
    %v1285 = vsel %vm839, %v1275, 0.0
    %v1286 = vadd.f32 %v1284, %v1285
    %v1287 = vsel %vm839, %v1276, 0.0
    %v1288 = vadd.f32 %v1286, %v1287
    %v1289 = vsel %vm839, %v1277, 0.0
    %v1290 = vadd.f32 %v1288, %v1289
    %v1291 = vsel %vm839, %v1278, 0.0
    %v1292 = vadd.f32 %v1290, %v1291
    %v1293 = vsel %vm839, %v1279, 0.0
    %v1294 = vadd.f32 %v1292, %v1293
    %v1295 = vrot.slane %v1294, 4
    %v1296 = vadd.f32 %v1294, %v1295
    %v1297 = vrot.slane %v1296, 2
    %v1298 = vadd.f32 %v1296, %v1297
    %v1299 = vrot.slane %v1298, 1
    %v1300 = vadd.f32 %v1298, %v1299
    %v1301 = vmul.f32 %v1300, 0.015625
    %v1302 = vsub.f32 %v1272, %v1301
    %v1303 = vsub.f32 %v1273, %v1301
    %v1304 = vsub.f32 %v1274, %v1301
    %v1305 = vsub.f32 %v1275, %v1301
    %v1306 = vsub.f32 %v1276, %v1301
    %v1307 = vsub.f32 %v1277, %v1301
    %v1308 = vsub.f32 %v1278, %v1301
    %v1309 = vsub.f32 %v1279, %v1301
    %v1310 = vmul.f32 %v1302, %v1302
    %v1311 = vmul.f32 %v1303, %v1303
    %v1312 = vmul.f32 %v1304, %v1304
    %v1313 = vmul.f32 %v1305, %v1305
    %v1314 = vmul.f32 %v1306, %v1306
    %v1315 = vmul.f32 %v1307, %v1307
    %v1316 = vmul.f32 %v1308, %v1308
    %v1317 = vmul.f32 %v1309, %v1309
    %v1318 = vsel %vm839, %v1310, 0.0
    %v1319 = vsel %vm839, %v1311, 0.0
    %v1320 = vadd.f32 %v1318, %v1319
    %v1321 = vsel %vm839, %v1312, 0.0
    %v1322 = vadd.f32 %v1320, %v1321
    %v1323 = vsel %vm839, %v1313, 0.0
    %v1324 = vadd.f32 %v1322, %v1323
    %v1325 = vsel %vm839, %v1314, 0.0
    %v1326 = vadd.f32 %v1324, %v1325
    %v1327 = vsel %vm839, %v1315, 0.0
    %v1328 = vadd.f32 %v1326, %v1327
    %v1329 = vsel %vm839, %v1316, 0.0
    %v1330 = vadd.f32 %v1328, %v1329
    %v1331 = vsel %vm839, %v1317, 0.0
    %v1332 = vadd.f32 %v1330, %v1331
    %v1333 = vrot.slane %v1332, 4
    %v1334 = vadd.f32 %v1332, %v1333
    %v1335 = vrot.slane %v1334, 2
    %v1336 = vadd.f32 %v1334, %v1335
    %v1337 = vrot.slane %v1336, 1
    %v1338 = vadd.f32 %v1336, %v1337
    %v1339 = vmul.f32 %v1338, 0.015625
    %v1340 = vadd.f32 %v1339, 1e-05
    %v1341 = vrsqrt.pop %v1340
    %v1342 = vld [vmem:[%s17] sm:$0x1]
    %v1343 = vmul.f32 %v1341, %v1342
    %v1344 = vld [vmem:[%s19] sm:$0x1]
    %v1345 = vmul.f32 %v1301, %v1343
    %v1346 = vsub.f32 %v1344, %v1345
    %v1347 = vlaneseq
    %v1348 = vshrl.u32 %v1347, 7
    %v1349 = vsub.s32 0, %v1348
    %v1350 = vrot.slane %v1343, %v1349
    %v1351 = vmul.f32 %v1272, %v1350
    %v1352 = vmul.f32 %v1273, %v1350
    %v1353 = vmul.f32 %v1274, %v1350
    %v1354 = vmul.f32 %v1275, %v1350
    %v1355 = vmul.f32 %v1276, %v1350
    %v1356 = vmul.f32 %v1277, %v1350
    %v1357 = vmul.f32 %v1278, %v1350
    %v1358 = vmul.f32 %v1279, %v1350
    %v1360 = vlaneseq
    %v1361 = vshrl.u32 %v1360, 7
    %v1362 = vsub.s32 0, %v1361
    %v1363 = vrot.slane %v1346, %v1362
    %v1365 = vadd.f32 %v1351, %v1363
    %v1366 = vadd.f32 %v1352, %v1363
    %v1367 = vadd.f32 %v1353, %v1363
    %v1368 = vadd.f32 %v1354, %v1363
    %v1369 = vadd.f32 %v1355, %v1363
    %v1370 = vadd.f32 %v1356, %v1363
    %v1371 = vadd.f32 %v1357, %v1363
    %v1372 = vadd.f32 %v1358, %v1363
    %v1373 = vld [vmem:[%s21] sm:$0xf]
    %v1374 = vld [vmem:[%s21 + $0x4] sm:$0xf]
    %v1375 = vld [vmem:[%s21 + $0x8] sm:$0xf]
    %v1376 = vld [vmem:[%s21 + $0xc] sm:$0xf]
    %v1377 = vld [vmem:[%s21 + $0x10] sm:$0xf]
    %v1378 = vld [vmem:[%s21 + $0x14] sm:$0xf]
    %v1379 = vld [vmem:[%s21 + $0x18] sm:$0xf]
    %v1380 = vld [vmem:[%s21 + $0x1c] sm:$0xf]
    %v1381 = vld [vmem:[%s21 + $0x20] sm:$0xf]
    %v1382 = vld [vmem:[%s21 + $0x24] sm:$0xf]
    %v1383 = vld [vmem:[%s21 + $0x28] sm:$0xf]
    %v1384 = vld [vmem:[%s21 + $0x2c] sm:$0xf]
    %v1385 = vld [vmem:[%s21 + $0x30] sm:$0xf]
    %v1386 = vld [vmem:[%s21 + $0x34] sm:$0xf]
    %v1387 = vld [vmem:[%s21 + $0x38] sm:$0xf]
    %v1388 = vld [vmem:[%s21 + $0x3c] sm:$0xf]
    %v1389 = vld [vmem:[%s23] sm:$0x1]
    %v1390 = vpack.c.bf16 %v1366, %v1365
    %v1391 = vpack.c.bf16 %v1368, %v1367
    %1392 = vmatprep.subr.bf16.mxu0 0
    %1393 = vmatpush1.bf16.msra.mxu0 %v1390
    %1394 = vmatprep.subr.bf16.mxu0 0
    %1395 = vmatpush1.bf16.msra.mxu0 %v1391
    %1396 = vmatprep.subr.bf16.mxu0 0
    %1397 = vmatpush1.bf16.msra.mxu0 0
    %1398 = vmatprep.subr.bf16.mxu0 0
    %1399 = vmatpush1.bf16.msra.mxu0 0
    %1400 = vmatprep.subr.bf16.mxu0 0
    %1401 = vmatpush1.bf16.msra.mxu0 0
    %1402 = vmatprep.subr.bf16.mxu0 0
    %1403 = vmatpush1.bf16.msra.mxu0 0
    %1404 = vmatprep.subr.bf16.mxu0 0
    %1405 = vmatpush1.bf16.msra.mxu0 0
    %1406 = vmatprep.subr.bf16.mxu0 0
    %1407 = vmatpush1.bf16.msra.mxu0 0
    %1408 = vmatprep.subr.bf16.mxu0 0
    %1409 = vmatpush1.bf16.msra.mxu0 0
    %1410 = vmatprep.subr.bf16.mxu0 0
    %1411 = vmatpush1.bf16.msra.mxu0 0
    %1412 = vmatprep.subr.bf16.mxu0 0
    %1413 = vmatpush1.bf16.msra.mxu0 0
    %1414 = vmatprep.subr.bf16.mxu0 0
    %1415 = vmatpush1.bf16.msra.mxu0 0
    %1416 = vmatprep.subr.bf16.mxu0 0
    %1417 = vmatpush1.bf16.msra.mxu0 0
    %1418 = vmatprep.subr.bf16.mxu0 0
    %1419 = vmatpush1.bf16.msra.mxu0 0
    %1420 = vmatprep.subr.bf16.mxu0 0
    %1421 = vmatpush1.bf16.msra.mxu0 0
    %1422 = vmatprep.subr.bf16.mxu0 0
    %1423 = vmatpush1.bf16.msra.mxu0 0
    %1424 = vmatprep.mubr.bf16.mxu0 0
    %1425 = vmatmul.mubr.bf16.gmra.mrb[0].mxu0 %v535
    %v1426 = vpop.f32.mrb[0].mxu0
    %v1427 = vadd.f32 0.0, %v1426
    %v1428 = vpop.f32.mrb[0].mxu0
    %v1429 = vpop.f32.mrb[0].mxu0
    %v1430 = vadd.f32 0.0, %v1429
    %v1431 = vpop.f32.mrb[0].mxu0
    %1432 = vmatprep.mubr.bf16.mxu0 0
    %1433 = vmatmul.mubr.bf16.gmra.mrb[0].mxu0 %v538
    %v1434 = vpop.f32.mrb[0].mxu0
    %v1435 = vadd.f32 0.0, %v1434
    %v1436 = vpop.f32.mrb[0].mxu0
    %v1437 = vpop.f32.mrb[0].mxu0
    %v1438 = vadd.f32 0.0, %v1437
    %v1439 = vpop.f32.mrb[0].mxu0
    %1440 = vdwg.mxu0
    %v1441 = vpack.c.bf16 %v1370, %v1369
    %v1442 = vpack.c.bf16 %v1372, %v1371
    %1443 = vmatprep.subr.bf16.mxu0 0
    %1444 = vmatpush1.bf16.msra.mxu0 %v1441
    %1445 = vmatprep.subr.bf16.mxu0 0
    %1446 = vmatpush1.bf16.msra.mxu0 %v1442
    %1447 = vmatprep.subr.bf16.mxu0 0
    %1448 = vmatpush1.bf16.msra.mxu0 0
    %1449 = vmatprep.subr.bf16.mxu0 0
    %1450 = vmatpush1.bf16.msra.mxu0 0
    %1451 = vmatprep.subr.bf16.mxu0 0
    %1452 = vmatpush1.bf16.msra.mxu0 0
    %1453 = vmatprep.subr.bf16.mxu0 0
    %1454 = vmatpush1.bf16.msra.mxu0 0
    %1455 = vmatprep.subr.bf16.mxu0 0
    %1456 = vmatpush1.bf16.msra.mxu0 0
    %1457 = vmatprep.subr.bf16.mxu0 0
    %1458 = vmatpush1.bf16.msra.mxu0 0
    %1459 = vmatprep.subr.bf16.mxu0 0
    %1460 = vmatpush1.bf16.msra.mxu0 0
    %1461 = vmatprep.subr.bf16.mxu0 0
    %1462 = vmatpush1.bf16.msra.mxu0 0
    %1463 = vmatprep.subr.bf16.mxu0 0
    %1464 = vmatpush1.bf16.msra.mxu0 0
    %1465 = vmatprep.subr.bf16.mxu0 0
    %1466 = vmatpush1.bf16.msra.mxu0 0
    %1467 = vmatprep.subr.bf16.mxu0 0
    %1468 = vmatpush1.bf16.msra.mxu0 0
    %1469 = vmatprep.subr.bf16.mxu0 0
    %1470 = vmatpush1.bf16.msra.mxu0 0
    %1471 = vmatprep.subr.bf16.mxu0 0
    %1472 = vmatpush1.bf16.msra.mxu0 0
    %1473 = vmatprep.subr.bf16.mxu0 0
    %1474 = vmatpush1.bf16.msra.mxu0 0
    %1475 = vmatprep.mubr.bf16.mxu0 0
    %1476 = vmatmul.mubr.bf16.gmra.mrb[0].mxu0 %v592
    %v1477 = vpop.f32.mrb[0].mxu0
    %v1478 = vadd.f32 0.0, %v1477
    %v1479 = vpop.f32.mrb[0].mxu0
    %v1480 = vpop.f32.mrb[0].mxu0
    %v1481 = vadd.f32 0.0, %v1480
    %v1482 = vpop.f32.mrb[0].mxu0
    %1483 = vmatprep.mubr.bf16.mxu0 0
    %1484 = vmatmul.mubr.bf16.gmra.mrb[0].mxu0 %v595
    %v1485 = vpop.f32.mrb[0].mxu0
    %v1486 = vadd.f32 0.0, %v1485
    %v1487 = vpop.f32.mrb[0].mxu0
    %v1488 = vpop.f32.mrb[0].mxu0
    %v1489 = vadd.f32 0.0, %v1488
    %v1490 = vpop.f32.mrb[0].mxu0
    %1491 = vdwg.mxu0
    %v1492 = vpack.c.bf16 %v1430, %v1427
    %v1493 = vpack.c.bf16 %v1438, %v1435
    %v1494 = vpack.c.bf16 %v1481, %v1478
    %v1495 = vpack.c.bf16 %v1489, %v1486
    %v1504 = vunpack.c.l.b16 %v1381
    %v1505 = vunpack.c.l.b16 %v1382
    %v1506 = vunpack.c.l.b16 %v1383
    %v1507 = vunpack.c.l.b16 %v1384
    %v1508 = vunpack.c.l.b16 %v1385
    %v1509 = vunpack.c.l.b16 %v1386
    %v1510 = vunpack.c.l.b16 %v1387
    %v1511 = vunpack.c.l.b16 %v1388
    %v1512 = vpack.c.b16 %v1505, %v1504
    %v1513 = vpack.c.b16 %v1507, %v1506
    %v1514 = vpack.c.b16 %v1509, %v1508
    %v1515 = vpack.c.b16 %v1511, %v1510
    %v1521 = vsel %vm839, %v1390, 0
    %v1524 = vsel %vm839, %v1391, 0
    %v1527 = vsel %vm839, %v1441, 0
    %v1530 = vsel %vm839, %v1442, 0
    %1532 = vmatprep.subr.bf16.mxu0 0
    %1533 = vmatpush1.bf16.msra.mxu0 %v1512
    %1534 = vmatprep.subr.bf16.mxu0 0
    %1535 = vmatpush1.bf16.msra.mxu0 %v1513
    %1536 = vmatprep.subr.bf16.mxu0 0
    %1537 = vmatpush1.bf16.msra.mxu0 %v1514
    %1538 = vmatprep.subr.bf16.mxu0 0
    %1539 = vmatpush1.bf16.msra.mxu0 %v1515
    %1540 = vmatprep.subr.bf16.mxu0 0
    %1541 = vmatpush1.bf16.msra.mxu0 0
    %1542 = vmatprep.subr.bf16.mxu0 0
    %1543 = vmatpush1.bf16.msra.mxu0 0
    %1544 = vmatprep.subr.bf16.mxu0 0
    %1545 = vmatpush1.bf16.msra.mxu0 0
    %1546 = vmatprep.subr.bf16.mxu0 0
    %1547 = vmatpush1.bf16.msra.mxu0 0
    %1548 = vmatprep.subr.bf16.mxu0 0
    %1549 = vmatpush1.bf16.msra.mxu0 0
    %1550 = vmatprep.subr.bf16.mxu0 0
    %1551 = vmatpush1.bf16.msra.mxu0 0
    %1552 = vmatprep.subr.bf16.mxu0 0
    %1553 = vmatpush1.bf16.msra.mxu0 0
    %1554 = vmatprep.subr.bf16.mxu0 0
    %1555 = vmatpush1.bf16.msra.mxu0 0
    %1556 = vmatprep.subr.bf16.mxu0 0
    %1557 = vmatpush1.bf16.msra.mxu0 0
    %1558 = vmatprep.subr.bf16.mxu0 0
    %1559 = vmatpush1.bf16.msra.mxu0 0
    %1560 = vmatprep.subr.bf16.mxu0 0
    %1561 = vmatpush1.bf16.msra.mxu0 0
    %1562 = vmatprep.subr.bf16.mxu0 0
    %1563 = vmatpush1.bf16.msra.mxu0 0
    %1564 = vmatprep.mubr.bf16.mxu0 0
    %1565 = vmatmul.mubr.bf16.gmra.mrb[0].mxu0 %v1521
    %v1566 = vpop.f32.mrb[0].mxu0
    %v1567 = vadd.f32 0.0, %v1566
    %v1568 = vpop.f32.mrb[0].mxu0
    %v1569 = vpop.f32.mrb[0].mxu0
    %v1570 = vadd.f32 0.0, %v1569
    %v1571 = vpop.f32.mrb[0].mxu0
    %1572 = vmatprep.mubr.bf16.mxu0 0
    %1573 = vmatmul.mubr.bf16.gmra.mrb[0].mxu0 %v1524
    %v1574 = vpop.f32.mrb[0].mxu0
    %v1575 = vadd.f32 0.0, %v1574
    %v1576 = vpop.f32.mrb[0].mxu0
    %v1577 = vpop.f32.mrb[0].mxu0
    %v1578 = vadd.f32 0.0, %v1577
    %v1579 = vpop.f32.mrb[0].mxu0
    %1580 = vmatprep.mubr.bf16.mxu0 0
    %1581 = vmatmul.mubr.bf16.gmra.mrb[0].mxu0 %v1527
    %v1582 = vpop.f32.mrb[0].mxu0
    %v1583 = vadd.f32 0.0, %v1582
    %v1584 = vpop.f32.mrb[0].mxu0
    %v1585 = vpop.f32.mrb[0].mxu0
    %v1586 = vadd.f32 0.0, %v1585
    %v1587 = vpop.f32.mrb[0].mxu0
    %1588 = vmatprep.mubr.bf16.mxu0 0
    %1589 = vmatmul.mubr.bf16.gmra.mrb[0].mxu0 %v1530
    %v1590 = vpop.f32.mrb[0].mxu0
    %v1591 = vadd.f32 0.0, %v1590
    %v1592 = vpop.f32.mrb[0].mxu0
    %v1593 = vpop.f32.mrb[0].mxu0
    %v1594 = vadd.f32 0.0, %v1593
    %v1595 = vpop.f32.mrb[0].mxu0
    %1596 = vdwg.mxu0
    %v1605 = vunpack.c.l.b16 %v1373
    %v1606 = vunpack.c.l.b16 %v1374
    %v1607 = vunpack.c.l.b16 %v1375
    %v1608 = vunpack.c.l.b16 %v1376
    %v1609 = vunpack.c.l.b16 %v1377
    %v1610 = vunpack.c.l.b16 %v1378
    %v1611 = vunpack.c.l.b16 %v1379
    %v1612 = vunpack.c.l.b16 %v1380
    %v1613 = vpack.c.b16 %v1606, %v1605
    %v1614 = vpack.c.b16 %v1608, %v1607
    %v1615 = vpack.c.b16 %v1610, %v1609
    %v1616 = vpack.c.b16 %v1612, %v1611
    %v1622 = vsel %vm839, %v1492, 0
    %v1625 = vsel %vm839, %v1493, 0
    %v1628 = vsel %vm839, %v1494, 0
    %v1631 = vsel %vm839, %v1495, 0
    %1633 = vmatprep.subr.bf16.mxu0 0
    %1634 = vmatpush1.bf16.msra.mxu0 %v1613
    %1635 = vmatprep.subr.bf16.mxu0 0
    %1636 = vmatpush1.bf16.msra.mxu0 %v1614
    %1637 = vmatprep.subr.bf16.mxu0 0
    %1638 = vmatpush1.bf16.msra.mxu0 %v1615
    %1639 = vmatprep.subr.bf16.mxu0 0
    %1640 = vmatpush1.bf16.msra.mxu0 %v1616
    %1641 = vmatprep.subr.bf16.mxu0 0
    %1642 = vmatpush1.bf16.msra.mxu0 0
    %1643 = vmatprep.subr.bf16.mxu0 0
    %1644 = vmatpush1.bf16.msra.mxu0 0
    %1645 = vmatprep.subr.bf16.mxu0 0
    %1646 = vmatpush1.bf16.msra.mxu0 0
    %1647 = vmatprep.subr.bf16.mxu0 0
    %1648 = vmatpush1.bf16.msra.mxu0 0
    %1649 = vmatprep.subr.bf16.mxu0 0
    %1650 = vmatpush1.bf16.msra.mxu0 0
    %1651 = vmatprep.subr.bf16.mxu0 0
    %1652 = vmatpush1.bf16.msra.mxu0 0
    %1653 = vmatprep.subr.bf16.mxu0 0
    %1654 = vmatpush1.bf16.msra.mxu0 0
    %1655 = vmatprep.subr.bf16.mxu0 0
    %1656 = vmatpush1.bf16.msra.mxu0 0
    %1657 = vmatprep.subr.bf16.mxu0 0
    %1658 = vmatpush1.bf16.msra.mxu0 0
    %1659 = vmatprep.subr.bf16.mxu0 0
    %1660 = vmatpush1.bf16.msra.mxu0 0
    %1661 = vmatprep.subr.bf16.mxu0 0
    %1662 = vmatpush1.bf16.msra.mxu0 0
    %1663 = vmatprep.subr.bf16.mxu0 0
    %1664 = vmatpush1.bf16.msra.mxu0 0
    %1665 = vmatprep.mubr.bf16.mxu0 0
    %1666 = vmatmul.mubr.bf16.gmra.mrb[0].mxu0 %v1622
    %v1667 = vpop.f32.mrb[0].mxu0
    %v1668 = vadd.f32 %v1567, %v1667
    %v1669 = vpop.f32.mrb[0].mxu0
    %v1670 = vpop.f32.mrb[0].mxu0
    %v1671 = vadd.f32 %v1570, %v1670
    %v1672 = vpop.f32.mrb[0].mxu0
    %1673 = vmatprep.mubr.bf16.mxu0 0
    %1674 = vmatmul.mubr.bf16.gmra.mrb[0].mxu0 %v1625
    %v1675 = vpop.f32.mrb[0].mxu0
    %v1676 = vadd.f32 %v1575, %v1675
    %v1677 = vpop.f32.mrb[0].mxu0
    %v1678 = vpop.f32.mrb[0].mxu0
    %v1679 = vadd.f32 %v1578, %v1678
    %v1680 = vpop.f32.mrb[0].mxu0
    %1681 = vmatprep.mubr.bf16.mxu0 0
    %1682 = vmatmul.mubr.bf16.gmra.mrb[0].mxu0 %v1628
    %v1683 = vpop.f32.mrb[0].mxu0
    %v1684 = vadd.f32 %v1583, %v1683
    %v1685 = vpop.f32.mrb[0].mxu0
    %v1686 = vpop.f32.mrb[0].mxu0
    %v1687 = vadd.f32 %v1586, %v1686
    %v1688 = vpop.f32.mrb[0].mxu0
    %1689 = vmatprep.mubr.bf16.mxu0 0
    %1690 = vmatmul.mubr.bf16.gmra.mrb[0].mxu0 %v1631
    %v1691 = vpop.f32.mrb[0].mxu0
    %v1692 = vadd.f32 %v1591, %v1691
    %v1693 = vpop.f32.mrb[0].mxu0
    %v1694 = vpop.f32.mrb[0].mxu0
    %v1695 = vadd.f32 %v1594, %v1694
    %v1696 = vpop.f32.mrb[0].mxu0
    %1697 = vdwg.mxu0
    %v1699 = vlaneseq
    %v1700 = vshrl.u32 %v1699, 7
    %v1701 = vsub.s32 0, %v1700
    %v1702 = vrot.slane %v1389, %v1701
    %v1704 = vadd.f32 %v1668, %v1702
    %v1705 = vadd.f32 %v1671, %v1702
    %v1706 = vadd.f32 %v1676, %v1702
    %v1707 = vadd.f32 %v1679, %v1702
    %v1708 = vadd.f32 %v1684, %v1702
    %v1709 = vadd.f32 %v1687, %v1702
    %v1710 = vadd.f32 %v1692, %v1702
    %v1711 = vadd.f32 %v1695, %v1702
    %v1712 = vmax.f32 %v1704, 0.0
    %v1713 = vmax.f32 %v1705, 0.0
    %v1714 = vmax.f32 %v1706, 0.0
    %v1715 = vmax.f32 %v1707, 0.0
    %v1716 = vmax.f32 %v1708, 0.0
    %v1717 = vmax.f32 %v1709, 0.0
    %v1718 = vmax.f32 %v1710, 0.0
    %v1719 = vmax.f32 %v1711, 0.0
    %vm1720 = vcmask 64512
    %v1721 = vsel %vm1720, %v1712, 0.0
    %v1722 = vsel %vm1720, %v1713, 0.0
    %v1723 = vadd.f32 %v1721, %v1722
    %v1724 = vsel %vm1720, %v1714, 0.0
    %v1725 = vadd.f32 %v1723, %v1724
    %v1726 = vsel %vm1720, %v1715, 0.0
    %v1727 = vadd.f32 %v1725, %v1726
    %v1728 = vsel %vm1720, %v1716, 0.0
    %v1729 = vadd.f32 %v1727, %v1728
    %v1730 = vsel %vm1720, %v1717, 0.0
    %v1731 = vadd.f32 %v1729, %v1730
    %v1732 = vsel %vm1720, %v1718, 0.0
    %v1733 = vadd.f32 %v1731, %v1732
    %v1734 = vsel %vm1720, %v1719, 0.0
    %v1735 = vadd.f32 %v1733, %v1734
    %v1736 = vrot.slane %v1735, 4
    %v1737 = vadd.f32 %v1735, %v1736
    %v1738 = vrot.slane %v1737, 2
    %v1739 = vadd.f32 %v1737, %v1738
    %v1740 = vrot.slane %v1739, 1
    %v1741 = vadd.f32 %v1739, %v1740
    %v1742 = vmul.f32 %v1741, 0.015625
    %v1743 = vsub.f32 %v1712, %v1742
    %v1744 = vsub.f32 %v1713, %v1742
    %v1745 = vsub.f32 %v1714, %v1742
    %v1746 = vsub.f32 %v1715, %v1742
    %v1747 = vsub.f32 %v1716, %v1742
    %v1748 = vsub.f32 %v1717, %v1742
    %v1749 = vsub.f32 %v1718, %v1742
    %v1750 = vsub.f32 %v1719, %v1742
    %v1751 = vmul.f32 %v1743, %v1743
    %v1752 = vmul.f32 %v1744, %v1744
    %v1753 = vmul.f32 %v1745, %v1745
    %v1754 = vmul.f32 %v1746, %v1746
    %v1755 = vmul.f32 %v1747, %v1747
    %v1756 = vmul.f32 %v1748, %v1748
    %v1757 = vmul.f32 %v1749, %v1749
    %v1758 = vmul.f32 %v1750, %v1750
    %v1759 = vsel %vm1720, %v1751, 0.0
    %v1760 = vsel %vm1720, %v1752, 0.0
    %v1761 = vadd.f32 %v1759, %v1760
    %v1762 = vsel %vm1720, %v1753, 0.0
    %v1763 = vadd.f32 %v1761, %v1762
    %v1764 = vsel %vm1720, %v1754, 0.0
    %v1765 = vadd.f32 %v1763, %v1764
    %v1766 = vsel %vm1720, %v1755, 0.0
    %v1767 = vadd.f32 %v1765, %v1766
    %v1768 = vsel %vm1720, %v1756, 0.0
    %v1769 = vadd.f32 %v1767, %v1768
    %v1770 = vsel %vm1720, %v1757, 0.0
    %v1771 = vadd.f32 %v1769, %v1770
    %v1772 = vsel %vm1720, %v1758, 0.0
    %v1773 = vadd.f32 %v1771, %v1772
    %v1774 = vrot.slane %v1773, 4
    %v1775 = vadd.f32 %v1773, %v1774
    %v1776 = vrot.slane %v1775, 2
    %v1777 = vadd.f32 %v1775, %v1776
    %v1778 = vrot.slane %v1777, 1
    %v1779 = vadd.f32 %v1777, %v1778
    %v1780 = vmul.f32 %v1779, 0.015625
    %v1781 = vadd.f32 %v1780, 1e-05
    %v1782 = vrsqrt.pop %v1781
    %v1783 = vld [vmem:[%s25] sm:$0x1]
    %v1784 = vmul.f32 %v1782, %v1783
    %v1785 = vld [vmem:[%s27] sm:$0x1]
    %v1786 = vmul.f32 %v1742, %v1784
    %v1787 = vsub.f32 %v1785, %v1786
    %v1788 = vlaneseq
    %v1789 = vshrl.u32 %v1788, 7
    %v1790 = vsub.s32 0, %v1789
    %v1791 = vrot.slane %v1784, %v1790
    %v1792 = vmul.f32 %v1712, %v1791
    %v1793 = vmul.f32 %v1713, %v1791
    %v1794 = vmul.f32 %v1714, %v1791
    %v1795 = vmul.f32 %v1715, %v1791
    %v1796 = vmul.f32 %v1716, %v1791
    %v1797 = vmul.f32 %v1717, %v1791
    %v1798 = vmul.f32 %v1718, %v1791
    %v1799 = vmul.f32 %v1719, %v1791
    %v1801 = vlaneseq
    %v1802 = vshrl.u32 %v1801, 7
    %v1803 = vsub.s32 0, %v1802
    %v1804 = vrot.slane %v1787, %v1803
    %v1806 = vadd.f32 %v1792, %v1804
    %v1807 = vadd.f32 %v1793, %v1804
    %v1808 = vadd.f32 %v1794, %v1804
    %v1809 = vadd.f32 %v1795, %v1804
    %v1810 = vadd.f32 %v1796, %v1804
    %v1811 = vadd.f32 %v1797, %v1804
    %v1812 = vadd.f32 %v1798, %v1804
    %v1813 = vadd.f32 %v1799, %v1804
    %1818 = vrot.lane.b32.xlu0 %v1365, 64
    %v1819 = vpop.permute.xlu0 %1818
    %1820 = vrot.lane.b32.xlu0 %v1366, 64
    %v1821 = vpop.permute.xlu0 %1820
    %1822 = vrot.lane.b32.xlu0 %v1367, 64
    %v1823 = vpop.permute.xlu0 %1822
    %1824 = vrot.lane.b32.xlu0 %v1368, 64
    %v1825 = vpop.permute.xlu0 %1824
    %v1830 = vsel %vm839, %v925, %v1819
    %v1831 = vsel %vm839, %v926, %v1821
    %v1832 = vsel %vm839, %v927, %v1823
    %v1833 = vsel %vm839, %v928, %v1825
    %1838 = vrot.lane.b32.xlu0 %v1369, 64
    %v1839 = vpop.permute.xlu0 %1838
    %1840 = vrot.lane.b32.xlu0 %v1370, 64
    %v1841 = vpop.permute.xlu0 %1840
    %1842 = vrot.lane.b32.xlu0 %v1371, 64
    %v1843 = vpop.permute.xlu0 %1842
    %1844 = vrot.lane.b32.xlu0 %v1372, 64
    %v1845 = vpop.permute.xlu0 %1844
    %v1850 = vsel %vm839, %v929, %v1839
    %v1851 = vsel %vm839, %v930, %v1841
    %v1852 = vsel %vm839, %v931, %v1843
    %v1853 = vsel %vm839, %v932, %v1845
    %v1854 = vld [vmem:[%s29] sm:$0xf]
    %v1855 = vld [vmem:[%s29 + $0x4] sm:$0xf]
    %v1856 = vld [vmem:[%s29 + $0x8] sm:$0xf]
    %v1857 = vld [vmem:[%s29 + $0xc] sm:$0xf]
    %v1858 = vld [vmem:[%s29 + $0x10] sm:$0xf]
    %v1859 = vld [vmem:[%s29 + $0x14] sm:$0xf]
    %v1860 = vld [vmem:[%s29 + $0x18] sm:$0xf]
    %v1861 = vld [vmem:[%s29 + $0x1c] sm:$0xf]
    %v1862 = vld [vmem:[%s29 + $0x20] sm:$0xf]
    %v1863 = vld [vmem:[%s29 + $0x24] sm:$0xf]
    %v1864 = vld [vmem:[%s29 + $0x28] sm:$0xf]
    %v1865 = vld [vmem:[%s29 + $0x2c] sm:$0xf]
    %v1866 = vld [vmem:[%s29 + $0x30] sm:$0xf]
    %v1867 = vld [vmem:[%s29 + $0x34] sm:$0xf]
    %v1868 = vld [vmem:[%s29 + $0x38] sm:$0xf]
    %v1869 = vld [vmem:[%s29 + $0x3c] sm:$0xf]
    %v1870 = vld [vmem:[%s29 + $0x40] sm:$0xf]
    %v1871 = vld [vmem:[%s31] sm:$0x1]
    %v1872 = vpack.c.bf16 %v1831, %v1830
    %v1873 = vpack.c.bf16 %v1807, %v1806
    %v1874 = vpack.c.bf16 %v1833, %v1832
    %v1875 = vpack.c.bf16 %v1809, %v1808
    %v1876 = vpack.c.bf16 %v1851, %v1850
    %v1877 = vpack.c.bf16 %v1811, %v1810
    %v1878 = vpack.c.bf16 %v1853, %v1852
    %v1879 = vpack.c.bf16 %v1813, %v1812
    %v1881 = vlaneseq
    %v1882 = vshrl.u32 %v1881, 7
    %v1883 = vsub.s32 0, %v1882
    %v1884 = vrot.slane %v1871, %v1883
    %v1903 = vunpack.c.l.b16 %v1854
    %v1904 = vunpack.c.l.b16 %v1855
    %v1905 = vunpack.c.l.b16 %v1856
    %v1906 = vunpack.c.l.b16 %v1857
    %v1907 = vunpack.c.l.b16 %v1858
    %v1908 = vunpack.c.l.b16 %v1859
    %v1909 = vunpack.c.l.b16 %v1860
    %v1910 = vunpack.c.l.b16 %v1861
    %v1911 = vunpack.c.l.b16 %v1862
    %v1912 = vunpack.c.l.b16 %v1863
    %v1913 = vunpack.c.l.b16 %v1864
    %v1914 = vunpack.c.l.b16 %v1865
    %v1915 = vunpack.c.l.b16 %v1866
    %v1916 = vunpack.c.l.b16 %v1867
    %v1917 = vunpack.c.l.b16 %v1868
    %v1918 = vunpack.c.l.b16 %v1869
    %v1919 = vunpack.c.l.b16 %v1870
    %v1920 = vpack.c.b16 %v1904, %v1903
    %v1921 = vpack.c.b16 %v1906, %v1905
    %v1922 = vpack.c.b16 %v1908, %v1907
    %v1923 = vpack.c.b16 %v1910, %v1909
    %v1924 = vpack.c.b16 %v1912, %v1911
    %v1925 = vpack.c.b16 %v1914, %v1913
    %v1926 = vpack.c.b16 %v1916, %v1915
    %v1927 = vpack.c.b16 %v1918, %v1917
    %v1928 = vpack.c.b16 %v1919, %v1919
    %v1938 = vsel %vm1720, %v1873, 0
    %v1941 = vsel %vm1720, %v1875, 0
    %v1944 = vsel %vm1720, %v1877, 0
    %v1947 = vsel %vm1720, %v1879, 0
    %vm1949 = vcmask 1043456
    %v1951 = vsel %vm1949, %v1928, 0
    %1953 = vmatprep.subr.bf16.mxu0 0
    %1954 = vmatpush1.bf16.msra.mxu0 %v1920
    %1955 = vmatprep.subr.bf16.mxu0 0
    %1956 = vmatpush1.bf16.msra.mxu0 %v1921
    %1957 = vmatprep.subr.bf16.mxu0 0
    %1958 = vmatpush1.bf16.msra.mxu0 %v1922
    %1959 = vmatprep.subr.bf16.mxu0 0
    %1960 = vmatpush1.bf16.msra.mxu0 %v1923
    %1961 = vmatprep.subr.bf16.mxu0 0
    %1962 = vmatpush1.bf16.msra.mxu0 %v1924
    %1963 = vmatprep.subr.bf16.mxu0 0
    %1964 = vmatpush1.bf16.msra.mxu0 %v1925
    %1965 = vmatprep.subr.bf16.mxu0 0
    %1966 = vmatpush1.bf16.msra.mxu0 %v1926
    %1967 = vmatprep.subr.bf16.mxu0 0
    %1968 = vmatpush1.bf16.msra.mxu0 %v1927
    %1969 = vmatprep.subr.bf16.mxu0 0
    %1970 = vmatpush1.bf16.msra.mxu0 %v1951
    %1971 = vmatprep.subr.bf16.mxu0 0
    %1972 = vmatpush1.bf16.msra.mxu0 0
    %1973 = vmatprep.subr.bf16.mxu0 0
    %1974 = vmatpush1.bf16.msra.mxu0 0
    %1975 = vmatprep.subr.bf16.mxu0 0
    %1976 = vmatpush1.bf16.msra.mxu0 0
    %1977 = vmatprep.subr.bf16.mxu0 0
    %1978 = vmatpush1.bf16.msra.mxu0 0
    %1979 = vmatprep.subr.bf16.mxu0 0
    %1980 = vmatpush1.bf16.msra.mxu0 0
    %1981 = vmatprep.subr.bf16.mxu0 0
    %1982 = vmatpush1.bf16.msra.mxu0 0
    %1983 = vmatprep.subr.bf16.mxu0 0
    %1984 = vmatpush1.bf16.msra.mxu0 0
    %1985 = vmatprep.mubr.bf16.mxu0 %v1938
    %1986 = vmatmul.mubr.bf16.gmra.mrb[0].mxu0 %v1872
    %v1987 = vpop.f32.mrb[0].mxu0
    %v1988 = vadd.f32 %v1884, %v1987
    %v1989 = vpop.f32.mrb[0].mxu0
    %v1990 = vpop.f32.mrb[0].mxu0
    %v1991 = vadd.f32 %v1884, %v1990
    %v1992 = vpop.f32.mrb[0].mxu0
    %1993 = vmatprep.mubr.bf16.mxu0 %v1941
    %1994 = vmatmul.mubr.bf16.gmra.mrb[0].mxu0 %v1874
    %v1995 = vpop.f32.mrb[0].mxu0
    %v1996 = vadd.f32 %v1884, %v1995
    %v1997 = vpop.f32.mrb[0].mxu0
    %v1998 = vpop.f32.mrb[0].mxu0
    %v1999 = vadd.f32 %v1884, %v1998
    %v2000 = vpop.f32.mrb[0].mxu0
    %2001 = vmatprep.mubr.bf16.mxu0 %v1944
    %2002 = vmatmul.mubr.bf16.gmra.mrb[0].mxu0 %v1876
    %v2003 = vpop.f32.mrb[0].mxu0
    %v2004 = vadd.f32 %v1884, %v2003
    %v2005 = vpop.f32.mrb[0].mxu0
    %v2006 = vpop.f32.mrb[0].mxu0
    %v2007 = vadd.f32 %v1884, %v2006
    %v2008 = vpop.f32.mrb[0].mxu0
    %2009 = vmatprep.mubr.bf16.mxu0 %v1947
    %2010 = vmatmul.mubr.bf16.gmra.mrb[0].mxu0 %v1878
    %v2011 = vpop.f32.mrb[0].mxu0
    %v2012 = vadd.f32 %v1884, %v2011
    %v2013 = vpop.f32.mrb[0].mxu0
    %v2014 = vpop.f32.mrb[0].mxu0
    %v2015 = vadd.f32 %v1884, %v2014
    %v2016 = vpop.f32.mrb[0].mxu0
    %2017 = vdwg.mxu0
    %v2018 = vmax.f32 %v1988, 0.0
    %v2019 = vmax.f32 %v1991, 0.0
    %v2020 = vmax.f32 %v1996, 0.0
    %v2021 = vmax.f32 %v1999, 0.0
    %v2022 = vmax.f32 %v2004, 0.0
    %v2023 = vmax.f32 %v2007, 0.0
    %v2024 = vmax.f32 %v2012, 0.0
    %v2025 = vmax.f32 %v2015, 0.0
    %v2026 = vld [vmem:[%s33] sm:$0xf]
    %v2027 = vld [vmem:[%s33 + $0x4] sm:$0xf]
    %v2028 = vld [vmem:[%s33 + $0x8] sm:$0xf]
    %v2029 = vld [vmem:[%s33 + $0xc] sm:$0xf]
    %v2030 = vld [vmem:[%s35] sm:$0x1]
    %v2033 = vunpack.c.l.b16 %v2028
    %v2034 = vunpack.c.l.b16 %v2029
    %v2035 = vpack.c.b16 %v2034, %v2033
    %2037 = vmatprep.subr.bf16.mxu0 0
    %2038 = vmatpush1.bf16.msra.mxu0 %v2035
    %2039 = vmatprep.subr.bf16.mxu0 0
    %2040 = vmatpush1.bf16.msra.mxu0 0
    %2041 = vmatprep.subr.bf16.mxu0 0
    %2042 = vmatpush1.bf16.msra.mxu0 0
    %2043 = vmatprep.subr.bf16.mxu0 0
    %2044 = vmatpush1.bf16.msra.mxu0 0
    %2045 = vmatprep.subr.bf16.mxu0 0
    %2046 = vmatpush1.bf16.msra.mxu0 0
    %2047 = vmatprep.subr.bf16.mxu0 0
    %2048 = vmatpush1.bf16.msra.mxu0 0
    %2049 = vmatprep.subr.bf16.mxu0 0
    %2050 = vmatpush1.bf16.msra.mxu0 0
    %2051 = vmatprep.subr.bf16.mxu0 0
    %2052 = vmatpush1.bf16.msra.mxu0 0
    %2053 = vmatprep.subr.bf16.mxu0 0
    %2054 = vmatpush1.bf16.msra.mxu0 0
    %2055 = vmatprep.subr.bf16.mxu0 0
    %2056 = vmatpush1.bf16.msra.mxu0 0
    %2057 = vmatprep.subr.bf16.mxu0 0
    %2058 = vmatpush1.bf16.msra.mxu0 0
    %2059 = vmatprep.subr.bf16.mxu0 0
    %2060 = vmatpush1.bf16.msra.mxu0 0
    %2061 = vmatprep.subr.bf16.mxu0 0
    %2062 = vmatpush1.bf16.msra.mxu0 0
    %2063 = vmatprep.subr.bf16.mxu0 0
    %2064 = vmatpush1.bf16.msra.mxu0 0
    %2065 = vmatprep.subr.bf16.mxu0 0
    %2066 = vmatpush1.bf16.msra.mxu0 0
    %2067 = vmatprep.subr.bf16.mxu0 0
    %2068 = vmatpush1.bf16.msra.mxu0 0
    %2069 = vmatprep.mubr.bf16.mxu0 0
    %2070 = vmatmul.mubr.bf16.gmra.mrb[0].mxu0 %v658
    %v2071 = vpop.f32.mrb[0].mxu0
    %v2072 = vadd.f32 0.0, %v2071
    %v2073 = vpop.f32.mrb[0].mxu0
    %v2074 = vpop.f32.mrb[0].mxu0
    %v2075 = vadd.f32 0.0, %v2074
    %v2076 = vpop.f32.mrb[0].mxu0
    %2077 = vmatprep.mubr.bf16.mxu0 0
    %2078 = vmatmul.mubr.bf16.gmra.mrb[0].mxu0 %v661
    %v2079 = vpop.f32.mrb[0].mxu0
    %v2080 = vadd.f32 0.0, %v2079
    %v2081 = vpop.f32.mrb[0].mxu0
    %v2082 = vpop.f32.mrb[0].mxu0
    %v2083 = vadd.f32 0.0, %v2082
    %v2084 = vpop.f32.mrb[0].mxu0
    %2085 = vmatprep.mubr.bf16.mxu0 0
    %2086 = vmatmul.mubr.bf16.gmra.mrb[0].mxu0 %v664
    %v2087 = vpop.f32.mrb[0].mxu0
    %v2088 = vadd.f32 0.0, %v2087
    %v2089 = vpop.f32.mrb[0].mxu0
    %v2090 = vpop.f32.mrb[0].mxu0
    %v2091 = vadd.f32 0.0, %v2090
    %v2092 = vpop.f32.mrb[0].mxu0
    %2093 = vmatprep.mubr.bf16.mxu0 0
    %2094 = vmatmul.mubr.bf16.gmra.mrb[0].mxu0 %v667
    %v2095 = vpop.f32.mrb[0].mxu0
    %v2096 = vadd.f32 0.0, %v2095
    %v2097 = vpop.f32.mrb[0].mxu0
    %v2098 = vpop.f32.mrb[0].mxu0
    %v2099 = vadd.f32 0.0, %v2098
    %v2100 = vpop.f32.mrb[0].mxu0
    %2101 = vdwg.mxu0
    %v2104 = vunpack.c.l.b16 %v2026
    %v2105 = vunpack.c.l.b16 %v2027
    %v2106 = vpack.c.b16 %v2105, %v2104
    %2108 = vmatprep.subr.bf16.mxu0 0
    %2109 = vmatpush1.bf16.msra.mxu0 %v2106
    %2110 = vmatprep.subr.bf16.mxu0 0
    %2111 = vmatpush1.bf16.msra.mxu0 0
    %2112 = vmatprep.subr.bf16.mxu0 0
    %2113 = vmatpush1.bf16.msra.mxu0 0
    %2114 = vmatprep.subr.bf16.mxu0 0
    %2115 = vmatpush1.bf16.msra.mxu0 0
    %2116 = vmatprep.subr.bf16.mxu0 0
    %2117 = vmatpush1.bf16.msra.mxu0 0
    %2118 = vmatprep.subr.bf16.mxu0 0
    %2119 = vmatpush1.bf16.msra.mxu0 0
    %2120 = vmatprep.subr.bf16.mxu0 0
    %2121 = vmatpush1.bf16.msra.mxu0 0
    %2122 = vmatprep.subr.bf16.mxu0 0
    %2123 = vmatpush1.bf16.msra.mxu0 0
    %2124 = vmatprep.subr.bf16.mxu0 0
    %2125 = vmatpush1.bf16.msra.mxu0 0
    %2126 = vmatprep.subr.bf16.mxu0 0
    %2127 = vmatpush1.bf16.msra.mxu0 0
    %2128 = vmatprep.subr.bf16.mxu0 0
    %2129 = vmatpush1.bf16.msra.mxu0 0
    %2130 = vmatprep.subr.bf16.mxu0 0
    %2131 = vmatpush1.bf16.msra.mxu0 0
    %2132 = vmatprep.subr.bf16.mxu0 0
    %2133 = vmatpush1.bf16.msra.mxu0 0
    %2134 = vmatprep.subr.bf16.mxu0 0
    %2135 = vmatpush1.bf16.msra.mxu0 0
    %2136 = vmatprep.subr.bf16.mxu0 0
    %2137 = vmatpush1.bf16.msra.mxu0 0
    %2138 = vmatprep.subr.bf16.mxu0 0
    %2139 = vmatpush1.bf16.msra.mxu0 0
    %2140 = vmatprep.mubr.bf16.mxu0 0
    %2141 = vmatmul.mubr.bf16.gmra.mrb[0].mxu0 %v741
    %v2142 = vpop.f32.mrb[0].mxu0
    %v2143 = vadd.f32 %v2072, %v2142
    %v2144 = vpop.f32.mrb[0].mxu0
    %v2145 = vpop.f32.mrb[0].mxu0
    %v2146 = vadd.f32 %v2075, %v2145
    %v2147 = vpop.f32.mrb[0].mxu0
    %2148 = vmatprep.mubr.bf16.mxu0 0
    %2149 = vmatmul.mubr.bf16.gmra.mrb[0].mxu0 %v744
    %v2150 = vpop.f32.mrb[0].mxu0
    %v2151 = vadd.f32 %v2080, %v2150
    %v2152 = vpop.f32.mrb[0].mxu0
    %v2153 = vpop.f32.mrb[0].mxu0
    %v2154 = vadd.f32 %v2083, %v2153
    %v2155 = vpop.f32.mrb[0].mxu0
    %2156 = vmatprep.mubr.bf16.mxu0 0
    %2157 = vmatmul.mubr.bf16.gmra.mrb[0].mxu0 %v747
    %v2158 = vpop.f32.mrb[0].mxu0
    %v2159 = vadd.f32 %v2088, %v2158
    %v2160 = vpop.f32.mrb[0].mxu0
    %v2161 = vpop.f32.mrb[0].mxu0
    %v2162 = vadd.f32 %v2091, %v2161
    %v2163 = vpop.f32.mrb[0].mxu0
    %2164 = vmatprep.mubr.bf16.mxu0 0
    %2165 = vmatmul.mubr.bf16.gmra.mrb[0].mxu0 %v750
    %v2166 = vpop.f32.mrb[0].mxu0
    %v2167 = vadd.f32 %v2096, %v2166
    %v2168 = vpop.f32.mrb[0].mxu0
    %v2169 = vpop.f32.mrb[0].mxu0
    %v2170 = vadd.f32 %v2099, %v2169
    %v2171 = vpop.f32.mrb[0].mxu0
    %2172 = vdwg.mxu0
    %v2174 = vlaneseq
    %v2175 = vshrl.u32 %v2174, 7
    %v2176 = vsub.s32 0, %v2175
    %v2177 = vrot.slane %v2030, %v2176
    %v2179 = vadd.f32 %v2143, %v2177
    %v2180 = vadd.f32 %v2146, %v2177
    %v2181 = vadd.f32 %v2151, %v2177
    %v2182 = vadd.f32 %v2154, %v2177
    %v2183 = vadd.f32 %v2159, %v2177
    %v2184 = vadd.f32 %v2162, %v2177
    %v2185 = vadd.f32 %v2167, %v2177
    %v2186 = vadd.f32 %v2170, %v2177
    %v2187 = vmax.f32 %v2179, 0.0
    %v2188 = vmax.f32 %v2180, 0.0
    %v2189 = vmax.f32 %v2181, 0.0
    %v2190 = vmax.f32 %v2182, 0.0
    %v2191 = vmax.f32 %v2183, 0.0
    %v2192 = vmax.f32 %v2184, 0.0
    %v2193 = vmax.f32 %v2185, 0.0
    %v2194 = vmax.f32 %v2186, 0.0
    %v2195 = vsel %vm839, %v2187, 0.0
    %v2196 = vsel %vm839, %v2188, 0.0
    %v2197 = vadd.f32 %v2195, %v2196
    %v2198 = vsel %vm839, %v2189, 0.0
    %v2199 = vadd.f32 %v2197, %v2198
    %v2200 = vsel %vm839, %v2190, 0.0
    %v2201 = vadd.f32 %v2199, %v2200
    %v2202 = vsel %vm839, %v2191, 0.0
    %v2203 = vadd.f32 %v2201, %v2202
    %v2204 = vsel %vm839, %v2192, 0.0
    %v2205 = vadd.f32 %v2203, %v2204
    %v2206 = vsel %vm839, %v2193, 0.0
    %v2207 = vadd.f32 %v2205, %v2206
    %v2208 = vsel %vm839, %v2194, 0.0
    %v2209 = vadd.f32 %v2207, %v2208
    %v2210 = vrot.slane %v2209, 4
    %v2211 = vadd.f32 %v2209, %v2210
    %v2212 = vrot.slane %v2211, 2
    %v2213 = vadd.f32 %v2211, %v2212
    %v2214 = vrot.slane %v2213, 1
    %v2215 = vadd.f32 %v2213, %v2214
    %v2216 = vmul.f32 %v2215, 0.015625
    %v2217 = vsub.f32 %v2187, %v2216
    %v2218 = vsub.f32 %v2188, %v2216
    %v2219 = vsub.f32 %v2189, %v2216
    %v2220 = vsub.f32 %v2190, %v2216
    %v2221 = vsub.f32 %v2191, %v2216
    %v2222 = vsub.f32 %v2192, %v2216
    %v2223 = vsub.f32 %v2193, %v2216
    %v2224 = vsub.f32 %v2194, %v2216
    %v2225 = vmul.f32 %v2217, %v2217
    %v2226 = vmul.f32 %v2218, %v2218
    %v2227 = vmul.f32 %v2219, %v2219
    %v2228 = vmul.f32 %v2220, %v2220
    %v2229 = vmul.f32 %v2221, %v2221
    %v2230 = vmul.f32 %v2222, %v2222
    %v2231 = vmul.f32 %v2223, %v2223
    %v2232 = vmul.f32 %v2224, %v2224
    %v2233 = vsel %vm839, %v2225, 0.0
    %v2234 = vsel %vm839, %v2226, 0.0
    %v2235 = vadd.f32 %v2233, %v2234
    %v2236 = vsel %vm839, %v2227, 0.0
    %v2237 = vadd.f32 %v2235, %v2236
    %v2238 = vsel %vm839, %v2228, 0.0
    %v2239 = vadd.f32 %v2237, %v2238
    %v2240 = vsel %vm839, %v2229, 0.0
    %v2241 = vadd.f32 %v2239, %v2240
    %v2242 = vsel %vm839, %v2230, 0.0
    %v2243 = vadd.f32 %v2241, %v2242
    %v2244 = vsel %vm839, %v2231, 0.0
    %v2245 = vadd.f32 %v2243, %v2244
    %v2246 = vsel %vm839, %v2232, 0.0
    %v2247 = vadd.f32 %v2245, %v2246
    %v2248 = vrot.slane %v2247, 4
    %v2249 = vadd.f32 %v2247, %v2248
    %v2250 = vrot.slane %v2249, 2
    %v2251 = vadd.f32 %v2249, %v2250
    %v2252 = vrot.slane %v2251, 1
    %v2253 = vadd.f32 %v2251, %v2252
    %v2254 = vmul.f32 %v2253, 0.015625
    %v2255 = vadd.f32 %v2254, 1e-05
    %v2256 = vrsqrt.pop %v2255
    %v2257 = vld [vmem:[%s37] sm:$0x1]
    %v2258 = vmul.f32 %v2256, %v2257
    %v2259 = vld [vmem:[%s39] sm:$0x1]
    %v2260 = vmul.f32 %v2216, %v2258
    %v2261 = vsub.f32 %v2259, %v2260
    %v2262 = vlaneseq
    %v2263 = vshrl.u32 %v2262, 7
    %v2264 = vsub.s32 0, %v2263
    %v2265 = vrot.slane %v2258, %v2264
    %v2266 = vmul.f32 %v2187, %v2265
    %v2267 = vmul.f32 %v2188, %v2265
    %v2268 = vmul.f32 %v2189, %v2265
    %v2269 = vmul.f32 %v2190, %v2265
    %v2270 = vmul.f32 %v2191, %v2265
    %v2271 = vmul.f32 %v2192, %v2265
    %v2272 = vmul.f32 %v2193, %v2265
    %v2273 = vmul.f32 %v2194, %v2265
    %v2275 = vlaneseq
    %v2276 = vshrl.u32 %v2275, 7
    %v2277 = vsub.s32 0, %v2276
    %v2278 = vrot.slane %v2261, %v2277
    %v2280 = vadd.f32 %v2266, %v2278
    %v2281 = vadd.f32 %v2267, %v2278
    %v2282 = vadd.f32 %v2268, %v2278
    %v2283 = vadd.f32 %v2269, %v2278
    %v2284 = vadd.f32 %v2270, %v2278
    %v2285 = vadd.f32 %v2271, %v2278
    %v2286 = vadd.f32 %v2272, %v2278
    %v2287 = vadd.f32 %v2273, %v2278
    %v2288 = vld [vmem:[%s41] sm:$0xf]
    %v2289 = vld [vmem:[%s41 + $0x4] sm:$0xf]
    %v2290 = vld [vmem:[%s41 + $0x8] sm:$0xf]
    %v2291 = vld [vmem:[%s41 + $0xc] sm:$0xf]
    %v2292 = vld [vmem:[%s41 + $0x10] sm:$0xf]
    %v2293 = vld [vmem:[%s41 + $0x14] sm:$0xf]
    %v2294 = vld [vmem:[%s41 + $0x18] sm:$0xf]
    %v2295 = vld [vmem:[%s41 + $0x1c] sm:$0xf]
    %v2296 = vld [vmem:[%s41 + $0x20] sm:$0xf]
    %v2297 = vld [vmem:[%s41 + $0x24] sm:$0xf]
    %v2298 = vld [vmem:[%s41 + $0x28] sm:$0xf]
    %v2299 = vld [vmem:[%s41 + $0x2c] sm:$0xf]
    %v2300 = vld [vmem:[%s41 + $0x30] sm:$0xf]
    %v2301 = vld [vmem:[%s41 + $0x34] sm:$0xf]
    %v2302 = vld [vmem:[%s41 + $0x38] sm:$0xf]
    %v2303 = vld [vmem:[%s41 + $0x3c] sm:$0xf]
    %v2304 = vld [vmem:[%s43] sm:$0x1]
    %v2305 = vpack.c.bf16 %v2281, %v2280
    %v2306 = vpack.c.bf16 %v2283, %v2282
    %2307 = vmatprep.subr.bf16.mxu0 0
    %2308 = vmatpush1.bf16.msra.mxu0 %v2305
    %2309 = vmatprep.subr.bf16.mxu0 0
    %2310 = vmatpush1.bf16.msra.mxu0 %v2306
    %2311 = vmatprep.subr.bf16.mxu0 0
    %2312 = vmatpush1.bf16.msra.mxu0 0
    %2313 = vmatprep.subr.bf16.mxu0 0
    %2314 = vmatpush1.bf16.msra.mxu0 0
    %2315 = vmatprep.subr.bf16.mxu0 0
    %2316 = vmatpush1.bf16.msra.mxu0 0
    %2317 = vmatprep.subr.bf16.mxu0 0
    %2318 = vmatpush1.bf16.msra.mxu0 0
    %2319 = vmatprep.subr.bf16.mxu0 0
    %2320 = vmatpush1.bf16.msra.mxu0 0
    %2321 = vmatprep.subr.bf16.mxu0 0
    %2322 = vmatpush1.bf16.msra.mxu0 0
    %2323 = vmatprep.subr.bf16.mxu0 0
    %2324 = vmatpush1.bf16.msra.mxu0 0
    %2325 = vmatprep.subr.bf16.mxu0 0
    %2326 = vmatpush1.bf16.msra.mxu0 0
    %2327 = vmatprep.subr.bf16.mxu0 0
    %2328 = vmatpush1.bf16.msra.mxu0 0
    %2329 = vmatprep.subr.bf16.mxu0 0
    %2330 = vmatpush1.bf16.msra.mxu0 0
    %2331 = vmatprep.subr.bf16.mxu0 0
    %2332 = vmatpush1.bf16.msra.mxu0 0
    %2333 = vmatprep.subr.bf16.mxu0 0
    %2334 = vmatpush1.bf16.msra.mxu0 0
    %2335 = vmatprep.subr.bf16.mxu0 0
    %2336 = vmatpush1.bf16.msra.mxu0 0
    %2337 = vmatprep.subr.bf16.mxu0 0
    %2338 = vmatpush1.bf16.msra.mxu0 0
    %2339 = vmatprep.mubr.bf16.mxu0 0
    %2340 = vmatmul.mubr.bf16.gmra.mrb[0].mxu0 %v535
    %v2341 = vpop.f32.mrb[0].mxu0
    %v2342 = vadd.f32 0.0, %v2341
    %v2343 = vpop.f32.mrb[0].mxu0
    %v2344 = vpop.f32.mrb[0].mxu0
    %v2345 = vadd.f32 0.0, %v2344
    %v2346 = vpop.f32.mrb[0].mxu0
    %2347 = vmatprep.mubr.bf16.mxu0 0
    %2348 = vmatmul.mubr.bf16.gmra.mrb[0].mxu0 %v538
    %v2349 = vpop.f32.mrb[0].mxu0
    %v2350 = vadd.f32 0.0, %v2349
    %v2351 = vpop.f32.mrb[0].mxu0
    %v2352 = vpop.f32.mrb[0].mxu0
    %v2353 = vadd.f32 0.0, %v2352
    %v2354 = vpop.f32.mrb[0].mxu0
    %2355 = vdwg.mxu0
    %v2356 = vpack.c.bf16 %v2285, %v2284
    %v2357 = vpack.c.bf16 %v2287, %v2286
    %2358 = vmatprep.subr.bf16.mxu0 0
    %2359 = vmatpush1.bf16.msra.mxu0 %v2356
    %2360 = vmatprep.subr.bf16.mxu0 0
    %2361 = vmatpush1.bf16.msra.mxu0 %v2357
    %2362 = vmatprep.subr.bf16.mxu0 0
    %2363 = vmatpush1.bf16.msra.mxu0 0
    %2364 = vmatprep.subr.bf16.mxu0 0
    %2365 = vmatpush1.bf16.msra.mxu0 0
    %2366 = vmatprep.subr.bf16.mxu0 0
    %2367 = vmatpush1.bf16.msra.mxu0 0
    %2368 = vmatprep.subr.bf16.mxu0 0
    %2369 = vmatpush1.bf16.msra.mxu0 0
    %2370 = vmatprep.subr.bf16.mxu0 0
    %2371 = vmatpush1.bf16.msra.mxu0 0
    %2372 = vmatprep.subr.bf16.mxu0 0
    %2373 = vmatpush1.bf16.msra.mxu0 0
    %2374 = vmatprep.subr.bf16.mxu0 0
    %2375 = vmatpush1.bf16.msra.mxu0 0
    %2376 = vmatprep.subr.bf16.mxu0 0
    %2377 = vmatpush1.bf16.msra.mxu0 0
    %2378 = vmatprep.subr.bf16.mxu0 0
    %2379 = vmatpush1.bf16.msra.mxu0 0
    %2380 = vmatprep.subr.bf16.mxu0 0
    %2381 = vmatpush1.bf16.msra.mxu0 0
    %2382 = vmatprep.subr.bf16.mxu0 0
    %2383 = vmatpush1.bf16.msra.mxu0 0
    %2384 = vmatprep.subr.bf16.mxu0 0
    %2385 = vmatpush1.bf16.msra.mxu0 0
    %2386 = vmatprep.subr.bf16.mxu0 0
    %2387 = vmatpush1.bf16.msra.mxu0 0
    %2388 = vmatprep.subr.bf16.mxu0 0
    %2389 = vmatpush1.bf16.msra.mxu0 0
    %2390 = vmatprep.mubr.bf16.mxu0 0
    %2391 = vmatmul.mubr.bf16.gmra.mrb[0].mxu0 %v592
    %v2392 = vpop.f32.mrb[0].mxu0
    %v2393 = vadd.f32 0.0, %v2392
    %v2394 = vpop.f32.mrb[0].mxu0
    %v2395 = vpop.f32.mrb[0].mxu0
    %v2396 = vadd.f32 0.0, %v2395
    %v2397 = vpop.f32.mrb[0].mxu0
    %2398 = vmatprep.mubr.bf16.mxu0 0
    %2399 = vmatmul.mubr.bf16.gmra.mrb[0].mxu0 %v595
    %v2400 = vpop.f32.mrb[0].mxu0
    %v2401 = vadd.f32 0.0, %v2400
    %v2402 = vpop.f32.mrb[0].mxu0
    %v2403 = vpop.f32.mrb[0].mxu0
    %v2404 = vadd.f32 0.0, %v2403
    %v2405 = vpop.f32.mrb[0].mxu0
    %2406 = vdwg.mxu0
    %v2407 = vpack.c.bf16 %v2345, %v2342
    %v2408 = vpack.c.bf16 %v2353, %v2350
    %v2409 = vpack.c.bf16 %v2396, %v2393
    %v2410 = vpack.c.bf16 %v2404, %v2401
    %v2419 = vunpack.c.l.b16 %v2296
    %v2420 = vunpack.c.l.b16 %v2297
    %v2421 = vunpack.c.l.b16 %v2298
    %v2422 = vunpack.c.l.b16 %v2299
    %v2423 = vunpack.c.l.b16 %v2300
    %v2424 = vunpack.c.l.b16 %v2301
    %v2425 = vunpack.c.l.b16 %v2302
    %v2426 = vunpack.c.l.b16 %v2303
    %v2427 = vpack.c.b16 %v2420, %v2419
    %v2428 = vpack.c.b16 %v2422, %v2421
    %v2429 = vpack.c.b16 %v2424, %v2423
    %v2430 = vpack.c.b16 %v2426, %v2425
    %v2436 = vsel %vm839, %v2305, 0
    %v2439 = vsel %vm839, %v2306, 0
    %v2442 = vsel %vm839, %v2356, 0
    %v2445 = vsel %vm839, %v2357, 0
    %2447 = vmatprep.subr.bf16.mxu0 0
    %2448 = vmatpush1.bf16.msra.mxu0 %v2427
    %2449 = vmatprep.subr.bf16.mxu0 0
    %2450 = vmatpush1.bf16.msra.mxu0 %v2428
    %2451 = vmatprep.subr.bf16.mxu0 0
    %2452 = vmatpush1.bf16.msra.mxu0 %v2429
    %2453 = vmatprep.subr.bf16.mxu0 0
    %2454 = vmatpush1.bf16.msra.mxu0 %v2430
    %2455 = vmatprep.subr.bf16.mxu0 0
    %2456 = vmatpush1.bf16.msra.mxu0 0
    %2457 = vmatprep.subr.bf16.mxu0 0
    %2458 = vmatpush1.bf16.msra.mxu0 0
    %2459 = vmatprep.subr.bf16.mxu0 0
    %2460 = vmatpush1.bf16.msra.mxu0 0
    %2461 = vmatprep.subr.bf16.mxu0 0
    %2462 = vmatpush1.bf16.msra.mxu0 0
    %2463 = vmatprep.subr.bf16.mxu0 0
    %2464 = vmatpush1.bf16.msra.mxu0 0
    %2465 = vmatprep.subr.bf16.mxu0 0
    %2466 = vmatpush1.bf16.msra.mxu0 0
    %2467 = vmatprep.subr.bf16.mxu0 0
    %2468 = vmatpush1.bf16.msra.mxu0 0
    %2469 = vmatprep.subr.bf16.mxu0 0
    %2470 = vmatpush1.bf16.msra.mxu0 0
    %2471 = vmatprep.subr.bf16.mxu0 0
    %2472 = vmatpush1.bf16.msra.mxu0 0
    %2473 = vmatprep.subr.bf16.mxu0 0
    %2474 = vmatpush1.bf16.msra.mxu0 0
    %2475 = vmatprep.subr.bf16.mxu0 0
    %2476 = vmatpush1.bf16.msra.mxu0 0
    %2477 = vmatprep.subr.bf16.mxu0 0
    %2478 = vmatpush1.bf16.msra.mxu0 0
    %2479 = vmatprep.mubr.bf16.mxu0 0
    %2480 = vmatmul.mubr.bf16.gmra.mrb[0].mxu0 %v2436
    %v2481 = vpop.f32.mrb[0].mxu0
    %v2482 = vadd.f32 0.0, %v2481
    %v2483 = vpop.f32.mrb[0].mxu0
    %v2484 = vpop.f32.mrb[0].mxu0
    %v2485 = vadd.f32 0.0, %v2484
    %v2486 = vpop.f32.mrb[0].mxu0
    %2487 = vmatprep.mubr.bf16.mxu0 0
    %2488 = vmatmul.mubr.bf16.gmra.mrb[0].mxu0 %v2439
    %v2489 = vpop.f32.mrb[0].mxu0
    %v2490 = vadd.f32 0.0, %v2489
    %v2491 = vpop.f32.mrb[0].mxu0
    %v2492 = vpop.f32.mrb[0].mxu0
    %v2493 = vadd.f32 0.0, %v2492
    %v2494 = vpop.f32.mrb[0].mxu0
    %2495 = vmatprep.mubr.bf16.mxu0 0
    %2496 = vmatmul.mubr.bf16.gmra.mrb[0].mxu0 %v2442
    %v2497 = vpop.f32.mrb[0].mxu0
    %v2498 = vadd.f32 0.0, %v2497
    %v2499 = vpop.f32.mrb[0].mxu0
    %v2500 = vpop.f32.mrb[0].mxu0
    %v2501 = vadd.f32 0.0, %v2500
    %v2502 = vpop.f32.mrb[0].mxu0
    %2503 = vmatprep.mubr.bf16.mxu0 0
    %2504 = vmatmul.mubr.bf16.gmra.mrb[0].mxu0 %v2445
    %v2505 = vpop.f32.mrb[0].mxu0
    %v2506 = vadd.f32 0.0, %v2505
    %v2507 = vpop.f32.mrb[0].mxu0
    %v2508 = vpop.f32.mrb[0].mxu0
    %v2509 = vadd.f32 0.0, %v2508
    %v2510 = vpop.f32.mrb[0].mxu0
    %2511 = vdwg.mxu0
    %v2520 = vunpack.c.l.b16 %v2288
    %v2521 = vunpack.c.l.b16 %v2289
    %v2522 = vunpack.c.l.b16 %v2290
    %v2523 = vunpack.c.l.b16 %v2291
    %v2524 = vunpack.c.l.b16 %v2292
    %v2525 = vunpack.c.l.b16 %v2293
    %v2526 = vunpack.c.l.b16 %v2294
    %v2527 = vunpack.c.l.b16 %v2295
    %v2528 = vpack.c.b16 %v2521, %v2520
    %v2529 = vpack.c.b16 %v2523, %v2522
    %v2530 = vpack.c.b16 %v2525, %v2524
    %v2531 = vpack.c.b16 %v2527, %v2526
    %v2537 = vsel %vm839, %v2407, 0
    %v2540 = vsel %vm839, %v2408, 0
    %v2543 = vsel %vm839, %v2409, 0
    %v2546 = vsel %vm839, %v2410, 0
    %2548 = vmatprep.subr.bf16.mxu0 0
    %2549 = vmatpush1.bf16.msra.mxu0 %v2528
    %2550 = vmatprep.subr.bf16.mxu0 0
    %2551 = vmatpush1.bf16.msra.mxu0 %v2529
    %2552 = vmatprep.subr.bf16.mxu0 0
    %2553 = vmatpush1.bf16.msra.mxu0 %v2530
    %2554 = vmatprep.subr.bf16.mxu0 0
    %2555 = vmatpush1.bf16.msra.mxu0 %v2531
    %2556 = vmatprep.subr.bf16.mxu0 0
    %2557 = vmatpush1.bf16.msra.mxu0 0
    %2558 = vmatprep.subr.bf16.mxu0 0
    %2559 = vmatpush1.bf16.msra.mxu0 0
    %2560 = vmatprep.subr.bf16.mxu0 0
    %2561 = vmatpush1.bf16.msra.mxu0 0
    %2562 = vmatprep.subr.bf16.mxu0 0
    %2563 = vmatpush1.bf16.msra.mxu0 0
    %2564 = vmatprep.subr.bf16.mxu0 0
    %2565 = vmatpush1.bf16.msra.mxu0 0
    %2566 = vmatprep.subr.bf16.mxu0 0
    %2567 = vmatpush1.bf16.msra.mxu0 0
    %2568 = vmatprep.subr.bf16.mxu0 0
    %2569 = vmatpush1.bf16.msra.mxu0 0
    %2570 = vmatprep.subr.bf16.mxu0 0
    %2571 = vmatpush1.bf16.msra.mxu0 0
    %2572 = vmatprep.subr.bf16.mxu0 0
    %2573 = vmatpush1.bf16.msra.mxu0 0
    %2574 = vmatprep.subr.bf16.mxu0 0
    %2575 = vmatpush1.bf16.msra.mxu0 0
    %2576 = vmatprep.subr.bf16.mxu0 0
    %2577 = vmatpush1.bf16.msra.mxu0 0
    %2578 = vmatprep.subr.bf16.mxu0 0
    %2579 = vmatpush1.bf16.msra.mxu0 0
    %2580 = vmatprep.mubr.bf16.mxu0 0
    %2581 = vmatmul.mubr.bf16.gmra.mrb[0].mxu0 %v2537
    %v2582 = vpop.f32.mrb[0].mxu0
    %v2583 = vadd.f32 %v2482, %v2582
    %v2584 = vpop.f32.mrb[0].mxu0
    %v2585 = vpop.f32.mrb[0].mxu0
    %v2586 = vadd.f32 %v2485, %v2585
    %v2587 = vpop.f32.mrb[0].mxu0
    %2588 = vmatprep.mubr.bf16.mxu0 0
    %2589 = vmatmul.mubr.bf16.gmra.mrb[0].mxu0 %v2540
    %v2590 = vpop.f32.mrb[0].mxu0
    %v2591 = vadd.f32 %v2490, %v2590
    %v2592 = vpop.f32.mrb[0].mxu0
    %v2593 = vpop.f32.mrb[0].mxu0
    %v2594 = vadd.f32 %v2493, %v2593
    %v2595 = vpop.f32.mrb[0].mxu0
    %2596 = vmatprep.mubr.bf16.mxu0 0
    %2597 = vmatmul.mubr.bf16.gmra.mrb[0].mxu0 %v2543
    %v2598 = vpop.f32.mrb[0].mxu0
    %v2599 = vadd.f32 %v2498, %v2598
    %v2600 = vpop.f32.mrb[0].mxu0
    %v2601 = vpop.f32.mrb[0].mxu0
    %v2602 = vadd.f32 %v2501, %v2601
    %v2603 = vpop.f32.mrb[0].mxu0
    %2604 = vmatprep.mubr.bf16.mxu0 0
    %2605 = vmatmul.mubr.bf16.gmra.mrb[0].mxu0 %v2546
    %v2606 = vpop.f32.mrb[0].mxu0
    %v2607 = vadd.f32 %v2506, %v2606
    %v2608 = vpop.f32.mrb[0].mxu0
    %v2609 = vpop.f32.mrb[0].mxu0
    %v2610 = vadd.f32 %v2509, %v2609
    %v2611 = vpop.f32.mrb[0].mxu0
    %2612 = vdwg.mxu0
    %v2614 = vlaneseq
    %v2615 = vshrl.u32 %v2614, 7
    %v2616 = vsub.s32 0, %v2615
    %v2617 = vrot.slane %v2304, %v2616
    %v2619 = vadd.f32 %v2583, %v2617
    %v2620 = vadd.f32 %v2586, %v2617
    %v2621 = vadd.f32 %v2591, %v2617
    %v2622 = vadd.f32 %v2594, %v2617
    %v2623 = vadd.f32 %v2599, %v2617
    %v2624 = vadd.f32 %v2602, %v2617
    %v2625 = vadd.f32 %v2607, %v2617
    %v2626 = vadd.f32 %v2610, %v2617
    %v2627 = vmax.f32 %v2619, 0.0
    %v2628 = vmax.f32 %v2620, 0.0
    %v2629 = vmax.f32 %v2621, 0.0
    %v2630 = vmax.f32 %v2622, 0.0
    %v2631 = vmax.f32 %v2623, 0.0
    %v2632 = vmax.f32 %v2624, 0.0
    %v2633 = vmax.f32 %v2625, 0.0
    %v2634 = vmax.f32 %v2626, 0.0
    %v2635 = vsel %vm839, %v2627, 0.0
    %v2636 = vsel %vm839, %v2628, 0.0
    %v2637 = vadd.f32 %v2635, %v2636
    %v2638 = vsel %vm839, %v2629, 0.0
    %v2639 = vadd.f32 %v2637, %v2638
    %v2640 = vsel %vm839, %v2630, 0.0
    %v2641 = vadd.f32 %v2639, %v2640
    %v2642 = vsel %vm839, %v2631, 0.0
    %v2643 = vadd.f32 %v2641, %v2642
    %v2644 = vsel %vm839, %v2632, 0.0
    %v2645 = vadd.f32 %v2643, %v2644
    %v2646 = vsel %vm839, %v2633, 0.0
    %v2647 = vadd.f32 %v2645, %v2646
    %v2648 = vsel %vm839, %v2634, 0.0
    %v2649 = vadd.f32 %v2647, %v2648
    %v2650 = vrot.slane %v2649, 4
    %v2651 = vadd.f32 %v2649, %v2650
    %v2652 = vrot.slane %v2651, 2
    %v2653 = vadd.f32 %v2651, %v2652
    %v2654 = vrot.slane %v2653, 1
    %v2655 = vadd.f32 %v2653, %v2654
    %v2656 = vmul.f32 %v2655, 0.015625
    %v2657 = vsub.f32 %v2627, %v2656
    %v2658 = vsub.f32 %v2628, %v2656
    %v2659 = vsub.f32 %v2629, %v2656
    %v2660 = vsub.f32 %v2630, %v2656
    %v2661 = vsub.f32 %v2631, %v2656
    %v2662 = vsub.f32 %v2632, %v2656
    %v2663 = vsub.f32 %v2633, %v2656
    %v2664 = vsub.f32 %v2634, %v2656
    %v2665 = vmul.f32 %v2657, %v2657
    %v2666 = vmul.f32 %v2658, %v2658
    %v2667 = vmul.f32 %v2659, %v2659
    %v2668 = vmul.f32 %v2660, %v2660
    %v2669 = vmul.f32 %v2661, %v2661
    %v2670 = vmul.f32 %v2662, %v2662
    %v2671 = vmul.f32 %v2663, %v2663
    %v2672 = vmul.f32 %v2664, %v2664
    %v2673 = vsel %vm839, %v2665, 0.0
    %v2674 = vsel %vm839, %v2666, 0.0
    %v2675 = vadd.f32 %v2673, %v2674
    %v2676 = vsel %vm839, %v2667, 0.0
    %v2677 = vadd.f32 %v2675, %v2676
    %v2678 = vsel %vm839, %v2668, 0.0
    %v2679 = vadd.f32 %v2677, %v2678
    %v2680 = vsel %vm839, %v2669, 0.0
    %v2681 = vadd.f32 %v2679, %v2680
    %v2682 = vsel %vm839, %v2670, 0.0
    %v2683 = vadd.f32 %v2681, %v2682
    %v2684 = vsel %vm839, %v2671, 0.0
    %v2685 = vadd.f32 %v2683, %v2684
    %v2686 = vsel %vm839, %v2672, 0.0
    %v2687 = vadd.f32 %v2685, %v2686
    %v2688 = vrot.slane %v2687, 4
    %v2689 = vadd.f32 %v2687, %v2688
    %v2690 = vrot.slane %v2689, 2
    %v2691 = vadd.f32 %v2689, %v2690
    %v2692 = vrot.slane %v2691, 1
    %v2693 = vadd.f32 %v2691, %v2692
    %v2694 = vmul.f32 %v2693, 0.015625
    %v2695 = vadd.f32 %v2694, 1e-05
    %v2696 = vrsqrt.pop %v2695
    %v2697 = vld [vmem:[%s45] sm:$0x1]
    %v2698 = vmul.f32 %v2696, %v2697
    %v2699 = vld [vmem:[%s47] sm:$0x1]
    %v2700 = vmul.f32 %v2656, %v2698
    %v2701 = vsub.f32 %v2699, %v2700
    %v2702 = vlaneseq
    %v2703 = vshrl.u32 %v2702, 7
    %v2704 = vsub.s32 0, %v2703
    %v2705 = vrot.slane %v2698, %v2704
    %v2706 = vmul.f32 %v2627, %v2705
    %v2707 = vmul.f32 %v2628, %v2705
    %v2708 = vmul.f32 %v2629, %v2705
    %v2709 = vmul.f32 %v2630, %v2705
    %v2710 = vmul.f32 %v2631, %v2705
    %v2711 = vmul.f32 %v2632, %v2705
    %v2712 = vmul.f32 %v2633, %v2705
    %v2713 = vmul.f32 %v2634, %v2705
    %v2715 = vlaneseq
    %v2716 = vshrl.u32 %v2715, 7
    %v2717 = vsub.s32 0, %v2716
    %v2718 = vrot.slane %v2701, %v2717
    %v2720 = vadd.f32 %v2706, %v2718
    %v2721 = vadd.f32 %v2707, %v2718
    %v2722 = vadd.f32 %v2708, %v2718
    %v2723 = vadd.f32 %v2709, %v2718
    %v2724 = vadd.f32 %v2710, %v2718
    %v2725 = vadd.f32 %v2711, %v2718
    %v2726 = vadd.f32 %v2712, %v2718
    %v2727 = vadd.f32 %v2713, %v2718
    %v2728 = vld [vmem:[%s49] sm:$0xf]
    %v2729 = vld [vmem:[%s49 + $0x4] sm:$0xf]
    %v2730 = vld [vmem:[%s49 + $0x8] sm:$0xf]
    %v2731 = vld [vmem:[%s49 + $0xc] sm:$0xf]
    %v2732 = vld [vmem:[%s49 + $0x10] sm:$0xf]
    %v2733 = vld [vmem:[%s49 + $0x14] sm:$0xf]
    %v2734 = vld [vmem:[%s49 + $0x18] sm:$0xf]
    %v2735 = vld [vmem:[%s49 + $0x1c] sm:$0xf]
    %v2736 = vld [vmem:[%s49 + $0x20] sm:$0xf]
    %v2737 = vld [vmem:[%s49 + $0x24] sm:$0xf]
    %v2738 = vld [vmem:[%s49 + $0x28] sm:$0xf]
    %v2739 = vld [vmem:[%s49 + $0x2c] sm:$0xf]
    %v2740 = vld [vmem:[%s49 + $0x30] sm:$0xf]
    %v2741 = vld [vmem:[%s49 + $0x34] sm:$0xf]
    %v2742 = vld [vmem:[%s49 + $0x38] sm:$0xf]
    %v2743 = vld [vmem:[%s49 + $0x3c] sm:$0xf]
    %v2744 = vld [vmem:[%s51] sm:$0x1]
    %v2745 = vpack.c.bf16 %v2721, %v2720
    %v2746 = vpack.c.bf16 %v2723, %v2722
    %2747 = vmatprep.subr.bf16.mxu0 0
    %2748 = vmatpush1.bf16.msra.mxu0 %v2745
    %2749 = vmatprep.subr.bf16.mxu0 0
    %2750 = vmatpush1.bf16.msra.mxu0 %v2746
    %2751 = vmatprep.subr.bf16.mxu0 0
    %2752 = vmatpush1.bf16.msra.mxu0 0
    %2753 = vmatprep.subr.bf16.mxu0 0
    %2754 = vmatpush1.bf16.msra.mxu0 0
    %2755 = vmatprep.subr.bf16.mxu0 0
    %2756 = vmatpush1.bf16.msra.mxu0 0
    %2757 = vmatprep.subr.bf16.mxu0 0
    %2758 = vmatpush1.bf16.msra.mxu0 0
    %2759 = vmatprep.subr.bf16.mxu0 0
    %2760 = vmatpush1.bf16.msra.mxu0 0
    %2761 = vmatprep.subr.bf16.mxu0 0
    %2762 = vmatpush1.bf16.msra.mxu0 0
    %2763 = vmatprep.subr.bf16.mxu0 0
    %2764 = vmatpush1.bf16.msra.mxu0 0
    %2765 = vmatprep.subr.bf16.mxu0 0
    %2766 = vmatpush1.bf16.msra.mxu0 0
    %2767 = vmatprep.subr.bf16.mxu0 0
    %2768 = vmatpush1.bf16.msra.mxu0 0
    %2769 = vmatprep.subr.bf16.mxu0 0
    %2770 = vmatpush1.bf16.msra.mxu0 0
    %2771 = vmatprep.subr.bf16.mxu0 0
    %2772 = vmatpush1.bf16.msra.mxu0 0
    %2773 = vmatprep.subr.bf16.mxu0 0
    %2774 = vmatpush1.bf16.msra.mxu0 0
    %2775 = vmatprep.subr.bf16.mxu0 0
    %2776 = vmatpush1.bf16.msra.mxu0 0
    %2777 = vmatprep.subr.bf16.mxu0 0
    %2778 = vmatpush1.bf16.msra.mxu0 0
    %2779 = vmatprep.mubr.bf16.mxu0 0
    %2780 = vmatmul.mubr.bf16.gmra.mrb[0].mxu0 %v535
    %v2781 = vpop.f32.mrb[0].mxu0
    %v2782 = vadd.f32 0.0, %v2781
    %v2783 = vpop.f32.mrb[0].mxu0
    %v2784 = vpop.f32.mrb[0].mxu0
    %v2785 = vadd.f32 0.0, %v2784
    %v2786 = vpop.f32.mrb[0].mxu0
    %2787 = vmatprep.mubr.bf16.mxu0 0
    %2788 = vmatmul.mubr.bf16.gmra.mrb[0].mxu0 %v538
    %v2789 = vpop.f32.mrb[0].mxu0
    %v2790 = vadd.f32 0.0, %v2789
    %v2791 = vpop.f32.mrb[0].mxu0
    %v2792 = vpop.f32.mrb[0].mxu0
    %v2793 = vadd.f32 0.0, %v2792
    %v2794 = vpop.f32.mrb[0].mxu0
    %2795 = vdwg.mxu0
    %v2796 = vpack.c.bf16 %v2725, %v2724
    %v2797 = vpack.c.bf16 %v2727, %v2726
    %2798 = vmatprep.subr.bf16.mxu0 0
    %2799 = vmatpush1.bf16.msra.mxu0 %v2796
    %2800 = vmatprep.subr.bf16.mxu0 0
    %2801 = vmatpush1.bf16.msra.mxu0 %v2797
    %2802 = vmatprep.subr.bf16.mxu0 0
    %2803 = vmatpush1.bf16.msra.mxu0 0
    %2804 = vmatprep.subr.bf16.mxu0 0
    %2805 = vmatpush1.bf16.msra.mxu0 0
    %2806 = vmatprep.subr.bf16.mxu0 0
    %2807 = vmatpush1.bf16.msra.mxu0 0
    %2808 = vmatprep.subr.bf16.mxu0 0
    %2809 = vmatpush1.bf16.msra.mxu0 0
    %2810 = vmatprep.subr.bf16.mxu0 0
    %2811 = vmatpush1.bf16.msra.mxu0 0
    %2812 = vmatprep.subr.bf16.mxu0 0
    %2813 = vmatpush1.bf16.msra.mxu0 0
    %2814 = vmatprep.subr.bf16.mxu0 0
    %2815 = vmatpush1.bf16.msra.mxu0 0
    %2816 = vmatprep.subr.bf16.mxu0 0
    %2817 = vmatpush1.bf16.msra.mxu0 0
    %2818 = vmatprep.subr.bf16.mxu0 0
    %2819 = vmatpush1.bf16.msra.mxu0 0
    %2820 = vmatprep.subr.bf16.mxu0 0
    %2821 = vmatpush1.bf16.msra.mxu0 0
    %2822 = vmatprep.subr.bf16.mxu0 0
    %2823 = vmatpush1.bf16.msra.mxu0 0
    %2824 = vmatprep.subr.bf16.mxu0 0
    %2825 = vmatpush1.bf16.msra.mxu0 0
    %2826 = vmatprep.subr.bf16.mxu0 0
    %2827 = vmatpush1.bf16.msra.mxu0 0
    %2828 = vmatprep.subr.bf16.mxu0 0
    %2829 = vmatpush1.bf16.msra.mxu0 0
    %2830 = vmatprep.mubr.bf16.mxu0 0
    %2831 = vmatmul.mubr.bf16.gmra.mrb[0].mxu0 %v592
    %v2832 = vpop.f32.mrb[0].mxu0
    %v2833 = vadd.f32 0.0, %v2832
    %v2834 = vpop.f32.mrb[0].mxu0
    %v2835 = vpop.f32.mrb[0].mxu0
    %v2836 = vadd.f32 0.0, %v2835
    %v2837 = vpop.f32.mrb[0].mxu0
    %2838 = vmatprep.mubr.bf16.mxu0 0
    %2839 = vmatmul.mubr.bf16.gmra.mrb[0].mxu0 %v595
    %v2840 = vpop.f32.mrb[0].mxu0
    %v2841 = vadd.f32 0.0, %v2840
    %v2842 = vpop.f32.mrb[0].mxu0
    %v2843 = vpop.f32.mrb[0].mxu0
    %v2844 = vadd.f32 0.0, %v2843
    %v2845 = vpop.f32.mrb[0].mxu0
    %2846 = vdwg.mxu0
    %v2847 = vpack.c.bf16 %v2785, %v2782
    %v2848 = vpack.c.bf16 %v2793, %v2790
    %v2849 = vpack.c.bf16 %v2836, %v2833
    %v2850 = vpack.c.bf16 %v2844, %v2841
    %v2859 = vunpack.c.l.b16 %v2736
    %v2860 = vunpack.c.l.b16 %v2737
    %v2861 = vunpack.c.l.b16 %v2738
    %v2862 = vunpack.c.l.b16 %v2739
    %v2863 = vunpack.c.l.b16 %v2740
    %v2864 = vunpack.c.l.b16 %v2741
    %v2865 = vunpack.c.l.b16 %v2742
    %v2866 = vunpack.c.l.b16 %v2743
    %v2867 = vpack.c.b16 %v2860, %v2859
    %v2868 = vpack.c.b16 %v2862, %v2861
    %v2869 = vpack.c.b16 %v2864, %v2863
    %v2870 = vpack.c.b16 %v2866, %v2865
    %v2876 = vsel %vm839, %v2745, 0
    %v2879 = vsel %vm839, %v2746, 0
    %v2882 = vsel %vm839, %v2796, 0
    %v2885 = vsel %vm839, %v2797, 0
    %2887 = vmatprep.subr.bf16.mxu0 0
    %2888 = vmatpush1.bf16.msra.mxu0 %v2867
    %2889 = vmatprep.subr.bf16.mxu0 0
    %2890 = vmatpush1.bf16.msra.mxu0 %v2868
    %2891 = vmatprep.subr.bf16.mxu0 0
    %2892 = vmatpush1.bf16.msra.mxu0 %v2869
    %2893 = vmatprep.subr.bf16.mxu0 0
    %2894 = vmatpush1.bf16.msra.mxu0 %v2870
    %2895 = vmatprep.subr.bf16.mxu0 0
    %2896 = vmatpush1.bf16.msra.mxu0 0
    %2897 = vmatprep.subr.bf16.mxu0 0
    %2898 = vmatpush1.bf16.msra.mxu0 0
    %2899 = vmatprep.subr.bf16.mxu0 0
    %2900 = vmatpush1.bf16.msra.mxu0 0
    %2901 = vmatprep.subr.bf16.mxu0 0
    %2902 = vmatpush1.bf16.msra.mxu0 0
    %2903 = vmatprep.subr.bf16.mxu0 0
    %2904 = vmatpush1.bf16.msra.mxu0 0
    %2905 = vmatprep.subr.bf16.mxu0 0
    %2906 = vmatpush1.bf16.msra.mxu0 0
    %2907 = vmatprep.subr.bf16.mxu0 0
    %2908 = vmatpush1.bf16.msra.mxu0 0
    %2909 = vmatprep.subr.bf16.mxu0 0
    %2910 = vmatpush1.bf16.msra.mxu0 0
    %2911 = vmatprep.subr.bf16.mxu0 0
    %2912 = vmatpush1.bf16.msra.mxu0 0
    %2913 = vmatprep.subr.bf16.mxu0 0
    %2914 = vmatpush1.bf16.msra.mxu0 0
    %2915 = vmatprep.subr.bf16.mxu0 0
    %2916 = vmatpush1.bf16.msra.mxu0 0
    %2917 = vmatprep.subr.bf16.mxu0 0
    %2918 = vmatpush1.bf16.msra.mxu0 0
    %2919 = vmatprep.mubr.bf16.mxu0 0
    %2920 = vmatmul.mubr.bf16.gmra.mrb[0].mxu0 %v2876
    %v2921 = vpop.f32.mrb[0].mxu0
    %v2922 = vadd.f32 0.0, %v2921
    %v2923 = vpop.f32.mrb[0].mxu0
    %v2924 = vpop.f32.mrb[0].mxu0
    %v2925 = vadd.f32 0.0, %v2924
    %v2926 = vpop.f32.mrb[0].mxu0
    %2927 = vmatprep.mubr.bf16.mxu0 0
    %2928 = vmatmul.mubr.bf16.gmra.mrb[0].mxu0 %v2879
    %v2929 = vpop.f32.mrb[0].mxu0
    %v2930 = vadd.f32 0.0, %v2929
    %v2931 = vpop.f32.mrb[0].mxu0
    %v2932 = vpop.f32.mrb[0].mxu0
    %v2933 = vadd.f32 0.0, %v2932
    %v2934 = vpop.f32.mrb[0].mxu0
    %2935 = vmatprep.mubr.bf16.mxu0 0
    %2936 = vmatmul.mubr.bf16.gmra.mrb[0].mxu0 %v2882
    %v2937 = vpop.f32.mrb[0].mxu0
    %v2938 = vadd.f32 0.0, %v2937
    %v2939 = vpop.f32.mrb[0].mxu0
    %v2940 = vpop.f32.mrb[0].mxu0
    %v2941 = vadd.f32 0.0, %v2940
    %v2942 = vpop.f32.mrb[0].mxu0
    %2943 = vmatprep.mubr.bf16.mxu0 0
    %2944 = vmatmul.mubr.bf16.gmra.mrb[0].mxu0 %v2885
    %v2945 = vpop.f32.mrb[0].mxu0
    %v2946 = vadd.f32 0.0, %v2945
    %v2947 = vpop.f32.mrb[0].mxu0
    %v2948 = vpop.f32.mrb[0].mxu0
    %v2949 = vadd.f32 0.0, %v2948
    %v2950 = vpop.f32.mrb[0].mxu0
    %2951 = vdwg.mxu0
    %v2960 = vunpack.c.l.b16 %v2728
    %v2961 = vunpack.c.l.b16 %v2729
    %v2962 = vunpack.c.l.b16 %v2730
    %v2963 = vunpack.c.l.b16 %v2731
    %v2964 = vunpack.c.l.b16 %v2732
    %v2965 = vunpack.c.l.b16 %v2733
    %v2966 = vunpack.c.l.b16 %v2734
    %v2967 = vunpack.c.l.b16 %v2735
    %v2968 = vpack.c.b16 %v2961, %v2960
    %v2969 = vpack.c.b16 %v2963, %v2962
    %v2970 = vpack.c.b16 %v2965, %v2964
    %v2971 = vpack.c.b16 %v2967, %v2966
    %v2977 = vsel %vm839, %v2847, 0
    %v2980 = vsel %vm839, %v2848, 0
    %v2983 = vsel %vm839, %v2849, 0
    %v2986 = vsel %vm839, %v2850, 0
    %2988 = vmatprep.subr.bf16.mxu0 0
    %2989 = vmatpush1.bf16.msra.mxu0 %v2968
    %2990 = vmatprep.subr.bf16.mxu0 0
    %2991 = vmatpush1.bf16.msra.mxu0 %v2969
    %2992 = vmatprep.subr.bf16.mxu0 0
    %2993 = vmatpush1.bf16.msra.mxu0 %v2970
    %2994 = vmatprep.subr.bf16.mxu0 0
    %2995 = vmatpush1.bf16.msra.mxu0 %v2971
    %2996 = vmatprep.subr.bf16.mxu0 0
    %2997 = vmatpush1.bf16.msra.mxu0 0
    %2998 = vmatprep.subr.bf16.mxu0 0
    %2999 = vmatpush1.bf16.msra.mxu0 0
    %3000 = vmatprep.subr.bf16.mxu0 0
    %3001 = vmatpush1.bf16.msra.mxu0 0
    %3002 = vmatprep.subr.bf16.mxu0 0
    %3003 = vmatpush1.bf16.msra.mxu0 0
    %3004 = vmatprep.subr.bf16.mxu0 0
    %3005 = vmatpush1.bf16.msra.mxu0 0
    %3006 = vmatprep.subr.bf16.mxu0 0
    %3007 = vmatpush1.bf16.msra.mxu0 0
    %3008 = vmatprep.subr.bf16.mxu0 0
    %3009 = vmatpush1.bf16.msra.mxu0 0
    %3010 = vmatprep.subr.bf16.mxu0 0
    %3011 = vmatpush1.bf16.msra.mxu0 0
    %3012 = vmatprep.subr.bf16.mxu0 0
    %3013 = vmatpush1.bf16.msra.mxu0 0
    %3014 = vmatprep.subr.bf16.mxu0 0
    %3015 = vmatpush1.bf16.msra.mxu0 0
    %3016 = vmatprep.subr.bf16.mxu0 0
    %3017 = vmatpush1.bf16.msra.mxu0 0
    %3018 = vmatprep.subr.bf16.mxu0 0
    %3019 = vmatpush1.bf16.msra.mxu0 0
    %3020 = vmatprep.mubr.bf16.mxu0 0
    %3021 = vmatmul.mubr.bf16.gmra.mrb[0].mxu0 %v2977
    %v3022 = vpop.f32.mrb[0].mxu0
    %v3023 = vadd.f32 %v2922, %v3022
    %v3024 = vpop.f32.mrb[0].mxu0
    %v3025 = vpop.f32.mrb[0].mxu0
    %v3026 = vadd.f32 %v2925, %v3025
    %v3027 = vpop.f32.mrb[0].mxu0
    %3028 = vmatprep.mubr.bf16.mxu0 0
    %3029 = vmatmul.mubr.bf16.gmra.mrb[0].mxu0 %v2980
    %v3030 = vpop.f32.mrb[0].mxu0
    %v3031 = vadd.f32 %v2930, %v3030
    %v3032 = vpop.f32.mrb[0].mxu0
    %v3033 = vpop.f32.mrb[0].mxu0
    %v3034 = vadd.f32 %v2933, %v3033
    %v3035 = vpop.f32.mrb[0].mxu0
    %3036 = vmatprep.mubr.bf16.mxu0 0
    %3037 = vmatmul.mubr.bf16.gmra.mrb[0].mxu0 %v2983
    %v3038 = vpop.f32.mrb[0].mxu0
    %v3039 = vadd.f32 %v2938, %v3038
    %v3040 = vpop.f32.mrb[0].mxu0
    %v3041 = vpop.f32.mrb[0].mxu0
    %v3042 = vadd.f32 %v2941, %v3041
    %v3043 = vpop.f32.mrb[0].mxu0
    %3044 = vmatprep.mubr.bf16.mxu0 0
    %3045 = vmatmul.mubr.bf16.gmra.mrb[0].mxu0 %v2986
    %v3046 = vpop.f32.mrb[0].mxu0
    %v3047 = vadd.f32 %v2946, %v3046
    %v3048 = vpop.f32.mrb[0].mxu0
    %v3049 = vpop.f32.mrb[0].mxu0
    %v3050 = vadd.f32 %v2949, %v3049
    %v3051 = vpop.f32.mrb[0].mxu0
    %3052 = vdwg.mxu0
    %v3054 = vlaneseq
    %v3055 = vshrl.u32 %v3054, 7
    %v3056 = vsub.s32 0, %v3055
    %v3057 = vrot.slane %v2744, %v3056
    %v3059 = vadd.f32 %v3023, %v3057
    %v3060 = vadd.f32 %v3026, %v3057
    %v3061 = vadd.f32 %v3031, %v3057
    %v3062 = vadd.f32 %v3034, %v3057
    %v3063 = vadd.f32 %v3039, %v3057
    %v3064 = vadd.f32 %v3042, %v3057
    %v3065 = vadd.f32 %v3047, %v3057
    %v3066 = vadd.f32 %v3050, %v3057
    %v3067 = vmax.f32 %v3059, 0.0
    %v3068 = vmax.f32 %v3060, 0.0
    %v3069 = vmax.f32 %v3061, 0.0
    %v3070 = vmax.f32 %v3062, 0.0
    %v3071 = vmax.f32 %v3063, 0.0
    %v3072 = vmax.f32 %v3064, 0.0
    %v3073 = vmax.f32 %v3065, 0.0
    %v3074 = vmax.f32 %v3066, 0.0
    %v3075 = vsel %vm839, %v3067, 0.0
    %v3076 = vsel %vm839, %v3068, 0.0
    %v3077 = vadd.f32 %v3075, %v3076
    %v3078 = vsel %vm839, %v3069, 0.0
    %v3079 = vadd.f32 %v3077, %v3078
    %v3080 = vsel %vm839, %v3070, 0.0
    %v3081 = vadd.f32 %v3079, %v3080
    %v3082 = vsel %vm839, %v3071, 0.0
    %v3083 = vadd.f32 %v3081, %v3082
    %v3084 = vsel %vm839, %v3072, 0.0
    %v3085 = vadd.f32 %v3083, %v3084
    %v3086 = vsel %vm839, %v3073, 0.0
    %v3087 = vadd.f32 %v3085, %v3086
    %v3088 = vsel %vm839, %v3074, 0.0
    %v3089 = vadd.f32 %v3087, %v3088
    %v3090 = vrot.slane %v3089, 4
    %v3091 = vadd.f32 %v3089, %v3090
    %v3092 = vrot.slane %v3091, 2
    %v3093 = vadd.f32 %v3091, %v3092
    %v3094 = vrot.slane %v3093, 1
    %v3095 = vadd.f32 %v3093, %v3094
    %v3096 = vmul.f32 %v3095, 0.015625
    %v3097 = vsub.f32 %v3067, %v3096
    %v3098 = vsub.f32 %v3068, %v3096
    %v3099 = vsub.f32 %v3069, %v3096
    %v3100 = vsub.f32 %v3070, %v3096
    %v3101 = vsub.f32 %v3071, %v3096
    %v3102 = vsub.f32 %v3072, %v3096
    %v3103 = vsub.f32 %v3073, %v3096
    %v3104 = vsub.f32 %v3074, %v3096
    %v3105 = vmul.f32 %v3097, %v3097
    %v3106 = vmul.f32 %v3098, %v3098
    %v3107 = vmul.f32 %v3099, %v3099
    %v3108 = vmul.f32 %v3100, %v3100
    %v3109 = vmul.f32 %v3101, %v3101
    %v3110 = vmul.f32 %v3102, %v3102
    %v3111 = vmul.f32 %v3103, %v3103
    %v3112 = vmul.f32 %v3104, %v3104
    %v3113 = vsel %vm839, %v3105, 0.0
    %v3114 = vsel %vm839, %v3106, 0.0
    %v3115 = vadd.f32 %v3113, %v3114
    %v3116 = vsel %vm839, %v3107, 0.0
    %v3117 = vadd.f32 %v3115, %v3116
    %v3118 = vsel %vm839, %v3108, 0.0
    %v3119 = vadd.f32 %v3117, %v3118
    %v3120 = vsel %vm839, %v3109, 0.0
    %v3121 = vadd.f32 %v3119, %v3120
    %v3122 = vsel %vm839, %v3110, 0.0
    %v3123 = vadd.f32 %v3121, %v3122
    %v3124 = vsel %vm839, %v3111, 0.0
    %v3125 = vadd.f32 %v3123, %v3124
    %v3126 = vsel %vm839, %v3112, 0.0
    %v3127 = vadd.f32 %v3125, %v3126
    %v3128 = vrot.slane %v3127, 4
    %v3129 = vadd.f32 %v3127, %v3128
    %v3130 = vrot.slane %v3129, 2
    %v3131 = vadd.f32 %v3129, %v3130
    %v3132 = vrot.slane %v3131, 1
    %v3133 = vadd.f32 %v3131, %v3132
    %v3134 = vmul.f32 %v3133, 0.015625
    %v3135 = vadd.f32 %v3134, 1e-05
    %v3136 = vrsqrt.pop %v3135
    %v3137 = vld [vmem:[%s53] sm:$0x1]
    %v3138 = vmul.f32 %v3136, %v3137
    %v3139 = vld [vmem:[%s55] sm:$0x1]
    %v3140 = vmul.f32 %v3096, %v3138
    %v3141 = vsub.f32 %v3139, %v3140
    %v3142 = vlaneseq
    %v3143 = vshrl.u32 %v3142, 7
    %v3144 = vsub.s32 0, %v3143
    %v3145 = vrot.slane %v3138, %v3144
    %v3146 = vmul.f32 %v3067, %v3145
    %v3147 = vmul.f32 %v3068, %v3145
    %v3148 = vmul.f32 %v3069, %v3145
    %v3149 = vmul.f32 %v3070, %v3145
    %v3150 = vmul.f32 %v3071, %v3145
    %v3151 = vmul.f32 %v3072, %v3145
    %v3152 = vmul.f32 %v3073, %v3145
    %v3153 = vmul.f32 %v3074, %v3145
    %v3155 = vlaneseq
    %v3156 = vshrl.u32 %v3155, 7
    %v3157 = vsub.s32 0, %v3156
    %v3158 = vrot.slane %v3141, %v3157
    %v3160 = vadd.f32 %v3146, %v3158
    %v3161 = vadd.f32 %v3147, %v3158
    %v3162 = vadd.f32 %v3148, %v3158
    %v3163 = vadd.f32 %v3149, %v3158
    %v3164 = vadd.f32 %v3150, %v3158
    %v3165 = vadd.f32 %v3151, %v3158
    %v3166 = vadd.f32 %v3152, %v3158
    %v3167 = vadd.f32 %v3153, %v3158
    %3172 = vrot.lane.b32.xlu0 %v2720, 64
    %v3173 = vpop.permute.xlu0 %3172
    %3174 = vrot.lane.b32.xlu0 %v2721, 64
    %v3175 = vpop.permute.xlu0 %3174
    %3176 = vrot.lane.b32.xlu0 %v2722, 64
    %v3177 = vpop.permute.xlu0 %3176
    %3178 = vrot.lane.b32.xlu0 %v2723, 64
    %v3179 = vpop.permute.xlu0 %3178
    %v3184 = vsel %vm839, %v2280, %v3173
    %v3185 = vsel %vm839, %v2281, %v3175
    %v3186 = vsel %vm839, %v2282, %v3177
    %v3187 = vsel %vm839, %v2283, %v3179
    %3192 = vrot.lane.b32.xlu0 %v2724, 64
    %v3193 = vpop.permute.xlu0 %3192
    %3194 = vrot.lane.b32.xlu0 %v2725, 64
    %v3195 = vpop.permute.xlu0 %3194
    %3196 = vrot.lane.b32.xlu0 %v2726, 64
    %v3197 = vpop.permute.xlu0 %3196
    %3198 = vrot.lane.b32.xlu0 %v2727, 64
    %v3199 = vpop.permute.xlu0 %3198
    %v3204 = vsel %vm839, %v2284, %v3193
    %v3205 = vsel %vm839, %v2285, %v3195
    %v3206 = vsel %vm839, %v2286, %v3197
    %v3207 = vsel %vm839, %v2287, %v3199
    %v3208 = vsel %vm1720, %v2018, -inf
    %3209 = vmax.xlane.f32.xlu0 %v3208
    %v3210 = vpop.xlane.xlu0 %3209
    %v3211 = vsel %vm1720, %v2019, -inf
    %3212 = vmax.xlane.f32.xlu0 %v3211
    %v3213 = vpop.xlane.xlu0 %3212
    %v3214 = vsel %vm1720, %v2020, -inf
    %3215 = vmax.xlane.f32.xlu0 %v3214
    %v3216 = vpop.xlane.xlu0 %3215
    %v3217 = vsel %vm1720, %v2021, -inf
    %3218 = vmax.xlane.f32.xlu0 %v3217
    %v3219 = vpop.xlane.xlu0 %3218
    %v3220 = vsub.f32 %v2018, %v3210
    %v3221 = vsub.f32 %v2019, %v3213
    %v3222 = vsub.f32 %v2020, %v3216
    %v3223 = vsub.f32 %v2021, %v3219
    %v3224 = vmul.f32 %v3220, 1.442695
    %v3225 = vpow.pop %v3224
    %v3226 = vmul.f32 %v3221, 1.442695
    %v3227 = vpow.pop %v3226
    %v3228 = vmul.f32 %v3222, 1.442695
    %v3229 = vpow.pop %v3228
    %v3230 = vmul.f32 %v3223, 1.442695
    %v3231 = vpow.pop %v3230
    %v3232 = vsel %vm1720, %v3225, 0.0
    %3233 = vadd.xlane.f32.xlu0 %v3232
    %v3234 = vpop.xlane.xlu0 %3233
    %v3235 = vsel %vm1720, %v3227, 0.0
    %3236 = vadd.xlane.f32.xlu0 %v3235
    %v3237 = vpop.xlane.xlu0 %3236
    %v3238 = vsel %vm1720, %v3229, 0.0
    %3239 = vadd.xlane.f32.xlu0 %v3238
    %v3240 = vpop.xlane.xlu0 %3239
    %v3241 = vsel %vm1720, %v3231, 0.0
    %3242 = vadd.xlane.f32.xlu0 %v3241
    %v3243 = vpop.xlane.xlu0 %3242
    %v3244 = vrcp.pop %v3234
    %v3245 = vmul.f32 %v3225, %v3244
    %v3246 = vrcp.pop %v3237
    %v3247 = vmul.f32 %v3227, %v3246
    %v3248 = vrcp.pop %v3240
    %v3249 = vmul.f32 %v3229, %v3248
    %v3250 = vrcp.pop %v3243
    %v3251 = vmul.f32 %v3231, %v3250
    %3252 = vxpose.xlu0.b32.start [1/16] %v3245, 128
    %3253 = vxpose.xlu0.b32.cont [2/16] %v3247, 128
    %3254 = vxpose.xlu0.b32.cont [3/16] %v3249, 128
    %3255 = vxpose.xlu0.b32.cont [4/16] %v3251, 128
    %3256 = vxpose.xlu0.b32.cont [5/16] 0.0, 128
    %3257 = vxpose.xlu0.b32.cont [6/16] 0.0, 128
    %3258 = vxpose.xlu0.b32.cont [7/16] 0.0, 128
    %3259 = vxpose.xlu0.b32.cont [8/16] 0.0, 128
    %3260 = vxpose.xlu0.b32.cont [9/16] 0.0, 128
    %3261 = vxpose.xlu0.b32.cont [10/16] 0.0, 128
    %3262 = vxpose.xlu0.b32.cont [11/16] 0.0, 128
    %3263 = vxpose.xlu0.b32.cont [12/16] 0.0, 128
    %3264 = vxpose.xlu0.b32.cont [13/16] 0.0, 128
    %3265 = vxpose.xlu0.b32.cont [14/16] 0.0, 128
    %3266 = vxpose.xlu0.b32.cont [15/16] 0.0, 128
    %3267 = vxpose.xlu0.b32.end [16/16] 0.0, 128
    %v3268 = vpop.trf.xlu0
    %v3269 = vpop.trf.xlu0
    %v3270 = vpop.trf.xlu0
    %v3271 = vpop.trf.xlu0
    %v3272 = vpop.trf.xlu0
    %v3273 = vpop.trf.xlu0
    %v3274 = vpop.trf.xlu0
    %v3275 = vpop.trf.xlu0
    %v3276 = vpop.trf.xlu0
    %v3277 = vpop.trf.xlu0
    %v3278 = vpop.trf.xlu0
    %v3279 = vpop.trf.xlu0
    %v3280 = vpop.trf.xlu0
    %v3281 = vpop.trf.xlu0
    %v3282 = vpop.trf.xlu0
    %v3283 = vpop.trf.xlu0
    %v3284 = vpack.c.bf16 %v3247, %v3245
    %v3285 = vpack.c.bf16 %v3251, %v3249
    %v3286 = vpack.c.bf16 %v3268, %v3268
    %v3287 = vpack.c.bf16 %v3185, %v3184
    %v3288 = vpack.c.bf16 %v3161, %v3160
    %v3289 = vpack.c.bf16 %v3187, %v3186
    %v3290 = vpack.c.bf16 %v3163, %v3162
    %v3292 = vsel %vm474, %v3286, 0
    %3294 = vmatprep.subr.bf16.mxu0 %v3288
    %3295 = vmatpush1.bf16.msra.mxu0 %v3287
    %3296 = vmatprep.subr.bf16.mxu0 %v3290
    %3297 = vmatpush1.bf16.msra.mxu0 %v3289
    %3298 = vmatprep.subr.bf16.mxu0 0
    %3299 = vmatpush1.bf16.msra.mxu0 0
    %3300 = vmatprep.subr.bf16.mxu0 0
    %3301 = vmatpush1.bf16.msra.mxu0 0
    %3302 = vmatprep.subr.bf16.mxu0 0
    %3303 = vmatpush1.bf16.msra.mxu0 0
    %3304 = vmatprep.subr.bf16.mxu0 0
    %3305 = vmatpush1.bf16.msra.mxu0 0
    %3306 = vmatprep.subr.bf16.mxu0 0
    %3307 = vmatpush1.bf16.msra.mxu0 0
    %3308 = vmatprep.subr.bf16.mxu0 0
    %3309 = vmatpush1.bf16.msra.mxu0 0
    %3310 = vmatprep.subr.bf16.mxu0 0
    %3311 = vmatpush1.bf16.msra.mxu0 0
    %3312 = vmatprep.subr.bf16.mxu0 0
    %3313 = vmatpush1.bf16.msra.mxu0 0
    %3314 = vmatprep.subr.bf16.mxu0 0
    %3315 = vmatpush1.bf16.msra.mxu0 0
    %3316 = vmatprep.subr.bf16.mxu0 0
    %3317 = vmatpush1.bf16.msra.mxu0 0
    %3318 = vmatprep.subr.bf16.mxu0 0
    %3319 = vmatpush1.bf16.msra.mxu0 0
    %3320 = vmatprep.subr.bf16.mxu0 0
    %3321 = vmatpush1.bf16.msra.mxu0 0
    %3322 = vmatprep.subr.bf16.mxu0 0
    %3323 = vmatpush1.bf16.msra.mxu0 0
    %3324 = vmatprep.subr.bf16.mxu0 0
    %3325 = vmatpush1.bf16.msra.mxu0 0
    %3326 = vmatprep.mubr.bf16.mxu0 0
    %3327 = vmatmul.mubr.bf16.gmra.mrb[0].mxu0 %v3292
    %v3328 = vpop.f32.mrb[0].mxu0
    %v3329 = vadd.f32 0.0, %v3328
    %v3330 = vpop.f32.mrb[0].mxu0
    %v3331 = vadd.f32 0.0, %v3330
    %v3332 = vpop.f32.mrb[0].mxu0
    %v3333 = vpop.f32.mrb[0].mxu0
    %3334 = vdwg.mxu0
    %v3335 = vpack.c.bf16 %v466, %v465
    %v3336 = vpack.c.bf16 %v468, %v467
    %3337 = vmatprep.subr.bf16.mxu0 0
    %3338 = vmatpush1.bf16.msra.mxu0 %v3335
    %3339 = vmatprep.subr.bf16.mxu0 0
    %3340 = vmatpush1.bf16.msra.mxu0 %v3336
    %3341 = vmatprep.subr.bf16.mxu0 0
    %3342 = vmatpush1.bf16.msra.mxu0 0
    %3343 = vmatprep.subr.bf16.mxu0 0
    %3344 = vmatpush1.bf16.msra.mxu0 0
    %3345 = vmatprep.subr.bf16.mxu0 0
    %3346 = vmatpush1.bf16.msra.mxu0 0
    %3347 = vmatprep.subr.bf16.mxu0 0
    %3348 = vmatpush1.bf16.msra.mxu0 0
    %3349 = vmatprep.subr.bf16.mxu0 0
    %3350 = vmatpush1.bf16.msra.mxu0 0
    %3351 = vmatprep.subr.bf16.mxu0 0
    %3352 = vmatpush1.bf16.msra.mxu0 0
    %3353 = vmatprep.subr.bf16.mxu0 0
    %3354 = vmatpush1.bf16.msra.mxu0 0
    %3355 = vmatprep.subr.bf16.mxu0 0
    %3356 = vmatpush1.bf16.msra.mxu0 0
    %3357 = vmatprep.subr.bf16.mxu0 0
    %3358 = vmatpush1.bf16.msra.mxu0 0
    %3359 = vmatprep.subr.bf16.mxu0 0
    %3360 = vmatpush1.bf16.msra.mxu0 0
    %3361 = vmatprep.subr.bf16.mxu0 0
    %3362 = vmatpush1.bf16.msra.mxu0 0
    %3363 = vmatprep.subr.bf16.mxu0 0
    %3364 = vmatpush1.bf16.msra.mxu0 0
    %3365 = vmatprep.subr.bf16.mxu0 0
    %3366 = vmatpush1.bf16.msra.mxu0 0
    %3367 = vmatprep.subr.bf16.mxu0 0
    %3368 = vmatpush1.bf16.msra.mxu0 0
    %3369 = vmatprep.mubr.bf16.mxu0 0
    %3370 = vmatmul.mubr.bf16.gmra.mrb[0].mxu0 %v3292
    %v3371 = vpop.f32.mrb[0].mxu0
    %v3372 = vadd.f32 0.0, %v3371
    %v3373 = vpop.f32.mrb[0].mxu0
    %v3374 = vpop.f32.mrb[0].mxu0
    %v3375 = vpop.f32.mrb[0].mxu0
    %3376 = vdwg.mxu0
    %v3377 = vpack.c.bf16 %v3372, %v3372
    %v3379 = vsel %vm474, %v3377, 0
    %3381 = vmatprep.subr.bf16.mxu0 0
    %3382 = vmatpush1.bf16.msra.mxu0 %v3284
    %3383 = vmatprep.subr.bf16.mxu0 0
    %3384 = vmatpush1.bf16.msra.mxu0 %v3285
    %3385 = vmatprep.subr.bf16.mxu0 0
    %3386 = vmatpush1.bf16.msra.mxu0 0
    %3387 = vmatprep.subr.bf16.mxu0 0
    %3388 = vmatpush1.bf16.msra.mxu0 0
    %3389 = vmatprep.subr.bf16.mxu0 0
    %3390 = vmatpush1.bf16.msra.mxu0 0
    %3391 = vmatprep.subr.bf16.mxu0 0
    %3392 = vmatpush1.bf16.msra.mxu0 0
    %3393 = vmatprep.subr.bf16.mxu0 0
    %3394 = vmatpush1.bf16.msra.mxu0 0
    %3395 = vmatprep.subr.bf16.mxu0 0
    %3396 = vmatpush1.bf16.msra.mxu0 0
    %3397 = vmatprep.subr.bf16.mxu0 0
    %3398 = vmatpush1.bf16.msra.mxu0 0
    %3399 = vmatprep.subr.bf16.mxu0 0
    %3400 = vmatpush1.bf16.msra.mxu0 0
    %3401 = vmatprep.subr.bf16.mxu0 0
    %3402 = vmatpush1.bf16.msra.mxu0 0
    %3403 = vmatprep.subr.bf16.mxu0 0
    %3404 = vmatpush1.bf16.msra.mxu0 0
    %3405 = vmatprep.subr.bf16.mxu0 0
    %3406 = vmatpush1.bf16.msra.mxu0 0
    %3407 = vmatprep.subr.bf16.mxu0 0
    %3408 = vmatpush1.bf16.msra.mxu0 0
    %3409 = vmatprep.subr.bf16.mxu0 0
    %3410 = vmatpush1.bf16.msra.mxu0 0
    %3411 = vmatprep.subr.bf16.mxu0 0
    %3412 = vmatpush1.bf16.msra.mxu0 0
    %3413 = vmatprep.mubr.bf16.mxu0 0
    %3414 = vmatmul.mubr.bf16.gmra.mrb[0].mxu0 %v3379
    %v3415 = vpop.f32.mrb[0].mxu0
    %v3416 = vadd.f32 0.0, %v3415
    %v3417 = vpop.f32.mrb[0].mxu0
    %v3418 = vpop.f32.mrb[0].mxu0
    %v3419 = vpop.f32.mrb[0].mxu0
    %3420 = vdwg.mxu0
    %v3422 = vsel %vm1720, %v3284, 0
    %v3425 = vsel %vm1720, %v3285, 0
    %v3427 = vsel %vm1949, %v3286, 0
    %3429 = vmatprep.subr.bf16.mxu0 0
    %3430 = vmatpush1.bf16.msra.mxu0 %v3427
    %3431 = vmatprep.subr.bf16.mxu0 0
    %3432 = vmatpush1.bf16.msra.mxu0 0
    %3433 = vmatprep.subr.bf16.mxu0 0
    %3434 = vmatpush1.bf16.msra.mxu0 0
    %3435 = vmatprep.subr.bf16.mxu0 0
    %3436 = vmatpush1.bf16.msra.mxu0 0
    %3437 = vmatprep.subr.bf16.mxu0 0
    %3438 = vmatpush1.bf16.msra.mxu0 0
    %3439 = vmatprep.subr.bf16.mxu0 0
    %3440 = vmatpush1.bf16.msra.mxu0 0
    %3441 = vmatprep.subr.bf16.mxu0 0
    %3442 = vmatpush1.bf16.msra.mxu0 0
    %3443 = vmatprep.subr.bf16.mxu0 0
    %3444 = vmatpush1.bf16.msra.mxu0 0
    %3445 = vmatprep.subr.bf16.mxu0 0
    %3446 = vmatpush1.bf16.msra.mxu0 0
    %3447 = vmatprep.subr.bf16.mxu0 0
    %3448 = vmatpush1.bf16.msra.mxu0 0
    %3449 = vmatprep.subr.bf16.mxu0 0
    %3450 = vmatpush1.bf16.msra.mxu0 0
    %3451 = vmatprep.subr.bf16.mxu0 0
    %3452 = vmatpush1.bf16.msra.mxu0 0
    %3453 = vmatprep.subr.bf16.mxu0 0
    %3454 = vmatpush1.bf16.msra.mxu0 0
    %3455 = vmatprep.subr.bf16.mxu0 0
    %3456 = vmatpush1.bf16.msra.mxu0 0
    %3457 = vmatprep.subr.bf16.mxu0 0
    %3458 = vmatpush1.bf16.msra.mxu0 0
    %3459 = vmatprep.subr.bf16.mxu0 0
    %3460 = vmatpush1.bf16.msra.mxu0 0
    %3461 = vmatprep.mubr.bf16.mxu0 0
    %3462 = vmatmul.mubr.bf16.gmra.mrb[0].mxu0 %v3422
    %v3463 = vpop.f32.mrb[0].mxu0
    %v3464 = vadd.f32 0.0, %v3463
    %v3465 = vpop.f32.mrb[0].mxu0
    %v3466 = vpop.f32.mrb[0].mxu0
    %v3467 = vadd.f32 0.0, %v3466
    %v3468 = vpop.f32.mrb[0].mxu0
    %3469 = vmatprep.mubr.bf16.mxu0 0
    %3470 = vmatmul.mubr.bf16.gmra.mrb[0].mxu0 %v3425
    %v3471 = vpop.f32.mrb[0].mxu0
    %v3472 = vadd.f32 0.0, %v3471
    %v3473 = vpop.f32.mrb[0].mxu0
    %v3474 = vpop.f32.mrb[0].mxu0
    %v3475 = vadd.f32 0.0, %v3474
    %v3476 = vpop.f32.mrb[0].mxu0
    %3477 = vdwg.mxu0
    %v3478 = vsub.f32 %v465, %v3464
    %v3479 = vsub.f32 %v466, %v3467
    %v3480 = vsub.f32 %v467, %v3472
    %v3481 = vsub.f32 %v468, %v3475
    %v3482 = vmul.f32 %v3478, %v3478
    %v3483 = vmul.f32 %v3479, %v3479
    %v3484 = vmul.f32 %v3480, %v3480
    %v3485 = vmul.f32 %v3481, %v3481
    %v3486 = vsel %vm474, %v3482, 0.0
    %3487 = vadd.xlane.f32.xlu0 %v3486
    %v3488 = vpop.xlane.xlu0 %3487
    %v3489 = vsel %vm474, %v3483, 0.0
    %3490 = vadd.xlane.f32.xlu0 %v3489
    %v3491 = vpop.xlane.xlu0 %3490
    %v3492 = vsel %vm474, %v3484, 0.0
    %3493 = vadd.xlane.f32.xlu0 %v3492
    %v3494 = vpop.xlane.xlu0 %3493
    %v3495 = vsel %vm474, %v3485, 0.0
    %3496 = vadd.xlane.f32.xlu0 %v3495
    %v3497 = vpop.xlane.xlu0 %3496
    %v3498 = vadd.f32 %v3488, %v3491
    %v3499 = vadd.f32 %v3498, %v3494
    %v3500 = vadd.f32 %v3499, %v3497
    %v3501 = vrot.slane %v3500, 4
    %v3502 = vadd.f32 %v3500, %v3501
    %v3503 = vrot.slane %v3502, 2
    %v3504 = vadd.f32 %v3502, %v3503
    %v3505 = vrot.slane %v3504, 1
    %v3506 = vadd.f32 %v3504, %v3505
    %v3507 = vadd.f32 %v3506, 0.0
    %v3508 = vsub.f32 0.0, %v3245
    %v3509 = vsub.f32 0.0, %v3247
    %v3510 = vsub.f32 0.0, %v3249
    %v3511 = vsub.f32 0.0, %v3251
    %v3512 = vadd.f32 %v3245, 1e-15
    %v3513 = vadd.f32 %v3247, 1e-15
    %v3514 = vadd.f32 %v3249, 1e-15
    %v3515 = vadd.f32 %v3251, 1e-15
    %v3516 = vlog2.pop %v3512
    %v3517 = vmul.f32 %v3516, 0.6931472
    %v3518 = vlog2.pop %v3513
    %v3519 = vmul.f32 %v3518, 0.6931472
    %v3520 = vlog2.pop %v3514
    %v3521 = vmul.f32 %v3520, 0.6931472
    %v3522 = vlog2.pop %v3515
    %v3523 = vmul.f32 %v3522, 0.6931472
    %v3524 = vmul.f32 %v3508, %v3517
    %v3525 = vmul.f32 %v3509, %v3519
    %v3526 = vmul.f32 %v3510, %v3521
    %v3527 = vmul.f32 %v3511, %v3523
    %v3528 = vsel %vm1720, %v3524, 0.0
    %3529 = vadd.xlane.f32.xlu0 %v3528
    %v3530 = vpop.xlane.xlu0 %3529
    %v3531 = vsel %vm1720, %v3525, 0.0
    %3532 = vadd.xlane.f32.xlu0 %v3531
    %v3533 = vpop.xlane.xlu0 %3532
    %v3534 = vsel %vm1720, %v3526, 0.0
    %3535 = vadd.xlane.f32.xlu0 %v3534
    %v3536 = vpop.xlane.xlu0 %3535
    %v3537 = vsel %vm1720, %v3527, 0.0
    %3538 = vadd.xlane.f32.xlu0 %v3537
    %v3539 = vpop.xlane.xlu0 %3538
    %v3540 = vadd.f32 %v3530, %v3533
    %v3541 = vadd.f32 %v3540, %v3536
    %v3542 = vadd.f32 %v3541, %v3539
    %v3543 = vrot.slane %v3542, 4
    %v3544 = vadd.f32 %v3542, %v3543
    %v3545 = vrot.slane %v3544, 2
    %v3546 = vadd.f32 %v3544, %v3545
    %v3547 = vrot.slane %v3546, 1
    %v3548 = vadd.f32 %v3546, %v3547
    %v3549 = vadd.f32 %v3548, 0.0
    %v3550 = vsel %vm1720, %v2022, -inf
    %3551 = vmax.xlane.f32.xlu0 %v3550
    %v3552 = vpop.xlane.xlu0 %3551
    %v3553 = vsel %vm1720, %v2023, -inf
    %3554 = vmax.xlane.f32.xlu0 %v3553
    %v3555 = vpop.xlane.xlu0 %3554
    %v3556 = vsel %vm1720, %v2024, -inf
    %3557 = vmax.xlane.f32.xlu0 %v3556
    %v3558 = vpop.xlane.xlu0 %3557
    %v3559 = vsel %vm1720, %v2025, -inf
    %3560 = vmax.xlane.f32.xlu0 %v3559
    %v3561 = vpop.xlane.xlu0 %3560
    %v3562 = vsub.f32 %v2022, %v3552
    %v3563 = vsub.f32 %v2023, %v3555
    %v3564 = vsub.f32 %v2024, %v3558
    %v3565 = vsub.f32 %v2025, %v3561
    %v3566 = vmul.f32 %v3562, 1.442695
    %v3567 = vpow.pop %v3566
    %v3568 = vmul.f32 %v3563, 1.442695
    %v3569 = vpow.pop %v3568
    %v3570 = vmul.f32 %v3564, 1.442695
    %v3571 = vpow.pop %v3570
    %v3572 = vmul.f32 %v3565, 1.442695
    %v3573 = vpow.pop %v3572
    %v3574 = vsel %vm1720, %v3567, 0.0
    %3575 = vadd.xlane.f32.xlu0 %v3574
    %v3576 = vpop.xlane.xlu0 %3575
    %v3577 = vsel %vm1720, %v3569, 0.0
    %3578 = vadd.xlane.f32.xlu0 %v3577
    %v3579 = vpop.xlane.xlu0 %3578
    %v3580 = vsel %vm1720, %v3571, 0.0
    %3581 = vadd.xlane.f32.xlu0 %v3580
    %v3582 = vpop.xlane.xlu0 %3581
    %v3583 = vsel %vm1720, %v3573, 0.0
    %3584 = vadd.xlane.f32.xlu0 %v3583
    %v3585 = vpop.xlane.xlu0 %3584
    %v3586 = vrcp.pop %v3576
    %v3587 = vmul.f32 %v3567, %v3586
    %v3588 = vrcp.pop %v3579
    %v3589 = vmul.f32 %v3569, %v3588
    %v3590 = vrcp.pop %v3582
    %v3591 = vmul.f32 %v3571, %v3590
    %v3592 = vrcp.pop %v3585
    %v3593 = vmul.f32 %v3573, %v3592
    %3594 = vxpose.xlu0.b32.start [1/16] %v3587, 128
    %3595 = vxpose.xlu0.b32.cont [2/16] %v3589, 128
    %3596 = vxpose.xlu0.b32.cont [3/16] %v3591, 128
    %3597 = vxpose.xlu0.b32.cont [4/16] %v3593, 128
    %3598 = vxpose.xlu0.b32.cont [5/16] 0.0, 128
    %3599 = vxpose.xlu0.b32.cont [6/16] 0.0, 128
    %3600 = vxpose.xlu0.b32.cont [7/16] 0.0, 128
    %3601 = vxpose.xlu0.b32.cont [8/16] 0.0, 128
    %3602 = vxpose.xlu0.b32.cont [9/16] 0.0, 128
    %3603 = vxpose.xlu0.b32.cont [10/16] 0.0, 128
    %3604 = vxpose.xlu0.b32.cont [11/16] 0.0, 128
    %3605 = vxpose.xlu0.b32.cont [12/16] 0.0, 128
    %3606 = vxpose.xlu0.b32.cont [13/16] 0.0, 128
    %3607 = vxpose.xlu0.b32.cont [14/16] 0.0, 128
    %3608 = vxpose.xlu0.b32.cont [15/16] 0.0, 128
    %3609 = vxpose.xlu0.b32.end [16/16] 0.0, 128
    %v3610 = vpop.trf.xlu0
    %v3611 = vpop.trf.xlu0
    %v3612 = vpop.trf.xlu0
    %v3613 = vpop.trf.xlu0
    %v3614 = vpop.trf.xlu0
    %v3615 = vpop.trf.xlu0
    %v3616 = vpop.trf.xlu0
    %v3617 = vpop.trf.xlu0
    %v3618 = vpop.trf.xlu0
    %v3619 = vpop.trf.xlu0
    %v3620 = vpop.trf.xlu0
    %v3621 = vpop.trf.xlu0
    %v3622 = vpop.trf.xlu0
    %v3623 = vpop.trf.xlu0
    %v3624 = vpop.trf.xlu0
    %v3625 = vpop.trf.xlu0
    %v3626 = vpack.c.bf16 %v3589, %v3587
    %v3627 = vpack.c.bf16 %v3593, %v3591
    %v3628 = vpack.c.bf16 %v3610, %v3610
    %v3629 = vpack.c.bf16 %v3205, %v3204
    %v3630 = vpack.c.bf16 %v3165, %v3164
    %v3631 = vpack.c.bf16 %v3207, %v3206
    %v3632 = vpack.c.bf16 %v3167, %v3166
    %v3634 = vsel %vm474, %v3628, 0
    %3636 = vmatprep.subr.bf16.mxu0 %v3630
    %3637 = vmatpush1.bf16.msra.mxu0 %v3629
    %3638 = vmatprep.subr.bf16.mxu0 %v3632
    %3639 = vmatpush1.bf16.msra.mxu0 %v3631
    %3640 = vmatprep.subr.bf16.mxu0 0
    %3641 = vmatpush1.bf16.msra.mxu0 0
    %3642 = vmatprep.subr.bf16.mxu0 0
    %3643 = vmatpush1.bf16.msra.mxu0 0
    %3644 = vmatprep.subr.bf16.mxu0 0
    %3645 = vmatpush1.bf16.msra.mxu0 0
    %3646 = vmatprep.subr.bf16.mxu0 0
    %3647 = vmatpush1.bf16.msra.mxu0 0
    %3648 = vmatprep.subr.bf16.mxu0 0
    %3649 = vmatpush1.bf16.msra.mxu0 0
    %3650 = vmatprep.subr.bf16.mxu0 0
    %3651 = vmatpush1.bf16.msra.mxu0 0
    %3652 = vmatprep.subr.bf16.mxu0 0
    %3653 = vmatpush1.bf16.msra.mxu0 0
    %3654 = vmatprep.subr.bf16.mxu0 0
    %3655 = vmatpush1.bf16.msra.mxu0 0
    %3656 = vmatprep.subr.bf16.mxu0 0
    %3657 = vmatpush1.bf16.msra.mxu0 0
    %3658 = vmatprep.subr.bf16.mxu0 0
    %3659 = vmatpush1.bf16.msra.mxu0 0
    %3660 = vmatprep.subr.bf16.mxu0 0
    %3661 = vmatpush1.bf16.msra.mxu0 0
    %3662 = vmatprep.subr.bf16.mxu0 0
    %3663 = vmatpush1.bf16.msra.mxu0 0
    %3664 = vmatprep.subr.bf16.mxu0 0
    %3665 = vmatpush1.bf16.msra.mxu0 0
    %3666 = vmatprep.subr.bf16.mxu0 0
    %3667 = vmatpush1.bf16.msra.mxu0 0
    %3668 = vmatprep.mubr.bf16.mxu0 0
    %3669 = vmatmul.mubr.bf16.gmra.mrb[0].mxu0 %v3634
    %v3670 = vpop.f32.mrb[0].mxu0
    %v3671 = vadd.f32 0.0, %v3670
    %v3672 = vpop.f32.mrb[0].mxu0
    %v3673 = vadd.f32 0.0, %v3672
    %v3674 = vpop.f32.mrb[0].mxu0
    %v3675 = vpop.f32.mrb[0].mxu0
    %3676 = vdwg.mxu0
    %v3677 = vpack.c.bf16 %v471, %v470
    %v3678 = vpack.c.bf16 %v473, %v472
    %3679 = vmatprep.subr.bf16.mxu0 0
    %3680 = vmatpush1.bf16.msra.mxu0 %v3677
    %3681 = vmatprep.subr.bf16.mxu0 0
    %3682 = vmatpush1.bf16.msra.mxu0 %v3678
    %3683 = vmatprep.subr.bf16.mxu0 0
    %3684 = vmatpush1.bf16.msra.mxu0 0
    %3685 = vmatprep.subr.bf16.mxu0 0
    %3686 = vmatpush1.bf16.msra.mxu0 0
    %3687 = vmatprep.subr.bf16.mxu0 0
    %3688 = vmatpush1.bf16.msra.mxu0 0
    %3689 = vmatprep.subr.bf16.mxu0 0
    %3690 = vmatpush1.bf16.msra.mxu0 0
    %3691 = vmatprep.subr.bf16.mxu0 0
    %3692 = vmatpush1.bf16.msra.mxu0 0
    %3693 = vmatprep.subr.bf16.mxu0 0
    %3694 = vmatpush1.bf16.msra.mxu0 0
    %3695 = vmatprep.subr.bf16.mxu0 0
    %3696 = vmatpush1.bf16.msra.mxu0 0
    %3697 = vmatprep.subr.bf16.mxu0 0
    %3698 = vmatpush1.bf16.msra.mxu0 0
    %3699 = vmatprep.subr.bf16.mxu0 0
    %3700 = vmatpush1.bf16.msra.mxu0 0
    %3701 = vmatprep.subr.bf16.mxu0 0
    %3702 = vmatpush1.bf16.msra.mxu0 0
    %3703 = vmatprep.subr.bf16.mxu0 0
    %3704 = vmatpush1.bf16.msra.mxu0 0
    %3705 = vmatprep.subr.bf16.mxu0 0
    %3706 = vmatpush1.bf16.msra.mxu0 0
    %3707 = vmatprep.subr.bf16.mxu0 0
    %3708 = vmatpush1.bf16.msra.mxu0 0
    %3709 = vmatprep.subr.bf16.mxu0 0
    %3710 = vmatpush1.bf16.msra.mxu0 0
    %3711 = vmatprep.mubr.bf16.mxu0 0
    %3712 = vmatmul.mubr.bf16.gmra.mrb[0].mxu0 %v3634
    %v3713 = vpop.f32.mrb[0].mxu0
    %v3714 = vadd.f32 0.0, %v3713
    %v3715 = vpop.f32.mrb[0].mxu0
    %v3716 = vpop.f32.mrb[0].mxu0
    %v3717 = vpop.f32.mrb[0].mxu0
    %3718 = vdwg.mxu0
    %v3719 = vpack.c.bf16 %v3714, %v3714
    %v3721 = vsel %vm474, %v3719, 0
    %3723 = vmatprep.subr.bf16.mxu0 0
    %3724 = vmatpush1.bf16.msra.mxu0 %v3626
    %3725 = vmatprep.subr.bf16.mxu0 0
    %3726 = vmatpush1.bf16.msra.mxu0 %v3627
    %3727 = vmatprep.subr.bf16.mxu0 0
    %3728 = vmatpush1.bf16.msra.mxu0 0
    %3729 = vmatprep.subr.bf16.mxu0 0
    %3730 = vmatpush1.bf16.msra.mxu0 0
    %3731 = vmatprep.subr.bf16.mxu0 0
    %3732 = vmatpush1.bf16.msra.mxu0 0
    %3733 = vmatprep.subr.bf16.mxu0 0
    %3734 = vmatpush1.bf16.msra.mxu0 0
    %3735 = vmatprep.subr.bf16.mxu0 0
    %3736 = vmatpush1.bf16.msra.mxu0 0
    %3737 = vmatprep.subr.bf16.mxu0 0
    %3738 = vmatpush1.bf16.msra.mxu0 0
    %3739 = vmatprep.subr.bf16.mxu0 0
    %3740 = vmatpush1.bf16.msra.mxu0 0
    %3741 = vmatprep.subr.bf16.mxu0 0
    %3742 = vmatpush1.bf16.msra.mxu0 0
    %3743 = vmatprep.subr.bf16.mxu0 0
    %3744 = vmatpush1.bf16.msra.mxu0 0
    %3745 = vmatprep.subr.bf16.mxu0 0
    %3746 = vmatpush1.bf16.msra.mxu0 0
    %3747 = vmatprep.subr.bf16.mxu0 0
    %3748 = vmatpush1.bf16.msra.mxu0 0
    %3749 = vmatprep.subr.bf16.mxu0 0
    %3750 = vmatpush1.bf16.msra.mxu0 0
    %3751 = vmatprep.subr.bf16.mxu0 0
    %3752 = vmatpush1.bf16.msra.mxu0 0
    %3753 = vmatprep.subr.bf16.mxu0 0
    %3754 = vmatpush1.bf16.msra.mxu0 0
    %3755 = vmatprep.mubr.bf16.mxu0 0
    %3756 = vmatmul.mubr.bf16.gmra.mrb[0].mxu0 %v3721
    %v3757 = vpop.f32.mrb[0].mxu0
    %v3758 = vadd.f32 0.0, %v3757
    %v3759 = vpop.f32.mrb[0].mxu0
    %v3760 = vpop.f32.mrb[0].mxu0
    %v3761 = vpop.f32.mrb[0].mxu0
    %3762 = vdwg.mxu0
    %v3764 = vsel %vm1720, %v3626, 0
    %v3767 = vsel %vm1720, %v3627, 0
    %v3769 = vsel %vm1949, %v3628, 0
    %3771 = vmatprep.subr.bf16.mxu0 0
    %3772 = vmatpush1.bf16.msra.mxu0 %v3769
    %3773 = vmatprep.subr.bf16.mxu0 0
    %3774 = vmatpush1.bf16.msra.mxu0 0
    %3775 = vmatprep.subr.bf16.mxu0 0
    %3776 = vmatpush1.bf16.msra.mxu0 0
    %3777 = vmatprep.subr.bf16.mxu0 0
    %3778 = vmatpush1.bf16.msra.mxu0 0
    %3779 = vmatprep.subr.bf16.mxu0 0
    %3780 = vmatpush1.bf16.msra.mxu0 0
    %3781 = vmatprep.subr.bf16.mxu0 0
    %3782 = vmatpush1.bf16.msra.mxu0 0
    %3783 = vmatprep.subr.bf16.mxu0 0
    %3784 = vmatpush1.bf16.msra.mxu0 0
    %3785 = vmatprep.subr.bf16.mxu0 0
    %3786 = vmatpush1.bf16.msra.mxu0 0
    %3787 = vmatprep.subr.bf16.mxu0 0
    %3788 = vmatpush1.bf16.msra.mxu0 0
    %3789 = vmatprep.subr.bf16.mxu0 0
    %3790 = vmatpush1.bf16.msra.mxu0 0
    %3791 = vmatprep.subr.bf16.mxu0 0
    %3792 = vmatpush1.bf16.msra.mxu0 0
    %3793 = vmatprep.subr.bf16.mxu0 0
    %3794 = vmatpush1.bf16.msra.mxu0 0
    %3795 = vmatprep.subr.bf16.mxu0 0
    %3796 = vmatpush1.bf16.msra.mxu0 0
    %3797 = vmatprep.subr.bf16.mxu0 0
    %3798 = vmatpush1.bf16.msra.mxu0 0
    %3799 = vmatprep.subr.bf16.mxu0 0
    %3800 = vmatpush1.bf16.msra.mxu0 0
    %3801 = vmatprep.subr.bf16.mxu0 0
    %3802 = vmatpush1.bf16.msra.mxu0 0
    %3803 = vmatprep.mubr.bf16.mxu0 0
    %3804 = vmatmul.mubr.bf16.gmra.mrb[0].mxu0 %v3764
    %v3805 = vpop.f32.mrb[0].mxu0
    %v3806 = vadd.f32 0.0, %v3805
    %v3807 = vpop.f32.mrb[0].mxu0
    %v3808 = vpop.f32.mrb[0].mxu0
    %v3809 = vadd.f32 0.0, %v3808
    %v3810 = vpop.f32.mrb[0].mxu0
    %3811 = vmatprep.mubr.bf16.mxu0 0
    %3812 = vmatmul.mubr.bf16.gmra.mrb[0].mxu0 %v3767
    %v3813 = vpop.f32.mrb[0].mxu0
    %v3814 = vadd.f32 0.0, %v3813
    %v3815 = vpop.f32.mrb[0].mxu0
    %v3816 = vpop.f32.mrb[0].mxu0
    %v3817 = vadd.f32 0.0, %v3816
    %v3818 = vpop.f32.mrb[0].mxu0
    %3819 = vdwg.mxu0
    %v3820 = vsub.f32 %v470, %v3806
    %v3821 = vsub.f32 %v471, %v3809
    %v3822 = vsub.f32 %v472, %v3814
    %v3823 = vsub.f32 %v473, %v3817
    %v3824 = vmul.f32 %v3820, %v3820
    %v3825 = vmul.f32 %v3821, %v3821
    %v3826 = vmul.f32 %v3822, %v3822
    %v3827 = vmul.f32 %v3823, %v3823
    %v3828 = vsel %vm474, %v3824, 0.0
    %3829 = vadd.xlane.f32.xlu0 %v3828
    %v3830 = vpop.xlane.xlu0 %3829
    %v3831 = vsel %vm474, %v3825, 0.0
    %3832 = vadd.xlane.f32.xlu0 %v3831
    %v3833 = vpop.xlane.xlu0 %3832
    %v3834 = vsel %vm474, %v3826, 0.0
    %3835 = vadd.xlane.f32.xlu0 %v3834
    %v3836 = vpop.xlane.xlu0 %3835
    %v3837 = vsel %vm474, %v3827, 0.0
    %3838 = vadd.xlane.f32.xlu0 %v3837
    %v3839 = vpop.xlane.xlu0 %3838
    %v3840 = vadd.f32 %v3830, %v3833
    %v3841 = vadd.f32 %v3840, %v3836
    %v3842 = vadd.f32 %v3841, %v3839
    %v3843 = vrot.slane %v3842, 4
    %v3844 = vadd.f32 %v3842, %v3843
    %v3845 = vrot.slane %v3844, 2
    %v3846 = vadd.f32 %v3844, %v3845
    %v3847 = vrot.slane %v3846, 1
    %v3848 = vadd.f32 %v3846, %v3847
    %v3849 = vadd.f32 %v3507, %v3848
    %v3850 = vsub.f32 0.0, %v3587
    %v3851 = vsub.f32 0.0, %v3589
    %v3852 = vsub.f32 0.0, %v3591
    %v3853 = vsub.f32 0.0, %v3593
    %v3854 = vadd.f32 %v3587, 1e-15
    %v3855 = vadd.f32 %v3589, 1e-15
    %v3856 = vadd.f32 %v3591, 1e-15
    %v3857 = vadd.f32 %v3593, 1e-15
    %v3858 = vlog2.pop %v3854
    %v3859 = vmul.f32 %v3858, 0.6931472
    %v3860 = vlog2.pop %v3855
    %v3861 = vmul.f32 %v3860, 0.6931472
    %v3862 = vlog2.pop %v3856
    %v3863 = vmul.f32 %v3862, 0.6931472
    %v3864 = vlog2.pop %v3857
    %v3865 = vmul.f32 %v3864, 0.6931472
    %v3866 = vmul.f32 %v3850, %v3859
    %v3867 = vmul.f32 %v3851, %v3861
    %v3868 = vmul.f32 %v3852, %v3863
    %v3869 = vmul.f32 %v3853, %v3865
    %v3870 = vsel %vm1720, %v3866, 0.0
    %3871 = vadd.xlane.f32.xlu0 %v3870
    %v3872 = vpop.xlane.xlu0 %3871
    %v3873 = vsel %vm1720, %v3867, 0.0
    %3874 = vadd.xlane.f32.xlu0 %v3873
    %v3875 = vpop.xlane.xlu0 %3874
    %v3876 = vsel %vm1720, %v3868, 0.0
    %3877 = vadd.xlane.f32.xlu0 %v3876
    %v3878 = vpop.xlane.xlu0 %3877
    %v3879 = vsel %vm1720, %v3869, 0.0
    %3880 = vadd.xlane.f32.xlu0 %v3879
    %v3881 = vpop.xlane.xlu0 %3880
    %v3882 = vadd.f32 %v3872, %v3875
    %v3883 = vadd.f32 %v3882, %v3878
    %v3884 = vadd.f32 %v3883, %v3881
    %v3885 = vrot.slane %v3884, 4
    %v3886 = vadd.f32 %v3884, %v3885
    %v3887 = vrot.slane %v3886, 2
    %v3888 = vadd.f32 %v3886, %v3887
    %v3889 = vrot.slane %v3888, 1
    %v3890 = vadd.f32 %v3888, %v3889
    %v3891 = vadd.f32 %v3549, %v3890
    %v3892 = vrsqrt.pop %v3849
    %v3893 = vmul.f32 %v3849, %v3892
    %vm3894 = vcmp.eq.f32.partialorder %v3849, inf
    %v3895 = vsel %vm3894, %v3849, %v3893
    %vm3896 = vcmp.eq.f32.partialorder %v3849, 0.0
    %v3897 = vand.u32 %v3849, 2147483648
    %v3898 = vsel %vm3896, %v3897, %v3895
    %v3899 = vmul.f32 %v3898, 0.00048828125
    %v3900 = vmul.f32 %v3891, 0.015625
    %v3901 = vsel %vm1720, %v3416, 0.0
    %3902 = vadd.xlane.f32.xlu0 %v3901
    %v3903 = vpop.xlane.xlu0 %3902
    %v3904 = vmax.f32 %v3903, 1.0
    %v3905 = vrcp.pop %v3904
    %v3906 = vmul.f32 %v3416, %v3905
    %v3907 = vpack.c.bf16 %v3906, %v3906
    %v3908 = vsel %vm1720, %v3758, 0.0
    %3909 = vadd.xlane.f32.xlu0 %v3908
    %v3910 = vpop.xlane.xlu0 %3909
    %v3911 = vmax.f32 %v3910, 1.0
    %v3912 = vrcp.pop %v3911
    %v3913 = vmul.f32 %v3758, %v3912
    %v3914 = vpack.c.bf16 %v3913, %v3913
    %v3915 = vld [vmem:[%s57] sm:$0xf]
    %v3916 = vld [vmem:[%s57 + $0x4] sm:$0xf]
    %v3917 = vld [vmem:[%s57 + $0x8] sm:$0xf]
    %v3918 = vld [vmem:[%s57 + $0xc] sm:$0xf]
    %v3919 = vld [vmem:[%s57 + $0x10] sm:$0xf]
    %v3920 = vld [vmem:[%s57 + $0x14] sm:$0xf]
    %v3921 = vld [vmem:[%s57 + $0x18] sm:$0xf]
    %v3922 = vld [vmem:[%s57 + $0x1c] sm:$0xf]
    %v3923 = vld [vmem:[%s57 + $0x20] sm:$0xf]
    %v3924 = vld [vmem:[%s57 + $0x24] sm:$0xf]
    %v3925 = vld [vmem:[%s57 + $0x28] sm:$0xf]
    %v3926 = vld [vmem:[%s57 + $0x2c] sm:$0xf]
    %v3927 = vld [vmem:[%s57 + $0x30] sm:$0xf]
    %v3928 = vld [vmem:[%s57 + $0x34] sm:$0xf]
    %v3929 = vld [vmem:[%s57 + $0x38] sm:$0xf]
    %v3930 = vld [vmem:[%s57 + $0x3c] sm:$0xf]
    %v3931 = vld [vmem:[%s57 + $0x40] sm:$0xf]
    %v3932 = vld [vmem:[%s57 + $0x44] sm:$0xf]
    %v3933 = vld [vmem:[%s57 + $0x48] sm:$0xf]
    %v3934 = vld [vmem:[%s57 + $0x4c] sm:$0xf]
    %v3935 = vld [vmem:[%s57 + $0x50] sm:$0xf]
    %v3936 = vld [vmem:[%s57 + $0x54] sm:$0xf]
    %v3937 = vld [vmem:[%s57 + $0x58] sm:$0xf]
    %v3938 = vld [vmem:[%s57 + $0x5c] sm:$0xf]
    %v3939 = vld [vmem:[%s57 + $0x60] sm:$0xf]
    %v3940 = vld [vmem:[%s57 + $0x64] sm:$0xf]
    %v3941 = vld [vmem:[%s57 + $0x68] sm:$0xf]
    %v3942 = vld [vmem:[%s57 + $0x6c] sm:$0xf]
    %v3943 = vld [vmem:[%s57 + $0x70] sm:$0xf]
    %v3944 = vld [vmem:[%s57 + $0x74] sm:$0xf]
    %v3945 = vld [vmem:[%s57 + $0x78] sm:$0xf]
    %v3946 = vld [vmem:[%s57 + $0x7c] sm:$0xf]
    %v3947 = vld [vmem:[%s57 + $0x80] sm:$0xf]
    %v3948 = vld [vmem:[%s57 + $0x84] sm:$0xf]
    %v3949 = vld [vmem:[%s57 + $0x88] sm:$0xf]
    %v3950 = vld [vmem:[%s57 + $0x8c] sm:$0xf]
    %v3951 = vld [vmem:[%s57 + $0x90] sm:$0xf]
    %v3952 = vld [vmem:[%s57 + $0x94] sm:$0xf]
    %v3953 = vld [vmem:[%s57 + $0x98] sm:$0xf]
    %v3954 = vld [vmem:[%s57 + $0x9c] sm:$0xf]
    %v3955 = vld [vmem:[%s57 + $0xa0] sm:$0xf]
    %v3956 = vld [vmem:[%s57 + $0xa4] sm:$0xf]
    %v3957 = vld [vmem:[%s57 + $0xa8] sm:$0xf]
    %v3958 = vld [vmem:[%s57 + $0xac] sm:$0xf]
    %v3959 = vld [vmem:[%s57 + $0xb0] sm:$0xf]
    %v3960 = vld [vmem:[%s57 + $0xb4] sm:$0xf]
    %v3961 = vld [vmem:[%s57 + $0xb8] sm:$0xf]
    %v3962 = vld [vmem:[%s57 + $0xbc] sm:$0xf]
    %v3963 = vld [vmem:[%s59] sm:$0x1]
    %v3964 = vpack.c.bf16 %v3329, %v3329
    %v3965 = vpack.c.bf16 %v3331, %v3331
    %v3967 = vsel %vm1720, %v3907, 0
    %v3970 = vsel %vm1949, %v3964, 0
    %v3973 = vsel %vm1949, %v3965, 0
    %3975 = vmatprep.subr.bf16.mxu0 %v3973
    %3976 = vmatpush1.bf16.msra.mxu0 %v3970
    %3977 = vmatprep.subr.bf16.mxu0 0
    %3978 = vmatpush1.bf16.msra.mxu0 0
    %3979 = vmatprep.subr.bf16.mxu0 0
    %3980 = vmatpush1.bf16.msra.mxu0 0
    %3981 = vmatprep.subr.bf16.mxu0 0
    %3982 = vmatpush1.bf16.msra.mxu0 0
    %3983 = vmatprep.subr.bf16.mxu0 0
    %3984 = vmatpush1.bf16.msra.mxu0 0
    %3985 = vmatprep.subr.bf16.mxu0 0
    %3986 = vmatpush1.bf16.msra.mxu0 0
    %3987 = vmatprep.subr.bf16.mxu0 0
    %3988 = vmatpush1.bf16.msra.mxu0 0
    %3989 = vmatprep.subr.bf16.mxu0 0
    %3990 = vmatpush1.bf16.msra.mxu0 0
    %3991 = vmatprep.subr.bf16.mxu0 0
    %3992 = vmatpush1.bf16.msra.mxu0 0
    %3993 = vmatprep.subr.bf16.mxu0 0
    %3994 = vmatpush1.bf16.msra.mxu0 0
    %3995 = vmatprep.subr.bf16.mxu0 0
    %3996 = vmatpush1.bf16.msra.mxu0 0
    %3997 = vmatprep.subr.bf16.mxu0 0
    %3998 = vmatpush1.bf16.msra.mxu0 0
    %3999 = vmatprep.subr.bf16.mxu0 0
    %4000 = vmatpush1.bf16.msra.mxu0 0
    %4001 = vmatprep.subr.bf16.mxu0 0
    %4002 = vmatpush1.bf16.msra.mxu0 0
    %4003 = vmatprep.subr.bf16.mxu0 0
    %4004 = vmatpush1.bf16.msra.mxu0 0
    %4005 = vmatprep.subr.bf16.mxu0 0
    %4006 = vmatpush1.bf16.msra.mxu0 0
    %4007 = vmatprep.mubr.bf16.mxu0 0
    %4008 = vmatmul.mubr.bf16.gmra.mrb[0].mxu0 %v3967
    %v4009 = vpop.f32.mrb[0].mxu0
    %v4010 = vadd.f32 0.0, %v4009
    %v4011 = vpop.f32.mrb[0].mxu0
    %v4012 = vadd.f32 0.0, %v4011
    %v4013 = vpop.f32.mrb[0].mxu0
    %v4014 = vpop.f32.mrb[0].mxu0
    %4015 = vdwg.mxu0
    %v4016 = vpack.c.bf16 %v3671, %v3671
    %v4017 = vpack.c.bf16 %v3673, %v3673
    %v4019 = vsel %vm1720, %v3914, 0
    %v4022 = vsel %vm1949, %v4016, 0
    %v4025 = vsel %vm1949, %v4017, 0
    %4027 = vmatprep.subr.bf16.mxu0 %v4025
    %4028 = vmatpush1.bf16.msra.mxu0 %v4022
    %4029 = vmatprep.subr.bf16.mxu0 0
    %4030 = vmatpush1.bf16.msra.mxu0 0
    %4031 = vmatprep.subr.bf16.mxu0 0
    %4032 = vmatpush1.bf16.msra.mxu0 0
    %4033 = vmatprep.subr.bf16.mxu0 0
    %4034 = vmatpush1.bf16.msra.mxu0 0
    %4035 = vmatprep.subr.bf16.mxu0 0
    %4036 = vmatpush1.bf16.msra.mxu0 0
    %4037 = vmatprep.subr.bf16.mxu0 0
    %4038 = vmatpush1.bf16.msra.mxu0 0
    %4039 = vmatprep.subr.bf16.mxu0 0
    %4040 = vmatpush1.bf16.msra.mxu0 0
    %4041 = vmatprep.subr.bf16.mxu0 0
    %4042 = vmatpush1.bf16.msra.mxu0 0
    %4043 = vmatprep.subr.bf16.mxu0 0
    %4044 = vmatpush1.bf16.msra.mxu0 0
    %4045 = vmatprep.subr.bf16.mxu0 0
    %4046 = vmatpush1.bf16.msra.mxu0 0
    %4047 = vmatprep.subr.bf16.mxu0 0
    %4048 = vmatpush1.bf16.msra.mxu0 0
    %4049 = vmatprep.subr.bf16.mxu0 0
    %4050 = vmatpush1.bf16.msra.mxu0 0
    %4051 = vmatprep.subr.bf16.mxu0 0
    %4052 = vmatpush1.bf16.msra.mxu0 0
    %4053 = vmatprep.subr.bf16.mxu0 0
    %4054 = vmatpush1.bf16.msra.mxu0 0
    %4055 = vmatprep.subr.bf16.mxu0 0
    %4056 = vmatpush1.bf16.msra.mxu0 0
    %4057 = vmatprep.subr.bf16.mxu0 0
    %4058 = vmatpush1.bf16.msra.mxu0 0
    %4059 = vmatprep.mubr.bf16.mxu0 0
    %4060 = vmatmul.mubr.bf16.gmra.mrb[0].mxu0 %v4019
    %v4061 = vpop.f32.mrb[0].mxu0
    %v4062 = vadd.f32 0.0, %v4061
    %v4063 = vpop.f32.mrb[0].mxu0
    %v4064 = vadd.f32 0.0, %v4063
    %v4065 = vpop.f32.mrb[0].mxu0
    %v4066 = vpop.f32.mrb[0].mxu0
    %4067 = vdwg.mxu0
    %v4068 = vpack.c.bf16 %v4062, %v4010
    %v4069 = vpack.c.bf16 %v4064, %v4012
    %v4070 = vpack.c.bf16 %v3671, %v3329
    %v4071 = vpack.c.bf16 %v3673, %v3331
    %v4096 = vunpack.c.l.b16 %v3939
    %v4097 = vunpack.c.l.b16 %v3940
    %v4098 = vunpack.c.l.b16 %v3941
    %v4099 = vunpack.c.l.b16 %v3942
    %v4100 = vunpack.c.l.b16 %v3943
    %v4101 = vunpack.c.l.b16 %v3944
    %v4102 = vunpack.c.l.b16 %v3945
    %v4103 = vunpack.c.l.b16 %v3946
    %v4104 = vunpack.c.l.b16 %v3947
    %v4105 = vunpack.c.l.b16 %v3948
    %v4106 = vunpack.c.l.b16 %v3949
    %v4107 = vunpack.c.l.b16 %v3950
    %v4108 = vunpack.c.l.b16 %v3951
    %v4109 = vunpack.c.l.b16 %v3952
    %v4110 = vunpack.c.l.b16 %v3953
    %v4111 = vunpack.c.l.b16 %v3954
    %v4112 = vunpack.c.l.b16 %v3955
    %v4113 = vunpack.c.l.b16 %v3956
    %v4114 = vunpack.c.l.b16 %v3957
    %v4115 = vunpack.c.l.b16 %v3958
    %v4116 = vunpack.c.l.b16 %v3959
    %v4117 = vunpack.c.l.b16 %v3960
    %v4118 = vunpack.c.l.b16 %v3961
    %v4119 = vunpack.c.l.b16 %v3962
    %v4120 = vpack.c.b16 %v4097, %v4096
    %v4121 = vpack.c.b16 %v4099, %v4098
    %v4122 = vpack.c.b16 %v4101, %v4100
    %v4123 = vpack.c.b16 %v4103, %v4102
    %v4124 = vpack.c.b16 %v4105, %v4104
    %v4125 = vpack.c.b16 %v4107, %v4106
    %v4126 = vpack.c.b16 %v4109, %v4108
    %v4127 = vpack.c.b16 %v4111, %v4110
    %v4128 = vpack.c.b16 %v4113, %v4112
    %v4129 = vpack.c.b16 %v4115, %v4114
    %v4130 = vpack.c.b16 %v4117, %v4116
    %v4131 = vpack.c.b16 %v4119, %v4118
    %v4145 = vsel %vm839, %v4071, 0
    %4147 = vmatprep.subr.bf16.mxu0 0
    %4148 = vmatpush1.bf16.msra.mxu0 %v4120
    %4149 = vmatprep.subr.bf16.mxu0 0
    %4150 = vmatpush1.bf16.msra.mxu0 %v4121
    %4151 = vmatprep.subr.bf16.mxu0 0
    %4152 = vmatpush1.bf16.msra.mxu0 %v4122
    %4153 = vmatprep.subr.bf16.mxu0 0
    %4154 = vmatpush1.bf16.msra.mxu0 %v4123
    %4155 = vmatprep.subr.bf16.mxu0 0
    %4156 = vmatpush1.bf16.msra.mxu0 %v4124
    %4157 = vmatprep.subr.bf16.mxu0 0
    %4158 = vmatpush1.bf16.msra.mxu0 %v4125
    %4159 = vmatprep.subr.bf16.mxu0 0
    %4160 = vmatpush1.bf16.msra.mxu0 %v4126
    %4161 = vmatprep.subr.bf16.mxu0 0
    %4162 = vmatpush1.bf16.msra.mxu0 %v4127
    %4163 = vmatprep.subr.bf16.mxu0 0
    %4164 = vmatpush1.bf16.msra.mxu0 %v4128
    %4165 = vmatprep.subr.bf16.mxu0 0
    %4166 = vmatpush1.bf16.msra.mxu0 %v4129
    %4167 = vmatprep.subr.bf16.mxu0 0
    %4168 = vmatpush1.bf16.msra.mxu0 %v4130
    %4169 = vmatprep.subr.bf16.mxu0 0
    %4170 = vmatpush1.bf16.msra.mxu0 %v4131
    %4171 = vmatprep.subr.bf16.mxu0 0
    %4172 = vmatpush1.bf16.msra.mxu0 0
    %4173 = vmatprep.subr.bf16.mxu0 0
    %4174 = vmatpush1.bf16.msra.mxu0 0
    %4175 = vmatprep.subr.bf16.mxu0 0
    %4176 = vmatpush1.bf16.msra.mxu0 0
    %4177 = vmatprep.subr.bf16.mxu0 0
    %4178 = vmatpush1.bf16.msra.mxu0 0
    %4179 = vmatprep.mubr.bf16.mxu0 %v4145
    %4180 = vmatmul.mubr.bf16.gmra.mrb[0].mxu0 %v4070
    %v4181 = vpop.f32.mrb[0].mxu0
    %v4182 = vadd.f32 0.0, %v4181
    %v4183 = vpop.f32.mrb[0].mxu0
    %v4184 = vpop.f32.mrb[0].mxu0
    %v4185 = vadd.f32 0.0, %v4184
    %v4186 = vpop.f32.mrb[0].mxu0
    %4187 = vdwg.mxu0
    %v4212 = vunpack.c.l.b16 %v3915
    %v4213 = vunpack.c.l.b16 %v3916
    %v4214 = vunpack.c.l.b16 %v3917
    %v4215 = vunpack.c.l.b16 %v3918
    %v4216 = vunpack.c.l.b16 %v3919
    %v4217 = vunpack.c.l.b16 %v3920
    %v4218 = vunpack.c.l.b16 %v3921
    %v4219 = vunpack.c.l.b16 %v3922
    %v4220 = vunpack.c.l.b16 %v3923
    %v4221 = vunpack.c.l.b16 %v3924
    %v4222 = vunpack.c.l.b16 %v3925
    %v4223 = vunpack.c.l.b16 %v3926
    %v4224 = vunpack.c.l.b16 %v3927
    %v4225 = vunpack.c.l.b16 %v3928
    %v4226 = vunpack.c.l.b16 %v3929
    %v4227 = vunpack.c.l.b16 %v3930
    %v4228 = vunpack.c.l.b16 %v3931
    %v4229 = vunpack.c.l.b16 %v3932
    %v4230 = vunpack.c.l.b16 %v3933
    %v4231 = vunpack.c.l.b16 %v3934
    %v4232 = vunpack.c.l.b16 %v3935
    %v4233 = vunpack.c.l.b16 %v3936
    %v4234 = vunpack.c.l.b16 %v3937
    %v4235 = vunpack.c.l.b16 %v3938
    %v4236 = vpack.c.b16 %v4213, %v4212
    %v4237 = vpack.c.b16 %v4215, %v4214
    %v4238 = vpack.c.b16 %v4217, %v4216
    %v4239 = vpack.c.b16 %v4219, %v4218
    %v4240 = vpack.c.b16 %v4221, %v4220
    %v4241 = vpack.c.b16 %v4223, %v4222
    %v4242 = vpack.c.b16 %v4225, %v4224
    %v4243 = vpack.c.b16 %v4227, %v4226
    %v4244 = vpack.c.b16 %v4229, %v4228
    %v4245 = vpack.c.b16 %v4231, %v4230
    %v4246 = vpack.c.b16 %v4233, %v4232
    %v4247 = vpack.c.b16 %v4235, %v4234
    %v4261 = vsel %vm839, %v4069, 0
    %4263 = vmatprep.subr.bf16.mxu0 0
    %4264 = vmatpush1.bf16.msra.mxu0 %v4236
    %4265 = vmatprep.subr.bf16.mxu0 0
    %4266 = vmatpush1.bf16.msra.mxu0 %v4237
    %4267 = vmatprep.subr.bf16.mxu0 0
    %4268 = vmatpush1.bf16.msra.mxu0 %v4238
    %4269 = vmatprep.subr.bf16.mxu0 0
    %4270 = vmatpush1.bf16.msra.mxu0 %v4239
    %4271 = vmatprep.subr.bf16.mxu0 0
    %4272 = vmatpush1.bf16.msra.mxu0 %v4240
    %4273 = vmatprep.subr.bf16.mxu0 0
    %4274 = vmatpush1.bf16.msra.mxu0 %v4241
    %4275 = vmatprep.subr.bf16.mxu0 0
    %4276 = vmatpush1.bf16.msra.mxu0 %v4242
    %4277 = vmatprep.subr.bf16.mxu0 0
    %4278 = vmatpush1.bf16.msra.mxu0 %v4243
    %4279 = vmatprep.subr.bf16.mxu0 0
    %4280 = vmatpush1.bf16.msra.mxu0 %v4244
    %4281 = vmatprep.subr.bf16.mxu0 0
    %4282 = vmatpush1.bf16.msra.mxu0 %v4245
    %4283 = vmatprep.subr.bf16.mxu0 0
    %4284 = vmatpush1.bf16.msra.mxu0 %v4246
    %4285 = vmatprep.subr.bf16.mxu0 0
    %4286 = vmatpush1.bf16.msra.mxu0 %v4247
    %4287 = vmatprep.subr.bf16.mxu0 0
    %4288 = vmatpush1.bf16.msra.mxu0 0
    %4289 = vmatprep.subr.bf16.mxu0 0
    %4290 = vmatpush1.bf16.msra.mxu0 0
    %4291 = vmatprep.subr.bf16.mxu0 0
    %4292 = vmatpush1.bf16.msra.mxu0 0
    %4293 = vmatprep.subr.bf16.mxu0 0
    %4294 = vmatpush1.bf16.msra.mxu0 0
    %4295 = vmatprep.mubr.bf16.mxu0 %v4261
    %4296 = vmatmul.mubr.bf16.gmra.mrb[0].mxu0 %v4068
    %v4297 = vpop.f32.mrb[0].mxu0
    %v4298 = vadd.f32 %v4182, %v4297
    %v4299 = vpop.f32.mrb[0].mxu0
    %v4300 = vpop.f32.mrb[0].mxu0
    %v4301 = vadd.f32 %v4185, %v4300
    %v4302 = vpop.f32.mrb[0].mxu0
    %4303 = vdwg.mxu0
    %v4305 = vlaneseq
    %v4306 = vshrl.u32 %v4305, 7
    %v4307 = vsub.s32 0, %v4306
    %v4308 = vrot.slane %v3963, %v4307
    %v4310 = vadd.f32 %v4298, %v4308
    %v4311 = vadd.f32 %v4301, %v4308
    %v4312 = vmax.f32 %v4310, 0.0
    %v4313 = vmax.f32 %v4311, 0.0
    %v4314 = vsel %vm839, %v4312, 0.0
    %v4315 = vsel %vm839, %v4313, 0.0
    %v4316 = vadd.f32 %v4314, %v4315
    %v4317 = vrot.slane %v4316, 4
    %v4318 = vadd.f32 %v4316, %v4317
    %v4319 = vrot.slane %v4318, 2
    %v4320 = vadd.f32 %v4318, %v4319
    %v4321 = vrot.slane %v4320, 1
    %v4322 = vadd.f32 %v4320, %v4321
    %v4323 = vmul.f32 %v4322, 0.0625
    %v4324 = vsub.f32 %v4312, %v4323
    %v4325 = vsub.f32 %v4313, %v4323
    %v4326 = vmul.f32 %v4324, %v4324
    %v4327 = vmul.f32 %v4325, %v4325
    %v4328 = vsel %vm839, %v4326, 0.0
    %v4329 = vsel %vm839, %v4327, 0.0
    %v4330 = vadd.f32 %v4328, %v4329
    %v4331 = vrot.slane %v4330, 4
    %v4332 = vadd.f32 %v4330, %v4331
    %v4333 = vrot.slane %v4332, 2
    %v4334 = vadd.f32 %v4332, %v4333
    %v4335 = vrot.slane %v4334, 1
    %v4336 = vadd.f32 %v4334, %v4335
    %v4337 = vmul.f32 %v4336, 0.0625
    %v4338 = vadd.f32 %v4337, 1e-05
    %v4339 = vrsqrt.pop %v4338
    %v4340 = vld [vmem:[%s61] sm:$0x1]
    %v4341 = vmul.f32 %v4339, %v4340
    %v4342 = vld [vmem:[%s63] sm:$0x1]
    %v4343 = vmul.f32 %v4323, %v4341
    %v4344 = vsub.f32 %v4342, %v4343
    %v4345 = vlaneseq
    %v4346 = vshrl.u32 %v4345, 7
    %v4347 = vsub.s32 0, %v4346
    %v4348 = vrot.slane %v4341, %v4347
    %v4349 = vmul.f32 %v4312, %v4348
    %v4350 = vmul.f32 %v4313, %v4348
    %v4352 = vlaneseq
    %v4353 = vshrl.u32 %v4352, 7
    %v4354 = vsub.s32 0, %v4353
    %v4355 = vrot.slane %v4344, %v4354
    %v4357 = vadd.f32 %v4349, %v4355
    %v4358 = vadd.f32 %v4350, %v4355
    %v4359 = vld [vmem:[%s65] sm:$0xf]
    %v4360 = vld [vmem:[%s65 + $0x4] sm:$0xf]
    %v4361 = vld [vmem:[%s65 + $0x8] sm:$0xf]
    %v4362 = vld [vmem:[%s65 + $0xc] sm:$0xf]
    %v4363 = vld [vmem:[%s65 + $0x10] sm:$0xf]
    %v4364 = vld [vmem:[%s65 + $0x14] sm:$0xf]
    %v4365 = vld [vmem:[%s65 + $0x18] sm:$0xf]
    %v4366 = vld [vmem:[%s65 + $0x1c] sm:$0xf]
    %v4367 = vld [vmem:[%s65 + $0x20] sm:$0xf]
    %v4368 = vld [vmem:[%s65 + $0x24] sm:$0xf]
    %v4369 = vld [vmem:[%s65 + $0x28] sm:$0xf]
    %v4370 = vld [vmem:[%s65 + $0x2c] sm:$0xf]
    %v4371 = vld [vmem:[%s65 + $0x30] sm:$0xf]
    %v4372 = vld [vmem:[%s65 + $0x34] sm:$0xf]
    %v4373 = vld [vmem:[%s65 + $0x38] sm:$0xf]
    %v4374 = vld [vmem:[%s65 + $0x3c] sm:$0xf]
    %v4375 = vld [vmem:[%s67] sm:$0x1]
    %v4376 = vpack.c.bf16 %v4357, %v4357
    %v4378 = vsel %vm1949, %v4376, 0
    %4380 = vmatprep.subr.bf16.mxu0 0
    %4381 = vmatpush1.bf16.msra.mxu0 %v4378
    %4382 = vmatprep.subr.bf16.mxu0 0
    %4383 = vmatpush1.bf16.msra.mxu0 0
    %4384 = vmatprep.subr.bf16.mxu0 0
    %4385 = vmatpush1.bf16.msra.mxu0 0
    %4386 = vmatprep.subr.bf16.mxu0 0
    %4387 = vmatpush1.bf16.msra.mxu0 0
    %4388 = vmatprep.subr.bf16.mxu0 0
    %4389 = vmatpush1.bf16.msra.mxu0 0
    %4390 = vmatprep.subr.bf16.mxu0 0
    %4391 = vmatpush1.bf16.msra.mxu0 0
    %4392 = vmatprep.subr.bf16.mxu0 0
    %4393 = vmatpush1.bf16.msra.mxu0 0
    %4394 = vmatprep.subr.bf16.mxu0 0
    %4395 = vmatpush1.bf16.msra.mxu0 0
    %4396 = vmatprep.subr.bf16.mxu0 0
    %4397 = vmatpush1.bf16.msra.mxu0 0
    %4398 = vmatprep.subr.bf16.mxu0 0
    %4399 = vmatpush1.bf16.msra.mxu0 0
    %4400 = vmatprep.subr.bf16.mxu0 0
    %4401 = vmatpush1.bf16.msra.mxu0 0
    %4402 = vmatprep.subr.bf16.mxu0 0
    %4403 = vmatpush1.bf16.msra.mxu0 0
    %4404 = vmatprep.subr.bf16.mxu0 0
    %4405 = vmatpush1.bf16.msra.mxu0 0
    %4406 = vmatprep.subr.bf16.mxu0 0
    %4407 = vmatpush1.bf16.msra.mxu0 0
    %4408 = vmatprep.subr.bf16.mxu0 0
    %4409 = vmatpush1.bf16.msra.mxu0 0
    %4410 = vmatprep.subr.bf16.mxu0 0
    %4411 = vmatpush1.bf16.msra.mxu0 0
    %4412 = vmatprep.mubr.bf16.mxu0 0
    %4413 = vmatmul.mubr.bf16.gmra.mrb[0].mxu0 %v3967
    %v4414 = vpop.f32.mrb[0].mxu0
    %v4415 = vadd.f32 0.0, %v4414
    %v4416 = vpop.f32.mrb[0].mxu0
    %v4417 = vpop.f32.mrb[0].mxu0
    %v4418 = vpop.f32.mrb[0].mxu0
    %4419 = vdwg.mxu0
    %v4420 = vpack.c.bf16 %v4358, %v4358
    %v4422 = vsel %vm1949, %v4420, 0
    %4424 = vmatprep.subr.bf16.mxu0 0
    %4425 = vmatpush1.bf16.msra.mxu0 %v4422
    %4426 = vmatprep.subr.bf16.mxu0 0
    %4427 = vmatpush1.bf16.msra.mxu0 0
    %4428 = vmatprep.subr.bf16.mxu0 0
    %4429 = vmatpush1.bf16.msra.mxu0 0
    %4430 = vmatprep.subr.bf16.mxu0 0
    %4431 = vmatpush1.bf16.msra.mxu0 0
    %4432 = vmatprep.subr.bf16.mxu0 0
    %4433 = vmatpush1.bf16.msra.mxu0 0
    %4434 = vmatprep.subr.bf16.mxu0 0
    %4435 = vmatpush1.bf16.msra.mxu0 0
    %4436 = vmatprep.subr.bf16.mxu0 0
    %4437 = vmatpush1.bf16.msra.mxu0 0
    %4438 = vmatprep.subr.bf16.mxu0 0
    %4439 = vmatpush1.bf16.msra.mxu0 0
    %4440 = vmatprep.subr.bf16.mxu0 0
    %4441 = vmatpush1.bf16.msra.mxu0 0
    %4442 = vmatprep.subr.bf16.mxu0 0
    %4443 = vmatpush1.bf16.msra.mxu0 0
    %4444 = vmatprep.subr.bf16.mxu0 0
    %4445 = vmatpush1.bf16.msra.mxu0 0
    %4446 = vmatprep.subr.bf16.mxu0 0
    %4447 = vmatpush1.bf16.msra.mxu0 0
    %4448 = vmatprep.subr.bf16.mxu0 0
    %4449 = vmatpush1.bf16.msra.mxu0 0
    %4450 = vmatprep.subr.bf16.mxu0 0
    %4451 = vmatpush1.bf16.msra.mxu0 0
    %4452 = vmatprep.subr.bf16.mxu0 0
    %4453 = vmatpush1.bf16.msra.mxu0 0
    %4454 = vmatprep.subr.bf16.mxu0 0
    %4455 = vmatpush1.bf16.msra.mxu0 0
    %4456 = vmatprep.mubr.bf16.mxu0 0
    %4457 = vmatmul.mubr.bf16.gmra.mrb[0].mxu0 %v4019
    %v4458 = vpop.f32.mrb[0].mxu0
    %v4459 = vadd.f32 0.0, %v4458
    %v4460 = vpop.f32.mrb[0].mxu0
    %v4461 = vpop.f32.mrb[0].mxu0
    %v4462 = vpop.f32.mrb[0].mxu0
    %4463 = vdwg.mxu0
    %v4464 = vpack.c.bf16 %v4459, %v4415
    %v4465 = vpack.c.bf16 %v4358, %v4357
    %v4474 = vunpack.c.l.b16 %v4367
    %v4475 = vunpack.c.l.b16 %v4368
    %v4476 = vunpack.c.l.b16 %v4369
    %v4477 = vunpack.c.l.b16 %v4370
    %v4478 = vunpack.c.l.b16 %v4371
    %v4479 = vunpack.c.l.b16 %v4372
    %v4480 = vunpack.c.l.b16 %v4373
    %v4481 = vunpack.c.l.b16 %v4374
    %v4482 = vpack.c.b16 %v4475, %v4474
    %v4483 = vpack.c.b16 %v4477, %v4476
    %v4484 = vpack.c.b16 %v4479, %v4478
    %v4485 = vpack.c.b16 %v4481, %v4480
    %v4491 = vsel %vm839, %v4465, 0
    %4493 = vmatprep.subr.bf16.mxu0 0
    %4494 = vmatpush1.bf16.msra.mxu0 %v4482
    %4495 = vmatprep.subr.bf16.mxu0 0
    %4496 = vmatpush1.bf16.msra.mxu0 %v4483
    %4497 = vmatprep.subr.bf16.mxu0 0
    %4498 = vmatpush1.bf16.msra.mxu0 %v4484
    %4499 = vmatprep.subr.bf16.mxu0 0
    %4500 = vmatpush1.bf16.msra.mxu0 %v4485
    %4501 = vmatprep.subr.bf16.mxu0 0
    %4502 = vmatpush1.bf16.msra.mxu0 0
    %4503 = vmatprep.subr.bf16.mxu0 0
    %4504 = vmatpush1.bf16.msra.mxu0 0
    %4505 = vmatprep.subr.bf16.mxu0 0
    %4506 = vmatpush1.bf16.msra.mxu0 0
    %4507 = vmatprep.subr.bf16.mxu0 0
    %4508 = vmatpush1.bf16.msra.mxu0 0
    %4509 = vmatprep.subr.bf16.mxu0 0
    %4510 = vmatpush1.bf16.msra.mxu0 0
    %4511 = vmatprep.subr.bf16.mxu0 0
    %4512 = vmatpush1.bf16.msra.mxu0 0
    %4513 = vmatprep.subr.bf16.mxu0 0
    %4514 = vmatpush1.bf16.msra.mxu0 0
    %4515 = vmatprep.subr.bf16.mxu0 0
    %4516 = vmatpush1.bf16.msra.mxu0 0
    %4517 = vmatprep.subr.bf16.mxu0 0
    %4518 = vmatpush1.bf16.msra.mxu0 0
    %4519 = vmatprep.subr.bf16.mxu0 0
    %4520 = vmatpush1.bf16.msra.mxu0 0
    %4521 = vmatprep.subr.bf16.mxu0 0
    %4522 = vmatpush1.bf16.msra.mxu0 0
    %4523 = vmatprep.subr.bf16.mxu0 0
    %4524 = vmatpush1.bf16.msra.mxu0 0
    %4525 = vmatprep.mubr.bf16.mxu0 0
    %4526 = vmatmul.mubr.bf16.gmra.mrb[0].mxu0 %v4491
    %v4527 = vpop.f32.mrb[0].mxu0
    %v4528 = vadd.f32 0.0, %v4527
    %v4529 = vpop.f32.mrb[0].mxu0
    %v4530 = vpop.f32.mrb[0].mxu0
    %v4531 = vadd.f32 0.0, %v4530
    %v4532 = vpop.f32.mrb[0].mxu0
    %4533 = vdwg.mxu0
    %v4542 = vunpack.c.l.b16 %v4359
    %v4543 = vunpack.c.l.b16 %v4360
    %v4544 = vunpack.c.l.b16 %v4361
    %v4545 = vunpack.c.l.b16 %v4362
    %v4546 = vunpack.c.l.b16 %v4363
    %v4547 = vunpack.c.l.b16 %v4364
    %v4548 = vunpack.c.l.b16 %v4365
    %v4549 = vunpack.c.l.b16 %v4366
    %v4550 = vpack.c.b16 %v4543, %v4542
    %v4551 = vpack.c.b16 %v4545, %v4544
    %v4552 = vpack.c.b16 %v4547, %v4546
    %v4553 = vpack.c.b16 %v4549, %v4548
    %v4559 = vsel %vm839, %v4464, 0
    %4561 = vmatprep.subr.bf16.mxu0 0
    %4562 = vmatpush1.bf16.msra.mxu0 %v4550
    %4563 = vmatprep.subr.bf16.mxu0 0
    %4564 = vmatpush1.bf16.msra.mxu0 %v4551
    %4565 = vmatprep.subr.bf16.mxu0 0
    %4566 = vmatpush1.bf16.msra.mxu0 %v4552
    %4567 = vmatprep.subr.bf16.mxu0 0
    %4568 = vmatpush1.bf16.msra.mxu0 %v4553
    %4569 = vmatprep.subr.bf16.mxu0 0
    %4570 = vmatpush1.bf16.msra.mxu0 0
    %4571 = vmatprep.subr.bf16.mxu0 0
    %4572 = vmatpush1.bf16.msra.mxu0 0
    %4573 = vmatprep.subr.bf16.mxu0 0
    %4574 = vmatpush1.bf16.msra.mxu0 0
    %4575 = vmatprep.subr.bf16.mxu0 0
    %4576 = vmatpush1.bf16.msra.mxu0 0
    %4577 = vmatprep.subr.bf16.mxu0 0
    %4578 = vmatpush1.bf16.msra.mxu0 0
    %4579 = vmatprep.subr.bf16.mxu0 0
    %4580 = vmatpush1.bf16.msra.mxu0 0
    %4581 = vmatprep.subr.bf16.mxu0 0
    %4582 = vmatpush1.bf16.msra.mxu0 0
    %4583 = vmatprep.subr.bf16.mxu0 0
    %4584 = vmatpush1.bf16.msra.mxu0 0
    %4585 = vmatprep.subr.bf16.mxu0 0
    %4586 = vmatpush1.bf16.msra.mxu0 0
    %4587 = vmatprep.subr.bf16.mxu0 0
    %4588 = vmatpush1.bf16.msra.mxu0 0
    %4589 = vmatprep.subr.bf16.mxu0 0
    %4590 = vmatpush1.bf16.msra.mxu0 0
    %4591 = vmatprep.subr.bf16.mxu0 0
    %4592 = vmatpush1.bf16.msra.mxu0 0
    %4593 = vmatprep.mubr.bf16.mxu0 0
    %4594 = vmatmul.mubr.bf16.gmra.mrb[0].mxu0 %v4559
    %v4595 = vpop.f32.mrb[0].mxu0
    %v4596 = vadd.f32 %v4528, %v4595
    %v4597 = vpop.f32.mrb[0].mxu0
    %v4598 = vpop.f32.mrb[0].mxu0
    %v4599 = vadd.f32 %v4531, %v4598
    %v4600 = vpop.f32.mrb[0].mxu0
    %4601 = vdwg.mxu0
    %v4603 = vlaneseq
    %v4604 = vshrl.u32 %v4603, 7
    %v4605 = vsub.s32 0, %v4604
    %v4606 = vrot.slane %v4375, %v4605
    %v4608 = vadd.f32 %v4596, %v4606
    %v4609 = vadd.f32 %v4599, %v4606
    %v4610 = vmax.f32 %v4608, 0.0
    %v4611 = vmax.f32 %v4609, 0.0
    %v4612 = vsel %vm839, %v4610, 0.0
    %v4613 = vsel %vm839, %v4611, 0.0
    %v4614 = vadd.f32 %v4612, %v4613
    %v4615 = vrot.slane %v4614, 4
    %v4616 = vadd.f32 %v4614, %v4615
    %v4617 = vrot.slane %v4616, 2
    %v4618 = vadd.f32 %v4616, %v4617
    %v4619 = vrot.slane %v4618, 1
    %v4620 = vadd.f32 %v4618, %v4619
    %v4621 = vmul.f32 %v4620, 0.0625
    %v4622 = vsub.f32 %v4610, %v4621
    %v4623 = vsub.f32 %v4611, %v4621
    %v4624 = vmul.f32 %v4622, %v4622
    %v4625 = vmul.f32 %v4623, %v4623
    %v4626 = vsel %vm839, %v4624, 0.0
    %v4627 = vsel %vm839, %v4625, 0.0
    %v4628 = vadd.f32 %v4626, %v4627
    %v4629 = vrot.slane %v4628, 4
    %v4630 = vadd.f32 %v4628, %v4629
    %v4631 = vrot.slane %v4630, 2
    %v4632 = vadd.f32 %v4630, %v4631
    %v4633 = vrot.slane %v4632, 1
    %v4634 = vadd.f32 %v4632, %v4633
    %v4635 = vmul.f32 %v4634, 0.0625
    %v4636 = vadd.f32 %v4635, 1e-05
    %v4637 = vrsqrt.pop %v4636
    %v4638 = vld [vmem:[%s69] sm:$0x1]
    %v4639 = vmul.f32 %v4637, %v4638
    %v4640 = vld [vmem:[%s71] sm:$0x1]
    %v4641 = vmul.f32 %v4621, %v4639
    %v4642 = vsub.f32 %v4640, %v4641
    %v4643 = vlaneseq
    %v4644 = vshrl.u32 %v4643, 7
    %v4645 = vsub.s32 0, %v4644
    %v4646 = vrot.slane %v4639, %v4645
    %v4647 = vmul.f32 %v4610, %v4646
    %v4648 = vmul.f32 %v4611, %v4646
    %v4650 = vlaneseq
    %v4651 = vshrl.u32 %v4650, 7
    %v4652 = vsub.s32 0, %v4651
    %v4653 = vrot.slane %v4642, %v4652
    %v4655 = vadd.f32 %v4647, %v4653
    %v4656 = vadd.f32 %v4648, %v4653
    %v4657 = vld [vmem:[%s73] sm:$0xf]
    %v4658 = vld [vmem:[%s73 + $0x4] sm:$0xf]
    %v4659 = vld [vmem:[%s73 + $0x8] sm:$0xf]
    %v4660 = vld [vmem:[%s73 + $0xc] sm:$0xf]
    %v4661 = vld [vmem:[%s73 + $0x10] sm:$0xf]
    %v4662 = vld [vmem:[%s73 + $0x14] sm:$0xf]
    %v4663 = vld [vmem:[%s73 + $0x18] sm:$0xf]
    %v4664 = vld [vmem:[%s73 + $0x1c] sm:$0xf]
    %v4665 = vld [vmem:[%s73 + $0x20] sm:$0xf]
    %v4666 = vld [vmem:[%s73 + $0x24] sm:$0xf]
    %v4667 = vld [vmem:[%s73 + $0x28] sm:$0xf]
    %v4668 = vld [vmem:[%s73 + $0x2c] sm:$0xf]
    %v4669 = vld [vmem:[%s73 + $0x30] sm:$0xf]
    %v4670 = vld [vmem:[%s73 + $0x34] sm:$0xf]
    %v4671 = vld [vmem:[%s73 + $0x38] sm:$0xf]
    %v4672 = vld [vmem:[%s73 + $0x3c] sm:$0xf]
    %v4673 = vld [vmem:[%s75] sm:$0x1]
    %v4674 = vpack.c.bf16 %v4655, %v4655
    %v4676 = vsel %vm1949, %v4674, 0
    %4678 = vmatprep.subr.bf16.mxu0 0
    %4679 = vmatpush1.bf16.msra.mxu0 %v4676
    %4680 = vmatprep.subr.bf16.mxu0 0
    %4681 = vmatpush1.bf16.msra.mxu0 0
    %4682 = vmatprep.subr.bf16.mxu0 0
    %4683 = vmatpush1.bf16.msra.mxu0 0
    %4684 = vmatprep.subr.bf16.mxu0 0
    %4685 = vmatpush1.bf16.msra.mxu0 0
    %4686 = vmatprep.subr.bf16.mxu0 0
    %4687 = vmatpush1.bf16.msra.mxu0 0
    %4688 = vmatprep.subr.bf16.mxu0 0
    %4689 = vmatpush1.bf16.msra.mxu0 0
    %4690 = vmatprep.subr.bf16.mxu0 0
    %4691 = vmatpush1.bf16.msra.mxu0 0
    %4692 = vmatprep.subr.bf16.mxu0 0
    %4693 = vmatpush1.bf16.msra.mxu0 0
    %4694 = vmatprep.subr.bf16.mxu0 0
    %4695 = vmatpush1.bf16.msra.mxu0 0
    %4696 = vmatprep.subr.bf16.mxu0 0
    %4697 = vmatpush1.bf16.msra.mxu0 0
    %4698 = vmatprep.subr.bf16.mxu0 0
    %4699 = vmatpush1.bf16.msra.mxu0 0
    %4700 = vmatprep.subr.bf16.mxu0 0
    %4701 = vmatpush1.bf16.msra.mxu0 0
    %4702 = vmatprep.subr.bf16.mxu0 0
    %4703 = vmatpush1.bf16.msra.mxu0 0
    %4704 = vmatprep.subr.bf16.mxu0 0
    %4705 = vmatpush1.bf16.msra.mxu0 0
    %4706 = vmatprep.subr.bf16.mxu0 0
    %4707 = vmatpush1.bf16.msra.mxu0 0
    %4708 = vmatprep.subr.bf16.mxu0 0
    %4709 = vmatpush1.bf16.msra.mxu0 0
    %4710 = vmatprep.mubr.bf16.mxu0 0
    %4711 = vmatmul.mubr.bf16.gmra.mrb[0].mxu0 %v3967
    %v4712 = vpop.f32.mrb[0].mxu0
    %v4713 = vadd.f32 0.0, %v4712
    %v4714 = vpop.f32.mrb[0].mxu0
    %v4715 = vpop.f32.mrb[0].mxu0
    %v4716 = vpop.f32.mrb[0].mxu0
    %4717 = vdwg.mxu0
    %v4718 = vpack.c.bf16 %v4656, %v4656
    %v4720 = vsel %vm1949, %v4718, 0
    %4722 = vmatprep.subr.bf16.mxu0 0
    %4723 = vmatpush1.bf16.msra.mxu0 %v4720
    %4724 = vmatprep.subr.bf16.mxu0 0
    %4725 = vmatpush1.bf16.msra.mxu0 0
    %4726 = vmatprep.subr.bf16.mxu0 0
    %4727 = vmatpush1.bf16.msra.mxu0 0
    %4728 = vmatprep.subr.bf16.mxu0 0
    %4729 = vmatpush1.bf16.msra.mxu0 0
    %4730 = vmatprep.subr.bf16.mxu0 0
    %4731 = vmatpush1.bf16.msra.mxu0 0
    %4732 = vmatprep.subr.bf16.mxu0 0
    %4733 = vmatpush1.bf16.msra.mxu0 0
    %4734 = vmatprep.subr.bf16.mxu0 0
    %4735 = vmatpush1.bf16.msra.mxu0 0
    %4736 = vmatprep.subr.bf16.mxu0 0
    %4737 = vmatpush1.bf16.msra.mxu0 0
    %4738 = vmatprep.subr.bf16.mxu0 0
    %4739 = vmatpush1.bf16.msra.mxu0 0
    %4740 = vmatprep.subr.bf16.mxu0 0
    %4741 = vmatpush1.bf16.msra.mxu0 0
    %4742 = vmatprep.subr.bf16.mxu0 0
    %4743 = vmatpush1.bf16.msra.mxu0 0
    %4744 = vmatprep.subr.bf16.mxu0 0
    %4745 = vmatpush1.bf16.msra.mxu0 0
    %4746 = vmatprep.subr.bf16.mxu0 0
    %4747 = vmatpush1.bf16.msra.mxu0 0
    %4748 = vmatprep.subr.bf16.mxu0 0
    %4749 = vmatpush1.bf16.msra.mxu0 0
    %4750 = vmatprep.subr.bf16.mxu0 0
    %4751 = vmatpush1.bf16.msra.mxu0 0
    %4752 = vmatprep.subr.bf16.mxu0 0
    %4753 = vmatpush1.bf16.msra.mxu0 0
    %4754 = vmatprep.mubr.bf16.mxu0 0
    %4755 = vmatmul.mubr.bf16.gmra.mrb[0].mxu0 %v4019
    %v4756 = vpop.f32.mrb[0].mxu0
    %v4757 = vadd.f32 0.0, %v4756
    %v4758 = vpop.f32.mrb[0].mxu0
    %v4759 = vpop.f32.mrb[0].mxu0
    %v4760 = vpop.f32.mrb[0].mxu0
    %4761 = vdwg.mxu0
    %v4762 = vpack.c.bf16 %v4757, %v4713
    %v4763 = vpack.c.bf16 %v4656, %v4655
    %v4772 = vunpack.c.l.b16 %v4665
    %v4773 = vunpack.c.l.b16 %v4666
    %v4774 = vunpack.c.l.b16 %v4667
    %v4775 = vunpack.c.l.b16 %v4668
    %v4776 = vunpack.c.l.b16 %v4669
    %v4777 = vunpack.c.l.b16 %v4670
    %v4778 = vunpack.c.l.b16 %v4671
    %v4779 = vunpack.c.l.b16 %v4672
    %v4780 = vpack.c.b16 %v4773, %v4772
    %v4781 = vpack.c.b16 %v4775, %v4774
    %v4782 = vpack.c.b16 %v4777, %v4776
    %v4783 = vpack.c.b16 %v4779, %v4778
    %v4789 = vsel %vm839, %v4763, 0
    %4791 = vmatprep.subr.bf16.mxu0 0
    %4792 = vmatpush1.bf16.msra.mxu0 %v4780
    %4793 = vmatprep.subr.bf16.mxu0 0
    %4794 = vmatpush1.bf16.msra.mxu0 %v4781
    %4795 = vmatprep.subr.bf16.mxu0 0
    %4796 = vmatpush1.bf16.msra.mxu0 %v4782
    %4797 = vmatprep.subr.bf16.mxu0 0
    %4798 = vmatpush1.bf16.msra.mxu0 %v4783
    %4799 = vmatprep.subr.bf16.mxu0 0
    %4800 = vmatpush1.bf16.msra.mxu0 0
    %4801 = vmatprep.subr.bf16.mxu0 0
    %4802 = vmatpush1.bf16.msra.mxu0 0
    %4803 = vmatprep.subr.bf16.mxu0 0
    %4804 = vmatpush1.bf16.msra.mxu0 0
    %4805 = vmatprep.subr.bf16.mxu0 0
    %4806 = vmatpush1.bf16.msra.mxu0 0
    %4807 = vmatprep.subr.bf16.mxu0 0
    %4808 = vmatpush1.bf16.msra.mxu0 0
    %4809 = vmatprep.subr.bf16.mxu0 0
    %4810 = vmatpush1.bf16.msra.mxu0 0
    %4811 = vmatprep.subr.bf16.mxu0 0
    %4812 = vmatpush1.bf16.msra.mxu0 0
    %4813 = vmatprep.subr.bf16.mxu0 0
    %4814 = vmatpush1.bf16.msra.mxu0 0
    %4815 = vmatprep.subr.bf16.mxu0 0
    %4816 = vmatpush1.bf16.msra.mxu0 0
    %4817 = vmatprep.subr.bf16.mxu0 0
    %4818 = vmatpush1.bf16.msra.mxu0 0
    %4819 = vmatprep.subr.bf16.mxu0 0
    %4820 = vmatpush1.bf16.msra.mxu0 0
    %4821 = vmatprep.subr.bf16.mxu0 0
    %4822 = vmatpush1.bf16.msra.mxu0 0
    %4823 = vmatprep.mubr.bf16.mxu0 0
    %4824 = vmatmul.mubr.bf16.gmra.mrb[0].mxu0 %v4789
    %v4825 = vpop.f32.mrb[0].mxu0
    %v4826 = vadd.f32 0.0, %v4825
    %v4827 = vpop.f32.mrb[0].mxu0
    %v4828 = vpop.f32.mrb[0].mxu0
    %v4829 = vadd.f32 0.0, %v4828
    %v4830 = vpop.f32.mrb[0].mxu0
    %4831 = vdwg.mxu0
    %v4840 = vunpack.c.l.b16 %v4657
    %v4841 = vunpack.c.l.b16 %v4658
    %v4842 = vunpack.c.l.b16 %v4659
    %v4843 = vunpack.c.l.b16 %v4660
    %v4844 = vunpack.c.l.b16 %v4661
    %v4845 = vunpack.c.l.b16 %v4662
    %v4846 = vunpack.c.l.b16 %v4663
    %v4847 = vunpack.c.l.b16 %v4664
    %v4848 = vpack.c.b16 %v4841, %v4840
    %v4849 = vpack.c.b16 %v4843, %v4842
    %v4850 = vpack.c.b16 %v4845, %v4844
    %v4851 = vpack.c.b16 %v4847, %v4846
    %v4857 = vsel %vm839, %v4762, 0
    %4859 = vmatprep.subr.bf16.mxu0 0
    %4860 = vmatpush1.bf16.msra.mxu0 %v4848
    %4861 = vmatprep.subr.bf16.mxu0 0
    %4862 = vmatpush1.bf16.msra.mxu0 %v4849
    %4863 = vmatprep.subr.bf16.mxu0 0
    %4864 = vmatpush1.bf16.msra.mxu0 %v4850
    %4865 = vmatprep.subr.bf16.mxu0 0
    %4866 = vmatpush1.bf16.msra.mxu0 %v4851
    %4867 = vmatprep.subr.bf16.mxu0 0
    %4868 = vmatpush1.bf16.msra.mxu0 0
    %4869 = vmatprep.subr.bf16.mxu0 0
    %4870 = vmatpush1.bf16.msra.mxu0 0
    %4871 = vmatprep.subr.bf16.mxu0 0
    %4872 = vmatpush1.bf16.msra.mxu0 0
    %4873 = vmatprep.subr.bf16.mxu0 0
    %4874 = vmatpush1.bf16.msra.mxu0 0
    %4875 = vmatprep.subr.bf16.mxu0 0
    %4876 = vmatpush1.bf16.msra.mxu0 0
    %4877 = vmatprep.subr.bf16.mxu0 0
    %4878 = vmatpush1.bf16.msra.mxu0 0
    %4879 = vmatprep.subr.bf16.mxu0 0
    %4880 = vmatpush1.bf16.msra.mxu0 0
    %4881 = vmatprep.subr.bf16.mxu0 0
    %4882 = vmatpush1.bf16.msra.mxu0 0
    %4883 = vmatprep.subr.bf16.mxu0 0
    %4884 = vmatpush1.bf16.msra.mxu0 0
    %4885 = vmatprep.subr.bf16.mxu0 0
    %4886 = vmatpush1.bf16.msra.mxu0 0
    %4887 = vmatprep.subr.bf16.mxu0 0
    %4888 = vmatpush1.bf16.msra.mxu0 0
    %4889 = vmatprep.subr.bf16.mxu0 0
    %4890 = vmatpush1.bf16.msra.mxu0 0
    %4891 = vmatprep.mubr.bf16.mxu0 0
    %4892 = vmatmul.mubr.bf16.gmra.mrb[0].mxu0 %v4857
    %v4893 = vpop.f32.mrb[0].mxu0
    %v4894 = vadd.f32 %v4826, %v4893
    %v4895 = vpop.f32.mrb[0].mxu0
    %v4896 = vpop.f32.mrb[0].mxu0
    %v4897 = vadd.f32 %v4829, %v4896
    %v4898 = vpop.f32.mrb[0].mxu0
    %4899 = vdwg.mxu0
    %v4901 = vlaneseq
    %v4902 = vshrl.u32 %v4901, 7
    %v4903 = vsub.s32 0, %v4902
    %v4904 = vrot.slane %v4673, %v4903
    %v4906 = vadd.f32 %v4894, %v4904
    %v4907 = vadd.f32 %v4897, %v4904
    %v4908 = vmax.f32 %v4906, 0.0
    %v4909 = vmax.f32 %v4907, 0.0
    %vm4910 = vcmask 15360
    %v4911 = vsel %vm4910, %v4908, 0.0
    %v4912 = vsel %vm4910, %v4909, 0.0
    %v4913 = vadd.f32 %v4911, %v4912
    %v4914 = vrot.slane %v4913, 4
    %v4915 = vadd.f32 %v4913, %v4914
    %v4916 = vrot.slane %v4915, 2
    %v4917 = vadd.f32 %v4915, %v4916
    %v4918 = vrot.slane %v4917, 1
    %v4919 = vadd.f32 %v4917, %v4918
    %v4920 = vmul.f32 %v4919, 0.0625
    %v4921 = vsub.f32 %v4908, %v4920
    %v4922 = vsub.f32 %v4909, %v4920
    %v4923 = vmul.f32 %v4921, %v4921
    %v4924 = vmul.f32 %v4922, %v4922
    %v4925 = vsel %vm4910, %v4923, 0.0
    %v4926 = vsel %vm4910, %v4924, 0.0
    %v4927 = vadd.f32 %v4925, %v4926
    %v4928 = vrot.slane %v4927, 4
    %v4929 = vadd.f32 %v4927, %v4928
    %v4930 = vrot.slane %v4929, 2
    %v4931 = vadd.f32 %v4929, %v4930
    %v4932 = vrot.slane %v4931, 1
    %v4933 = vadd.f32 %v4931, %v4932
    %v4934 = vmul.f32 %v4933, 0.0625
    %v4935 = vadd.f32 %v4934, 1e-05
    %v4936 = vrsqrt.pop %v4935
    %v4937 = vld [vmem:[%s77] sm:$0x1]
    %v4938 = vmul.f32 %v4936, %v4937
    %v4939 = vld [vmem:[%s79] sm:$0x1]
    %v4940 = vmul.f32 %v4920, %v4938
    %v4941 = vsub.f32 %v4939, %v4940
    %v4942 = vlaneseq
    %v4943 = vshrl.u32 %v4942, 7
    %v4944 = vsub.s32 0, %v4943
    %v4945 = vrot.slane %v4938, %v4944
    %v4946 = vmul.f32 %v4908, %v4945
    %v4947 = vmul.f32 %v4909, %v4945
    %v4949 = vlaneseq
    %v4950 = vshrl.u32 %v4949, 7
    %v4951 = vsub.s32 0, %v4950
    %v4952 = vrot.slane %v4941, %v4951
    %v4954 = vadd.f32 %v4946, %v4952
    %v4955 = vadd.f32 %v4947, %v4952
    %4957 = vrot.lane.b32.xlu0 %v4655, 64
    %v4958 = vpop.permute.xlu0 %4957
    %v4960 = vsel %vm839, %v4357, %v4958
    %4962 = vrot.lane.b32.xlu0 %v4656, 64
    %v4963 = vpop.permute.xlu0 %4962
    %v4965 = vsel %vm839, %v4358, %v4963
    %v4966 = vld [vmem:[%s81] sm:$0xf]
    %v4967 = vld [vmem:[%s81 + $0x4] sm:$0xf]
    %v4968 = vld [vmem:[%s81 + $0x8] sm:$0xf]
    %v4969 = vld [vmem:[%s81 + $0xc] sm:$0xf]
    %v4970 = vld [vmem:[%s81 + $0x10] sm:$0xf]
    %v4971 = vld [vmem:[%s81 + $0x14] sm:$0xf]
    %v4972 = vld [vmem:[%s81 + $0x18] sm:$0xf]
    %v4973 = vld [vmem:[%s81 + $0x1c] sm:$0xf]
    %v4974 = vld [vmem:[%s81 + $0x20] sm:$0xf]
    %v4975 = vld [vmem:[%s81 + $0x24] sm:$0xf]
    %v4976 = vld [vmem:[%s81 + $0x28] sm:$0xf]
    %v4977 = vld [vmem:[%s81 + $0x2c] sm:$0xf]
    %v4978 = vld [vmem:[%s81 + $0x30] sm:$0xf]
    %v4979 = vld [vmem:[%s81 + $0x34] sm:$0xf]
    %v4980 = vld [vmem:[%s81 + $0x38] sm:$0xf]
    %v4981 = vld [vmem:[%s81 + $0x3c] sm:$0xf]
    %v4982 = vld [vmem:[%s81 + $0x40] sm:$0x1]
    %v4983 = vld [vmem:[%s83] sm:$0x1]
    %v4984 = vpack.c.bf16 %v4965, %v4960
    %v4985 = vpack.c.bf16 %v4955, %v4954
    %v4987 = vlaneseq
    %v4988 = vshrl.u32 %v4987, 7
    %v4989 = vsub.s32 0, %v4988
    %v4990 = vrot.slane %v4983, %v4989
    %v5009 = vunpack.c.l.b16 %v4966
    %v5010 = vunpack.c.l.b16 %v4967
    %v5011 = vunpack.c.l.b16 %v4968
    %v5012 = vunpack.c.l.b16 %v4969
    %v5013 = vunpack.c.l.b16 %v4970
    %v5014 = vunpack.c.l.b16 %v4971
    %v5015 = vunpack.c.l.b16 %v4972
    %v5016 = vunpack.c.l.b16 %v4973
    %v5017 = vunpack.c.l.b16 %v4974
    %v5018 = vunpack.c.l.b16 %v4975
    %v5019 = vunpack.c.l.b16 %v4976
    %v5020 = vunpack.c.l.b16 %v4977
    %v5021 = vunpack.c.l.b16 %v4978
    %v5022 = vunpack.c.l.b16 %v4979
    %v5023 = vunpack.c.l.b16 %v4980
    %v5024 = vunpack.c.l.b16 %v4981
    %v5025 = vunpack.c.l.b16 %v4982
    %v5026 = vpack.c.b16 %v5010, %v5009
    %v5027 = vpack.c.b16 %v5012, %v5011
    %v5028 = vpack.c.b16 %v5014, %v5013
    %v5029 = vpack.c.b16 %v5016, %v5015
    %v5030 = vpack.c.b16 %v5018, %v5017
    %v5031 = vpack.c.b16 %v5020, %v5019
    %v5032 = vpack.c.b16 %v5022, %v5021
    %v5033 = vpack.c.b16 %v5024, %v5023
    %v5034 = vpack.c.b16 %v5025, %v5025
    %v5044 = vsel %vm4910, %v4985, 0
    %vm5046 = vcmask 1040384
    %v5048 = vsel %vm5046, %v5034, 0
    %5050 = vmatprep.subr.bf16.mxu0 0
    %5051 = vmatpush1.bf16.msra.mxu0 %v5026
    %5052 = vmatprep.subr.bf16.mxu0 0
    %5053 = vmatpush1.bf16.msra.mxu0 %v5027
    %5054 = vmatprep.subr.bf16.mxu0 0
    %5055 = vmatpush1.bf16.msra.mxu0 %v5028
    %5056 = vmatprep.subr.bf16.mxu0 0
    %5057 = vmatpush1.bf16.msra.mxu0 %v5029
    %5058 = vmatprep.subr.bf16.mxu0 0
    %5059 = vmatpush1.bf16.msra.mxu0 %v5030
    %5060 = vmatprep.subr.bf16.mxu0 0
    %5061 = vmatpush1.bf16.msra.mxu0 %v5031
    %5062 = vmatprep.subr.bf16.mxu0 0
    %5063 = vmatpush1.bf16.msra.mxu0 %v5032
    %5064 = vmatprep.subr.bf16.mxu0 0
    %5065 = vmatpush1.bf16.msra.mxu0 %v5033
    %5066 = vmatprep.subr.bf16.mxu0 0
    %5067 = vmatpush1.bf16.msra.mxu0 %v5048
    %5068 = vmatprep.subr.bf16.mxu0 0
    %5069 = vmatpush1.bf16.msra.mxu0 0
    %5070 = vmatprep.subr.bf16.mxu0 0
    %5071 = vmatpush1.bf16.msra.mxu0 0
    %5072 = vmatprep.subr.bf16.mxu0 0
    %5073 = vmatpush1.bf16.msra.mxu0 0
    %5074 = vmatprep.subr.bf16.mxu0 0
    %5075 = vmatpush1.bf16.msra.mxu0 0
    %5076 = vmatprep.subr.bf16.mxu0 0
    %5077 = vmatpush1.bf16.msra.mxu0 0
    %5078 = vmatprep.subr.bf16.mxu0 0
    %5079 = vmatpush1.bf16.msra.mxu0 0
    %5080 = vmatprep.subr.bf16.mxu0 0
    %5081 = vmatpush1.bf16.msra.mxu0 0
    %5082 = vmatprep.mubr.bf16.mxu0 %v5044
    %5083 = vmatmul.mubr.bf16.gmra.mrb[0].mxu0 %v4984
    %v5084 = vpop.f32.mrb[0].mxu0
    %v5085 = vadd.f32 %v4990, %v5084
    %v5086 = vpop.f32.mrb[0].mxu0
    %v5087 = vpop.f32.mrb[0].mxu0
    %v5088 = vadd.f32 %v4990, %v5087
    %v5089 = vpop.f32.mrb[0].mxu0
    %5090 = vdwg.mxu0
    %v5091 = vmax.f32 %v5085, 0.0
    %v5092 = vmax.f32 %v5088, 0.0
    %v5093 = vld [vmem:[%s85] sm:$0xf]
    %v5094 = vld [vmem:[%s85 + $0x4] sm:$0xf]
    %v5095 = vld [vmem:[%s85 + $0x8] sm:$0xf]
    %v5096 = vld [vmem:[%s85 + $0xc] sm:$0xf]
    %v5097 = vld [vmem:[%s85 + $0x10] sm:$0xf]
    %v5098 = vld [vmem:[%s85 + $0x14] sm:$0xf]
    %v5099 = vld [vmem:[%s85 + $0x18] sm:$0xf]
    %v5100 = vld [vmem:[%s85 + $0x1c] sm:$0xf]
    %v5101 = vld [vmem:[%s85 + $0x20] sm:$0xf]
    %v5102 = vld [vmem:[%s85 + $0x24] sm:$0xf]
    %v5103 = vld [vmem:[%s85 + $0x28] sm:$0xf]
    %v5104 = vld [vmem:[%s85 + $0x2c] sm:$0xf]
    %v5105 = vld [vmem:[%s85 + $0x30] sm:$0xf]
    %v5106 = vld [vmem:[%s85 + $0x34] sm:$0xf]
    %v5107 = vld [vmem:[%s85 + $0x38] sm:$0xf]
    %v5108 = vld [vmem:[%s85 + $0x3c] sm:$0xf]
    %v5109 = vld [vmem:[%s85 + $0x40] sm:$0xf]
    %v5110 = vld [vmem:[%s85 + $0x44] sm:$0xf]
    %v5111 = vld [vmem:[%s85 + $0x48] sm:$0xf]
    %v5112 = vld [vmem:[%s85 + $0x4c] sm:$0xf]
    %v5113 = vld [vmem:[%s85 + $0x50] sm:$0xf]
    %v5114 = vld [vmem:[%s85 + $0x54] sm:$0xf]
    %v5115 = vld [vmem:[%s85 + $0x58] sm:$0xf]
    %v5116 = vld [vmem:[%s85 + $0x5c] sm:$0xf]
    %v5117 = vld [vmem:[%s85 + $0x60] sm:$0xf]
    %v5118 = vld [vmem:[%s85 + $0x64] sm:$0xf]
    %v5119 = vld [vmem:[%s85 + $0x68] sm:$0xf]
    %v5120 = vld [vmem:[%s85 + $0x6c] sm:$0xf]
    %v5121 = vld [vmem:[%s85 + $0x70] sm:$0xf]
    %v5122 = vld [vmem:[%s85 + $0x74] sm:$0xf]
    %v5123 = vld [vmem:[%s85 + $0x78] sm:$0xf]
    %v5124 = vld [vmem:[%s85 + $0x7c] sm:$0xf]
    %v5125 = vld [vmem:[%s85 + $0x80] sm:$0xf]
    %v5126 = vld [vmem:[%s85 + $0x84] sm:$0xf]
    %v5127 = vld [vmem:[%s85 + $0x88] sm:$0xf]
    %v5128 = vld [vmem:[%s85 + $0x8c] sm:$0xf]
    %v5129 = vld [vmem:[%s85 + $0x90] sm:$0xf]
    %v5130 = vld [vmem:[%s85 + $0x94] sm:$0xf]
    %v5131 = vld [vmem:[%s85 + $0x98] sm:$0xf]
    %v5132 = vld [vmem:[%s85 + $0x9c] sm:$0xf]
    %v5133 = vld [vmem:[%s85 + $0xa0] sm:$0xf]
    %v5134 = vld [vmem:[%s85 + $0xa4] sm:$0xf]
    %v5135 = vld [vmem:[%s85 + $0xa8] sm:$0xf]
    %v5136 = vld [vmem:[%s85 + $0xac] sm:$0xf]
    %v5137 = vld [vmem:[%s85 + $0xb0] sm:$0xf]
    %v5138 = vld [vmem:[%s85 + $0xb4] sm:$0xf]
    %v5139 = vld [vmem:[%s85 + $0xb8] sm:$0xf]
    %v5140 = vld [vmem:[%s85 + $0xbc] sm:$0xf]
    %v5141 = vld [vmem:[%s87] sm:$0x1]
    %v5166 = vunpack.c.l.b16 %v5117
    %v5167 = vunpack.c.l.b16 %v5118
    %v5168 = vunpack.c.l.b16 %v5119
    %v5169 = vunpack.c.l.b16 %v5120
    %v5170 = vunpack.c.l.b16 %v5121
    %v5171 = vunpack.c.l.b16 %v5122
    %v5172 = vunpack.c.l.b16 %v5123
    %v5173 = vunpack.c.l.b16 %v5124
    %v5174 = vunpack.c.l.b16 %v5125
    %v5175 = vunpack.c.l.b16 %v5126
    %v5176 = vunpack.c.l.b16 %v5127
    %v5177 = vunpack.c.l.b16 %v5128
    %v5178 = vunpack.c.l.b16 %v5129
    %v5179 = vunpack.c.l.b16 %v5130
    %v5180 = vunpack.c.l.b16 %v5131
    %v5181 = vunpack.c.l.b16 %v5132
    %v5182 = vunpack.c.l.b16 %v5133
    %v5183 = vunpack.c.l.b16 %v5134
    %v5184 = vunpack.c.l.b16 %v5135
    %v5185 = vunpack.c.l.b16 %v5136
    %v5186 = vunpack.c.l.b16 %v5137
    %v5187 = vunpack.c.l.b16 %v5138
    %v5188 = vunpack.c.l.b16 %v5139
    %v5189 = vunpack.c.l.b16 %v5140
    %v5190 = vpack.c.b16 %v5167, %v5166
    %v5191 = vpack.c.b16 %v5169, %v5168
    %v5192 = vpack.c.b16 %v5171, %v5170
    %v5193 = vpack.c.b16 %v5173, %v5172
    %v5194 = vpack.c.b16 %v5175, %v5174
    %v5195 = vpack.c.b16 %v5177, %v5176
    %v5196 = vpack.c.b16 %v5179, %v5178
    %v5197 = vpack.c.b16 %v5181, %v5180
    %v5198 = vpack.c.b16 %v5183, %v5182
    %v5199 = vpack.c.b16 %v5185, %v5184
    %v5200 = vpack.c.b16 %v5187, %v5186
    %v5201 = vpack.c.b16 %v5189, %v5188
    %5214 = vmatprep.subr.bf16.mxu0 0
    %5215 = vmatpush1.bf16.msra.mxu0 %v5190
    %5216 = vmatprep.subr.bf16.mxu0 0
    %5217 = vmatpush1.bf16.msra.mxu0 %v5191
    %5218 = vmatprep.subr.bf16.mxu0 0
    %5219 = vmatpush1.bf16.msra.mxu0 %v5192
    %5220 = vmatprep.subr.bf16.mxu0 0
    %5221 = vmatpush1.bf16.msra.mxu0 %v5193
    %5222 = vmatprep.subr.bf16.mxu0 0
    %5223 = vmatpush1.bf16.msra.mxu0 %v5194
    %5224 = vmatprep.subr.bf16.mxu0 0
    %5225 = vmatpush1.bf16.msra.mxu0 %v5195
    %5226 = vmatprep.subr.bf16.mxu0 0
    %5227 = vmatpush1.bf16.msra.mxu0 %v5196
    %5228 = vmatprep.subr.bf16.mxu0 0
    %5229 = vmatpush1.bf16.msra.mxu0 %v5197
    %5230 = vmatprep.subr.bf16.mxu0 0
    %5231 = vmatpush1.bf16.msra.mxu0 %v5198
    %5232 = vmatprep.subr.bf16.mxu0 0
    %5233 = vmatpush1.bf16.msra.mxu0 %v5199
    %5234 = vmatprep.subr.bf16.mxu0 0
    %5235 = vmatpush1.bf16.msra.mxu0 %v5200
    %5236 = vmatprep.subr.bf16.mxu0 0
    %5237 = vmatpush1.bf16.msra.mxu0 %v5201
    %5238 = vmatprep.subr.bf16.mxu0 0
    %5239 = vmatpush1.bf16.msra.mxu0 0
    %5240 = vmatprep.subr.bf16.mxu0 0
    %5241 = vmatpush1.bf16.msra.mxu0 0
    %5242 = vmatprep.subr.bf16.mxu0 0
    %5243 = vmatpush1.bf16.msra.mxu0 0
    %5244 = vmatprep.subr.bf16.mxu0 0
    %5245 = vmatpush1.bf16.msra.mxu0 0
    %5246 = vmatprep.mubr.bf16.mxu0 %v4145
    %5247 = vmatmul.mubr.bf16.gmra.mrb[0].mxu0 %v4070
    %v5248 = vpop.f32.mrb[0].mxu0
    %v5249 = vadd.f32 0.0, %v5248
    %v5250 = vpop.f32.mrb[0].mxu0
    %v5251 = vpop.f32.mrb[0].mxu0
    %v5252 = vadd.f32 0.0, %v5251
    %v5253 = vpop.f32.mrb[0].mxu0
    %5254 = vdwg.mxu0
    %v5279 = vunpack.c.l.b16 %v5093
    %v5280 = vunpack.c.l.b16 %v5094
    %v5281 = vunpack.c.l.b16 %v5095
    %v5282 = vunpack.c.l.b16 %v5096
    %v5283 = vunpack.c.l.b16 %v5097
    %v5284 = vunpack.c.l.b16 %v5098
    %v5285 = vunpack.c.l.b16 %v5099
    %v5286 = vunpack.c.l.b16 %v5100
    %v5287 = vunpack.c.l.b16 %v5101
    %v5288 = vunpack.c.l.b16 %v5102
    %v5289 = vunpack.c.l.b16 %v5103
    %v5290 = vunpack.c.l.b16 %v5104
    %v5291 = vunpack.c.l.b16 %v5105
    %v5292 = vunpack.c.l.b16 %v5106
    %v5293 = vunpack.c.l.b16 %v5107
    %v5294 = vunpack.c.l.b16 %v5108
    %v5295 = vunpack.c.l.b16 %v5109
    %v5296 = vunpack.c.l.b16 %v5110
    %v5297 = vunpack.c.l.b16 %v5111
    %v5298 = vunpack.c.l.b16 %v5112
    %v5299 = vunpack.c.l.b16 %v5113
    %v5300 = vunpack.c.l.b16 %v5114
    %v5301 = vunpack.c.l.b16 %v5115
    %v5302 = vunpack.c.l.b16 %v5116
    %v5303 = vpack.c.b16 %v5280, %v5279
    %v5304 = vpack.c.b16 %v5282, %v5281
    %v5305 = vpack.c.b16 %v5284, %v5283
    %v5306 = vpack.c.b16 %v5286, %v5285
    %v5307 = vpack.c.b16 %v5288, %v5287
    %v5308 = vpack.c.b16 %v5290, %v5289
    %v5309 = vpack.c.b16 %v5292, %v5291
    %v5310 = vpack.c.b16 %v5294, %v5293
    %v5311 = vpack.c.b16 %v5296, %v5295
    %v5312 = vpack.c.b16 %v5298, %v5297
    %v5313 = vpack.c.b16 %v5300, %v5299
    %v5314 = vpack.c.b16 %v5302, %v5301
    %5327 = vmatprep.subr.bf16.mxu0 0
    %5328 = vmatpush1.bf16.msra.mxu0 %v5303
    %5329 = vmatprep.subr.bf16.mxu0 0
    %5330 = vmatpush1.bf16.msra.mxu0 %v5304
    %5331 = vmatprep.subr.bf16.mxu0 0
    %5332 = vmatpush1.bf16.msra.mxu0 %v5305
    %5333 = vmatprep.subr.bf16.mxu0 0
    %5334 = vmatpush1.bf16.msra.mxu0 %v5306
    %5335 = vmatprep.subr.bf16.mxu0 0
    %5336 = vmatpush1.bf16.msra.mxu0 %v5307
    %5337 = vmatprep.subr.bf16.mxu0 0
    %5338 = vmatpush1.bf16.msra.mxu0 %v5308
    %5339 = vmatprep.subr.bf16.mxu0 0
    %5340 = vmatpush1.bf16.msra.mxu0 %v5309
    %5341 = vmatprep.subr.bf16.mxu0 0
    %5342 = vmatpush1.bf16.msra.mxu0 %v5310
    %5343 = vmatprep.subr.bf16.mxu0 0
    %5344 = vmatpush1.bf16.msra.mxu0 %v5311
    %5345 = vmatprep.subr.bf16.mxu0 0
    %5346 = vmatpush1.bf16.msra.mxu0 %v5312
    %5347 = vmatprep.subr.bf16.mxu0 0
    %5348 = vmatpush1.bf16.msra.mxu0 %v5313
    %5349 = vmatprep.subr.bf16.mxu0 0
    %5350 = vmatpush1.bf16.msra.mxu0 %v5314
    %5351 = vmatprep.subr.bf16.mxu0 0
    %5352 = vmatpush1.bf16.msra.mxu0 0
    %5353 = vmatprep.subr.bf16.mxu0 0
    %5354 = vmatpush1.bf16.msra.mxu0 0
    %5355 = vmatprep.subr.bf16.mxu0 0
    %5356 = vmatpush1.bf16.msra.mxu0 0
    %5357 = vmatprep.subr.bf16.mxu0 0
    %5358 = vmatpush1.bf16.msra.mxu0 0
    %5359 = vmatprep.mubr.bf16.mxu0 %v4261
    %5360 = vmatmul.mubr.bf16.gmra.mrb[0].mxu0 %v4068
    %v5361 = vpop.f32.mrb[0].mxu0
    %v5362 = vadd.f32 %v5249, %v5361
    %v5363 = vpop.f32.mrb[0].mxu0
    %v5364 = vpop.f32.mrb[0].mxu0
    %v5365 = vadd.f32 %v5252, %v5364
    %v5366 = vpop.f32.mrb[0].mxu0
    %5367 = vdwg.mxu0
    %v5369 = vlaneseq
    %v5370 = vshrl.u32 %v5369, 7
    %v5371 = vsub.s32 0, %v5370
    %v5372 = vrot.slane %v5141, %v5371
    %v5374 = vadd.f32 %v5362, %v5372
    %v5375 = vadd.f32 %v5365, %v5372
    %v5376 = vmax.f32 %v5374, 0.0
    %v5377 = vmax.f32 %v5375, 0.0
    %v5378 = vsel %vm839, %v5376, 0.0
    %v5379 = vsel %vm839, %v5377, 0.0
    %v5380 = vadd.f32 %v5378, %v5379
    %v5381 = vrot.slane %v5380, 4
    %v5382 = vadd.f32 %v5380, %v5381
    %v5383 = vrot.slane %v5382, 2
    %v5384 = vadd.f32 %v5382, %v5383
    %v5385 = vrot.slane %v5384, 1
    %v5386 = vadd.f32 %v5384, %v5385
    %v5387 = vmul.f32 %v5386, 0.0625
    %v5388 = vsub.f32 %v5376, %v5387
    %v5389 = vsub.f32 %v5377, %v5387
    %v5390 = vmul.f32 %v5388, %v5388
    %v5391 = vmul.f32 %v5389, %v5389
    %v5392 = vsel %vm839, %v5390, 0.0
    %v5393 = vsel %vm839, %v5391, 0.0
    %v5394 = vadd.f32 %v5392, %v5393
    %v5395 = vrot.slane %v5394, 4
    %v5396 = vadd.f32 %v5394, %v5395
    %v5397 = vrot.slane %v5396, 2
    %v5398 = vadd.f32 %v5396, %v5397
    %v5399 = vrot.slane %v5398, 1
    %v5400 = vadd.f32 %v5398, %v5399
    %v5401 = vmul.f32 %v5400, 0.0625
    %v5402 = vadd.f32 %v5401, 1e-05
    %v5403 = vrsqrt.pop %v5402
    %v5404 = vld [vmem:[%s89] sm:$0x1]
    %v5405 = vmul.f32 %v5403, %v5404
    %v5406 = vld [vmem:[%s91] sm:$0x1]
    %v5407 = vmul.f32 %v5387, %v5405
    %v5408 = vsub.f32 %v5406, %v5407
    %v5409 = vlaneseq
    %v5410 = vshrl.u32 %v5409, 7
    %v5411 = vsub.s32 0, %v5410
    %v5412 = vrot.slane %v5405, %v5411
    %v5413 = vmul.f32 %v5376, %v5412
    %v5414 = vmul.f32 %v5377, %v5412
    %v5416 = vlaneseq
    %v5417 = vshrl.u32 %v5416, 7
    %v5418 = vsub.s32 0, %v5417
    %v5419 = vrot.slane %v5408, %v5418
    %v5421 = vadd.f32 %v5413, %v5419
    %v5422 = vadd.f32 %v5414, %v5419
    %v5423 = vld [vmem:[%s93] sm:$0xf]
    %v5424 = vld [vmem:[%s93 + $0x4] sm:$0xf]
    %v5425 = vld [vmem:[%s93 + $0x8] sm:$0xf]
    %v5426 = vld [vmem:[%s93 + $0xc] sm:$0xf]
    %v5427 = vld [vmem:[%s93 + $0x10] sm:$0xf]
    %v5428 = vld [vmem:[%s93 + $0x14] sm:$0xf]
    %v5429 = vld [vmem:[%s93 + $0x18] sm:$0xf]
    %v5430 = vld [vmem:[%s93 + $0x1c] sm:$0xf]
    %v5431 = vld [vmem:[%s93 + $0x20] sm:$0xf]
    %v5432 = vld [vmem:[%s93 + $0x24] sm:$0xf]
    %v5433 = vld [vmem:[%s93 + $0x28] sm:$0xf]
    %v5434 = vld [vmem:[%s93 + $0x2c] sm:$0xf]
    %v5435 = vld [vmem:[%s93 + $0x30] sm:$0xf]
    %v5436 = vld [vmem:[%s93 + $0x34] sm:$0xf]
    %v5437 = vld [vmem:[%s93 + $0x38] sm:$0xf]
    %v5438 = vld [vmem:[%s93 + $0x3c] sm:$0xf]
    %v5439 = vld [vmem:[%s95] sm:$0x1]
    %v5440 = vpack.c.bf16 %v5421, %v5421
    %v5442 = vsel %vm1949, %v5440, 0
    %5444 = vmatprep.subr.bf16.mxu0 0
    %5445 = vmatpush1.bf16.msra.mxu0 %v5442
    %5446 = vmatprep.subr.bf16.mxu0 0
    %5447 = vmatpush1.bf16.msra.mxu0 0
    %5448 = vmatprep.subr.bf16.mxu0 0
    %5449 = vmatpush1.bf16.msra.mxu0 0
    %5450 = vmatprep.subr.bf16.mxu0 0
    %5451 = vmatpush1.bf16.msra.mxu0 0
    %5452 = vmatprep.subr.bf16.mxu0 0
    %5453 = vmatpush1.bf16.msra.mxu0 0
    %5454 = vmatprep.subr.bf16.mxu0 0
    %5455 = vmatpush1.bf16.msra.mxu0 0
    %5456 = vmatprep.subr.bf16.mxu0 0
    %5457 = vmatpush1.bf16.msra.mxu0 0
    %5458 = vmatprep.subr.bf16.mxu0 0
    %5459 = vmatpush1.bf16.msra.mxu0 0
    %5460 = vmatprep.subr.bf16.mxu0 0
    %5461 = vmatpush1.bf16.msra.mxu0 0
    %5462 = vmatprep.subr.bf16.mxu0 0
    %5463 = vmatpush1.bf16.msra.mxu0 0
    %5464 = vmatprep.subr.bf16.mxu0 0
    %5465 = vmatpush1.bf16.msra.mxu0 0
    %5466 = vmatprep.subr.bf16.mxu0 0
    %5467 = vmatpush1.bf16.msra.mxu0 0
    %5468 = vmatprep.subr.bf16.mxu0 0
    %5469 = vmatpush1.bf16.msra.mxu0 0
    %5470 = vmatprep.subr.bf16.mxu0 0
    %5471 = vmatpush1.bf16.msra.mxu0 0
    %5472 = vmatprep.subr.bf16.mxu0 0
    %5473 = vmatpush1.bf16.msra.mxu0 0
    %5474 = vmatprep.subr.bf16.mxu0 0
    %5475 = vmatpush1.bf16.msra.mxu0 0
    %5476 = vmatprep.mubr.bf16.mxu0 0
    %5477 = vmatmul.mubr.bf16.gmra.mrb[0].mxu0 %v3967
    %v5478 = vpop.f32.mrb[0].mxu0
    %v5479 = vadd.f32 0.0, %v5478
    %v5480 = vpop.f32.mrb[0].mxu0
    %v5481 = vpop.f32.mrb[0].mxu0
    %v5482 = vpop.f32.mrb[0].mxu0
    %5483 = vdwg.mxu0
    %v5484 = vpack.c.bf16 %v5422, %v5422
    %v5486 = vsel %vm1949, %v5484, 0
    %5488 = vmatprep.subr.bf16.mxu0 0
    %5489 = vmatpush1.bf16.msra.mxu0 %v5486
    %5490 = vmatprep.subr.bf16.mxu0 0
    %5491 = vmatpush1.bf16.msra.mxu0 0
    %5492 = vmatprep.subr.bf16.mxu0 0
    %5493 = vmatpush1.bf16.msra.mxu0 0
    %5494 = vmatprep.subr.bf16.mxu0 0
    %5495 = vmatpush1.bf16.msra.mxu0 0
    %5496 = vmatprep.subr.bf16.mxu0 0
    %5497 = vmatpush1.bf16.msra.mxu0 0
    %5498 = vmatprep.subr.bf16.mxu0 0
    %5499 = vmatpush1.bf16.msra.mxu0 0
    %5500 = vmatprep.subr.bf16.mxu0 0
    %5501 = vmatpush1.bf16.msra.mxu0 0
    %5502 = vmatprep.subr.bf16.mxu0 0
    %5503 = vmatpush1.bf16.msra.mxu0 0
    %5504 = vmatprep.subr.bf16.mxu0 0
    %5505 = vmatpush1.bf16.msra.mxu0 0
    %5506 = vmatprep.subr.bf16.mxu0 0
    %5507 = vmatpush1.bf16.msra.mxu0 0
    %5508 = vmatprep.subr.bf16.mxu0 0
    %5509 = vmatpush1.bf16.msra.mxu0 0
    %5510 = vmatprep.subr.bf16.mxu0 0
    %5511 = vmatpush1.bf16.msra.mxu0 0
    %5512 = vmatprep.subr.bf16.mxu0 0
    %5513 = vmatpush1.bf16.msra.mxu0 0
    %5514 = vmatprep.subr.bf16.mxu0 0
    %5515 = vmatpush1.bf16.msra.mxu0 0
    %5516 = vmatprep.subr.bf16.mxu0 0
    %5517 = vmatpush1.bf16.msra.mxu0 0
    %5518 = vmatprep.subr.bf16.mxu0 0
    %5519 = vmatpush1.bf16.msra.mxu0 0
    %5520 = vmatprep.mubr.bf16.mxu0 0
    %5521 = vmatmul.mubr.bf16.gmra.mrb[0].mxu0 %v4019
    %v5522 = vpop.f32.mrb[0].mxu0
    %v5523 = vadd.f32 0.0, %v5522
    %v5524 = vpop.f32.mrb[0].mxu0
    %v5525 = vpop.f32.mrb[0].mxu0
    %v5526 = vpop.f32.mrb[0].mxu0
    %5527 = vdwg.mxu0
    %v5528 = vpack.c.bf16 %v5523, %v5479
    %v5529 = vpack.c.bf16 %v5422, %v5421
    %v5538 = vunpack.c.l.b16 %v5431
    %v5539 = vunpack.c.l.b16 %v5432
    %v5540 = vunpack.c.l.b16 %v5433
    %v5541 = vunpack.c.l.b16 %v5434
    %v5542 = vunpack.c.l.b16 %v5435
    %v5543 = vunpack.c.l.b16 %v5436
    %v5544 = vunpack.c.l.b16 %v5437
    %v5545 = vunpack.c.l.b16 %v5438
    %v5546 = vpack.c.b16 %v5539, %v5538
    %v5547 = vpack.c.b16 %v5541, %v5540
    %v5548 = vpack.c.b16 %v5543, %v5542
    %v5549 = vpack.c.b16 %v5545, %v5544
    %v5555 = vsel %vm839, %v5529, 0
    %5557 = vmatprep.subr.bf16.mxu0 0
    %5558 = vmatpush1.bf16.msra.mxu0 %v5546
    %5559 = vmatprep.subr.bf16.mxu0 0
    %5560 = vmatpush1.bf16.msra.mxu0 %v5547
    %5561 = vmatprep.subr.bf16.mxu0 0
    %5562 = vmatpush1.bf16.msra.mxu0 %v5548
    %5563 = vmatprep.subr.bf16.mxu0 0
    %5564 = vmatpush1.bf16.msra.mxu0 %v5549
    %5565 = vmatprep.subr.bf16.mxu0 0
    %5566 = vmatpush1.bf16.msra.mxu0 0
    %5567 = vmatprep.subr.bf16.mxu0 0
    %5568 = vmatpush1.bf16.msra.mxu0 0
    %5569 = vmatprep.subr.bf16.mxu0 0
    %5570 = vmatpush1.bf16.msra.mxu0 0
    %5571 = vmatprep.subr.bf16.mxu0 0
    %5572 = vmatpush1.bf16.msra.mxu0 0
    %5573 = vmatprep.subr.bf16.mxu0 0
    %5574 = vmatpush1.bf16.msra.mxu0 0
    %5575 = vmatprep.subr.bf16.mxu0 0
    %5576 = vmatpush1.bf16.msra.mxu0 0
    %5577 = vmatprep.subr.bf16.mxu0 0
    %5578 = vmatpush1.bf16.msra.mxu0 0
    %5579 = vmatprep.subr.bf16.mxu0 0
    %5580 = vmatpush1.bf16.msra.mxu0 0
    %5581 = vmatprep.subr.bf16.mxu0 0
    %5582 = vmatpush1.bf16.msra.mxu0 0
    %5583 = vmatprep.subr.bf16.mxu0 0
    %5584 = vmatpush1.bf16.msra.mxu0 0
    %5585 = vmatprep.subr.bf16.mxu0 0
    %5586 = vmatpush1.bf16.msra.mxu0 0
    %5587 = vmatprep.subr.bf16.mxu0 0
    %5588 = vmatpush1.bf16.msra.mxu0 0
    %5589 = vmatprep.mubr.bf16.mxu0 0
    %5590 = vmatmul.mubr.bf16.gmra.mrb[0].mxu0 %v5555
    %v5591 = vpop.f32.mrb[0].mxu0
    %v5592 = vadd.f32 0.0, %v5591
    %v5593 = vpop.f32.mrb[0].mxu0
    %v5594 = vpop.f32.mrb[0].mxu0
    %v5595 = vadd.f32 0.0, %v5594
    %v5596 = vpop.f32.mrb[0].mxu0
    %5597 = vdwg.mxu0
    %v5606 = vunpack.c.l.b16 %v5423
    %v5607 = vunpack.c.l.b16 %v5424
    %v5608 = vunpack.c.l.b16 %v5425
    %v5609 = vunpack.c.l.b16 %v5426
    %v5610 = vunpack.c.l.b16 %v5427
    %v5611 = vunpack.c.l.b16 %v5428
    %v5612 = vunpack.c.l.b16 %v5429
    %v5613 = vunpack.c.l.b16 %v5430
    %v5614 = vpack.c.b16 %v5607, %v5606
    %v5615 = vpack.c.b16 %v5609, %v5608
    %v5616 = vpack.c.b16 %v5611, %v5610
    %v5617 = vpack.c.b16 %v5613, %v5612
    %v5623 = vsel %vm839, %v5528, 0
    %5625 = vmatprep.subr.bf16.mxu0 0
    %5626 = vmatpush1.bf16.msra.mxu0 %v5614
    %5627 = vmatprep.subr.bf16.mxu0 0
    %5628 = vmatpush1.bf16.msra.mxu0 %v5615
    %5629 = vmatprep.subr.bf16.mxu0 0
    %5630 = vmatpush1.bf16.msra.mxu0 %v5616
    %5631 = vmatprep.subr.bf16.mxu0 0
    %5632 = vmatpush1.bf16.msra.mxu0 %v5617
    %5633 = vmatprep.subr.bf16.mxu0 0
    %5634 = vmatpush1.bf16.msra.mxu0 0
    %5635 = vmatprep.subr.bf16.mxu0 0
    %5636 = vmatpush1.bf16.msra.mxu0 0
    %5637 = vmatprep.subr.bf16.mxu0 0
    %5638 = vmatpush1.bf16.msra.mxu0 0
    %5639 = vmatprep.subr.bf16.mxu0 0
    %5640 = vmatpush1.bf16.msra.mxu0 0
    %5641 = vmatprep.subr.bf16.mxu0 0
    %5642 = vmatpush1.bf16.msra.mxu0 0
    %5643 = vmatprep.subr.bf16.mxu0 0
    %5644 = vmatpush1.bf16.msra.mxu0 0
    %5645 = vmatprep.subr.bf16.mxu0 0
    %5646 = vmatpush1.bf16.msra.mxu0 0
    %5647 = vmatprep.subr.bf16.mxu0 0
    %5648 = vmatpush1.bf16.msra.mxu0 0
    %5649 = vmatprep.subr.bf16.mxu0 0
    %5650 = vmatpush1.bf16.msra.mxu0 0
    %5651 = vmatprep.subr.bf16.mxu0 0
    %5652 = vmatpush1.bf16.msra.mxu0 0
    %5653 = vmatprep.subr.bf16.mxu0 0
    %5654 = vmatpush1.bf16.msra.mxu0 0
    %5655 = vmatprep.subr.bf16.mxu0 0
    %5656 = vmatpush1.bf16.msra.mxu0 0
    %5657 = vmatprep.mubr.bf16.mxu0 0
    %5658 = vmatmul.mubr.bf16.gmra.mrb[0].mxu0 %v5623
    %v5659 = vpop.f32.mrb[0].mxu0
    %v5660 = vadd.f32 %v5592, %v5659
    %v5661 = vpop.f32.mrb[0].mxu0
    %v5662 = vpop.f32.mrb[0].mxu0
    %v5663 = vadd.f32 %v5595, %v5662
    %v5664 = vpop.f32.mrb[0].mxu0
    %5665 = vdwg.mxu0
    %v5667 = vlaneseq
    %v5668 = vshrl.u32 %v5667, 7
    %v5669 = vsub.s32 0, %v5668
    %v5670 = vrot.slane %v5439, %v5669
    %v5672 = vadd.f32 %v5660, %v5670
    %v5673 = vadd.f32 %v5663, %v5670
    %v5674 = vmax.f32 %v5672, 0.0
    %v5675 = vmax.f32 %v5673, 0.0
    %v5676 = vsel %vm839, %v5674, 0.0
    %v5677 = vsel %vm839, %v5675, 0.0
    %v5678 = vadd.f32 %v5676, %v5677
    %v5679 = vrot.slane %v5678, 4
    %v5680 = vadd.f32 %v5678, %v5679
    %v5681 = vrot.slane %v5680, 2
    %v5682 = vadd.f32 %v5680, %v5681
    %v5683 = vrot.slane %v5682, 1
    %v5684 = vadd.f32 %v5682, %v5683
    %v5685 = vmul.f32 %v5684, 0.0625
    %v5686 = vsub.f32 %v5674, %v5685
    %v5687 = vsub.f32 %v5675, %v5685
    %v5688 = vmul.f32 %v5686, %v5686
    %v5689 = vmul.f32 %v5687, %v5687
    %v5690 = vsel %vm839, %v5688, 0.0
    %v5691 = vsel %vm839, %v5689, 0.0
    %v5692 = vadd.f32 %v5690, %v5691
    %v5693 = vrot.slane %v5692, 4
    %v5694 = vadd.f32 %v5692, %v5693
    %v5695 = vrot.slane %v5694, 2
    %v5696 = vadd.f32 %v5694, %v5695
    %v5697 = vrot.slane %v5696, 1
    %v5698 = vadd.f32 %v5696, %v5697
    %v5699 = vmul.f32 %v5698, 0.0625
    %v5700 = vadd.f32 %v5699, 1e-05
    %v5701 = vrsqrt.pop %v5700
    %v5702 = vld [vmem:[%s97] sm:$0x1]
    %v5703 = vmul.f32 %v5701, %v5702
    %v5704 = vld [vmem:[%s99] sm:$0x1]
    %v5705 = vmul.f32 %v5685, %v5703
    %v5706 = vsub.f32 %v5704, %v5705
    %v5707 = vlaneseq
    %v5708 = vshrl.u32 %v5707, 7
    %v5709 = vsub.s32 0, %v5708
    %v5710 = vrot.slane %v5703, %v5709
    %v5711 = vmul.f32 %v5674, %v5710
    %v5712 = vmul.f32 %v5675, %v5710
    %v5714 = vlaneseq
    %v5715 = vshrl.u32 %v5714, 7
    %v5716 = vsub.s32 0, %v5715
    %v5717 = vrot.slane %v5706, %v5716
    %v5719 = vadd.f32 %v5711, %v5717
    %v5720 = vadd.f32 %v5712, %v5717
    %v5721 = vld [vmem:[%s101] sm:$0xf]
    %v5722 = vld [vmem:[%s101 + $0x4] sm:$0xf]
    %v5723 = vld [vmem:[%s101 + $0x8] sm:$0xf]
    %v5724 = vld [vmem:[%s101 + $0xc] sm:$0xf]
    %v5725 = vld [vmem:[%s101 + $0x10] sm:$0xf]
    %v5726 = vld [vmem:[%s101 + $0x14] sm:$0xf]
    %v5727 = vld [vmem:[%s101 + $0x18] sm:$0xf]
    %v5728 = vld [vmem:[%s101 + $0x1c] sm:$0xf]
    %v5729 = vld [vmem:[%s101 + $0x20] sm:$0xf]
    %v5730 = vld [vmem:[%s101 + $0x24] sm:$0xf]
    %v5731 = vld [vmem:[%s101 + $0x28] sm:$0xf]
    %v5732 = vld [vmem:[%s101 + $0x2c] sm:$0xf]
    %v5733 = vld [vmem:[%s101 + $0x30] sm:$0xf]
    %v5734 = vld [vmem:[%s101 + $0x34] sm:$0xf]
    %v5735 = vld [vmem:[%s101 + $0x38] sm:$0xf]
    %v5736 = vld [vmem:[%s101 + $0x3c] sm:$0xf]
    %v5737 = vld [vmem:[#allocation2] sm:$0x1]
    %v5738 = vpack.c.bf16 %v5719, %v5719
    %v5740 = vsel %vm1949, %v5738, 0
    %5742 = vmatprep.subr.bf16.mxu0 0
    %5743 = vmatpush1.bf16.msra.mxu0 %v5740
    %5744 = vmatprep.subr.bf16.mxu0 0
    %5745 = vmatpush1.bf16.msra.mxu0 0
    %5746 = vmatprep.subr.bf16.mxu0 0
    %5747 = vmatpush1.bf16.msra.mxu0 0
    %5748 = vmatprep.subr.bf16.mxu0 0
    %5749 = vmatpush1.bf16.msra.mxu0 0
    %5750 = vmatprep.subr.bf16.mxu0 0
    %5751 = vmatpush1.bf16.msra.mxu0 0
    %5752 = vmatprep.subr.bf16.mxu0 0
    %5753 = vmatpush1.bf16.msra.mxu0 0
    %5754 = vmatprep.subr.bf16.mxu0 0
    %5755 = vmatpush1.bf16.msra.mxu0 0
    %5756 = vmatprep.subr.bf16.mxu0 0
    %5757 = vmatpush1.bf16.msra.mxu0 0
    %5758 = vmatprep.subr.bf16.mxu0 0
    %5759 = vmatpush1.bf16.msra.mxu0 0
    %5760 = vmatprep.subr.bf16.mxu0 0
    %5761 = vmatpush1.bf16.msra.mxu0 0
    %5762 = vmatprep.subr.bf16.mxu0 0
    %5763 = vmatpush1.bf16.msra.mxu0 0
    %5764 = vmatprep.subr.bf16.mxu0 0
    %5765 = vmatpush1.bf16.msra.mxu0 0
    %5766 = vmatprep.subr.bf16.mxu0 0
    %5767 = vmatpush1.bf16.msra.mxu0 0
    %5768 = vmatprep.subr.bf16.mxu0 0
    %5769 = vmatpush1.bf16.msra.mxu0 0
    %5770 = vmatprep.subr.bf16.mxu0 0
    %5771 = vmatpush1.bf16.msra.mxu0 0
    %5772 = vmatprep.subr.bf16.mxu0 0
    %5773 = vmatpush1.bf16.msra.mxu0 0
    %5774 = vmatprep.mubr.bf16.mxu0 0
    %5775 = vmatmul.mubr.bf16.gmra.mrb[0].mxu0 %v3967
    %v5776 = vpop.f32.mrb[0].mxu0
    %v5777 = vadd.f32 0.0, %v5776
    %v5778 = vpop.f32.mrb[0].mxu0
    %v5779 = vpop.f32.mrb[0].mxu0
    %v5780 = vpop.f32.mrb[0].mxu0
    %5781 = vdwg.mxu0
    %v5782 = vpack.c.bf16 %v5720, %v5720
    %v5784 = vsel %vm1949, %v5782, 0
    %5786 = vmatprep.subr.bf16.mxu0 0
    %5787 = vmatpush1.bf16.msra.mxu0 %v5784
    %5788 = vmatprep.subr.bf16.mxu0 0
    %5789 = vmatpush1.bf16.msra.mxu0 0
    %5790 = vmatprep.subr.bf16.mxu0 0
    %5791 = vmatpush1.bf16.msra.mxu0 0
    %5792 = vmatprep.subr.bf16.mxu0 0
    %5793 = vmatpush1.bf16.msra.mxu0 0
    %5794 = vmatprep.subr.bf16.mxu0 0
    %5795 = vmatpush1.bf16.msra.mxu0 0
    %5796 = vmatprep.subr.bf16.mxu0 0
    %5797 = vmatpush1.bf16.msra.mxu0 0
    %5798 = vmatprep.subr.bf16.mxu0 0
    %5799 = vmatpush1.bf16.msra.mxu0 0
    %5800 = vmatprep.subr.bf16.mxu0 0
    %5801 = vmatpush1.bf16.msra.mxu0 0
    %5802 = vmatprep.subr.bf16.mxu0 0
    %5803 = vmatpush1.bf16.msra.mxu0 0
    %5804 = vmatprep.subr.bf16.mxu0 0
    %5805 = vmatpush1.bf16.msra.mxu0 0
    %5806 = vmatprep.subr.bf16.mxu0 0
    %5807 = vmatpush1.bf16.msra.mxu0 0
    %5808 = vmatprep.subr.bf16.mxu0 0
    %5809 = vmatpush1.bf16.msra.mxu0 0
    %5810 = vmatprep.subr.bf16.mxu0 0
    %5811 = vmatpush1.bf16.msra.mxu0 0
    %5812 = vmatprep.subr.bf16.mxu0 0
    %5813 = vmatpush1.bf16.msra.mxu0 0
    %5814 = vmatprep.subr.bf16.mxu0 0
    %5815 = vmatpush1.bf16.msra.mxu0 0
    %5816 = vmatprep.subr.bf16.mxu0 0
    %5817 = vmatpush1.bf16.msra.mxu0 0
    %5818 = vmatprep.mubr.bf16.mxu0 0
    %5819 = vmatmul.mubr.bf16.gmra.mrb[0].mxu0 %v4019
    %v5820 = vpop.f32.mrb[0].mxu0
    %v5821 = vadd.f32 0.0, %v5820
    %v5822 = vpop.f32.mrb[0].mxu0
    %v5823 = vpop.f32.mrb[0].mxu0
    %v5824 = vpop.f32.mrb[0].mxu0
    %5825 = vdwg.mxu0
    %v5826 = vpack.c.bf16 %v5821, %v5777
    %v5827 = vpack.c.bf16 %v5720, %v5719
    %v5836 = vunpack.c.l.b16 %v5729
    %v5837 = vunpack.c.l.b16 %v5730
    %v5838 = vunpack.c.l.b16 %v5731
    %v5839 = vunpack.c.l.b16 %v5732
    %v5840 = vunpack.c.l.b16 %v5733
    %v5841 = vunpack.c.l.b16 %v5734
    %v5842 = vunpack.c.l.b16 %v5735
    %v5843 = vunpack.c.l.b16 %v5736
    %v5844 = vpack.c.b16 %v5837, %v5836
    %v5845 = vpack.c.b16 %v5839, %v5838
    %v5846 = vpack.c.b16 %v5841, %v5840
    %v5847 = vpack.c.b16 %v5843, %v5842
    %v5853 = vsel %vm839, %v5827, 0
    %5855 = vmatprep.subr.bf16.mxu0 0
    %5856 = vmatpush1.bf16.msra.mxu0 %v5844
    %5857 = vmatprep.subr.bf16.mxu0 0
    %5858 = vmatpush1.bf16.msra.mxu0 %v5845
    %5859 = vmatprep.subr.bf16.mxu0 0
    %5860 = vmatpush1.bf16.msra.mxu0 %v5846
    %5861 = vmatprep.subr.bf16.mxu0 0
    %5862 = vmatpush1.bf16.msra.mxu0 %v5847
    %5863 = vmatprep.subr.bf16.mxu0 0
    %5864 = vmatpush1.bf16.msra.mxu0 0
    %5865 = vmatprep.subr.bf16.mxu0 0
    %5866 = vmatpush1.bf16.msra.mxu0 0
    %5867 = vmatprep.subr.bf16.mxu0 0
    %5868 = vmatpush1.bf16.msra.mxu0 0
    %5869 = vmatprep.subr.bf16.mxu0 0
    %5870 = vmatpush1.bf16.msra.mxu0 0
    %5871 = vmatprep.subr.bf16.mxu0 0
    %5872 = vmatpush1.bf16.msra.mxu0 0
    %5873 = vmatprep.subr.bf16.mxu0 0
    %5874 = vmatpush1.bf16.msra.mxu0 0
    %5875 = vmatprep.subr.bf16.mxu0 0
    %5876 = vmatpush1.bf16.msra.mxu0 0
    %5877 = vmatprep.subr.bf16.mxu0 0
    %5878 = vmatpush1.bf16.msra.mxu0 0
    %5879 = vmatprep.subr.bf16.mxu0 0
    %5880 = vmatpush1.bf16.msra.mxu0 0
    %5881 = vmatprep.subr.bf16.mxu0 0
    %5882 = vmatpush1.bf16.msra.mxu0 0
    %5883 = vmatprep.subr.bf16.mxu0 0
    %5884 = vmatpush1.bf16.msra.mxu0 0
    %5885 = vmatprep.subr.bf16.mxu0 0
    %5886 = vmatpush1.bf16.msra.mxu0 0
    %5887 = vmatprep.mubr.bf16.mxu0 0
    %5888 = vmatmul.mubr.bf16.gmra.mrb[0].mxu0 %v5853
    %v5889 = vpop.f32.mrb[0].mxu0
    %v5890 = vadd.f32 0.0, %v5889
    %v5891 = vpop.f32.mrb[0].mxu0
    %v5892 = vpop.f32.mrb[0].mxu0
    %v5893 = vadd.f32 0.0, %v5892
    %v5894 = vpop.f32.mrb[0].mxu0
    %5895 = vdwg.mxu0
    %v5904 = vunpack.c.l.b16 %v5721
    %v5905 = vunpack.c.l.b16 %v5722
    %v5906 = vunpack.c.l.b16 %v5723
    %v5907 = vunpack.c.l.b16 %v5724
    %v5908 = vunpack.c.l.b16 %v5725
    %v5909 = vunpack.c.l.b16 %v5726
    %v5910 = vunpack.c.l.b16 %v5727
    %v5911 = vunpack.c.l.b16 %v5728
    %v5912 = vpack.c.b16 %v5905, %v5904
    %v5913 = vpack.c.b16 %v5907, %v5906
    %v5914 = vpack.c.b16 %v5909, %v5908
    %v5915 = vpack.c.b16 %v5911, %v5910
    %v5921 = vsel %vm839, %v5826, 0
    %5923 = vmatprep.subr.bf16.mxu0 0
    %5924 = vmatpush1.bf16.msra.mxu0 %v5912
    %5925 = vmatprep.subr.bf16.mxu0 0
    %5926 = vmatpush1.bf16.msra.mxu0 %v5913
    %5927 = vmatprep.subr.bf16.mxu0 0
    %5928 = vmatpush1.bf16.msra.mxu0 %v5914
    %5929 = vmatprep.subr.bf16.mxu0 0
    %5930 = vmatpush1.bf16.msra.mxu0 %v5915
    %5931 = vmatprep.subr.bf16.mxu0 0
    %5932 = vmatpush1.bf16.msra.mxu0 0
    %5933 = vmatprep.subr.bf16.mxu0 0
    %5934 = vmatpush1.bf16.msra.mxu0 0
    %5935 = vmatprep.subr.bf16.mxu0 0
    %5936 = vmatpush1.bf16.msra.mxu0 0
    %5937 = vmatprep.subr.bf16.mxu0 0
    %5938 = vmatpush1.bf16.msra.mxu0 0
    %5939 = vmatprep.subr.bf16.mxu0 0
    %5940 = vmatpush1.bf16.msra.mxu0 0
    %5941 = vmatprep.subr.bf16.mxu0 0
    %5942 = vmatpush1.bf16.msra.mxu0 0
    %5943 = vmatprep.subr.bf16.mxu0 0
    %5944 = vmatpush1.bf16.msra.mxu0 0
    %5945 = vmatprep.subr.bf16.mxu0 0
    %5946 = vmatpush1.bf16.msra.mxu0 0
    %5947 = vmatprep.subr.bf16.mxu0 0
    %5948 = vmatpush1.bf16.msra.mxu0 0
    %5949 = vmatprep.subr.bf16.mxu0 0
    %5950 = vmatpush1.bf16.msra.mxu0 0
    %5951 = vmatprep.subr.bf16.mxu0 0
    %5952 = vmatpush1.bf16.msra.mxu0 0
    %5953 = vmatprep.subr.bf16.mxu0 0
    %5954 = vmatpush1.bf16.msra.mxu0 0
    %5955 = vmatprep.mubr.bf16.mxu0 0
    %5956 = vmatmul.mubr.bf16.gmra.mrb[0].mxu0 %v5921
    %v5957 = vpop.f32.mrb[0].mxu0
    %v5958 = vadd.f32 %v5890, %v5957
    %v5959 = vpop.f32.mrb[0].mxu0
    %v5960 = vpop.f32.mrb[0].mxu0
    %v5961 = vadd.f32 %v5893, %v5960
    %v5962 = vpop.f32.mrb[0].mxu0
    %5963 = vdwg.mxu0
    %v5965 = vlaneseq
    %v5966 = vshrl.u32 %v5965, 7
    %v5967 = vsub.s32 0, %v5966
    %v5968 = vrot.slane %v5737, %v5967
    %v5970 = vadd.f32 %v5958, %v5968
    %v5971 = vadd.f32 %v5961, %v5968
    %v5972 = vmax.f32 %v5970, 0.0
    %v5973 = vmax.f32 %v5971, 0.0
    %v5974 = vsel %vm839, %v5972, 0.0
    %v5975 = vsel %vm839, %v5973, 0.0
    %v5976 = vadd.f32 %v5974, %v5975
    %v5977 = vrot.slane %v5976, 4
    %v5978 = vadd.f32 %v5976, %v5977
    %v5979 = vrot.slane %v5978, 2
    %v5980 = vadd.f32 %v5978, %v5979
    %v5981 = vrot.slane %v5980, 1
    %v5982 = vadd.f32 %v5980, %v5981
    %v5983 = vmul.f32 %v5982, 0.0625
    %v5984 = vsub.f32 %v5972, %v5983
    %v5985 = vsub.f32 %v5973, %v5983
    %v5986 = vmul.f32 %v5984, %v5984
    %v5987 = vmul.f32 %v5985, %v5985
    %v5988 = vsel %vm839, %v5986, 0.0
    %v5989 = vsel %vm839, %v5987, 0.0
    %v5990 = vadd.f32 %v5988, %v5989
    %v5991 = vrot.slane %v5990, 4
    %v5992 = vadd.f32 %v5990, %v5991
    %v5993 = vrot.slane %v5992, 2
    %v5994 = vadd.f32 %v5992, %v5993
    %v5995 = vrot.slane %v5994, 1
    %v5996 = vadd.f32 %v5994, %v5995
    %v5997 = vmul.f32 %v5996, 0.0625
    %v5998 = vadd.f32 %v5997, 1e-05
    %v5999 = vrsqrt.pop %v5998
    %v6000 = vld [vmem:[#allocation5] sm:$0x1]
    %v6001 = vmul.f32 %v5999, %v6000
    %v6002 = vld [vmem:[#allocation7] sm:$0x1]
    %v6003 = vmul.f32 %v5983, %v6001
    %v6004 = vsub.f32 %v6002, %v6003
    %v6005 = vlaneseq
    %v6006 = vshrl.u32 %v6005, 7
    %v6007 = vsub.s32 0, %v6006
    %v6008 = vrot.slane %v6001, %v6007
    %v6009 = vmul.f32 %v5972, %v6008
    %v6010 = vmul.f32 %v5973, %v6008
    %v6012 = vlaneseq
    %v6013 = vshrl.u32 %v6012, 7
    %v6014 = vsub.s32 0, %v6013
    %v6015 = vrot.slane %v6004, %v6014
    %v6017 = vadd.f32 %v6009, %v6015
    %v6018 = vadd.f32 %v6010, %v6015
    %6020 = vrot.lane.b32.xlu0 %v5719, 64
    %v6021 = vpop.permute.xlu0 %6020
    %v6023 = vsel %vm839, %v5421, %v6021
    %6025 = vrot.lane.b32.xlu0 %v5720, 64
    %v6026 = vpop.permute.xlu0 %6025
    %v6028 = vsel %vm839, %v5422, %v6026
    %v6029 = vsel %vm4910, %v5091, -inf
    %6030 = vmax.xlane.f32.xlu0 %v6029
    %v6031 = vpop.xlane.xlu0 %6030
    %v6032 = vsub.f32 %v5091, %v6031
    %v6033 = vmul.f32 %v6032, 1.442695
    %v6034 = vpow.pop %v6033
    %v6035 = vsel %vm4910, %v6034, 0.0
    %6036 = vadd.xlane.f32.xlu0 %v6035
    %v6037 = vpop.xlane.xlu0 %6036
    %v6038 = vrcp.pop %v6037
    %v6039 = vmul.f32 %v6034, %v6038
    %6040 = vxpose.xlu0.b32.start [1/16] %v6039, 128
    %6041 = vxpose.xlu0.b32.cont [2/16] 0.0, 128
    %6042 = vxpose.xlu0.b32.cont [3/16] 0.0, 128
    %6043 = vxpose.xlu0.b32.cont [4/16] 0.0, 128
    %6044 = vxpose.xlu0.b32.cont [5/16] 0.0, 128
    %6045 = vxpose.xlu0.b32.cont [6/16] 0.0, 128
    %6046 = vxpose.xlu0.b32.cont [7/16] 0.0, 128
    %6047 = vxpose.xlu0.b32.cont [8/16] 0.0, 128
    %6048 = vxpose.xlu0.b32.cont [9/16] 0.0, 128
    %6049 = vxpose.xlu0.b32.cont [10/16] 0.0, 128
    %6050 = vxpose.xlu0.b32.cont [11/16] 0.0, 128
    %6051 = vxpose.xlu0.b32.cont [12/16] 0.0, 128
    %6052 = vxpose.xlu0.b32.cont [13/16] 0.0, 128
    %6053 = vxpose.xlu0.b32.cont [14/16] 0.0, 128
    %6054 = vxpose.xlu0.b32.cont [15/16] 0.0, 128
    %6055 = vxpose.xlu0.b32.end [16/16] 0.0, 128
    %v6056 = vpop.trf.xlu0
    %v6057 = vpop.trf.xlu0
    %v6058 = vpop.trf.xlu0
    %v6059 = vpop.trf.xlu0
    %v6060 = vpop.trf.xlu0
    %v6061 = vpop.trf.xlu0
    %v6062 = vpop.trf.xlu0
    %v6063 = vpop.trf.xlu0
    %v6064 = vpop.trf.xlu0
    %v6065 = vpop.trf.xlu0
    %v6066 = vpop.trf.xlu0
    %v6067 = vpop.trf.xlu0
    %v6068 = vpop.trf.xlu0
    %v6069 = vpop.trf.xlu0
    %v6070 = vpop.trf.xlu0
    %v6071 = vpop.trf.xlu0
    %v6072 = vpack.c.bf16 %v6039, %v6039
    %v6073 = vpack.c.bf16 %v6056, %v6056
    %v6074 = vpack.c.bf16 %v6023, %v6023
    %v6075 = vpack.c.bf16 %v6017, %v6017
    %v6077 = vsel %vm1720, %v6073, 0
    %v6080 = vsel %vm1949, %v6074, 0
    %v6083 = vsel %vm1949, %v6075, 0
    %6085 = vmatprep.subr.bf16.mxu0 %v6083
    %6086 = vmatpush1.bf16.msra.mxu0 %v6080
    %6087 = vmatprep.subr.bf16.mxu0 0
    %6088 = vmatpush1.bf16.msra.mxu0 0
    %6089 = vmatprep.subr.bf16.mxu0 0
    %6090 = vmatpush1.bf16.msra.mxu0 0
    %6091 = vmatprep.subr.bf16.mxu0 0
    %6092 = vmatpush1.bf16.msra.mxu0 0
    %6093 = vmatprep.subr.bf16.mxu0 0
    %6094 = vmatpush1.bf16.msra.mxu0 0
    %6095 = vmatprep.subr.bf16.mxu0 0
    %6096 = vmatpush1.bf16.msra.mxu0 0
    %6097 = vmatprep.subr.bf16.mxu0 0
    %6098 = vmatpush1.bf16.msra.mxu0 0
    %6099 = vmatprep.subr.bf16.mxu0 0
    %6100 = vmatpush1.bf16.msra.mxu0 0
    %6101 = vmatprep.subr.bf16.mxu0 0
    %6102 = vmatpush1.bf16.msra.mxu0 0
    %6103 = vmatprep.subr.bf16.mxu0 0
    %6104 = vmatpush1.bf16.msra.mxu0 0
    %6105 = vmatprep.subr.bf16.mxu0 0
    %6106 = vmatpush1.bf16.msra.mxu0 0
    %6107 = vmatprep.subr.bf16.mxu0 0
    %6108 = vmatpush1.bf16.msra.mxu0 0
    %6109 = vmatprep.subr.bf16.mxu0 0
    %6110 = vmatpush1.bf16.msra.mxu0 0
    %6111 = vmatprep.subr.bf16.mxu0 0
    %6112 = vmatpush1.bf16.msra.mxu0 0
    %6113 = vmatprep.subr.bf16.mxu0 0
    %6114 = vmatpush1.bf16.msra.mxu0 0
    %6115 = vmatprep.subr.bf16.mxu0 0
    %6116 = vmatpush1.bf16.msra.mxu0 0
    %6117 = vmatprep.mubr.bf16.mxu0 0
    %6118 = vmatmul.mubr.bf16.gmra.mrb[0].mxu0 %v6077
    %v6119 = vpop.f32.mrb[0].mxu0
    %v6120 = vadd.f32 0.0, %v6119
    %v6121 = vpop.f32.mrb[0].mxu0
    %v6122 = vadd.f32 0.0, %v6121
    %v6123 = vpop.f32.mrb[0].mxu0
    %v6124 = vpop.f32.mrb[0].mxu0
    %6125 = vdwg.mxu0
    %v6126 = vpack.c.bf16 %v3416, %v3416
    %v6128 = vsel %vm1949, %v6126, 0
    %6130 = vmatprep.subr.bf16.mxu0 0
    %6131 = vmatpush1.bf16.msra.mxu0 %v6128
    %6132 = vmatprep.subr.bf16.mxu0 0
    %6133 = vmatpush1.bf16.msra.mxu0 0
    %6134 = vmatprep.subr.bf16.mxu0 0
    %6135 = vmatpush1.bf16.msra.mxu0 0
    %6136 = vmatprep.subr.bf16.mxu0 0
    %6137 = vmatpush1.bf16.msra.mxu0 0
    %6138 = vmatprep.subr.bf16.mxu0 0
    %6139 = vmatpush1.bf16.msra.mxu0 0
    %6140 = vmatprep.subr.bf16.mxu0 0
    %6141 = vmatpush1.bf16.msra.mxu0 0
    %6142 = vmatprep.subr.bf16.mxu0 0
    %6143 = vmatpush1.bf16.msra.mxu0 0
    %6144 = vmatprep.subr.bf16.mxu0 0
    %6145 = vmatpush1.bf16.msra.mxu0 0
    %6146 = vmatprep.subr.bf16.mxu0 0
    %6147 = vmatpush1.bf16.msra.mxu0 0
    %6148 = vmatprep.subr.bf16.mxu0 0
    %6149 = vmatpush1.bf16.msra.mxu0 0
    %6150 = vmatprep.subr.bf16.mxu0 0
    %6151 = vmatpush1.bf16.msra.mxu0 0
    %6152 = vmatprep.subr.bf16.mxu0 0
    %6153 = vmatpush1.bf16.msra.mxu0 0
    %6154 = vmatprep.subr.bf16.mxu0 0
    %6155 = vmatpush1.bf16.msra.mxu0 0
    %6156 = vmatprep.subr.bf16.mxu0 0
    %6157 = vmatpush1.bf16.msra.mxu0 0
    %6158 = vmatprep.subr.bf16.mxu0 0
    %6159 = vmatpush1.bf16.msra.mxu0 0
    %6160 = vmatprep.subr.bf16.mxu0 0
    %6161 = vmatpush1.bf16.msra.mxu0 0
    %6162 = vmatprep.mubr.bf16.mxu0 0
    %6163 = vmatmul.mubr.bf16.gmra.mrb[0].mxu0 %v6077
    %v6164 = vpop.f32.mrb[0].mxu0
    %v6165 = vadd.f32 0.0, %v6164
    %v6166 = vpop.f32.mrb[0].mxu0
    %v6167 = vpop.f32.mrb[0].mxu0
    %v6168 = vpop.f32.mrb[0].mxu0
    %6169 = vdwg.mxu0
    %v6170 = vpack.c.bf16 %v6165, %v6165
    %v6172 = vsel %vm1720, %v6170, 0
    %v6175 = vsel %vm1949, %v6072, 0
    %6177 = vmatprep.subr.bf16.mxu0 0
    %6178 = vmatpush1.bf16.msra.mxu0 %v6175
    %6179 = vmatprep.subr.bf16.mxu0 0
    %6180 = vmatpush1.bf16.msra.mxu0 0
    %6181 = vmatprep.subr.bf16.mxu0 0
    %6182 = vmatpush1.bf16.msra.mxu0 0
    %6183 = vmatprep.subr.bf16.mxu0 0
    %6184 = vmatpush1.bf16.msra.mxu0 0
    %6185 = vmatprep.subr.bf16.mxu0 0
    %6186 = vmatpush1.bf16.msra.mxu0 0
    %6187 = vmatprep.subr.bf16.mxu0 0
    %6188 = vmatpush1.bf16.msra.mxu0 0
    %6189 = vmatprep.subr.bf16.mxu0 0
    %6190 = vmatpush1.bf16.msra.mxu0 0
    %6191 = vmatprep.subr.bf16.mxu0 0
    %6192 = vmatpush1.bf16.msra.mxu0 0
    %6193 = vmatprep.subr.bf16.mxu0 0
    %6194 = vmatpush1.bf16.msra.mxu0 0
    %6195 = vmatprep.subr.bf16.mxu0 0
    %6196 = vmatpush1.bf16.msra.mxu0 0
    %6197 = vmatprep.subr.bf16.mxu0 0
    %6198 = vmatpush1.bf16.msra.mxu0 0
    %6199 = vmatprep.subr.bf16.mxu0 0
    %6200 = vmatpush1.bf16.msra.mxu0 0
    %6201 = vmatprep.subr.bf16.mxu0 0
    %6202 = vmatpush1.bf16.msra.mxu0 0
    %6203 = vmatprep.subr.bf16.mxu0 0
    %6204 = vmatpush1.bf16.msra.mxu0 0
    %6205 = vmatprep.subr.bf16.mxu0 0
    %6206 = vmatpush1.bf16.msra.mxu0 0
    %6207 = vmatprep.subr.bf16.mxu0 0
    %6208 = vmatpush1.bf16.msra.mxu0 0
    %6209 = vmatprep.mubr.bf16.mxu0 0
    %6210 = vmatmul.mubr.bf16.gmra.mrb[0].mxu0 %v6172
    %v6211 = vpop.f32.mrb[0].mxu0
    %v6212 = vadd.f32 0.0, %v6211
    %v6213 = vpop.f32.mrb[0].mxu0
    %v6214 = vpop.f32.mrb[0].mxu0
    %v6215 = vpop.f32.mrb[0].mxu0
    %6216 = vdwg.mxu0
    %v6217 = vsel %vm4910, %v6072, 0
    %v6219 = vsel %vm5046, %v6073, 0
    %6221 = vmatprep.subr.bf16.mxu0 0
    %6222 = vmatpush1.bf16.msra.mxu0 %v6219
    %6223 = vmatprep.subr.bf16.mxu0 0
    %6224 = vmatpush1.bf16.msra.mxu0 0
    %6225 = vmatprep.subr.bf16.mxu0 0
    %6226 = vmatpush1.bf16.msra.mxu0 0
    %6227 = vmatprep.subr.bf16.mxu0 0
    %6228 = vmatpush1.bf16.msra.mxu0 0
    %6229 = vmatprep.subr.bf16.mxu0 0
    %6230 = vmatpush1.bf16.msra.mxu0 0
    %6231 = vmatprep.subr.bf16.mxu0 0
    %6232 = vmatpush1.bf16.msra.mxu0 0
    %6233 = vmatprep.subr.bf16.mxu0 0
    %6234 = vmatpush1.bf16.msra.mxu0 0
    %6235 = vmatprep.subr.bf16.mxu0 0
    %6236 = vmatpush1.bf16.msra.mxu0 0
    %6237 = vmatprep.subr.bf16.mxu0 0
    %6238 = vmatpush1.bf16.msra.mxu0 0
    %6239 = vmatprep.subr.bf16.mxu0 0
    %6240 = vmatpush1.bf16.msra.mxu0 0
    %6241 = vmatprep.subr.bf16.mxu0 0
    %6242 = vmatpush1.bf16.msra.mxu0 0
    %6243 = vmatprep.subr.bf16.mxu0 0
    %6244 = vmatpush1.bf16.msra.mxu0 0
    %6245 = vmatprep.subr.bf16.mxu0 0
    %6246 = vmatpush1.bf16.msra.mxu0 0
    %6247 = vmatprep.subr.bf16.mxu0 0
    %6248 = vmatpush1.bf16.msra.mxu0 0
    %6249 = vmatprep.subr.bf16.mxu0 0
    %6250 = vmatpush1.bf16.msra.mxu0 0
    %6251 = vmatprep.subr.bf16.mxu0 0
    %6252 = vmatpush1.bf16.msra.mxu0 0
    %6253 = vmatprep.mubr.bf16.mxu0 0
    %6254 = vmatmul.mubr.bf16.gmra.mrb[0].mxu0 %v6217
    %v6255 = vpop.f32.mrb[0].mxu0
    %v6256 = vadd.f32 0.0, %v6255
    %v6257 = vpop.f32.mrb[0].mxu0
    %v6258 = vpop.f32.mrb[0].mxu0
    %v6259 = vpop.f32.mrb[0].mxu0
    %6260 = vdwg.mxu0
    %v6261 = vsub.f32 %v3416, %v6256
    %v6262 = vmul.f32 %v6261, %v6261
    %v6263 = vsel %vm1720, %v6262, 0.0
    %6264 = vadd.xlane.f32.xlu0 %v6263
    %v6265 = vpop.xlane.xlu0 %6264
    %v6266 = vrot.slane %v6265, 4
    %v6267 = vadd.f32 %v6265, %v6266
    %v6268 = vrot.slane %v6267, 2
    %v6269 = vadd.f32 %v6267, %v6268
    %v6270 = vrot.slane %v6269, 1
    %v6271 = vadd.f32 %v6269, %v6270
    %v6272 = vadd.f32 %v6271, 0.0
    %v6273 = vsub.f32 0.0, %v6039
    %v6274 = vadd.f32 %v6039, 1e-15
    %v6275 = vlog2.pop %v6274
    %v6276 = vmul.f32 %v6275, 0.6931472
    %v6277 = vmul.f32 %v6273, %v6276
    %v6278 = vsel %vm4910, %v6277, 0.0
    %6279 = vadd.xlane.f32.xlu0 %v6278
    %v6280 = vpop.xlane.xlu0 %6279
    %v6281 = vrot.slane %v6280, 4
    %v6282 = vadd.f32 %v6280, %v6281
    %v6283 = vrot.slane %v6282, 2
    %v6284 = vadd.f32 %v6282, %v6283
    %v6285 = vrot.slane %v6284, 1
    %v6286 = vadd.f32 %v6284, %v6285
    %v6287 = vadd.f32 %v6286, 0.0
    %v6288 = vsel %vm4910, %v5092, -inf
    %6289 = vmax.xlane.f32.xlu0 %v6288
    %v6290 = vpop.xlane.xlu0 %6289
    %v6291 = vsub.f32 %v5092, %v6290
    %v6292 = vmul.f32 %v6291, 1.442695
    %v6293 = vpow.pop %v6292
    %v6294 = vsel %vm4910, %v6293, 0.0
    %6295 = vadd.xlane.f32.xlu0 %v6294
    %v6296 = vpop.xlane.xlu0 %6295
    %v6297 = vrcp.pop %v6296
    %v6298 = vmul.f32 %v6293, %v6297
    %6299 = vxpose.xlu0.b32.start [1/16] %v6298, 128
    %6300 = vxpose.xlu0.b32.cont [2/16] 0.0, 128
    %6301 = vxpose.xlu0.b32.cont [3/16] 0.0, 128
    %6302 = vxpose.xlu0.b32.cont [4/16] 0.0, 128
    %6303 = vxpose.xlu0.b32.cont [5/16] 0.0, 128
    %6304 = vxpose.xlu0.b32.cont [6/16] 0.0, 128
    %6305 = vxpose.xlu0.b32.cont [7/16] 0.0, 128
    %6306 = vxpose.xlu0.b32.cont [8/16] 0.0, 128
    %6307 = vxpose.xlu0.b32.cont [9/16] 0.0, 128
    %6308 = vxpose.xlu0.b32.cont [10/16] 0.0, 128
    %6309 = vxpose.xlu0.b32.cont [11/16] 0.0, 128
    %6310 = vxpose.xlu0.b32.cont [12/16] 0.0, 128
    %6311 = vxpose.xlu0.b32.cont [13/16] 0.0, 128
    %6312 = vxpose.xlu0.b32.cont [14/16] 0.0, 128
    %6313 = vxpose.xlu0.b32.cont [15/16] 0.0, 128
    %6314 = vxpose.xlu0.b32.end [16/16] 0.0, 128
    %v6315 = vpop.trf.xlu0
    %v6316 = vpop.trf.xlu0
    %v6317 = vpop.trf.xlu0
    %v6318 = vpop.trf.xlu0
    %v6319 = vpop.trf.xlu0
    %v6320 = vpop.trf.xlu0
    %v6321 = vpop.trf.xlu0
    %v6322 = vpop.trf.xlu0
    %v6323 = vpop.trf.xlu0
    %v6324 = vpop.trf.xlu0
    %v6325 = vpop.trf.xlu0
    %v6326 = vpop.trf.xlu0
    %v6327 = vpop.trf.xlu0
    %v6328 = vpop.trf.xlu0
    %v6329 = vpop.trf.xlu0
    %v6330 = vpop.trf.xlu0
    %v6331 = vpack.c.bf16 %v6298, %v6298
    %v6332 = vpack.c.bf16 %v6315, %v6315
    %v6333 = vpack.c.bf16 %v6028, %v6028
    %v6334 = vpack.c.bf16 %v6018, %v6018
    %v6336 = vsel %vm1720, %v6332, 0
    %v6339 = vsel %vm1949, %v6333, 0
    %v6342 = vsel %vm1949, %v6334, 0
    %6344 = vmatprep.subr.bf16.mxu0 %v6342
    %6345 = vmatpush1.bf16.msra.mxu0 %v6339
    %6346 = vmatprep.subr.bf16.mxu0 0
    %6347 = vmatpush1.bf16.msra.mxu0 0
    %6348 = vmatprep.subr.bf16.mxu0 0
    %6349 = vmatpush1.bf16.msra.mxu0 0
    %6350 = vmatprep.subr.bf16.mxu0 0
    %6351 = vmatpush1.bf16.msra.mxu0 0
    %6352 = vmatprep.subr.bf16.mxu0 0
    %6353 = vmatpush1.bf16.msra.mxu0 0
    %6354 = vmatprep.subr.bf16.mxu0 0
    %6355 = vmatpush1.bf16.msra.mxu0 0
    %6356 = vmatprep.subr.bf16.mxu0 0
    %6357 = vmatpush1.bf16.msra.mxu0 0
    %6358 = vmatprep.subr.bf16.mxu0 0
    %6359 = vmatpush1.bf16.msra.mxu0 0
    %6360 = vmatprep.subr.bf16.mxu0 0
    %6361 = vmatpush1.bf16.msra.mxu0 0
    %6362 = vmatprep.subr.bf16.mxu0 0
    %6363 = vmatpush1.bf16.msra.mxu0 0
    %6364 = vmatprep.subr.bf16.mxu0 0
    %6365 = vmatpush1.bf16.msra.mxu0 0
    %6366 = vmatprep.subr.bf16.mxu0 0
    %6367 = vmatpush1.bf16.msra.mxu0 0
    %6368 = vmatprep.subr.bf16.mxu0 0
    %6369 = vmatpush1.bf16.msra.mxu0 0
    %6370 = vmatprep.subr.bf16.mxu0 0
    %6371 = vmatpush1.bf16.msra.mxu0 0
    %6372 = vmatprep.subr.bf16.mxu0 0
    %6373 = vmatpush1.bf16.msra.mxu0 0
    %6374 = vmatprep.subr.bf16.mxu0 0
    %6375 = vmatpush1.bf16.msra.mxu0 0
    %6376 = vmatprep.mubr.bf16.mxu0 0
    %6377 = vmatmul.mubr.bf16.gmra.mrb[0].mxu0 %v6336
    %v6378 = vpop.f32.mrb[0].mxu0
    %v6379 = vadd.f32 0.0, %v6378
    %v6380 = vpop.f32.mrb[0].mxu0
    %v6381 = vadd.f32 0.0, %v6380
    %v6382 = vpop.f32.mrb[0].mxu0
    %v6383 = vpop.f32.mrb[0].mxu0
    %6384 = vdwg.mxu0
    %v6385 = vpack.c.bf16 %v3758, %v3758
    %v6387 = vsel %vm1949, %v6385, 0
    %6389 = vmatprep.subr.bf16.mxu0 0
    %6390 = vmatpush1.bf16.msra.mxu0 %v6387
    %6391 = vmatprep.subr.bf16.mxu0 0
    %6392 = vmatpush1.bf16.msra.mxu0 0
    %6393 = vmatprep.subr.bf16.mxu0 0
    %6394 = vmatpush1.bf16.msra.mxu0 0
    %6395 = vmatprep.subr.bf16.mxu0 0
    %6396 = vmatpush1.bf16.msra.mxu0 0
    %6397 = vmatprep.subr.bf16.mxu0 0
    %6398 = vmatpush1.bf16.msra.mxu0 0
    %6399 = vmatprep.subr.bf16.mxu0 0
    %6400 = vmatpush1.bf16.msra.mxu0 0
    %6401 = vmatprep.subr.bf16.mxu0 0
    %6402 = vmatpush1.bf16.msra.mxu0 0
    %6403 = vmatprep.subr.bf16.mxu0 0
    %6404 = vmatpush1.bf16.msra.mxu0 0
    %6405 = vmatprep.subr.bf16.mxu0 0
    %6406 = vmatpush1.bf16.msra.mxu0 0
    %6407 = vmatprep.subr.bf16.mxu0 0
    %6408 = vmatpush1.bf16.msra.mxu0 0
    %6409 = vmatprep.subr.bf16.mxu0 0
    %6410 = vmatpush1.bf16.msra.mxu0 0
    %6411 = vmatprep.subr.bf16.mxu0 0
    %6412 = vmatpush1.bf16.msra.mxu0 0
    %6413 = vmatprep.subr.bf16.mxu0 0
    %6414 = vmatpush1.bf16.msra.mxu0 0
    %6415 = vmatprep.subr.bf16.mxu0 0
    %6416 = vmatpush1.bf16.msra.mxu0 0
    %6417 = vmatprep.subr.bf16.mxu0 0
    %6418 = vmatpush1.bf16.msra.mxu0 0
    %6419 = vmatprep.subr.bf16.mxu0 0
    %6420 = vmatpush1.bf16.msra.mxu0 0
    %6421 = vmatprep.mubr.bf16.mxu0 0
    %6422 = vmatmul.mubr.bf16.gmra.mrb[0].mxu0 %v6336
    %v6423 = vpop.f32.mrb[0].mxu0
    %v6424 = vadd.f32 0.0, %v6423
    %v6425 = vpop.f32.mrb[0].mxu0
    %v6426 = vpop.f32.mrb[0].mxu0
    %v6427 = vpop.f32.mrb[0].mxu0
    %6428 = vdwg.mxu0
    %v6429 = vpack.c.bf16 %v6424, %v6424
    %v6431 = vsel %vm1720, %v6429, 0
    %v6434 = vsel %vm1949, %v6331, 0
    %6436 = vmatprep.subr.bf16.mxu0 0
    %6437 = vmatpush1.bf16.msra.mxu0 %v6434
    %6438 = vmatprep.subr.bf16.mxu0 0
    %6439 = vmatpush1.bf16.msra.mxu0 0
    %6440 = vmatprep.subr.bf16.mxu0 0
    %6441 = vmatpush1.bf16.msra.mxu0 0
    %6442 = vmatprep.subr.bf16.mxu0 0
    %6443 = vmatpush1.bf16.msra.mxu0 0
    %6444 = vmatprep.subr.bf16.mxu0 0
    %6445 = vmatpush1.bf16.msra.mxu0 0
    %6446 = vmatprep.subr.bf16.mxu0 0
    %6447 = vmatpush1.bf16.msra.mxu0 0
    %6448 = vmatprep.subr.bf16.mxu0 0
    %6449 = vmatpush1.bf16.msra.mxu0 0
    %6450 = vmatprep.subr.bf16.mxu0 0
    %6451 = vmatpush1.bf16.msra.mxu0 0
    %6452 = vmatprep.subr.bf16.mxu0 0
    %6453 = vmatpush1.bf16.msra.mxu0 0
    %6454 = vmatprep.subr.bf16.mxu0 0
    %6455 = vmatpush1.bf16.msra.mxu0 0
    %6456 = vmatprep.subr.bf16.mxu0 0
    %6457 = vmatpush1.bf16.msra.mxu0 0
    %6458 = vmatprep.subr.bf16.mxu0 0
    %6459 = vmatpush1.bf16.msra.mxu0 0
    %6460 = vmatprep.subr.bf16.mxu0 0
    %6461 = vmatpush1.bf16.msra.mxu0 0
    %6462 = vmatprep.subr.bf16.mxu0 0
    %6463 = vmatpush1.bf16.msra.mxu0 0
    %6464 = vmatprep.subr.bf16.mxu0 0
    %6465 = vmatpush1.bf16.msra.mxu0 0
    %6466 = vmatprep.subr.bf16.mxu0 0
    %6467 = vmatpush1.bf16.msra.mxu0 0
    %6468 = vmatprep.mubr.bf16.mxu0 0
    %6469 = vmatmul.mubr.bf16.gmra.mrb[0].mxu0 %v6431
    %v6470 = vpop.f32.mrb[0].mxu0
    %v6471 = vadd.f32 0.0, %v6470
    %v6472 = vpop.f32.mrb[0].mxu0
    %v6473 = vpop.f32.mrb[0].mxu0
    %v6474 = vpop.f32.mrb[0].mxu0
    %6475 = vdwg.mxu0
    %v6476 = vsel %vm4910, %v6331, 0
    %v6478 = vsel %vm5046, %v6332, 0
    %6480 = vmatprep.subr.bf16.mxu0 0
    %6481 = vmatpush1.bf16.msra.mxu0 %v6478
    %6482 = vmatprep.subr.bf16.mxu0 0
    %6483 = vmatpush1.bf16.msra.mxu0 0
    %6484 = vmatprep.subr.bf16.mxu0 0
    %6485 = vmatpush1.bf16.msra.mxu0 0
    %6486 = vmatprep.subr.bf16.mxu0 0
    %6487 = vmatpush1.bf16.msra.mxu0 0
    %6488 = vmatprep.subr.bf16.mxu0 0
    %6489 = vmatpush1.bf16.msra.mxu0 0
    %6490 = vmatprep.subr.bf16.mxu0 0
    %6491 = vmatpush1.bf16.msra.mxu0 0
    %6492 = vmatprep.subr.bf16.mxu0 0
    %6493 = vmatpush1.bf16.msra.mxu0 0
    %6494 = vmatprep.subr.bf16.mxu0 0
    %6495 = vmatpush1.bf16.msra.mxu0 0
    %6496 = vmatprep.subr.bf16.mxu0 0
    %6497 = vmatpush1.bf16.msra.mxu0 0
    %6498 = vmatprep.subr.bf16.mxu0 0
    %6499 = vmatpush1.bf16.msra.mxu0 0
    %6500 = vmatprep.subr.bf16.mxu0 0
    %6501 = vmatpush1.bf16.msra.mxu0 0
    %6502 = vmatprep.subr.bf16.mxu0 0
    %6503 = vmatpush1.bf16.msra.mxu0 0
    %6504 = vmatprep.subr.bf16.mxu0 0
    %6505 = vmatpush1.bf16.msra.mxu0 0
    %6506 = vmatprep.subr.bf16.mxu0 0
    %6507 = vmatpush1.bf16.msra.mxu0 0
    %6508 = vmatprep.subr.bf16.mxu0 0
    %6509 = vmatpush1.bf16.msra.mxu0 0
    %6510 = vmatprep.subr.bf16.mxu0 0
    %6511 = vmatpush1.bf16.msra.mxu0 0
    %6512 = vmatprep.mubr.bf16.mxu0 0
    %6513 = vmatmul.mubr.bf16.gmra.mrb[0].mxu0 %v6476
    %v6514 = vpop.f32.mrb[0].mxu0
    %v6515 = vadd.f32 0.0, %v6514
    %v6516 = vpop.f32.mrb[0].mxu0
    %v6517 = vpop.f32.mrb[0].mxu0
    %v6518 = vpop.f32.mrb[0].mxu0
    %6519 = vdwg.mxu0
    %v6520 = vsub.f32 %v3758, %v6515
    %v6521 = vmul.f32 %v6520, %v6520
    %v6522 = vsel %vm1720, %v6521, 0.0
    %6523 = vadd.xlane.f32.xlu0 %v6522
    %v6524 = vpop.xlane.xlu0 %6523
    %v6525 = vrot.slane %v6524, 4
    %v6526 = vadd.f32 %v6524, %v6525
    %v6527 = vrot.slane %v6526, 2
    %v6528 = vadd.f32 %v6526, %v6527
    %v6529 = vrot.slane %v6528, 1
    %v6530 = vadd.f32 %v6528, %v6529
    %v6531 = vadd.f32 %v6272, %v6530
    %v6532 = vsub.f32 0.0, %v6298
    %v6533 = vadd.f32 %v6298, 1e-15
    %v6534 = vlog2.pop %v6533
    %v6535 = vmul.f32 %v6534, 0.6931472
    %v6536 = vmul.f32 %v6532, %v6535
    %v6537 = vsel %vm4910, %v6536, 0.0
    %6538 = vadd.xlane.f32.xlu0 %v6537
    %v6539 = vpop.xlane.xlu0 %6538
    %v6540 = vrot.slane %v6539, 4
    %v6541 = vadd.f32 %v6539, %v6540
    %v6542 = vrot.slane %v6541, 2
    %v6543 = vadd.f32 %v6541, %v6542
    %v6544 = vrot.slane %v6543, 1
    %v6545 = vadd.f32 %v6543, %v6544
    %v6546 = vadd.f32 %v6287, %v6545
    %v6547 = vrsqrt.pop %v6531
    %v6548 = vmul.f32 %v6531, %v6547
    %vm6549 = vcmp.eq.f32.partialorder %v6531, inf
    %v6550 = vsel %vm6549, %v6531, %v6548
    %vm6551 = vcmp.eq.f32.partialorder %v6531, 0.0
    %v6552 = vand.u32 %v6531, 2147483648
    %v6553 = vsel %vm6551, %v6552, %v6550
    %v6554 = vmul.f32 %v6553, 0.0078125
    %v6555 = vmul.f32 %v6546, 0.0625
    %vm6556 = vcmask 9216
    %v6557 = vsel %vm6556, %v6212, 0.0
    %6558 = vadd.xlane.f32.xlu0 %v6557
    %v6559 = vpop.xlane.xlu0 %6558
    %v6560 = vmax.f32 %v6559, 1.0
    %v6561 = vrcp.pop %v6560
    %v6562 = vmul.f32 %v6212, %v6561
    %v6563 = vpack.c.bf16 %v6562, %v6562
    %v6564 = vsel %vm6556, %v6471, 0.0
    %6565 = vadd.xlane.f32.xlu0 %v6564
    %v6566 = vpop.xlane.xlu0 %6565
    %v6567 = vmax.f32 %v6566, 1.0
    %v6568 = vrcp.pop %v6567
    %v6569 = vmul.f32 %v6471, %v6568
    %v6570 = vpack.c.bf16 %v6569, %v6569
    %v6571 = vld [vmem:[%s109] sm:$0xf]
    %v6572 = vld [vmem:[%s109 + $0x4] sm:$0xf]
    %v6573 = vld [vmem:[%s109 + $0x8] sm:$0xf]
    %v6574 = vld [vmem:[%s109 + $0xc] sm:$0xf]
    %v6575 = vld [vmem:[%s109 + $0x10] sm:$0xf]
    %v6576 = vld [vmem:[%s109 + $0x14] sm:$0xf]
    %v6577 = vld [vmem:[%s109 + $0x18] sm:$0xf]
    %v6578 = vld [vmem:[%s109 + $0x1c] sm:$0xf]
    %v6579 = vld [vmem:[%s109 + $0x20] sm:$0xf]
    %v6580 = vld [vmem:[%s109 + $0x24] sm:$0xf]
    %v6581 = vld [vmem:[%s109 + $0x28] sm:$0xf]
    %v6582 = vld [vmem:[%s109 + $0x2c] sm:$0xf]
    %v6583 = vld [vmem:[%s109 + $0x30] sm:$0xf]
    %v6584 = vld [vmem:[%s109 + $0x34] sm:$0xf]
    %v6585 = vld [vmem:[%s109 + $0x38] sm:$0xf]
    %v6586 = vld [vmem:[%s109 + $0x3c] sm:$0xf]
    %v6587 = vld [vmem:[%s109 + $0x40] sm:$0xf]
    %v6588 = vld [vmem:[%s109 + $0x44] sm:$0xf]
    %v6589 = vld [vmem:[%s109 + $0x48] sm:$0xf]
    %v6590 = vld [vmem:[%s109 + $0x4c] sm:$0xf]
    %v6591 = vld [vmem:[%s109 + $0x50] sm:$0xf]
    %v6592 = vld [vmem:[%s109 + $0x54] sm:$0xf]
    %v6593 = vld [vmem:[%s109 + $0x58] sm:$0xf]
    %v6594 = vld [vmem:[%s109 + $0x5c] sm:$0xf]
    %v6595 = vld [vmem:[%s109 + $0x60] sm:$0xf]
    %v6596 = vld [vmem:[%s109 + $0x64] sm:$0xf]
    %v6597 = vld [vmem:[%s109 + $0x68] sm:$0xf]
    %v6598 = vld [vmem:[%s109 + $0x6c] sm:$0xf]
    %v6599 = vld [vmem:[%s109 + $0x70] sm:$0xf]
    %v6600 = vld [vmem:[%s109 + $0x74] sm:$0xf]
    %v6601 = vld [vmem:[%s109 + $0x78] sm:$0xf]
    %v6602 = vld [vmem:[%s109 + $0x7c] sm:$0xf]
    %v6603 = vld [vmem:[%s109 + $0x80] sm:$0xf]
    %v6604 = vld [vmem:[%s109 + $0x84] sm:$0xf]
    %v6605 = vld [vmem:[%s109 + $0x88] sm:$0xf]
    %v6606 = vld [vmem:[%s109 + $0x8c] sm:$0xf]
    %v6607 = vld [vmem:[%s109 + $0x90] sm:$0xf]
    %v6608 = vld [vmem:[%s109 + $0x94] sm:$0xf]
    %v6609 = vld [vmem:[%s109 + $0x98] sm:$0xf]
    %v6610 = vld [vmem:[%s109 + $0x9c] sm:$0xf]
    %v6611 = vld [vmem:[%s109 + $0xa0] sm:$0xf]
    %v6612 = vld [vmem:[%s109 + $0xa4] sm:$0xf]
    %v6613 = vld [vmem:[%s109 + $0xa8] sm:$0xf]
    %v6614 = vld [vmem:[%s109 + $0xac] sm:$0xf]
    %v6615 = vld [vmem:[%s109 + $0xb0] sm:$0xf]
    %v6616 = vld [vmem:[%s109 + $0xb4] sm:$0xf]
    %v6617 = vld [vmem:[%s109 + $0xb8] sm:$0xf]
    %v6618 = vld [vmem:[%s109 + $0xbc] sm:$0xf]
    %v6619 = vld [vmem:[#allocation8] sm:$0x1]
    %v6620 = vpack.c.bf16 %v6120, %v6120
    %v6621 = vpack.c.bf16 %v6122, %v6122
    %v6623 = vsel %vm4910, %v6563, 0
    %v6626 = vsel %vm5046, %v6620, 0
    %v6629 = vsel %vm5046, %v6621, 0
    %6631 = vmatprep.subr.bf16.mxu0 %v6629
    %6632 = vmatpush1.bf16.msra.mxu0 %v6626
    %6633 = vmatprep.subr.bf16.mxu0 0
    %6634 = vmatpush1.bf16.msra.mxu0 0
    %6635 = vmatprep.subr.bf16.mxu0 0
    %6636 = vmatpush1.bf16.msra.mxu0 0
    %6637 = vmatprep.subr.bf16.mxu0 0
    %6638 = vmatpush1.bf16.msra.mxu0 0
    %6639 = vmatprep.subr.bf16.mxu0 0
    %6640 = vmatpush1.bf16.msra.mxu0 0
    %6641 = vmatprep.subr.bf16.mxu0 0
    %6642 = vmatpush1.bf16.msra.mxu0 0
    %6643 = vmatprep.subr.bf16.mxu0 0
    %6644 = vmatpush1.bf16.msra.mxu0 0
    %6645 = vmatprep.subr.bf16.mxu0 0
    %6646 = vmatpush1.bf16.msra.mxu0 0
    %6647 = vmatprep.subr.bf16.mxu0 0
    %6648 = vmatpush1.bf16.msra.mxu0 0
    %6649 = vmatprep.subr.bf16.mxu0 0
    %6650 = vmatpush1.bf16.msra.mxu0 0
    %6651 = vmatprep.subr.bf16.mxu0 0
    %6652 = vmatpush1.bf16.msra.mxu0 0
    %6653 = vmatprep.subr.bf16.mxu0 0
    %6654 = vmatpush1.bf16.msra.mxu0 0
    %6655 = vmatprep.subr.bf16.mxu0 0
    %6656 = vmatpush1.bf16.msra.mxu0 0
    %6657 = vmatprep.subr.bf16.mxu0 0
    %6658 = vmatpush1.bf16.msra.mxu0 0
    %6659 = vmatprep.subr.bf16.mxu0 0
    %6660 = vmatpush1.bf16.msra.mxu0 0
    %6661 = vmatprep.subr.bf16.mxu0 0
    %6662 = vmatpush1.bf16.msra.mxu0 0
    %6663 = vmatprep.mubr.bf16.mxu0 0
    %6664 = vmatmul.mubr.bf16.gmra.mrb[0].mxu0 %v6623
    %v6665 = vpop.f32.mrb[0].mxu0
    %v6666 = vadd.f32 0.0, %v6665
    %v6667 = vpop.f32.mrb[0].mxu0
    %v6668 = vadd.f32 0.0, %v6667
    %v6669 = vpop.f32.mrb[0].mxu0
    %v6670 = vpop.f32.mrb[0].mxu0
    %6671 = vdwg.mxu0
    %v6672 = vpack.c.bf16 %v6379, %v6379
    %v6673 = vpack.c.bf16 %v6381, %v6381
    %v6675 = vsel %vm4910, %v6570, 0
    %v6678 = vsel %vm5046, %v6672, 0
    %v6681 = vsel %vm5046, %v6673, 0
    %6683 = vmatprep.subr.bf16.mxu0 %v6681
    %6684 = vmatpush1.bf16.msra.mxu0 %v6678
    %6685 = vmatprep.subr.bf16.mxu0 0
    %6686 = vmatpush1.bf16.msra.mxu0 0
    %6687 = vmatprep.subr.bf16.mxu0 0
    %6688 = vmatpush1.bf16.msra.mxu0 0
    %6689 = vmatprep.subr.bf16.mxu0 0
    %6690 = vmatpush1.bf16.msra.mxu0 0
    %6691 = vmatprep.subr.bf16.mxu0 0
    %6692 = vmatpush1.bf16.msra.mxu0 0
    %6693 = vmatprep.subr.bf16.mxu0 0
    %6694 = vmatpush1.bf16.msra.mxu0 0
    %6695 = vmatprep.subr.bf16.mxu0 0
    %6696 = vmatpush1.bf16.msra.mxu0 0
    %6697 = vmatprep.subr.bf16.mxu0 0
    %6698 = vmatpush1.bf16.msra.mxu0 0
    %6699 = vmatprep.subr.bf16.mxu0 0
    %6700 = vmatpush1.bf16.msra.mxu0 0
    %6701 = vmatprep.subr.bf16.mxu0 0
    %6702 = vmatpush1.bf16.msra.mxu0 0
    %6703 = vmatprep.subr.bf16.mxu0 0
    %6704 = vmatpush1.bf16.msra.mxu0 0
    %6705 = vmatprep.subr.bf16.mxu0 0
    %6706 = vmatpush1.bf16.msra.mxu0 0
    %6707 = vmatprep.subr.bf16.mxu0 0
    %6708 = vmatpush1.bf16.msra.mxu0 0
    %6709 = vmatprep.subr.bf16.mxu0 0
    %6710 = vmatpush1.bf16.msra.mxu0 0
    %6711 = vmatprep.subr.bf16.mxu0 0
    %6712 = vmatpush1.bf16.msra.mxu0 0
    %6713 = vmatprep.subr.bf16.mxu0 0
    %6714 = vmatpush1.bf16.msra.mxu0 0
    %6715 = vmatprep.mubr.bf16.mxu0 0
    %6716 = vmatmul.mubr.bf16.gmra.mrb[0].mxu0 %v6675
    %v6717 = vpop.f32.mrb[0].mxu0
    %v6718 = vadd.f32 0.0, %v6717
    %v6719 = vpop.f32.mrb[0].mxu0
    %v6720 = vadd.f32 0.0, %v6719
    %v6721 = vpop.f32.mrb[0].mxu0
    %v6722 = vpop.f32.mrb[0].mxu0
    %6723 = vdwg.mxu0
    %v6724 = vpack.c.bf16 %v6666, %v6666
    %v6725 = vpack.c.bf16 %v6668, %v6668
    %v6750 = vunpack.c.l.b16 %v6595
    %v6751 = vunpack.c.l.b16 %v6596
    %v6752 = vunpack.c.l.b16 %v6597
    %v6753 = vunpack.c.l.b16 %v6598
    %v6754 = vunpack.c.l.b16 %v6599
    %v6755 = vunpack.c.l.b16 %v6600
    %v6756 = vunpack.c.l.b16 %v6601
    %v6757 = vunpack.c.l.b16 %v6602
    %v6758 = vunpack.c.l.b16 %v6603
    %v6759 = vunpack.c.l.b16 %v6604
    %v6760 = vunpack.c.l.b16 %v6605
    %v6761 = vunpack.c.l.b16 %v6606
    %v6762 = vunpack.c.l.b16 %v6607
    %v6763 = vunpack.c.l.b16 %v6608
    %v6764 = vunpack.c.l.b16 %v6609
    %v6765 = vunpack.c.l.b16 %v6610
    %v6766 = vunpack.c.l.b16 %v6611
    %v6767 = vunpack.c.l.b16 %v6612
    %v6768 = vunpack.c.l.b16 %v6613
    %v6769 = vunpack.c.l.b16 %v6614
    %v6770 = vunpack.c.l.b16 %v6615
    %v6771 = vunpack.c.l.b16 %v6616
    %v6772 = vunpack.c.l.b16 %v6617
    %v6773 = vunpack.c.l.b16 %v6618
    %v6774 = vpack.c.b16 %v6751, %v6750
    %v6775 = vpack.c.b16 %v6753, %v6752
    %v6776 = vpack.c.b16 %v6755, %v6754
    %v6777 = vpack.c.b16 %v6757, %v6756
    %v6778 = vpack.c.b16 %v6759, %v6758
    %v6779 = vpack.c.b16 %v6761, %v6760
    %v6780 = vpack.c.b16 %v6763, %v6762
    %v6781 = vpack.c.b16 %v6765, %v6764
    %v6782 = vpack.c.b16 %v6767, %v6766
    %v6783 = vpack.c.b16 %v6769, %v6768
    %v6784 = vpack.c.b16 %v6771, %v6770
    %v6785 = vpack.c.b16 %v6773, %v6772
    %v6798 = vsel %vm839, %v6621, 0
    %6800 = vmatprep.subr.bf16.mxu0 0
    %6801 = vmatpush1.bf16.msra.mxu0 %v6774
    %6802 = vmatprep.subr.bf16.mxu0 0
    %6803 = vmatpush1.bf16.msra.mxu0 %v6775
    %6804 = vmatprep.subr.bf16.mxu0 0
    %6805 = vmatpush1.bf16.msra.mxu0 %v6776
    %6806 = vmatprep.subr.bf16.mxu0 0
    %6807 = vmatpush1.bf16.msra.mxu0 %v6777
    %6808 = vmatprep.subr.bf16.mxu0 0
    %6809 = vmatpush1.bf16.msra.mxu0 %v6778
    %6810 = vmatprep.subr.bf16.mxu0 0
    %6811 = vmatpush1.bf16.msra.mxu0 %v6779
    %6812 = vmatprep.subr.bf16.mxu0 0
    %6813 = vmatpush1.bf16.msra.mxu0 %v6780
    %6814 = vmatprep.subr.bf16.mxu0 0
    %6815 = vmatpush1.bf16.msra.mxu0 %v6781
    %6816 = vmatprep.subr.bf16.mxu0 0
    %6817 = vmatpush1.bf16.msra.mxu0 %v6782
    %6818 = vmatprep.subr.bf16.mxu0 0
    %6819 = vmatpush1.bf16.msra.mxu0 %v6783
    %6820 = vmatprep.subr.bf16.mxu0 0
    %6821 = vmatpush1.bf16.msra.mxu0 %v6784
    %6822 = vmatprep.subr.bf16.mxu0 0
    %6823 = vmatpush1.bf16.msra.mxu0 %v6785
    %6824 = vmatprep.subr.bf16.mxu0 0
    %6825 = vmatpush1.bf16.msra.mxu0 0
    %6826 = vmatprep.subr.bf16.mxu0 0
    %6827 = vmatpush1.bf16.msra.mxu0 0
    %6828 = vmatprep.subr.bf16.mxu0 0
    %6829 = vmatpush1.bf16.msra.mxu0 0
    %6830 = vmatprep.subr.bf16.mxu0 0
    %6831 = vmatpush1.bf16.msra.mxu0 0
    %6832 = vmatprep.mubr.bf16.mxu0 %v6798
    %6833 = vmatmul.mubr.bf16.gmra.mrb[0].mxu0 %v6620
    %v6834 = vpop.f32.mrb[0].mxu0
    %v6835 = vadd.f32 0.0, %v6834
    %v6836 = vpop.f32.mrb[0].mxu0
    %v6837 = vpop.f32.mrb[0].mxu0
    %v6838 = vpop.f32.mrb[0].mxu0
    %6839 = vdwg.mxu0
    %v6864 = vunpack.c.l.b16 %v6571
    %v6865 = vunpack.c.l.b16 %v6572
    %v6866 = vunpack.c.l.b16 %v6573
    %v6867 = vunpack.c.l.b16 %v6574
    %v6868 = vunpack.c.l.b16 %v6575
    %v6869 = vunpack.c.l.b16 %v6576
    %v6870 = vunpack.c.l.b16 %v6577
    %v6871 = vunpack.c.l.b16 %v6578
    %v6872 = vunpack.c.l.b16 %v6579
    %v6873 = vunpack.c.l.b16 %v6580
    %v6874 = vunpack.c.l.b16 %v6581
    %v6875 = vunpack.c.l.b16 %v6582
    %v6876 = vunpack.c.l.b16 %v6583
    %v6877 = vunpack.c.l.b16 %v6584
    %v6878 = vunpack.c.l.b16 %v6585
    %v6879 = vunpack.c.l.b16 %v6586
    %v6880 = vunpack.c.l.b16 %v6587
    %v6881 = vunpack.c.l.b16 %v6588
    %v6882 = vunpack.c.l.b16 %v6589
    %v6883 = vunpack.c.l.b16 %v6590
    %v6884 = vunpack.c.l.b16 %v6591
    %v6885 = vunpack.c.l.b16 %v6592
    %v6886 = vunpack.c.l.b16 %v6593
    %v6887 = vunpack.c.l.b16 %v6594
    %v6888 = vpack.c.b16 %v6865, %v6864
    %v6889 = vpack.c.b16 %v6867, %v6866
    %v6890 = vpack.c.b16 %v6869, %v6868
    %v6891 = vpack.c.b16 %v6871, %v6870
    %v6892 = vpack.c.b16 %v6873, %v6872
    %v6893 = vpack.c.b16 %v6875, %v6874
    %v6894 = vpack.c.b16 %v6877, %v6876
    %v6895 = vpack.c.b16 %v6879, %v6878
    %v6896 = vpack.c.b16 %v6881, %v6880
    %v6897 = vpack.c.b16 %v6883, %v6882
    %v6898 = vpack.c.b16 %v6885, %v6884
    %v6899 = vpack.c.b16 %v6887, %v6886
    %v6913 = vsel %vm839, %v6725, 0
    %6915 = vmatprep.subr.bf16.mxu0 0
    %6916 = vmatpush1.bf16.msra.mxu0 %v6888
    %6917 = vmatprep.subr.bf16.mxu0 0
    %6918 = vmatpush1.bf16.msra.mxu0 %v6889
    %6919 = vmatprep.subr.bf16.mxu0 0
    %6920 = vmatpush1.bf16.msra.mxu0 %v6890
    %6921 = vmatprep.subr.bf16.mxu0 0
    %6922 = vmatpush1.bf16.msra.mxu0 %v6891
    %6923 = vmatprep.subr.bf16.mxu0 0
    %6924 = vmatpush1.bf16.msra.mxu0 %v6892
    %6925 = vmatprep.subr.bf16.mxu0 0
    %6926 = vmatpush1.bf16.msra.mxu0 %v6893
    %6927 = vmatprep.subr.bf16.mxu0 0
    %6928 = vmatpush1.bf16.msra.mxu0 %v6894
    %6929 = vmatprep.subr.bf16.mxu0 0
    %6930 = vmatpush1.bf16.msra.mxu0 %v6895
    %6931 = vmatprep.subr.bf16.mxu0 0
    %6932 = vmatpush1.bf16.msra.mxu0 %v6896
    %6933 = vmatprep.subr.bf16.mxu0 0
    %6934 = vmatpush1.bf16.msra.mxu0 %v6897
    %6935 = vmatprep.subr.bf16.mxu0 0
    %6936 = vmatpush1.bf16.msra.mxu0 %v6898
    %6937 = vmatprep.subr.bf16.mxu0 0
    %6938 = vmatpush1.bf16.msra.mxu0 %v6899
    %6939 = vmatprep.subr.bf16.mxu0 0
    %6940 = vmatpush1.bf16.msra.mxu0 0
    %6941 = vmatprep.subr.bf16.mxu0 0
    %6942 = vmatpush1.bf16.msra.mxu0 0
    %6943 = vmatprep.subr.bf16.mxu0 0
    %6944 = vmatpush1.bf16.msra.mxu0 0
    %6945 = vmatprep.subr.bf16.mxu0 0
    %6946 = vmatpush1.bf16.msra.mxu0 0
    %6947 = vmatprep.mubr.bf16.mxu0 %v6913
    %6948 = vmatmul.mubr.bf16.gmra.mrb[0].mxu0 %v6724
    %v6949 = vpop.f32.mrb[0].mxu0
    %v6950 = vadd.f32 %v6835, %v6949
    %v6951 = vpop.f32.mrb[0].mxu0
    %v6952 = vpop.f32.mrb[0].mxu0
    %v6953 = vpop.f32.mrb[0].mxu0
    %6954 = vdwg.mxu0
    %v6956 = vlaneseq
    %v6957 = vshrl.u32 %v6956, 7
    %v6958 = vsub.s32 0, %v6957
    %v6959 = vrot.slane %v6619, %v6958
    %v6961 = vadd.f32 %v6950, %v6959
    %v6962 = vmax.f32 %v6961, 0.0
    %v6963 = vpack.c.bf16 %v6718, %v6718
    %v6964 = vpack.c.bf16 %v6720, %v6720
    %v6965 = vsel %vm839, %v6673, 0
    %6967 = vmatprep.subr.bf16.mxu0 0
    %6968 = vmatpush1.bf16.msra.mxu0 %v6774
    %6969 = vmatprep.subr.bf16.mxu0 0
    %6970 = vmatpush1.bf16.msra.mxu0 %v6775
    %6971 = vmatprep.subr.bf16.mxu0 0
    %6972 = vmatpush1.bf16.msra.mxu0 %v6776
    %6973 = vmatprep.subr.bf16.mxu0 0
    %6974 = vmatpush1.bf16.msra.mxu0 %v6777
    %6975 = vmatprep.subr.bf16.mxu0 0
    %6976 = vmatpush1.bf16.msra.mxu0 %v6778
    %6977 = vmatprep.subr.bf16.mxu0 0
    %6978 = vmatpush1.bf16.msra.mxu0 %v6779
    %6979 = vmatprep.subr.bf16.mxu0 0
    %6980 = vmatpush1.bf16.msra.mxu0 %v6780
    %6981 = vmatprep.subr.bf16.mxu0 0
    %6982 = vmatpush1.bf16.msra.mxu0 %v6781
    %6983 = vmatprep.subr.bf16.mxu0 0
    %6984 = vmatpush1.bf16.msra.mxu0 %v6782
    %6985 = vmatprep.subr.bf16.mxu0 0
    %6986 = vmatpush1.bf16.msra.mxu0 %v6783
    %6987 = vmatprep.subr.bf16.mxu0 0
    %6988 = vmatpush1.bf16.msra.mxu0 %v6784
    %6989 = vmatprep.subr.bf16.mxu0 0
    %6990 = vmatpush1.bf16.msra.mxu0 %v6785
    %6991 = vmatprep.subr.bf16.mxu0 0
    %6992 = vmatpush1.bf16.msra.mxu0 0
    %6993 = vmatprep.subr.bf16.mxu0 0
    %6994 = vmatpush1.bf16.msra.mxu0 0
    %6995 = vmatprep.subr.bf16.mxu0 0
    %6996 = vmatpush1.bf16.msra.mxu0 0
    %6997 = vmatprep.subr.bf16.mxu0 0
    %6998 = vmatpush1.bf16.msra.mxu0 0
    %6999 = vmatprep.mubr.bf16.mxu0 %v6965
    %7000 = vmatmul.mubr.bf16.gmra.mrb[0].mxu0 %v6672
    %v7001 = vpop.f32.mrb[0].mxu0
    %v7002 = vadd.f32 0.0, %v7001
    %v7003 = vpop.f32.mrb[0].mxu0
    %v7004 = vpop.f32.mrb[0].mxu0
    %v7005 = vpop.f32.mrb[0].mxu0
    %7006 = vdwg.mxu0
    %v7008 = vsel %vm839, %v6964, 0
    %7010 = vmatprep.subr.bf16.mxu0 0
    %7011 = vmatpush1.bf16.msra.mxu0 %v6888
    %7012 = vmatprep.subr.bf16.mxu0 0
    %7013 = vmatpush1.bf16.msra.mxu0 %v6889
    %7014 = vmatprep.subr.bf16.mxu0 0
    %7015 = vmatpush1.bf16.msra.mxu0 %v6890
    %7016 = vmatprep.subr.bf16.mxu0 0
    %7017 = vmatpush1.bf16.msra.mxu0 %v6891
    %7018 = vmatprep.subr.bf16.mxu0 0
    %7019 = vmatpush1.bf16.msra.mxu0 %v6892
    %7020 = vmatprep.subr.bf16.mxu0 0
    %7021 = vmatpush1.bf16.msra.mxu0 %v6893
    %7022 = vmatprep.subr.bf16.mxu0 0
    %7023 = vmatpush1.bf16.msra.mxu0 %v6894
    %7024 = vmatprep.subr.bf16.mxu0 0
    %7025 = vmatpush1.bf16.msra.mxu0 %v6895
    %7026 = vmatprep.subr.bf16.mxu0 0
    %7027 = vmatpush1.bf16.msra.mxu0 %v6896
    %7028 = vmatprep.subr.bf16.mxu0 0
    %7029 = vmatpush1.bf16.msra.mxu0 %v6897
    %7030 = vmatprep.subr.bf16.mxu0 0
    %7031 = vmatpush1.bf16.msra.mxu0 %v6898
    %7032 = vmatprep.subr.bf16.mxu0 0
    %7033 = vmatpush1.bf16.msra.mxu0 %v6899
    %7034 = vmatprep.subr.bf16.mxu0 0
    %7035 = vmatpush1.bf16.msra.mxu0 0
    %7036 = vmatprep.subr.bf16.mxu0 0
    %7037 = vmatpush1.bf16.msra.mxu0 0
    %7038 = vmatprep.subr.bf16.mxu0 0
    %7039 = vmatpush1.bf16.msra.mxu0 0
    %7040 = vmatprep.subr.bf16.mxu0 0
    %7041 = vmatpush1.bf16.msra.mxu0 0
    %7042 = vmatprep.mubr.bf16.mxu0 %v7008
    %7043 = vmatmul.mubr.bf16.gmra.mrb[0].mxu0 %v6963
    %v7044 = vpop.f32.mrb[0].mxu0
    %v7045 = vadd.f32 %v7002, %v7044
    %v7046 = vpop.f32.mrb[0].mxu0
    %v7047 = vpop.f32.mrb[0].mxu0
    %v7048 = vpop.f32.mrb[0].mxu0
    %7049 = vdwg.mxu0
    %v7050 = vadd.f32 %v7045, %v6959
    %v7051 = vmax.f32 %v7050, 0.0
    %vm7052 = vcmask 517120
    %v7053 = vsel %vm7052, %v6962, 0.0
    %v7054 = vrot.slane %v7053, 4
    %v7055 = vadd.f32 %v7053, %v7054
    %v7056 = vrot.slane %v7055, 2
    %v7057 = vadd.f32 %v7055, %v7056
    %v7058 = vrot.slane %v7057, 1
    %v7059 = vadd.f32 %v7057, %v7058
    %v7060 = vadd.f32 %v7059, 0.0
    %v7061 = vsel %vm7052, %v7051, 0.0
    %v7062 = vrot.slane %v7061, 4
    %v7063 = vadd.f32 %v7061, %v7062
    %v7064 = vrot.slane %v7063, 2
    %v7065 = vadd.f32 %v7063, %v7064
    %v7066 = vrot.slane %v7065, 1
    %v7067 = vadd.f32 %v7065, %v7066
    %v7068 = vadd.f32 %v7060, %v7067
    %v7069 = vmul.f32 %v7068, 0.25
    %v7070 = vsub.f32 %v6962, %v7069
    %v7071 = vmul.f32 %v7070, %v7070
    %v7072 = vsel %vm7052, %v7071, 0.0
    %v7073 = vrot.slane %v7072, 4
    %v7074 = vadd.f32 %v7072, %v7073
    %v7075 = vrot.slane %v7074, 2
    %v7076 = vadd.f32 %v7074, %v7075
    %v7077 = vrot.slane %v7076, 1
    %v7078 = vadd.f32 %v7076, %v7077
    %v7079 = vadd.f32 %v7078, 0.0
    %v7080 = vsub.f32 %v7051, %v7069
    %v7081 = vmul.f32 %v7080, %v7080
    %v7082 = vsel %vm7052, %v7081, 0.0
    %v7083 = vrot.slane %v7082, 4
    %v7084 = vadd.f32 %v7082, %v7083
    %v7085 = vrot.slane %v7084, 2
    %v7086 = vadd.f32 %v7084, %v7085
    %v7087 = vrot.slane %v7086, 1
    %v7088 = vadd.f32 %v7086, %v7087
    %v7089 = vadd.f32 %v7079, %v7088
    %v7090 = vmul.f32 %v7089, 0.25
    %v7091 = vadd.f32 %v7090, 1e-05
    %v7092 = vrsqrt.pop %v7091
    %v7093 = vld [vmem:[#allocation10] sm:$0x1]
    %v7094 = vmul.f32 %v7092, %v7093
    %v7095 = vld [vmem:[#allocation11] sm:$0x1]
    %v7096 = vmul.f32 %v7069, %v7094
    %v7097 = vsub.f32 %v7095, %v7096
    %v7098 = vlaneseq
    %v7099 = vshrl.u32 %v7098, 7
    %v7100 = vsub.s32 0, %v7099
    %v7101 = vrot.slane %v7094, %v7100
    %v7102 = vmul.f32 %v6962, %v7101
    %v7104 = vlaneseq
    %v7105 = vshrl.u32 %v7104, 7
    %v7106 = vsub.s32 0, %v7105
    %v7107 = vrot.slane %v7097, %v7106
    %v7109 = vadd.f32 %v7102, %v7107
    %v7110 = vmul.f32 %v7051, %v7101
    %v7111 = vadd.f32 %v7110, %v7107
    %v7112 = vld [vmem:[%s117] sm:$0xf]
    %v7113 = vld [vmem:[%s117 + $0x4] sm:$0xf]
    %v7114 = vld [vmem:[%s117 + $0x8] sm:$0xf]
    %v7115 = vld [vmem:[%s117 + $0xc] sm:$0xf]
    %v7116 = vld [vmem:[%s117 + $0x10] sm:$0xf]
    %v7117 = vld [vmem:[%s117 + $0x14] sm:$0xf]
    %v7118 = vld [vmem:[%s117 + $0x18] sm:$0xf]
    %v7119 = vld [vmem:[%s117 + $0x1c] sm:$0xf]
    %v7120 = vld [vmem:[%s117 + $0x20] sm:$0xf]
    %v7121 = vld [vmem:[%s117 + $0x24] sm:$0xf]
    %v7122 = vld [vmem:[%s117 + $0x28] sm:$0xf]
    %v7123 = vld [vmem:[%s117 + $0x2c] sm:$0xf]
    %v7124 = vld [vmem:[%s117 + $0x30] sm:$0xf]
    %v7125 = vld [vmem:[%s117 + $0x34] sm:$0xf]
    %v7126 = vld [vmem:[%s117 + $0x38] sm:$0xf]
    %v7127 = vld [vmem:[%s117 + $0x3c] sm:$0xf]
    %v7128 = vld [vmem:[#allocation13] sm:$0x1]
    %v7129 = vpack.c.bf16 %v7109, %v7109
    %v7131 = vsel %vm5046, %v7129, 0
    %7133 = vmatprep.subr.bf16.mxu0 0
    %7134 = vmatpush1.bf16.msra.mxu0 %v7131
    %7135 = vmatprep.subr.bf16.mxu0 0
    %7136 = vmatpush1.bf16.msra.mxu0 0
    %7137 = vmatprep.subr.bf16.mxu0 0
    %7138 = vmatpush1.bf16.msra.mxu0 0
    %7139 = vmatprep.subr.bf16.mxu0 0
    %7140 = vmatpush1.bf16.msra.mxu0 0
    %7141 = vmatprep.subr.bf16.mxu0 0
    %7142 = vmatpush1.bf16.msra.mxu0 0
    %7143 = vmatprep.subr.bf16.mxu0 0
    %7144 = vmatpush1.bf16.msra.mxu0 0
    %7145 = vmatprep.subr.bf16.mxu0 0
    %7146 = vmatpush1.bf16.msra.mxu0 0
    %7147 = vmatprep.subr.bf16.mxu0 0
    %7148 = vmatpush1.bf16.msra.mxu0 0
    %7149 = vmatprep.subr.bf16.mxu0 0
    %7150 = vmatpush1.bf16.msra.mxu0 0
    %7151 = vmatprep.subr.bf16.mxu0 0
    %7152 = vmatpush1.bf16.msra.mxu0 0
    %7153 = vmatprep.subr.bf16.mxu0 0
    %7154 = vmatpush1.bf16.msra.mxu0 0
    %7155 = vmatprep.subr.bf16.mxu0 0
    %7156 = vmatpush1.bf16.msra.mxu0 0
    %7157 = vmatprep.subr.bf16.mxu0 0
    %7158 = vmatpush1.bf16.msra.mxu0 0
    %7159 = vmatprep.subr.bf16.mxu0 0
    %7160 = vmatpush1.bf16.msra.mxu0 0
    %7161 = vmatprep.subr.bf16.mxu0 0
    %7162 = vmatpush1.bf16.msra.mxu0 0
    %7163 = vmatprep.subr.bf16.mxu0 0
    %7164 = vmatpush1.bf16.msra.mxu0 0
    %7165 = vmatprep.mubr.bf16.mxu0 0
    %7166 = vmatmul.mubr.bf16.gmra.mrb[0].mxu0 %v6623
    %v7167 = vpop.f32.mrb[0].mxu0
    %v7168 = vadd.f32 0.0, %v7167
    %v7169 = vpop.f32.mrb[0].mxu0
    %v7170 = vpop.f32.mrb[0].mxu0
    %v7171 = vpop.f32.mrb[0].mxu0
    %7172 = vdwg.mxu0
    %v7173 = vpack.c.bf16 %v7111, %v7111
    %v7175 = vsel %vm5046, %v7173, 0
    %7177 = vmatprep.subr.bf16.mxu0 0
    %7178 = vmatpush1.bf16.msra.mxu0 %v7175
    %7179 = vmatprep.subr.bf16.mxu0 0
    %7180 = vmatpush1.bf16.msra.mxu0 0
    %7181 = vmatprep.subr.bf16.mxu0 0
    %7182 = vmatpush1.bf16.msra.mxu0 0
    %7183 = vmatprep.subr.bf16.mxu0 0
    %7184 = vmatpush1.bf16.msra.mxu0 0
    %7185 = vmatprep.subr.bf16.mxu0 0
    %7186 = vmatpush1.bf16.msra.mxu0 0
    %7187 = vmatprep.subr.bf16.mxu0 0
    %7188 = vmatpush1.bf16.msra.mxu0 0
    %7189 = vmatprep.subr.bf16.mxu0 0
    %7190 = vmatpush1.bf16.msra.mxu0 0
    %7191 = vmatprep.subr.bf16.mxu0 0
    %7192 = vmatpush1.bf16.msra.mxu0 0
    %7193 = vmatprep.subr.bf16.mxu0 0
    %7194 = vmatpush1.bf16.msra.mxu0 0
    %7195 = vmatprep.subr.bf16.mxu0 0
    %7196 = vmatpush1.bf16.msra.mxu0 0
    %7197 = vmatprep.subr.bf16.mxu0 0
    %7198 = vmatpush1.bf16.msra.mxu0 0
    %7199 = vmatprep.subr.bf16.mxu0 0
    %7200 = vmatpush1.bf16.msra.mxu0 0
    %7201 = vmatprep.subr.bf16.mxu0 0
    %7202 = vmatpush1.bf16.msra.mxu0 0
    %7203 = vmatprep.subr.bf16.mxu0 0
    %7204 = vmatpush1.bf16.msra.mxu0 0
    %7205 = vmatprep.subr.bf16.mxu0 0
    %7206 = vmatpush1.bf16.msra.mxu0 0
    %7207 = vmatprep.subr.bf16.mxu0 0
    %7208 = vmatpush1.bf16.msra.mxu0 0
    %7209 = vmatprep.mubr.bf16.mxu0 0
    %7210 = vmatmul.mubr.bf16.gmra.mrb[0].mxu0 %v6675
    %v7211 = vpop.f32.mrb[0].mxu0
    %v7212 = vadd.f32 0.0, %v7211
    %v7213 = vpop.f32.mrb[0].mxu0
    %v7214 = vpop.f32.mrb[0].mxu0
    %v7215 = vpop.f32.mrb[0].mxu0
    %7216 = vdwg.mxu0
    %v7217 = vpack.c.bf16 %v7168, %v7168
    %v7226 = vunpack.c.l.b16 %v7120
    %v7227 = vunpack.c.l.b16 %v7121
    %v7228 = vunpack.c.l.b16 %v7122
    %v7229 = vunpack.c.l.b16 %v7123
    %v7230 = vunpack.c.l.b16 %v7124
    %v7231 = vunpack.c.l.b16 %v7125
    %v7232 = vunpack.c.l.b16 %v7126
    %v7233 = vunpack.c.l.b16 %v7127
    %v7234 = vpack.c.b16 %v7227, %v7226
    %v7235 = vpack.c.b16 %v7229, %v7228
    %v7236 = vpack.c.b16 %v7231, %v7230
    %v7237 = vpack.c.b16 %v7233, %v7232
    %v7242 = vsel %vm839, %v7129, 0
    %7244 = vmatprep.subr.bf16.mxu0 0
    %7245 = vmatpush1.bf16.msra.mxu0 %v7234
    %7246 = vmatprep.subr.bf16.mxu0 0
    %7247 = vmatpush1.bf16.msra.mxu0 %v7235
    %7248 = vmatprep.subr.bf16.mxu0 0
    %7249 = vmatpush1.bf16.msra.mxu0 %v7236
    %7250 = vmatprep.subr.bf16.mxu0 0
    %7251 = vmatpush1.bf16.msra.mxu0 %v7237
    %7252 = vmatprep.subr.bf16.mxu0 0
    %7253 = vmatpush1.bf16.msra.mxu0 0
    %7254 = vmatprep.subr.bf16.mxu0 0
    %7255 = vmatpush1.bf16.msra.mxu0 0
    %7256 = vmatprep.subr.bf16.mxu0 0
    %7257 = vmatpush1.bf16.msra.mxu0 0
    %7258 = vmatprep.subr.bf16.mxu0 0
    %7259 = vmatpush1.bf16.msra.mxu0 0
    %7260 = vmatprep.subr.bf16.mxu0 0
    %7261 = vmatpush1.bf16.msra.mxu0 0
    %7262 = vmatprep.subr.bf16.mxu0 0
    %7263 = vmatpush1.bf16.msra.mxu0 0
    %7264 = vmatprep.subr.bf16.mxu0 0
    %7265 = vmatpush1.bf16.msra.mxu0 0
    %7266 = vmatprep.subr.bf16.mxu0 0
    %7267 = vmatpush1.bf16.msra.mxu0 0
    %7268 = vmatprep.subr.bf16.mxu0 0
    %7269 = vmatpush1.bf16.msra.mxu0 0
    %7270 = vmatprep.subr.bf16.mxu0 0
    %7271 = vmatpush1.bf16.msra.mxu0 0
    %7272 = vmatprep.subr.bf16.mxu0 0
    %7273 = vmatpush1.bf16.msra.mxu0 0
    %7274 = vmatprep.subr.bf16.mxu0 0
    %7275 = vmatpush1.bf16.msra.mxu0 0
    %7276 = vmatprep.mubr.bf16.mxu0 0
    %7277 = vmatmul.mubr.bf16.gmra.mrb[0].mxu0 %v7242
    %v7278 = vpop.f32.mrb[0].mxu0
    %v7279 = vadd.f32 0.0, %v7278
    %v7280 = vpop.f32.mrb[0].mxu0
    %v7281 = vpop.f32.mrb[0].mxu0
    %v7282 = vpop.f32.mrb[0].mxu0
    %7283 = vdwg.mxu0
    %v7292 = vunpack.c.l.b16 %v7112
    %v7293 = vunpack.c.l.b16 %v7113
    %v7294 = vunpack.c.l.b16 %v7114
    %v7295 = vunpack.c.l.b16 %v7115
    %v7296 = vunpack.c.l.b16 %v7116
    %v7297 = vunpack.c.l.b16 %v7117
    %v7298 = vunpack.c.l.b16 %v7118
    %v7299 = vunpack.c.l.b16 %v7119
    %v7300 = vpack.c.b16 %v7293, %v7292
    %v7301 = vpack.c.b16 %v7295, %v7294
    %v7302 = vpack.c.b16 %v7297, %v7296
    %v7303 = vpack.c.b16 %v7299, %v7298
    %v7309 = vsel %vm839, %v7217, 0
    %7311 = vmatprep.subr.bf16.mxu0 0
    %7312 = vmatpush1.bf16.msra.mxu0 %v7300
    %7313 = vmatprep.subr.bf16.mxu0 0
    %7314 = vmatpush1.bf16.msra.mxu0 %v7301
    %7315 = vmatprep.subr.bf16.mxu0 0
    %7316 = vmatpush1.bf16.msra.mxu0 %v7302
    %7317 = vmatprep.subr.bf16.mxu0 0
    %7318 = vmatpush1.bf16.msra.mxu0 %v7303
    %7319 = vmatprep.subr.bf16.mxu0 0
    %7320 = vmatpush1.bf16.msra.mxu0 0
    %7321 = vmatprep.subr.bf16.mxu0 0
    %7322 = vmatpush1.bf16.msra.mxu0 0
    %7323 = vmatprep.subr.bf16.mxu0 0
    %7324 = vmatpush1.bf16.msra.mxu0 0
    %7325 = vmatprep.subr.bf16.mxu0 0
    %7326 = vmatpush1.bf16.msra.mxu0 0
    %7327 = vmatprep.subr.bf16.mxu0 0
    %7328 = vmatpush1.bf16.msra.mxu0 0
    %7329 = vmatprep.subr.bf16.mxu0 0
    %7330 = vmatpush1.bf16.msra.mxu0 0
    %7331 = vmatprep.subr.bf16.mxu0 0
    %7332 = vmatpush1.bf16.msra.mxu0 0
    %7333 = vmatprep.subr.bf16.mxu0 0
    %7334 = vmatpush1.bf16.msra.mxu0 0
    %7335 = vmatprep.subr.bf16.mxu0 0
    %7336 = vmatpush1.bf16.msra.mxu0 0
    %7337 = vmatprep.subr.bf16.mxu0 0
    %7338 = vmatpush1.bf16.msra.mxu0 0
    %7339 = vmatprep.subr.bf16.mxu0 0
    %7340 = vmatpush1.bf16.msra.mxu0 0
    %7341 = vmatprep.subr.bf16.mxu0 0
    %7342 = vmatpush1.bf16.msra.mxu0 0
    %7343 = vmatprep.mubr.bf16.mxu0 0
    %7344 = vmatmul.mubr.bf16.gmra.mrb[0].mxu0 %v7309
    %v7345 = vpop.f32.mrb[0].mxu0
    %v7346 = vadd.f32 %v7279, %v7345
    %v7347 = vpop.f32.mrb[0].mxu0
    %v7348 = vpop.f32.mrb[0].mxu0
    %v7349 = vpop.f32.mrb[0].mxu0
    %7350 = vdwg.mxu0
    %v7352 = vlaneseq
    %v7353 = vshrl.u32 %v7352, 7
    %v7354 = vsub.s32 0, %v7353
    %v7355 = vrot.slane %v7128, %v7354
    %v7357 = vadd.f32 %v7346, %v7355
    %v7358 = vmax.f32 %v7357, 0.0
    %v7359 = vpack.c.bf16 %v7212, %v7212
    %v7360 = vsel %vm839, %v7173, 0
    %7362 = vmatprep.subr.bf16.mxu0 0
    %7363 = vmatpush1.bf16.msra.mxu0 %v7234
    %7364 = vmatprep.subr.bf16.mxu0 0
    %7365 = vmatpush1.bf16.msra.mxu0 %v7235
    %7366 = vmatprep.subr.bf16.mxu0 0
    %7367 = vmatpush1.bf16.msra.mxu0 %v7236
    %7368 = vmatprep.subr.bf16.mxu0 0
    %7369 = vmatpush1.bf16.msra.mxu0 %v7237
    %7370 = vmatprep.subr.bf16.mxu0 0
    %7371 = vmatpush1.bf16.msra.mxu0 0
    %7372 = vmatprep.subr.bf16.mxu0 0
    %7373 = vmatpush1.bf16.msra.mxu0 0
    %7374 = vmatprep.subr.bf16.mxu0 0
    %7375 = vmatpush1.bf16.msra.mxu0 0
    %7376 = vmatprep.subr.bf16.mxu0 0
    %7377 = vmatpush1.bf16.msra.mxu0 0
    %7378 = vmatprep.subr.bf16.mxu0 0
    %7379 = vmatpush1.bf16.msra.mxu0 0
    %7380 = vmatprep.subr.bf16.mxu0 0
    %7381 = vmatpush1.bf16.msra.mxu0 0
    %7382 = vmatprep.subr.bf16.mxu0 0
    %7383 = vmatpush1.bf16.msra.mxu0 0
    %7384 = vmatprep.subr.bf16.mxu0 0
    %7385 = vmatpush1.bf16.msra.mxu0 0
    %7386 = vmatprep.subr.bf16.mxu0 0
    %7387 = vmatpush1.bf16.msra.mxu0 0
    %7388 = vmatprep.subr.bf16.mxu0 0
    %7389 = vmatpush1.bf16.msra.mxu0 0
    %7390 = vmatprep.subr.bf16.mxu0 0
    %7391 = vmatpush1.bf16.msra.mxu0 0
    %7392 = vmatprep.subr.bf16.mxu0 0
    %7393 = vmatpush1.bf16.msra.mxu0 0
    %7394 = vmatprep.mubr.bf16.mxu0 0
    %7395 = vmatmul.mubr.bf16.gmra.mrb[0].mxu0 %v7360
    %v7396 = vpop.f32.mrb[0].mxu0
    %v7397 = vadd.f32 0.0, %v7396
    %v7398 = vpop.f32.mrb[0].mxu0
    %v7399 = vpop.f32.mrb[0].mxu0
    %v7400 = vpop.f32.mrb[0].mxu0
    %7401 = vdwg.mxu0
    %v7403 = vsel %vm839, %v7359, 0
    %7405 = vmatprep.subr.bf16.mxu0 0
    %7406 = vmatpush1.bf16.msra.mxu0 %v7300
    %7407 = vmatprep.subr.bf16.mxu0 0
    %7408 = vmatpush1.bf16.msra.mxu0 %v7301
    %7409 = vmatprep.subr.bf16.mxu0 0
    %7410 = vmatpush1.bf16.msra.mxu0 %v7302
    %7411 = vmatprep.subr.bf16.mxu0 0
    %7412 = vmatpush1.bf16.msra.mxu0 %v7303
    %7413 = vmatprep.subr.bf16.mxu0 0
    %7414 = vmatpush1.bf16.msra.mxu0 0
    %7415 = vmatprep.subr.bf16.mxu0 0
    %7416 = vmatpush1.bf16.msra.mxu0 0
    %7417 = vmatprep.subr.bf16.mxu0 0
    %7418 = vmatpush1.bf16.msra.mxu0 0
    %7419 = vmatprep.subr.bf16.mxu0 0
    %7420 = vmatpush1.bf16.msra.mxu0 0
    %7421 = vmatprep.subr.bf16.mxu0 0
    %7422 = vmatpush1.bf16.msra.mxu0 0
    %7423 = vmatprep.subr.bf16.mxu0 0
    %7424 = vmatpush1.bf16.msra.mxu0 0
    %7425 = vmatprep.subr.bf16.mxu0 0
    %7426 = vmatpush1.bf16.msra.mxu0 0
    %7427 = vmatprep.subr.bf16.mxu0 0
    %7428 = vmatpush1.bf16.msra.mxu0 0
    %7429 = vmatprep.subr.bf16.mxu0 0
    %7430 = vmatpush1.bf16.msra.mxu0 0
    %7431 = vmatprep.subr.bf16.mxu0 0
    %7432 = vmatpush1.bf16.msra.mxu0 0
    %7433 = vmatprep.subr.bf16.mxu0 0
    %7434 = vmatpush1.bf16.msra.mxu0 0
    %7435 = vmatprep.subr.bf16.mxu0 0
    %7436 = vmatpush1.bf16.msra.mxu0 0
    %7437 = vmatprep.mubr.bf16.mxu0 0
    %7438 = vmatmul.mubr.bf16.gmra.mrb[0].mxu0 %v7403
    %v7439 = vpop.f32.mrb[0].mxu0
    %v7440 = vadd.f32 %v7397, %v7439
    %v7441 = vpop.f32.mrb[0].mxu0
    %v7442 = vpop.f32.mrb[0].mxu0
    %v7443 = vpop.f32.mrb[0].mxu0
    %7444 = vdwg.mxu0
    %v7445 = vadd.f32 %v7440, %v7355
    %v7446 = vmax.f32 %v7445, 0.0
    %v7447 = vsel %vm7052, %v7358, 0.0
    %v7448 = vrot.slane %v7447, 4
    %v7449 = vadd.f32 %v7447, %v7448
    %v7450 = vrot.slane %v7449, 2
    %v7451 = vadd.f32 %v7449, %v7450
    %v7452 = vrot.slane %v7451, 1
    %v7453 = vadd.f32 %v7451, %v7452
    %v7454 = vadd.f32 %v7453, 0.0
    %v7455 = vsel %vm7052, %v7446, 0.0
    %v7456 = vrot.slane %v7455, 4
    %v7457 = vadd.f32 %v7455, %v7456
    %v7458 = vrot.slane %v7457, 2
    %v7459 = vadd.f32 %v7457, %v7458
    %v7460 = vrot.slane %v7459, 1
    %v7461 = vadd.f32 %v7459, %v7460
    %v7462 = vadd.f32 %v7454, %v7461
    %v7463 = vmul.f32 %v7462, 0.25
    %v7464 = vsub.f32 %v7358, %v7463
    %v7465 = vmul.f32 %v7464, %v7464
    %v7466 = vsel %vm7052, %v7465, 0.0
    %v7467 = vrot.slane %v7466, 4
    %v7468 = vadd.f32 %v7466, %v7467
    %v7469 = vrot.slane %v7468, 2
    %v7470 = vadd.f32 %v7468, %v7469
    %v7471 = vrot.slane %v7470, 1
    %v7472 = vadd.f32 %v7470, %v7471
    %v7473 = vadd.f32 %v7472, 0.0
    %v7474 = vsub.f32 %v7446, %v7463
    %v7475 = vmul.f32 %v7474, %v7474
    %v7476 = vsel %vm7052, %v7475, 0.0
    %v7477 = vrot.slane %v7476, 4
    %v7478 = vadd.f32 %v7476, %v7477
    %v7479 = vrot.slane %v7478, 2
    %v7480 = vadd.f32 %v7478, %v7479
    %v7481 = vrot.slane %v7480, 1
    %v7482 = vadd.f32 %v7480, %v7481
    %v7483 = vadd.f32 %v7473, %v7482
    %v7484 = vmul.f32 %v7483, 0.25
    %v7485 = vadd.f32 %v7484, 1e-05
    %v7486 = vrsqrt.pop %v7485
    %v7487 = vld [vmem:[#allocation14] sm:$0x1]
    %v7488 = vmul.f32 %v7486, %v7487
    %v7489 = vld [vmem:[#allocation16] sm:$0x1]
    %v7490 = vmul.f32 %v7463, %v7488
    %v7491 = vsub.f32 %v7489, %v7490
    %v7492 = vlaneseq
    %v7493 = vshrl.u32 %v7492, 7
    %v7494 = vsub.s32 0, %v7493
    %v7495 = vrot.slane %v7488, %v7494
    %v7496 = vmul.f32 %v7358, %v7495
    %v7498 = vlaneseq
    %v7499 = vshrl.u32 %v7498, 7
    %v7500 = vsub.s32 0, %v7499
    %v7501 = vrot.slane %v7491, %v7500
    %v7503 = vadd.f32 %v7496, %v7501
    %v7504 = vmul.f32 %v7446, %v7495
    %v7505 = vadd.f32 %v7504, %v7501
    %v7506 = vld [vmem:[%s125] sm:$0xf]
    %v7507 = vld [vmem:[%s125 + $0x4] sm:$0xf]
    %v7508 = vld [vmem:[%s125 + $0x8] sm:$0xf]
    %v7509 = vld [vmem:[%s125 + $0xc] sm:$0xf]
    %v7510 = vld [vmem:[%s125 + $0x10] sm:$0xf]
    %v7511 = vld [vmem:[%s125 + $0x14] sm:$0xf]
    %v7512 = vld [vmem:[%s125 + $0x18] sm:$0xf]
    %v7513 = vld [vmem:[%s125 + $0x1c] sm:$0xf]
    %v7514 = vld [vmem:[%s125 + $0x20] sm:$0xf]
    %v7515 = vld [vmem:[%s125 + $0x24] sm:$0xf]
    %v7516 = vld [vmem:[%s125 + $0x28] sm:$0xf]
    %v7517 = vld [vmem:[%s125 + $0x2c] sm:$0xf]
    %v7518 = vld [vmem:[%s125 + $0x30] sm:$0xf]
    %v7519 = vld [vmem:[%s125 + $0x34] sm:$0xf]
    %v7520 = vld [vmem:[%s125 + $0x38] sm:$0xf]
    %v7521 = vld [vmem:[%s125 + $0x3c] sm:$0xf]
    %v7522 = vld [vmem:[#allocation17] sm:$0x1]
    %v7523 = vpack.c.bf16 %v7503, %v7503
    %v7525 = vsel %vm5046, %v7523, 0
    %7527 = vmatprep.subr.bf16.mxu0 0
    %7528 = vmatpush1.bf16.msra.mxu0 %v7525
    %7529 = vmatprep.subr.bf16.mxu0 0
    %7530 = vmatpush1.bf16.msra.mxu0 0
    %7531 = vmatprep.subr.bf16.mxu0 0
    %7532 = vmatpush1.bf16.msra.mxu0 0
    %7533 = vmatprep.subr.bf16.mxu0 0
    %7534 = vmatpush1.bf16.msra.mxu0 0
    %7535 = vmatprep.subr.bf16.mxu0 0
    %7536 = vmatpush1.bf16.msra.mxu0 0
    %7537 = vmatprep.subr.bf16.mxu0 0
    %7538 = vmatpush1.bf16.msra.mxu0 0
    %7539 = vmatprep.subr.bf16.mxu0 0
    %7540 = vmatpush1.bf16.msra.mxu0 0
    %7541 = vmatprep.subr.bf16.mxu0 0
    %7542 = vmatpush1.bf16.msra.mxu0 0
    %7543 = vmatprep.subr.bf16.mxu0 0
    %7544 = vmatpush1.bf16.msra.mxu0 0
    %7545 = vmatprep.subr.bf16.mxu0 0
    %7546 = vmatpush1.bf16.msra.mxu0 0
    %7547 = vmatprep.subr.bf16.mxu0 0
    %7548 = vmatpush1.bf16.msra.mxu0 0
    %7549 = vmatprep.subr.bf16.mxu0 0
    %7550 = vmatpush1.bf16.msra.mxu0 0
    %7551 = vmatprep.subr.bf16.mxu0 0
    %7552 = vmatpush1.bf16.msra.mxu0 0
    %7553 = vmatprep.subr.bf16.mxu0 0
    %7554 = vmatpush1.bf16.msra.mxu0 0
    %7555 = vmatprep.subr.bf16.mxu0 0
    %7556 = vmatpush1.bf16.msra.mxu0 0
    %7557 = vmatprep.subr.bf16.mxu0 0
    %7558 = vmatpush1.bf16.msra.mxu0 0
    %7559 = vmatprep.mubr.bf16.mxu0 0
    %7560 = vmatmul.mubr.bf16.gmra.mrb[0].mxu0 %v6623
    %v7561 = vpop.f32.mrb[0].mxu0
    %v7562 = vadd.f32 0.0, %v7561
    %v7563 = vpop.f32.mrb[0].mxu0
    %v7564 = vpop.f32.mrb[0].mxu0
    %v7565 = vpop.f32.mrb[0].mxu0
    %7566 = vdwg.mxu0
    %v7567 = vpack.c.bf16 %v7505, %v7505
    %v7569 = vsel %vm5046, %v7567, 0
    %7571 = vmatprep.subr.bf16.mxu0 0
    %7572 = vmatpush1.bf16.msra.mxu0 %v7569
    %7573 = vmatprep.subr.bf16.mxu0 0
    %7574 = vmatpush1.bf16.msra.mxu0 0
    %7575 = vmatprep.subr.bf16.mxu0 0
    %7576 = vmatpush1.bf16.msra.mxu0 0
    %7577 = vmatprep.subr.bf16.mxu0 0
    %7578 = vmatpush1.bf16.msra.mxu0 0
    %7579 = vmatprep.subr.bf16.mxu0 0
    %7580 = vmatpush1.bf16.msra.mxu0 0
    %7581 = vmatprep.subr.bf16.mxu0 0
    %7582 = vmatpush1.bf16.msra.mxu0 0
    %7583 = vmatprep.subr.bf16.mxu0 0
    %7584 = vmatpush1.bf16.msra.mxu0 0
    %7585 = vmatprep.subr.bf16.mxu0 0
    %7586 = vmatpush1.bf16.msra.mxu0 0
    %7587 = vmatprep.subr.bf16.mxu0 0
    %7588 = vmatpush1.bf16.msra.mxu0 0
    %7589 = vmatprep.subr.bf16.mxu0 0
    %7590 = vmatpush1.bf16.msra.mxu0 0
    %7591 = vmatprep.subr.bf16.mxu0 0
    %7592 = vmatpush1.bf16.msra.mxu0 0
    %7593 = vmatprep.subr.bf16.mxu0 0
    %7594 = vmatpush1.bf16.msra.mxu0 0
    %7595 = vmatprep.subr.bf16.mxu0 0
    %7596 = vmatpush1.bf16.msra.mxu0 0
    %7597 = vmatprep.subr.bf16.mxu0 0
    %7598 = vmatpush1.bf16.msra.mxu0 0
    %7599 = vmatprep.subr.bf16.mxu0 0
    %7600 = vmatpush1.bf16.msra.mxu0 0
    %7601 = vmatprep.subr.bf16.mxu0 0
    %7602 = vmatpush1.bf16.msra.mxu0 0
    %7603 = vmatprep.mubr.bf16.mxu0 0
    %7604 = vmatmul.mubr.bf16.gmra.mrb[0].mxu0 %v6675
    %v7605 = vpop.f32.mrb[0].mxu0
    %v7606 = vadd.f32 0.0, %v7605
    %v7607 = vpop.f32.mrb[0].mxu0
    %v7608 = vpop.f32.mrb[0].mxu0
    %v7609 = vpop.f32.mrb[0].mxu0
    %7610 = vdwg.mxu0
    %v7611 = vpack.c.bf16 %v7562, %v7562
    %v7620 = vunpack.c.l.b16 %v7514
    %v7621 = vunpack.c.l.b16 %v7515
    %v7622 = vunpack.c.l.b16 %v7516
    %v7623 = vunpack.c.l.b16 %v7517
    %v7624 = vunpack.c.l.b16 %v7518
    %v7625 = vunpack.c.l.b16 %v7519
    %v7626 = vunpack.c.l.b16 %v7520
    %v7627 = vunpack.c.l.b16 %v7521
    %v7628 = vpack.c.b16 %v7621, %v7620
    %v7629 = vpack.c.b16 %v7623, %v7622
    %v7630 = vpack.c.b16 %v7625, %v7624
    %v7631 = vpack.c.b16 %v7627, %v7626
    %v7636 = vsel %vm839, %v7523, 0
    %7638 = vmatprep.subr.bf16.mxu0 0
    %7639 = vmatpush1.bf16.msra.mxu0 %v7628
    %7640 = vmatprep.subr.bf16.mxu0 0
    %7641 = vmatpush1.bf16.msra.mxu0 %v7629
    %7642 = vmatprep.subr.bf16.mxu0 0
    %7643 = vmatpush1.bf16.msra.mxu0 %v7630
    %7644 = vmatprep.subr.bf16.mxu0 0
    %7645 = vmatpush1.bf16.msra.mxu0 %v7631
    %7646 = vmatprep.subr.bf16.mxu0 0
    %7647 = vmatpush1.bf16.msra.mxu0 0
    %7648 = vmatprep.subr.bf16.mxu0 0
    %7649 = vmatpush1.bf16.msra.mxu0 0
    %7650 = vmatprep.subr.bf16.mxu0 0
    %7651 = vmatpush1.bf16.msra.mxu0 0
    %7652 = vmatprep.subr.bf16.mxu0 0
    %7653 = vmatpush1.bf16.msra.mxu0 0
    %7654 = vmatprep.subr.bf16.mxu0 0
    %7655 = vmatpush1.bf16.msra.mxu0 0
    %7656 = vmatprep.subr.bf16.mxu0 0
    %7657 = vmatpush1.bf16.msra.mxu0 0
    %7658 = vmatprep.subr.bf16.mxu0 0
    %7659 = vmatpush1.bf16.msra.mxu0 0
    %7660 = vmatprep.subr.bf16.mxu0 0
    %7661 = vmatpush1.bf16.msra.mxu0 0
    %7662 = vmatprep.subr.bf16.mxu0 0
    %7663 = vmatpush1.bf16.msra.mxu0 0
    %7664 = vmatprep.subr.bf16.mxu0 0
    %7665 = vmatpush1.bf16.msra.mxu0 0
    %7666 = vmatprep.subr.bf16.mxu0 0
    %7667 = vmatpush1.bf16.msra.mxu0 0
    %7668 = vmatprep.subr.bf16.mxu0 0
    %7669 = vmatpush1.bf16.msra.mxu0 0
    %7670 = vmatprep.mubr.bf16.mxu0 0
    %7671 = vmatmul.mubr.bf16.gmra.mrb[0].mxu0 %v7636
    %v7672 = vpop.f32.mrb[0].mxu0
    %v7673 = vadd.f32 0.0, %v7672
    %v7674 = vpop.f32.mrb[0].mxu0
    %v7675 = vpop.f32.mrb[0].mxu0
    %v7676 = vpop.f32.mrb[0].mxu0
    %7677 = vdwg.mxu0
    %v7686 = vunpack.c.l.b16 %v7506
    %v7687 = vunpack.c.l.b16 %v7507
    %v7688 = vunpack.c.l.b16 %v7508
    %v7689 = vunpack.c.l.b16 %v7509
    %v7690 = vunpack.c.l.b16 %v7510
    %v7691 = vunpack.c.l.b16 %v7511
    %v7692 = vunpack.c.l.b16 %v7512
    %v7693 = vunpack.c.l.b16 %v7513
    %v7694 = vpack.c.b16 %v7687, %v7686
    %v7695 = vpack.c.b16 %v7689, %v7688
    %v7696 = vpack.c.b16 %v7691, %v7690
    %v7697 = vpack.c.b16 %v7693, %v7692
    %v7703 = vsel %vm839, %v7611, 0
    %7705 = vmatprep.subr.bf16.mxu0 0
    %7706 = vmatpush1.bf16.msra.mxu0 %v7694
    %7707 = vmatprep.subr.bf16.mxu0 0
    %7708 = vmatpush1.bf16.msra.mxu0 %v7695
    %7709 = vmatprep.subr.bf16.mxu0 0
    %7710 = vmatpush1.bf16.msra.mxu0 %v7696
    %7711 = vmatprep.subr.bf16.mxu0 0
    %7712 = vmatpush1.bf16.msra.mxu0 %v7697
    %7713 = vmatprep.subr.bf16.mxu0 0
    %7714 = vmatpush1.bf16.msra.mxu0 0
    %7715 = vmatprep.subr.bf16.mxu0 0
    %7716 = vmatpush1.bf16.msra.mxu0 0
    %7717 = vmatprep.subr.bf16.mxu0 0
    %7718 = vmatpush1.bf16.msra.mxu0 0
    %7719 = vmatprep.subr.bf16.mxu0 0
    %7720 = vmatpush1.bf16.msra.mxu0 0
    %7721 = vmatprep.subr.bf16.mxu0 0
    %7722 = vmatpush1.bf16.msra.mxu0 0
    %7723 = vmatprep.subr.bf16.mxu0 0
    %7724 = vmatpush1.bf16.msra.mxu0 0
    %7725 = vmatprep.subr.bf16.mxu0 0
    %7726 = vmatpush1.bf16.msra.mxu0 0
    %7727 = vmatprep.subr.bf16.mxu0 0
    %7728 = vmatpush1.bf16.msra.mxu0 0
    %7729 = vmatprep.subr.bf16.mxu0 0
    %7730 = vmatpush1.bf16.msra.mxu0 0
    %7731 = vmatprep.subr.bf16.mxu0 0
    %7732 = vmatpush1.bf16.msra.mxu0 0
    %7733 = vmatprep.subr.bf16.mxu0 0
    %7734 = vmatpush1.bf16.msra.mxu0 0
    %7735 = vmatprep.subr.bf16.mxu0 0
    %7736 = vmatpush1.bf16.msra.mxu0 0
    %7737 = vmatprep.mubr.bf16.mxu0 0
    %7738 = vmatmul.mubr.bf16.gmra.mrb[0].mxu0 %v7703
    %v7739 = vpop.f32.mrb[0].mxu0
    %v7740 = vadd.f32 %v7673, %v7739
    %v7741 = vpop.f32.mrb[0].mxu0
    %v7742 = vpop.f32.mrb[0].mxu0
    %v7743 = vpop.f32.mrb[0].mxu0
    %7744 = vdwg.mxu0
    %v7746 = vlaneseq
    %v7747 = vshrl.u32 %v7746, 7
    %v7748 = vsub.s32 0, %v7747
    %v7749 = vrot.slane %v7522, %v7748
    %v7751 = vadd.f32 %v7740, %v7749
    %v7752 = vmax.f32 %v7751, 0.0
    %v7753 = vpack.c.bf16 %v7606, %v7606
    %v7754 = vsel %vm839, %v7567, 0
    %7756 = vmatprep.subr.bf16.mxu0 0
    %7757 = vmatpush1.bf16.msra.mxu0 %v7628
    %7758 = vmatprep.subr.bf16.mxu0 0
    %7759 = vmatpush1.bf16.msra.mxu0 %v7629
    %7760 = vmatprep.subr.bf16.mxu0 0
    %7761 = vmatpush1.bf16.msra.mxu0 %v7630
    %7762 = vmatprep.subr.bf16.mxu0 0
    %7763 = vmatpush1.bf16.msra.mxu0 %v7631
    %7764 = vmatprep.subr.bf16.mxu0 0
    %7765 = vmatpush1.bf16.msra.mxu0 0
    %7766 = vmatprep.subr.bf16.mxu0 0
    %7767 = vmatpush1.bf16.msra.mxu0 0
    %7768 = vmatprep.subr.bf16.mxu0 0
    %7769 = vmatpush1.bf16.msra.mxu0 0
    %7770 = vmatprep.subr.bf16.mxu0 0
    %7771 = vmatpush1.bf16.msra.mxu0 0
    %7772 = vmatprep.subr.bf16.mxu0 0
    %7773 = vmatpush1.bf16.msra.mxu0 0
    %7774 = vmatprep.subr.bf16.mxu0 0
    %7775 = vmatpush1.bf16.msra.mxu0 0
    %7776 = vmatprep.subr.bf16.mxu0 0
    %7777 = vmatpush1.bf16.msra.mxu0 0
    %7778 = vmatprep.subr.bf16.mxu0 0
    %7779 = vmatpush1.bf16.msra.mxu0 0
    %7780 = vmatprep.subr.bf16.mxu0 0
    %7781 = vmatpush1.bf16.msra.mxu0 0
    %7782 = vmatprep.subr.bf16.mxu0 0
    %7783 = vmatpush1.bf16.msra.mxu0 0
    %7784 = vmatprep.subr.bf16.mxu0 0
    %7785 = vmatpush1.bf16.msra.mxu0 0
    %7786 = vmatprep.subr.bf16.mxu0 0
    %7787 = vmatpush1.bf16.msra.mxu0 0
    %7788 = vmatprep.mubr.bf16.mxu0 0
    %7789 = vmatmul.mubr.bf16.gmra.mrb[0].mxu0 %v7754
    %v7790 = vpop.f32.mrb[0].mxu0
    %v7791 = vadd.f32 0.0, %v7790
    %v7792 = vpop.f32.mrb[0].mxu0
    %v7793 = vpop.f32.mrb[0].mxu0
    %v7794 = vpop.f32.mrb[0].mxu0
    %7795 = vdwg.mxu0
    %v7797 = vsel %vm839, %v7753, 0
    %7799 = vmatprep.subr.bf16.mxu0 0
    %7800 = vmatpush1.bf16.msra.mxu0 %v7694
    %7801 = vmatprep.subr.bf16.mxu0 0
    %7802 = vmatpush1.bf16.msra.mxu0 %v7695
    %7803 = vmatprep.subr.bf16.mxu0 0
    %7804 = vmatpush1.bf16.msra.mxu0 %v7696
    %7805 = vmatprep.subr.bf16.mxu0 0
    %7806 = vmatpush1.bf16.msra.mxu0 %v7697
    %7807 = vmatprep.subr.bf16.mxu0 0
    %7808 = vmatpush1.bf16.msra.mxu0 0
    %7809 = vmatprep.subr.bf16.mxu0 0
    %7810 = vmatpush1.bf16.msra.mxu0 0
    %7811 = vmatprep.subr.bf16.mxu0 0
    %7812 = vmatpush1.bf16.msra.mxu0 0
    %7813 = vmatprep.subr.bf16.mxu0 0
    %7814 = vmatpush1.bf16.msra.mxu0 0
    %7815 = vmatprep.subr.bf16.mxu0 0
    %7816 = vmatpush1.bf16.msra.mxu0 0
    %7817 = vmatprep.subr.bf16.mxu0 0
    %7818 = vmatpush1.bf16.msra.mxu0 0
    %7819 = vmatprep.subr.bf16.mxu0 0
    %7820 = vmatpush1.bf16.msra.mxu0 0
    %7821 = vmatprep.subr.bf16.mxu0 0
    %7822 = vmatpush1.bf16.msra.mxu0 0
    %7823 = vmatprep.subr.bf16.mxu0 0
    %7824 = vmatpush1.bf16.msra.mxu0 0
    %7825 = vmatprep.subr.bf16.mxu0 0
    %7826 = vmatpush1.bf16.msra.mxu0 0
    %7827 = vmatprep.subr.bf16.mxu0 0
    %7828 = vmatpush1.bf16.msra.mxu0 0
    %7829 = vmatprep.subr.bf16.mxu0 0
    %7830 = vmatpush1.bf16.msra.mxu0 0
    %7831 = vmatprep.mubr.bf16.mxu0 0
    %7832 = vmatmul.mubr.bf16.gmra.mrb[0].mxu0 %v7797
    %v7833 = vpop.f32.mrb[0].mxu0
    %v7834 = vadd.f32 %v7791, %v7833
    %v7835 = vpop.f32.mrb[0].mxu0
    %v7836 = vpop.f32.mrb[0].mxu0
    %v7837 = vpop.f32.mrb[0].mxu0
    %7838 = vdwg.mxu0
    %v7839 = vadd.f32 %v7834, %v7749
    %v7840 = vmax.f32 %v7839, 0.0
    %v7841 = vsel %vm7052, %v7752, 0.0
    %v7842 = vrot.slane %v7841, 4
    %v7843 = vadd.f32 %v7841, %v7842
    %v7844 = vrot.slane %v7843, 2
    %v7845 = vadd.f32 %v7843, %v7844
    %v7846 = vrot.slane %v7845, 1
    %v7847 = vadd.f32 %v7845, %v7846
    %v7848 = vadd.f32 %v7847, 0.0
    %v7849 = vsel %vm7052, %v7840, 0.0
    %v7850 = vrot.slane %v7849, 4
    %v7851 = vadd.f32 %v7849, %v7850
    %v7852 = vrot.slane %v7851, 2
    %v7853 = vadd.f32 %v7851, %v7852
    %v7854 = vrot.slane %v7853, 1
    %v7855 = vadd.f32 %v7853, %v7854
    %v7856 = vadd.f32 %v7848, %v7855
    %v7857 = vmul.f32 %v7856, 0.25
    %v7858 = vsub.f32 %v7752, %v7857
    %v7859 = vmul.f32 %v7858, %v7858
    %v7860 = vsel %vm7052, %v7859, 0.0
    %v7861 = vrot.slane %v7860, 4
    %v7862 = vadd.f32 %v7860, %v7861
    %v7863 = vrot.slane %v7862, 2
    %v7864 = vadd.f32 %v7862, %v7863
    %v7865 = vrot.slane %v7864, 1
    %v7866 = vadd.f32 %v7864, %v7865
    %v7867 = vadd.f32 %v7866, 0.0
    %v7868 = vsub.f32 %v7840, %v7857
    %v7869 = vmul.f32 %v7868, %v7868
    %v7870 = vsel %vm7052, %v7869, 0.0
    %v7871 = vrot.slane %v7870, 4
    %v7872 = vadd.f32 %v7870, %v7871
    %v7873 = vrot.slane %v7872, 2
    %v7874 = vadd.f32 %v7872, %v7873
    %v7875 = vrot.slane %v7874, 1
    %v7876 = vadd.f32 %v7874, %v7875
    %v7877 = vadd.f32 %v7867, %v7876
    %v7878 = vmul.f32 %v7877, 0.25
    %v7879 = vadd.f32 %v7878, 1e-05
    %v7880 = vrsqrt.pop %v7879
    %v7881 = vld [vmem:[#allocation19] sm:$0x1]
    %v7882 = vmul.f32 %v7880, %v7881
    %v7883 = vld [vmem:[#allocation20] sm:$0x1]
    %v7884 = vmul.f32 %v7857, %v7882
    %v7885 = vsub.f32 %v7883, %v7884
    %v7886 = vlaneseq
    %v7887 = vshrl.u32 %v7886, 7
    %v7888 = vsub.s32 0, %v7887
    %v7889 = vrot.slane %v7882, %v7888
    %v7890 = vmul.f32 %v7752, %v7889
    %v7892 = vlaneseq
    %v7893 = vshrl.u32 %v7892, 7
    %v7894 = vsub.s32 0, %v7893
    %v7895 = vrot.slane %v7885, %v7894
    %v7897 = vadd.f32 %v7890, %v7895
    %v7898 = vmul.f32 %v7840, %v7889
    %v7899 = vadd.f32 %v7898, %v7895
    %7901 = vrot.lane.b32.xlu0 %v7503, 64
    %v7902 = vpop.permute.xlu0 %7901
    %v7904 = vsel %vm839, %v7109, %v7902
    %7906 = vrot.lane.b32.xlu0 %v7505, 64
    %v7907 = vpop.permute.xlu0 %7906
    %v7909 = vsel %vm839, %v7111, %v7907
    %v7910 = vld [vmem:[%s133] sm:$0xf]
    %v7911 = vld [vmem:[%s133 + $0x4] sm:$0xf]
    %v7912 = vld [vmem:[%s133 + $0x8] sm:$0xf]
    %v7913 = vld [vmem:[%s133 + $0xc] sm:$0xf]
    %v7914 = vld [vmem:[%s133 + $0x10] sm:$0xf]
    %v7915 = vld [vmem:[%s133 + $0x14] sm:$0xf]
    %v7916 = vld [vmem:[%s133 + $0x18] sm:$0xf]
    %v7917 = vld [vmem:[%s133 + $0x1c] sm:$0xf]
    %v7918 = vld [vmem:[%s133 + $0x20] sm:$0xf]
    %v7919 = vld [vmem:[%s133 + $0x24] sm:$0xf]
    %v7920 = vld [vmem:[%s133 + $0x28] sm:$0xf]
    %v7921 = vld [vmem:[%s133 + $0x2c] sm:$0xf]
    %v7922 = vld [vmem:[%s133 + $0x30] sm:$0xf]
    %v7923 = vld [vmem:[%s133 + $0x34] sm:$0xf]
    %v7924 = vld [vmem:[%s133 + $0x38] sm:$0xf]
    %v7925 = vld [vmem:[%s133 + $0x3c] sm:$0xf]
    %v7926 = vld [vmem:[%s133 + $0x40] sm:$0xf]
    %v7927 = vld [vmem:[%s133 + $0x44] sm:$0xf]
    %v7928 = vld [vmem:[%s133 + $0x48] sm:$0xf]
    %v7929 = vld [vmem:[%s133 + $0x4c] sm:$0xf]
    %v7930 = vld [vmem:[%s133 + $0x50] sm:$0xf]
    %v7931 = vld [vmem:[%s133 + $0x54] sm:$0xf]
    %v7932 = vld [vmem:[%s133 + $0x58] sm:$0xf]
    %v7933 = vld [vmem:[%s133 + $0x5c] sm:$0xf]
    %v7934 = vld [vmem:[#allocation22] sm:$0x1]
    %v7935 = vld [vmem:[%s137] sm:$0xf]
    %v7936 = vld [vmem:[%s137 + $0x4] sm:$0xf]
    %v7937 = vld [vmem:[%s137 + $0x8] sm:$0xf]
    %v7938 = vld [vmem:[%s137 + $0xc] sm:$0xf]
    %v7939 = vld [vmem:[%s137 + $0x10] sm:$0xf]
    %v7940 = vld [vmem:[%s137 + $0x14] sm:$0xf]
    %v7941 = vld [vmem:[%s137 + $0x18] sm:$0xf]
    %v7942 = vld [vmem:[%s137 + $0x1c] sm:$0xf]
    %v7943 = vld [vmem:[#allocation23] sm:$0x1]
    %vm7944 = vcmask 1041408
    %v7945 = vsel %vm7944, %v7904, 0.0
    %v7946 = vrot.slane %v7945, 4
    %v7947 = vadd.f32 %v7945, %v7946
    %v7948 = vrot.slane %v7947, 2
    %v7949 = vadd.f32 %v7947, %v7948
    %v7950 = vrot.slane %v7949, 1
    %v7951 = vadd.f32 %v7949, %v7950
    %v7952 = vsel %vm7052, %v7897, 0.0
    %v7953 = vrot.slane %v7952, 4
    %v7954 = vadd.f32 %v7952, %v7953
    %v7955 = vrot.slane %v7954, 2
    %v7956 = vadd.f32 %v7954, %v7955
    %v7957 = vrot.slane %v7956, 1
    %v7958 = vadd.f32 %v7956, %v7957
    %v7959 = vrcp.pop 2.0
    %v7960 = vmul.f32 %v7951, %v7959
    %v7961 = vmul.f32 %v7958, %v7959
    %v7962 = vpack.c.bf16 %v7960, %v7960
    %v7963 = vpack.c.bf16 %v7961, %v7961
    %v7988 = vunpack.c.l.b16 %v7910
    %v7989 = vunpack.c.l.b16 %v7911
    %v7990 = vunpack.c.l.b16 %v7912
    %v7991 = vunpack.c.l.b16 %v7913
    %v7992 = vunpack.c.l.b16 %v7914
    %v7993 = vunpack.c.l.b16 %v7915
    %v7994 = vunpack.c.l.b16 %v7916
    %v7995 = vunpack.c.l.b16 %v7917
    %v7996 = vunpack.c.l.b16 %v7918
    %v7997 = vunpack.c.l.b16 %v7919
    %v7998 = vunpack.c.l.b16 %v7920
    %v7999 = vunpack.c.l.b16 %v7921
    %v8000 = vunpack.c.l.b16 %v7922
    %v8001 = vunpack.c.l.b16 %v7923
    %v8002 = vunpack.c.l.b16 %v7924
    %v8003 = vunpack.c.l.b16 %v7925
    %v8004 = vunpack.c.l.b16 %v7926
    %v8005 = vunpack.c.l.b16 %v7927
    %v8006 = vunpack.c.l.b16 %v7928
    %v8007 = vunpack.c.l.b16 %v7929
    %v8008 = vunpack.c.l.b16 %v7930
    %v8009 = vunpack.c.l.b16 %v7931
    %v8010 = vunpack.c.l.b16 %v7932
    %v8011 = vunpack.c.l.b16 %v7933
    %v8012 = vpack.c.b16 %v7989, %v7988
    %v8013 = vpack.c.b16 %v7991, %v7990
    %v8014 = vpack.c.b16 %v7993, %v7992
    %v8015 = vpack.c.b16 %v7995, %v7994
    %v8016 = vpack.c.b16 %v7997, %v7996
    %v8017 = vpack.c.b16 %v7999, %v7998
    %v8018 = vpack.c.b16 %v8001, %v8000
    %v8019 = vpack.c.b16 %v8003, %v8002
    %v8020 = vpack.c.b16 %v8005, %v8004
    %v8021 = vpack.c.b16 %v8007, %v8006
    %v8022 = vpack.c.b16 %v8009, %v8008
    %v8023 = vpack.c.b16 %v8011, %v8010
    %v8037 = vsel %vm839, %v7963, 0
    %8039 = vmatprep.subr.bf16.mxu0 0
    %8040 = vmatpush1.bf16.msra.mxu0 %v8012
    %8041 = vmatprep.subr.bf16.mxu0 0
    %8042 = vmatpush1.bf16.msra.mxu0 %v8013
    %8043 = vmatprep.subr.bf16.mxu0 0
    %8044 = vmatpush1.bf16.msra.mxu0 %v8014
    %8045 = vmatprep.subr.bf16.mxu0 0
    %8046 = vmatpush1.bf16.msra.mxu0 %v8015
    %8047 = vmatprep.subr.bf16.mxu0 0
    %8048 = vmatpush1.bf16.msra.mxu0 %v8016
    %8049 = vmatprep.subr.bf16.mxu0 0
    %8050 = vmatpush1.bf16.msra.mxu0 %v8017
    %8051 = vmatprep.subr.bf16.mxu0 0
    %8052 = vmatpush1.bf16.msra.mxu0 %v8018
    %8053 = vmatprep.subr.bf16.mxu0 0
    %8054 = vmatpush1.bf16.msra.mxu0 %v8019
    %8055 = vmatprep.subr.bf16.mxu0 0
    %8056 = vmatpush1.bf16.msra.mxu0 %v8020
    %8057 = vmatprep.subr.bf16.mxu0 0
    %8058 = vmatpush1.bf16.msra.mxu0 %v8021
    %8059 = vmatprep.subr.bf16.mxu0 0
    %8060 = vmatpush1.bf16.msra.mxu0 %v8022
    %8061 = vmatprep.subr.bf16.mxu0 0
    %8062 = vmatpush1.bf16.msra.mxu0 %v8023
    %8063 = vmatprep.subr.bf16.mxu0 0
    %8064 = vmatpush1.bf16.msra.mxu0 0
    %8065 = vmatprep.subr.bf16.mxu0 0
    %8066 = vmatpush1.bf16.msra.mxu0 0
    %8067 = vmatprep.subr.bf16.mxu0 0
    %8068 = vmatpush1.bf16.msra.mxu0 0
    %8069 = vmatprep.subr.bf16.mxu0 0
    %8070 = vmatpush1.bf16.msra.mxu0 0
    %8071 = vmatprep.mubr.bf16.mxu0 %v8037
    %8072 = vmatmul.mubr.bf16.gmra.mrb[0].mxu0 %v7962
    %v8073 = vpop.f32.mrb[0].mxu0
    %v8074 = vadd.f32 %v7934, %v8073
    %v8075 = vpop.f32.mrb[0].mxu0
    %v8076 = vpop.f32.mrb[0].mxu0
    %v8077 = vpop.f32.mrb[0].mxu0
    %8078 = vdwg.mxu0
    %v8079 = vmax.f32 %v8074, 0.0
    %v8080 = vpack.c.bf16 %v8079, %v8079
    %v8089 = vunpack.c.l.b16 %v7935
    %v8090 = vunpack.c.l.b16 %v7936
    %v8091 = vunpack.c.l.b16 %v7937
    %v8092 = vunpack.c.l.b16 %v7938
    %v8093 = vunpack.c.l.b16 %v7939
    %v8094 = vunpack.c.l.b16 %v7940
    %v8095 = vunpack.c.l.b16 %v7941
    %v8096 = vunpack.c.l.b16 %v7942
    %v8097 = vpack.c.b16 %v8090, %v8089
    %v8098 = vpack.c.b16 %v8092, %v8091
    %v8099 = vpack.c.b16 %v8094, %v8093
    %v8100 = vpack.c.b16 %v8096, %v8095
    %v8106 = vsel %vm839, %v8080, 0
    %8108 = vmatprep.subr.bf16.mxu0 0
    %8109 = vmatpush1.bf16.msra.mxu0 %v8097
    %8110 = vmatprep.subr.bf16.mxu0 0
    %8111 = vmatpush1.bf16.msra.mxu0 %v8098
    %8112 = vmatprep.subr.bf16.mxu0 0
    %8113 = vmatpush1.bf16.msra.mxu0 %v8099
    %8114 = vmatprep.subr.bf16.mxu0 0
    %8115 = vmatpush1.bf16.msra.mxu0 %v8100
    %8116 = vmatprep.subr.bf16.mxu0 0
    %8117 = vmatpush1.bf16.msra.mxu0 0
    %8118 = vmatprep.subr.bf16.mxu0 0
    %8119 = vmatpush1.bf16.msra.mxu0 0
    %8120 = vmatprep.subr.bf16.mxu0 0
    %8121 = vmatpush1.bf16.msra.mxu0 0
    %8122 = vmatprep.subr.bf16.mxu0 0
    %8123 = vmatpush1.bf16.msra.mxu0 0
    %8124 = vmatprep.subr.bf16.mxu0 0
    %8125 = vmatpush1.bf16.msra.mxu0 0
    %8126 = vmatprep.subr.bf16.mxu0 0
    %8127 = vmatpush1.bf16.msra.mxu0 0
    %8128 = vmatprep.subr.bf16.mxu0 0
    %8129 = vmatpush1.bf16.msra.mxu0 0
    %8130 = vmatprep.subr.bf16.mxu0 0
    %8131 = vmatpush1.bf16.msra.mxu0 0
    %8132 = vmatprep.subr.bf16.mxu0 0
    %8133 = vmatpush1.bf16.msra.mxu0 0
    %8134 = vmatprep.subr.bf16.mxu0 0
    %8135 = vmatpush1.bf16.msra.mxu0 0
    %8136 = vmatprep.subr.bf16.mxu0 0
    %8137 = vmatpush1.bf16.msra.mxu0 0
    %8138 = vmatprep.subr.bf16.mxu0 0
    %8139 = vmatpush1.bf16.msra.mxu0 0
    %8140 = vmatprep.mubr.bf16.mxu0 0
    %8141 = vmatmul.mubr.bf16.gmra.mrb[0].mxu0 %v8106
    %v8142 = vpop.f32.mrb[0].mxu0
    %v8143 = vadd.f32 %v7943, %v8142
    %v8144 = vpop.f32.mrb[0].mxu0
    %v8145 = vpop.f32.mrb[0].mxu0
    %v8146 = vpop.f32.mrb[0].mxu0
    %8147 = vdwg.mxu0
    %vm8148 = vcmask 24576
    %v8149 = vsel %vm8148, %v8143, -inf
    %8150 = vmax.xlane.f32.xlu0 %v8149
    %v8151 = vpop.xlane.xlu0 %8150
    %v8152 = vsub.f32 %v8143, %v8151
    %v8153 = vmul.f32 %v8152, 1.442695
    %v8154 = vpow.pop %v8153
    %v8155 = vsel %vm8148, %v8154, 0.0
    %8156 = vadd.xlane.f32.xlu0 %v8155
    %v8157 = vpop.xlane.xlu0 %8156
    %v8158 = vlog2.pop %v8157
    %v8159 = vmul.f32 %v8158, 0.6931472
    %v8160 = vsub.f32 %v8152, %v8159
    %8161 = vst.msk [vmem:[#allocation25] sm:$0x1] %vm8148, %v8160
    %v8162 = vsel %vm7944, %v7909, 0.0
    %v8163 = vrot.slane %v8162, 4
    %v8164 = vadd.f32 %v8162, %v8163
    %v8165 = vrot.slane %v8164, 2
    %v8166 = vadd.f32 %v8164, %v8165
    %v8167 = vrot.slane %v8166, 1
    %v8168 = vadd.f32 %v8166, %v8167
    %v8169 = vsel %vm7052, %v7899, 0.0
    %v8170 = vrot.slane %v8169, 4
    %v8171 = vadd.f32 %v8169, %v8170
    %v8172 = vrot.slane %v8171, 2
    %v8173 = vadd.f32 %v8171, %v8172
    %v8174 = vrot.slane %v8173, 1
    %v8175 = vadd.f32 %v8173, %v8174
    %v8176 = vmul.f32 %v8168, %v7959
    %v8177 = vmul.f32 %v8175, %v7959
    %v8178 = vpack.c.bf16 %v8176, %v8176
    %v8179 = vpack.c.bf16 %v8177, %v8177
    %v8181 = vsel %vm839, %v8179, 0
    %8183 = vmatprep.subr.bf16.mxu0 0
    %8184 = vmatpush1.bf16.msra.mxu0 %v8012
    %8185 = vmatprep.subr.bf16.mxu0 0
    %8186 = vmatpush1.bf16.msra.mxu0 %v8013
    %8187 = vmatprep.subr.bf16.mxu0 0
    %8188 = vmatpush1.bf16.msra.mxu0 %v8014
    %8189 = vmatprep.subr.bf16.mxu0 0
    %8190 = vmatpush1.bf16.msra.mxu0 %v8015
    %8191 = vmatprep.subr.bf16.mxu0 0
    %8192 = vmatpush1.bf16.msra.mxu0 %v8016
    %8193 = vmatprep.subr.bf16.mxu0 0
    %8194 = vmatpush1.bf16.msra.mxu0 %v8017
    %8195 = vmatprep.subr.bf16.mxu0 0
    %8196 = vmatpush1.bf16.msra.mxu0 %v8018
    %8197 = vmatprep.subr.bf16.mxu0 0
    %8198 = vmatpush1.bf16.msra.mxu0 %v8019
    %8199 = vmatprep.subr.bf16.mxu0 0
    %8200 = vmatpush1.bf16.msra.mxu0 %v8020
    %8201 = vmatprep.subr.bf16.mxu0 0
    %8202 = vmatpush1.bf16.msra.mxu0 %v8021
    %8203 = vmatprep.subr.bf16.mxu0 0
    %8204 = vmatpush1.bf16.msra.mxu0 %v8022
    %8205 = vmatprep.subr.bf16.mxu0 0
    %8206 = vmatpush1.bf16.msra.mxu0 %v8023
    %8207 = vmatprep.subr.bf16.mxu0 0
    %8208 = vmatpush1.bf16.msra.mxu0 0
    %8209 = vmatprep.subr.bf16.mxu0 0
    %8210 = vmatpush1.bf16.msra.mxu0 0
    %8211 = vmatprep.subr.bf16.mxu0 0
    %8212 = vmatpush1.bf16.msra.mxu0 0
    %8213 = vmatprep.subr.bf16.mxu0 0
    %8214 = vmatpush1.bf16.msra.mxu0 0
    %8215 = vmatprep.mubr.bf16.mxu0 %v8181
    %8216 = vmatmul.mubr.bf16.gmra.mrb[0].mxu0 %v8178
    %v8217 = vpop.f32.mrb[0].mxu0
    %v8218 = vadd.f32 %v7934, %v8217
    %v8219 = vpop.f32.mrb[0].mxu0
    %v8220 = vpop.f32.mrb[0].mxu0
    %v8221 = vpop.f32.mrb[0].mxu0
    %8222 = vdwg.mxu0
    %v8223 = vmax.f32 %v8218, 0.0
    %v8224 = vpack.c.bf16 %v8223, %v8223
    %v8226 = vsel %vm839, %v8224, 0
    %8228 = vmatprep.subr.bf16.mxu0 0
    %8229 = vmatpush1.bf16.msra.mxu0 %v8097
    %8230 = vmatprep.subr.bf16.mxu0 0
    %8231 = vmatpush1.bf16.msra.mxu0 %v8098
    %8232 = vmatprep.subr.bf16.mxu0 0
    %8233 = vmatpush1.bf16.msra.mxu0 %v8099
    %8234 = vmatprep.subr.bf16.mxu0 0
    %8235 = vmatpush1.bf16.msra.mxu0 %v8100
    %8236 = vmatprep.subr.bf16.mxu0 0
    %8237 = vmatpush1.bf16.msra.mxu0 0
    %8238 = vmatprep.subr.bf16.mxu0 0
    %8239 = vmatpush1.bf16.msra.mxu0 0
    %8240 = vmatprep.subr.bf16.mxu0 0
    %8241 = vmatpush1.bf16.msra.mxu0 0
    %8242 = vmatprep.subr.bf16.mxu0 0
    %8243 = vmatpush1.bf16.msra.mxu0 0
    %8244 = vmatprep.subr.bf16.mxu0 0
    %8245 = vmatpush1.bf16.msra.mxu0 0
    %8246 = vmatprep.subr.bf16.mxu0 0
    %8247 = vmatpush1.bf16.msra.mxu0 0
    %8248 = vmatprep.subr.bf16.mxu0 0
    %8249 = vmatpush1.bf16.msra.mxu0 0
    %8250 = vmatprep.subr.bf16.mxu0 0
    %8251 = vmatpush1.bf16.msra.mxu0 0
    %8252 = vmatprep.subr.bf16.mxu0 0
    %8253 = vmatpush1.bf16.msra.mxu0 0
    %8254 = vmatprep.subr.bf16.mxu0 0
    %8255 = vmatpush1.bf16.msra.mxu0 0
    %8256 = vmatprep.subr.bf16.mxu0 0
    %8257 = vmatpush1.bf16.msra.mxu0 0
    %8258 = vmatprep.subr.bf16.mxu0 0
    %8259 = vmatpush1.bf16.msra.mxu0 0
    %8260 = vmatprep.mubr.bf16.mxu0 0
    %8261 = vmatmul.mubr.bf16.gmra.mrb[0].mxu0 %v8226
    %v8262 = vpop.f32.mrb[0].mxu0
    %v8263 = vadd.f32 %v7943, %v8262
    %v8264 = vpop.f32.mrb[0].mxu0
    %v8265 = vpop.f32.mrb[0].mxu0
    %v8266 = vpop.f32.mrb[0].mxu0
    %8267 = vdwg.mxu0
    %v8268 = vsel %vm8148, %v8263, -inf
    %8269 = vmax.xlane.f32.xlu0 %v8268
    %v8270 = vpop.xlane.xlu0 %8269
    %v8271 = vsub.f32 %v8263, %v8270
    %v8272 = vmul.f32 %v8271, 1.442695
    %v8273 = vpow.pop %v8272
    %v8274 = vsel %vm8148, %v8273, 0.0
    %8275 = vadd.xlane.f32.xlu0 %v8274
    %v8276 = vpop.xlane.xlu0 %8275
    %v8277 = vlog2.pop %v8276
    %v8278 = vmul.f32 %v8277, 0.6931472
    %v8279 = vsub.f32 %v8271, %v8278
    %s8280 = scalar_lea.vmem [#allocation25], 1
    %8281 = vst.msk [vmem:[%s8280] sm:$0x1] %vm8148, %v8279
    %v8282 = vadd.f32 %v3899, %v6554
    %vm8283 = vcmask 0
    %8284 = vst.msk [vmem:[#allocation26] sm:$0x1] %vm8283, %v8282
    %v8285 = vadd.f32 %v3900, %v6555
    %8286 = vst.msk [vmem:[#allocation28] sm:$0x1] %vm8283, %v8285
    // Predicated region
    $region338: #{net_forward.1} parent=1 // pred_check
      _
    $region339: #{net_forward.1} parent=1 // pred_check_branch
      %8288 = sbr.rel (0) target = $region341
    $region340: #{net_forward.1} parent=1 // pred_region
      %s8290 = ssub.s32 32, 32
      %8291 = vsyncadd [#allocation4], %s8290
      %s8292 = sshll.u32 [#allocation25], 4
      %s8293 = int_to_ptr.vmem [resolvable:$true] %s8292
      %8298 = dma.vmem_to_hbm [thread:$0]  %s8293, 32, %s141, [#allocation4], 16, 16, 1
    $region341: #{net_forward.1} parent=1 // pred_fallthru
      _
    // Predicated region
    $region342: #{net_forward.1} parent=1 // pred_check
      _
    $region343: #{net_forward.1} parent=1 // pred_check_branch
      %8300 = sbr.rel (0) target = $region345
    $region344: #{net_forward.1} parent=1 // pred_region
      %s8302 = ssub.s32 16, 16
      %8303 = vsyncadd [#allocation27], %s8302
      %s8305 = sshll.u32 [#allocation26], 4
      %s8306 = int_to_ptr.vmem [resolvable:$true] %s8305
      %8308 = dma.vmem_to_hbm [thread:$0]  %s8306, 16, %s143, [#allocation27]
    $region345: #{net_forward.1} parent=1 // pred_fallthru
      _
    // Predicated region
    $region346: #{net_forward.1} parent=1 // pred_check
      _
    $region347: #{net_forward.1} parent=1 // pred_check_branch
      %8310 = sbr.rel (0) target = $region349
    $region348: #{net_forward.1} parent=1 // pred_region
      %s8312 = ssub.s32 16, 16
      %8313 = vsyncadd [#allocation27], %s8312
      %s8315 = sshll.u32 [#allocation28], 4
      %s8316 = int_to_ptr.vmem [resolvable:$true] %s8315
      %8318 = dma.vmem_to_hbm [thread:$0]  %s8316, 16, %s145, [#allocation27]
    $region349: #{net_forward.1} parent=1 // pred_fallthru
      _
    // Predicated region
    $region350: #{net_forward.1} parent=1 // pred_check
      _
    $region351: #{net_forward.1} parent=1 // pred_check_branch
      %8320 = sbr.rel (0) target = $region353
    $region352: #{net_forward.1} parent=1 // pred_region
      %8321 = dma.done [#allocation4], 32
    $region353: #{net_forward.1} parent=1 // pred_fallthru
      _
    // Predicated region
    $region354: #{net_forward.1} parent=1 // pred_check
      _
    $region355: #{net_forward.1} parent=1 // pred_check_branch
      %8323 = sbr.rel (0) target = $region357
    $region356: #{net_forward.1} parent=1 // pred_region
      %8324 = dma.done [#allocation27], 16
    $region357: #{net_forward.1} parent=1 // pred_fallthru
      _
    // Predicated region
    $region358: #{net_forward.1} parent=1 // pred_check
      _
    $region359: #{net_forward.1} parent=1 // pred_check_branch
      %8326 = sbr.rel (0) target = $region361
    $region360: #{net_forward.1} parent=1 // pred_region
      %8327 = dma.done [#allocation27], 16
    $region361: #{net_forward.1} parent=1 // pred_fallthru
      _
    %8328 = vsyncpa [#allocation3], 1
    %8329 = vsyncpa [#allocation6], 1
    %8330 = vsyncpa [#allocation9], 1
    %8331 = vsyncpa [#allocation12], 1
    %8332 = vsyncpa [#allocation15], 1
    %8333 = vsyncpa [#allocation18], 1
    %8334 = vsyncpa [#allocation21], 1
    %8335 = vsyncpa [#allocation24], 1
    %8336 = vsyncpa [#allocation4], 1
    %8337 = vsyncpa [#allocation27], 1

</llo_original>
